<compile_context>
chip_gen: v5e
topology: v5e:2x2
jax: 0.10.0
libtpu: 0.0.40
codegen_flags: <defaults>
</compile_context>

<pallas_src>
import jax
import jax.numpy as jnp
from jax import lax
from jax.experimental import pallas as pl
from jax.experimental.pallas import tpu as pltpu

EPS = 1e-5

# (cin, cout, kernel_h); all conv strides are (2, 1)
_LAYER_CFG = [
    (1, 2, 6),
    (2, 3, 6),
    (3, 5, 4),
    (5, 10, 4),
    (10, 10, 3),
]
_H0 = 500
_STRIDE = 2
_LINEAR_OUT = 2


# ----------------------------- static layout --------------------------------

def _layer_dims():
    """Per-layer (cin, cout, K, Hin, Lfull, Hout) with Lfull = stride-1 length."""
    dims = []
    h = _H0
    for cin, cout, k in _LAYER_CFG:
        lfull = h - k + 1
        hout = (h - k) // _STRIDE + 1
        dims.append((cin, cout, k, h, lfull, hout))
        h = hout
    return dims


def _param_offsets():
    """Static offsets of [w | bias | bn_scale | bn_shift] per layer in the packed SMEM array."""
    offs, off = [], 0
    for cin, cout, k in _LAYER_CFG:
        w_off = off; off += cout * cin * k
        b_off = off; off += cout
        s_off = off; off += cout
        t_off = off; off += cout
        offs.append((w_off, b_off, s_off, t_off))
    return offs, off


# ------------------------------ fused kernel --------------------------------

def _build_kernel():
    dims = _layer_dims()
    offs, _ = _param_offsets()
    c_last = _LAYER_CFG[-1][1]

    def kernel(params_ref, x_ref, lt_ref, lb_ref, out_ref):
        # Activations as a list of per-channel (B, H) lane-dense values.
        chans = [x_ref[...]]                                   # layer-1 input (cin == 1)

        for (cin, cout, k, hin, lfull, hout), (w_off, b_off, s_off, t_off) in zip(dims, offs):
            # Contiguous stride-1 taps, shared across all output channels.
            taps = [[chans[ci][:, j:j + lfull] for j in range(k)] for ci in range(cin)]

            # 0/1 stride-2 selection matrix built in-kernel (dsel[m, h] = (m == 2h)).
            row = lax.broadcasted_iota(jnp.int32, (lfull, hout), 0)
            col = lax.broadcasted_iota(jnp.int32, (lfull, hout), 1)
            dsel = (row == 2 * col).astype(jnp.float32)        # (lfull, hout)

            new_chans = []
            for co in range(cout):
                # Stride-1 conv via VPU FMAs with SMEM scalar weights.
                acc = None
                for ci in range(cin):
                    base = w_off + (co * cin + ci) * k
                    for j in range(k):
                        term = params_ref[base + j] * taps[ci][j]
                        acc = term if acc is None else acc + term
                # Stride-2 downsample: (B, lfull) @ (lfull, hout)  -> lane-dense output.
                z = jnp.dot(acc, dsel, preferred_element_type=jnp.float32)
                # conv bias -> ReLU -> folded BatchNorm(eval): z*scale + shift
                z = jnp.maximum(z + params_ref[b_off + co], 0.0)
                z = z * params_ref[s_off + co] + params_ref[t_off + co]
                new_chans.append(z)                            # (B, hout)
            chans = new_chans

        # Final linear on the channel-major flatten (== torch .view(-1, 10*14)).
        out = lb_ref[...]                                       # (1, OUT), broadcasts to (B, OUT)
        for c in range(c_last):
            out = out + jnp.dot(chans[c], lt_ref[c, :, :],
                                preferred_element_type=jnp.float32)
        out_ref[...] = out

    return kernel


# ------------------------------- wrappers ------------------------------------

def prepare_params(conv_params, linear_params):
    """Fold BN into scale/shift, pack all conv/BN params into one flat SMEM array,
    and pre-arrange the linear weight so the kernel needs no reshapes."""
    pieces = []
    for p in conv_params:
        scale = p["gamma"] * lax.rsqrt(p["var"] + EPS)
        shift = p["beta"] - p["mean"] * scale
        pieces += [p["w"].reshape(-1), p["b"], scale, shift]
    params_flat = jnp.concatenate(pieces).astype(jnp.float32)

    lw, lb = linear_params
    c5 = _LAYER_CFG[-1][1]
    h5 = _layer_dims()[-1][-1]
    lt = lw.reshape(_LINEAR_OUT, c5, h5).transpose(1, 2, 0).astype(jnp.float32)  # (10, 14, 2)
    lb2 = lb.reshape(1, _LINEAR_OUT).astype(jnp.float32)
    return params_flat, lt, lb2


@jax.jit
def forward(x_nchw, params_flat, lt, lb2):
    assert x_nchw.shape[1] == 1 and x_nchw.shape[2] == _H0 and x_nchw.shape[3] == 1
    b = x_nchw.shape[0]
    x2d = x_nchw[:, 0, :, 0]                 # (B, 500): drop trivial C/W dims (layout only)

    return pl.pallas_call(
        _build_kernel(),
        out_shape=jax.ShapeDtypeStruct((b, _LINEAR_OUT), jnp.float32),
        in_specs=[
            pl.BlockSpec(memory_space=pltpu.MemorySpace.SMEM),   # packed conv/BN params
            pl.BlockSpec(memory_space=pltpu.MemorySpace.VMEM),   # input (B, 500)
            pl.BlockSpec(memory_space=pltpu.MemorySpace.VMEM),   # linear weight (10, 14, 2)
            pl.BlockSpec(memory_space=pltpu.MemorySpace.VMEM),   # linear bias (1, 2)
        ],
        out_specs=pl.BlockSpec(memory_space=pltpu.MemorySpace.VMEM),
    )(params_flat, x2d, lt, lb2)


# ------------------------------ parameters -----------------------------------

def init_params(key):
    conv_params = []
    for (cin, cout, k) in _LAYER_CFG:
        key, k1, k2, k3, k4, k5, k6 = jax.random.split(key, 7)
        conv_params.append(
            dict(
                w=jax.random.normal(k1, (cout, cin, k), jnp.float32) * 0.2,
                b=jax.random.normal(k2, (cout,), jnp.float32) * 0.1,
                gamma=1.0 + 0.1 * jax.random.normal(k3, (cout,), jnp.float32),
                beta=0.1 * jax.random.normal(k4, (cout,), jnp.float32),
                mean=0.1 * jax.random.normal(k5, (cout,), jnp.float32),
                var=jnp.abs(jax.random.normal(k6, (cout,), jnp.float32)) + 0.5,
                stride=_STRIDE,
                k=k,
            )
        )
    key, kl1, kl2 = jax.random.split(key, 3)
    lw = jax.random.normal(kl1, (_LINEAR_OUT, 10 * 14), jnp.float32) * 0.05
    lb = jax.random.normal(kl2, (_LINEAR_OUT,), jnp.float32) * 0.1
    return conv_params, (lw, lb)


# --------------------------- pure-JAX reference ------------------------------

def ref_forward(x_nchw, conv_params, linear_params):
    h = x_nchw[:, :, :, 0]                                      # (B, Cin, H)
    for p in conv_params:
        _, _, H = h.shape
        k, s = p["k"], p["stride"]
        hout = (H - k) // s + 1
        taps = [h[:, :, j: j + s * (hout - 1) + 1: s] for j in range(k)]
        pat = jnp.stack(taps, axis=-1)                          # (B, Cin, Hout, K)
        z = jnp.einsum("bchk,ock->boh", pat, p["w"]) + p["b"][None, :, None]
        z = jnp.maximum(z, 0.0)                                 # ReLU before BN (as in module)
        g = p["gamma"][None, :, None]; be = p["beta"][None, :, None]
        mu = p["mean"][None, :, None]; va = p["var"][None, :, None]
        h = g * (z - mu) * lax.rsqrt(va + EPS) + be
    feat = h.reshape(h.shape[0], -1)                            # channel-major flatten
    lw, lb = linear_params
    return feat @ lw.T + lb


# ---------------------------------- main --------------------------------------

if __name__ == "__main__":
    key = jax.random.PRNGKey(0)
    key, xkey = jax.random.split(key)
    # Input consistent with the module: H must be 500 so conv5 output is (B,10,14,1).
    x = jax.random.normal(xkey, (2, 1, 500, 1), jnp.float32)

    conv_params, linear_params = init_params(key)
    params_flat, lt, lb2 = prepare_params(conv_params, linear_params)

    out = forward(x, params_flat, lt, lb2)
    out = jax.block_until_ready(out)
    assert out.shape == (2, 2) and out.dtype == jnp.float32

    ref = jax.block_until_ready(ref_forward(x, conv_params, linear_params))
    assert jnp.allclose(out, ref, atol=2e-2, rtol=2e-2), (out, ref)

    print("KERNEL_OK")
</pallas_src>

<mosaic_0001>
module attributes {stable_mosaic.version = 11 : i64} {
  func.func @kernel(%arg0: memref<698xf32, #tpu.memory_space<smem>>, %arg1: memref<2x500xf32, #tpu.memory_space<vmem>>, %arg2: memref<10x14x2xf32, #tpu.memory_space<vmem>>, %arg3: memref<1x2xf32, #tpu.memory_space<vmem>>, %arg4: memref<2x2xf32, #tpu.memory_space<vmem>>) attributes {dimension_semantics = [], scalar_prefetch = 0 : i64, scratch_operands = 0 : i64, tpu.core_type = #tpu.core_type<tc>} {
    %c0 = arith.constant 0 : index
    %c0_0 = arith.constant 0 : index
    %0 = vector.load %arg1[%c0, %c0_0] : memref<2x500xf32, #tpu.memory_space<vmem>>, vector<2x500xf32>
    %1 = vector.extract_strided_slice %0 {offsets = [0, 0], sizes = [2, 495], strides = [1, 1]} : vector<2x500xf32> to vector<2x495xf32>
    %2 = vector.extract_strided_slice %0 {offsets = [0, 1], sizes = [2, 495], strides = [1, 1]} : vector<2x500xf32> to vector<2x495xf32>
    %3 = vector.extract_strided_slice %0 {offsets = [0, 2], sizes = [2, 495], strides = [1, 1]} : vector<2x500xf32> to vector<2x495xf32>
    %4 = vector.extract_strided_slice %0 {offsets = [0, 3], sizes = [2, 495], strides = [1, 1]} : vector<2x500xf32> to vector<2x495xf32>
    %5 = vector.extract_strided_slice %0 {offsets = [0, 4], sizes = [2, 495], strides = [1, 1]} : vector<2x500xf32> to vector<2x495xf32>
    %6 = vector.extract_strided_slice %0 {offsets = [0, 5], sizes = [2, 495], strides = [1, 1]} : vector<2x500xf32> to vector<2x495xf32>
    %7 = tpu.iota {dimensions = array<i32: 0>} : vector<495x248xi32>
    %8 = tpu.iota {dimensions = array<i32: 1>} : vector<495x248xi32>
    %c2_i32 = arith.constant 2 : i32
    %9 = vector.broadcast %c2_i32 : i32 to vector<495x248xi32>
    %10 = arith.muli %9, %8 : vector<495x248xi32>
    %11 = arith.cmpi eq, %7, %10 : vector<495x248xi32>
    %12 = arith.extui %11 : vector<495x248xi1> to vector<495x248xi32>
    %13 = arith.sitofp %12 : vector<495x248xi32> to vector<495x248xf32>
    %c0_1 = arith.constant 0 : index
    %14 = memref.load %arg0[%c0_1] : memref<698xf32, #tpu.memory_space<smem>>
    %15 = vector.broadcast %14 : f32 to vector<2x495xf32>
    %16 = arith.mulf %15, %1 : vector<2x495xf32>
    %c1 = arith.constant 1 : index
    %17 = memref.load %arg0[%c1] : memref<698xf32, #tpu.memory_space<smem>>
    %18 = vector.broadcast %17 : f32 to vector<2x495xf32>
    %19 = arith.mulf %18, %2 : vector<2x495xf32>
    %20 = arith.addf %16, %19 : vector<2x495xf32>
    %c2 = arith.constant 2 : index
    %21 = memref.load %arg0[%c2] : memref<698xf32, #tpu.memory_space<smem>>
    %22 = vector.broadcast %21 : f32 to vector<2x495xf32>
    %23 = arith.mulf %22, %3 : vector<2x495xf32>
    %24 = arith.addf %20, %23 : vector<2x495xf32>
    %c3 = arith.constant 3 : index
    %25 = memref.load %arg0[%c3] : memref<698xf32, #tpu.memory_space<smem>>
    %26 = vector.broadcast %25 : f32 to vector<2x495xf32>
    %27 = arith.mulf %26, %4 : vector<2x495xf32>
    %28 = arith.addf %24, %27 : vector<2x495xf32>
    %c4 = arith.constant 4 : index
    %29 = memref.load %arg0[%c4] : memref<698xf32, #tpu.memory_space<smem>>
    %30 = vector.broadcast %29 : f32 to vector<2x495xf32>
    %31 = arith.mulf %30, %5 : vector<2x495xf32>
    %32 = arith.addf %28, %31 : vector<2x495xf32>
    %c5 = arith.constant 5 : index
    %33 = memref.load %arg0[%c5] : memref<698xf32, #tpu.memory_space<smem>>
    %34 = vector.broadcast %33 : f32 to vector<2x495xf32>
    %35 = arith.mulf %34, %6 : vector<2x495xf32>
    %36 = arith.addf %32, %35 : vector<2x495xf32>
    %cst = arith.constant dense<0.000000e+00> : vector<2x248xf32>
    %37 = tpu.matmul %36, %13, %cst {dimension_numbers = #tpu.dot_dimension_numbers<[1], [0], [0], [1], [0, 0, 1, 1], [], []>} : vector<2x495xf32>, vector<495x248xf32>, vector<2x248xf32> -> vector<2x248xf32>
    %c12 = arith.constant 12 : index
    %38 = memref.load %arg0[%c12] : memref<698xf32, #tpu.memory_space<smem>>
    %39 = vector.broadcast %38 : f32 to vector<2x248xf32>
    %40 = arith.addf %37, %39 : vector<2x248xf32>
    %cst_2 = arith.constant 0.000000e+00 : f32
    %41 = vector.broadcast %cst_2 : f32 to vector<2x248xf32>
    %42 = arith.maximumf %40, %41 : vector<2x248xf32>
    %c14 = arith.constant 14 : index
    %43 = memref.load %arg0[%c14] : memref<698xf32, #tpu.memory_space<smem>>
    %44 = vector.broadcast %43 : f32 to vector<2x248xf32>
    %45 = arith.mulf %42, %44 : vector<2x248xf32>
    %c16 = arith.constant 16 : index
    %46 = memref.load %arg0[%c16] : memref<698xf32, #tpu.memory_space<smem>>
    %47 = vector.broadcast %46 : f32 to vector<2x248xf32>
    %48 = arith.addf %45, %47 : vector<2x248xf32>
    %c6 = arith.constant 6 : index
    %49 = memref.load %arg0[%c6] : memref<698xf32, #tpu.memory_space<smem>>
    %50 = vector.broadcast %49 : f32 to vector<2x495xf32>
    %51 = arith.mulf %50, %1 : vector<2x495xf32>
    %c7 = arith.constant 7 : index
    %52 = memref.load %arg0[%c7] : memref<698xf32, #tpu.memory_space<smem>>
    %53 = vector.broadcast %52 : f32 to vector<2x495xf32>
    %54 = arith.mulf %53, %2 : vector<2x495xf32>
    %55 = arith.addf %51, %54 : vector<2x495xf32>
    %c8 = arith.constant 8 : index
    %56 = memref.load %arg0[%c8] : memref<698xf32, #tpu.memory_space<smem>>
    %57 = vector.broadcast %56 : f32 to vector<2x495xf32>
    %58 = arith.mulf %57, %3 : vector<2x495xf32>
    %59 = arith.addf %55, %58 : vector<2x495xf32>
    %c9 = arith.constant 9 : index
    %60 = memref.load %arg0[%c9] : memref<698xf32, #tpu.memory_space<smem>>
    %61 = vector.broadcast %60 : f32 to vector<2x495xf32>
    %62 = arith.mulf %61, %4 : vector<2x495xf32>
    %63 = arith.addf %59, %62 : vector<2x495xf32>
    %c10 = arith.constant 10 : index
    %64 = memref.load %arg0[%c10] : memref<698xf32, #tpu.memory_space<smem>>
    %65 = vector.broadcast %64 : f32 to vector<2x495xf32>
    %66 = arith.mulf %65, %5 : vector<2x495xf32>
    %67 = arith.addf %63, %66 : vector<2x495xf32>
    %c11 = arith.constant 11 : index
    %68 = memref.load %arg0[%c11] : memref<698xf32, #tpu.memory_space<smem>>
    %69 = vector.broadcast %68 : f32 to vector<2x495xf32>
    %70 = arith.mulf %69, %6 : vector<2x495xf32>
    %71 = arith.addf %67, %70 : vector<2x495xf32>
    %cst_3 = arith.constant dense<0.000000e+00> : vector<2x248xf32>
    %72 = tpu.matmul %71, %13, %cst_3 {dimension_numbers = #tpu.dot_dimension_numbers<[1], [0], [0], [1], [0, 0, 1, 1], [], []>} : vector<2x495xf32>, vector<495x248xf32>, vector<2x248xf32> -> vector<2x248xf32>
    %c13 = arith.constant 13 : index
    %73 = memref.load %arg0[%c13] : memref<698xf32, #tpu.memory_space<smem>>
    %74 = vector.broadcast %73 : f32 to vector<2x248xf32>
    %75 = arith.addf %72, %74 : vector<2x248xf32>
    %cst_4 = arith.constant 0.000000e+00 : f32
    %76 = vector.broadcast %cst_4 : f32 to vector<2x248xf32>
    %77 = arith.maximumf %75, %76 : vector<2x248xf32>
    %c15 = arith.constant 15 : index
    %78 = memref.load %arg0[%c15] : memref<698xf32, #tpu.memory_space<smem>>
    %79 = vector.broadcast %78 : f32 to vector<2x248xf32>
    %80 = arith.mulf %77, %79 : vector<2x248xf32>
    %c17 = arith.constant 17 : index
    %81 = memref.load %arg0[%c17] : memref<698xf32, #tpu.memory_space<smem>>
    %82 = vector.broadcast %81 : f32 to vector<2x248xf32>
    %83 = arith.addf %80, %82 : vector<2x248xf32>
    %84 = vector.extract_strided_slice %48 {offsets = [0, 0], sizes = [2, 243], strides = [1, 1]} : vector<2x248xf32> to vector<2x243xf32>
    %85 = vector.extract_strided_slice %48 {offsets = [0, 1], sizes = [2, 243], strides = [1, 1]} : vector<2x248xf32> to vector<2x243xf32>
    %86 = vector.extract_strided_slice %48 {offsets = [0, 2], sizes = [2, 243], strides = [1, 1]} : vector<2x248xf32> to vector<2x243xf32>
    %87 = vector.extract_strided_slice %48 {offsets = [0, 3], sizes = [2, 243], strides = [1, 1]} : vector<2x248xf32> to vector<2x243xf32>
    %88 = vector.extract_strided_slice %48 {offsets = [0, 4], sizes = [2, 243], strides = [1, 1]} : vector<2x248xf32> to vector<2x243xf32>
    %89 = vector.extract_strided_slice %48 {offsets = [0, 5], sizes = [2, 243], strides = [1, 1]} : vector<2x248xf32> to vector<2x243xf32>
    %90 = vector.extract_strided_slice %83 {offsets = [0, 0], sizes = [2, 243], strides = [1, 1]} : vector<2x248xf32> to vector<2x243xf32>
    %91 = vector.extract_strided_slice %83 {offsets = [0, 1], sizes = [2, 243], strides = [1, 1]} : vector<2x248xf32> to vector<2x243xf32>
    %92 = vector.extract_strided_slice %83 {offsets = [0, 2], sizes = [2, 243], strides = [1, 1]} : vector<2x248xf32> to vector<2x243xf32>
    %93 = vector.extract_strided_slice %83 {offsets = [0, 3], sizes = [2, 243], strides = [1, 1]} : vector<2x248xf32> to vector<2x243xf32>
    %94 = vector.extract_strided_slice %83 {offsets = [0, 4], sizes = [2, 243], strides = [1, 1]} : vector<2x248xf32> to vector<2x243xf32>
    %95 = vector.extract_strided_slice %83 {offsets = [0, 5], sizes = [2, 243], strides = [1, 1]} : vector<2x248xf32> to vector<2x243xf32>
    %96 = tpu.iota {dimensions = array<i32: 0>} : vector<243x122xi32>
    %97 = tpu.iota {dimensions = array<i32: 1>} : vector<243x122xi32>
    %c2_i32_5 = arith.constant 2 : i32
    %98 = vector.broadcast %c2_i32_5 : i32 to vector<243x122xi32>
    %99 = arith.muli %98, %97 : vector<243x122xi32>
    %100 = arith.cmpi eq, %96, %99 : vector<243x122xi32>
    %101 = arith.extui %100 : vector<243x122xi1> to vector<243x122xi32>
    %102 = arith.sitofp %101 : vector<243x122xi32> to vector<243x122xf32>
    %c18 = arith.constant 18 : index
    %103 = memref.load %arg0[%c18] : memref<698xf32, #tpu.memory_space<smem>>
    %104 = vector.broadcast %103 : f32 to vector<2x243xf32>
    %105 = arith.mulf %104, %84 : vector<2x243xf32>
    %c19 = arith.constant 19 : index
    %106 = memref.load %arg0[%c19] : memref<698xf32, #tpu.memory_space<smem>>
    %107 = vector.broadcast %106 : f32 to vector<2x243xf32>
    %108 = arith.mulf %107, %85 : vector<2x243xf32>
    %109 = arith.addf %105, %108 : vector<2x243xf32>
    %c20 = arith.constant 20 : index
    %110 = memref.load %arg0[%c20] : memref<698xf32, #tpu.memory_space<smem>>
    %111 = vector.broadcast %110 : f32 to vector<2x243xf32>
    %112 = arith.mulf %111, %86 : vector<2x243xf32>
    %113 = arith.addf %109, %112 : vector<2x243xf32>
    %c21 = arith.constant 21 : index
    %114 = memref.load %arg0[%c21] : memref<698xf32, #tpu.memory_space<smem>>
    %115 = vector.broadcast %114 : f32 to vector<2x243xf32>
    %116 = arith.mulf %115, %87 : vector<2x243xf32>
    %117 = arith.addf %113, %116 : vector<2x243xf32>
    %c22 = arith.constant 22 : index
    %118 = memref.load %arg0[%c22] : memref<698xf32, #tpu.memory_space<smem>>
    %119 = vector.broadcast %118 : f32 to vector<2x243xf32>
    %120 = arith.mulf %119, %88 : vector<2x243xf32>
    %121 = arith.addf %117, %120 : vector<2x243xf32>
    %c23 = arith.constant 23 : index
    %122 = memref.load %arg0[%c23] : memref<698xf32, #tpu.memory_space<smem>>
    %123 = vector.broadcast %122 : f32 to vector<2x243xf32>
    %124 = arith.mulf %123, %89 : vector<2x243xf32>
    %125 = arith.addf %121, %124 : vector<2x243xf32>
    %c24 = arith.constant 24 : index
    %126 = memref.load %arg0[%c24] : memref<698xf32, #tpu.memory_space<smem>>
    %127 = vector.broadcast %126 : f32 to vector<2x243xf32>
    %128 = arith.mulf %127, %90 : vector<2x243xf32>
    %129 = arith.addf %125, %128 : vector<2x243xf32>
    %c25 = arith.constant 25 : index
    %130 = memref.load %arg0[%c25] : memref<698xf32, #tpu.memory_space<smem>>
    %131 = vector.broadcast %130 : f32 to vector<2x243xf32>
    %132 = arith.mulf %131, %91 : vector<2x243xf32>
    %133 = arith.addf %129, %132 : vector<2x243xf32>
    %c26 = arith.constant 26 : index
    %134 = memref.load %arg0[%c26] : memref<698xf32, #tpu.memory_space<smem>>
    %135 = vector.broadcast %134 : f32 to vector<2x243xf32>
    %136 = arith.mulf %135, %92 : vector<2x243xf32>
    %137 = arith.addf %133, %136 : vector<2x243xf32>
    %c27 = arith.constant 27 : index
    %138 = memref.load %arg0[%c27] : memref<698xf32, #tpu.memory_space<smem>>
    %139 = vector.broadcast %138 : f32 to vector<2x243xf32>
    %140 = arith.mulf %139, %93 : vector<2x243xf32>
    %141 = arith.addf %137, %140 : vector<2x243xf32>
    %c28 = arith.constant 28 : index
    %142 = memref.load %arg0[%c28] : memref<698xf32, #tpu.memory_space<smem>>
    %143 = vector.broadcast %142 : f32 to vector<2x243xf32>
    %144 = arith.mulf %143, %94 : vector<2x243xf32>
    %145 = arith.addf %141, %144 : vector<2x243xf32>
    %c29 = arith.constant 29 : index
    %146 = memref.load %arg0[%c29] : memref<698xf32, #tpu.memory_space<smem>>
    %147 = vector.broadcast %146 : f32 to vector<2x243xf32>
    %148 = arith.mulf %147, %95 : vector<2x243xf32>
    %149 = arith.addf %145, %148 : vector<2x243xf32>
    %cst_6 = arith.constant dense<0.000000e+00> : vector<2x122xf32>
    %150 = tpu.matmul %149, %102, %cst_6 {dimension_numbers = #tpu.dot_dimension_numbers<[1], [0], [0], [1], [0, 0, 1, 1], [], []>} : vector<2x243xf32>, vector<243x122xf32>, vector<2x122xf32> -> vector<2x122xf32>
    %c54 = arith.constant 54 : index
    %151 = memref.load %arg0[%c54] : memref<698xf32, #tpu.memory_space<smem>>
    %152 = vector.broadcast %151 : f32 to vector<2x122xf32>
    %153 = arith.addf %150, %152 : vector<2x122xf32>
    %cst_7 = arith.constant 0.000000e+00 : f32
    %154 = vector.broadcast %cst_7 : f32 to vector<2x122xf32>
    %155 = arith.maximumf %153, %154 : vector<2x122xf32>
    %c57 = arith.constant 57 : index
    %156 = memref.load %arg0[%c57] : memref<698xf32, #tpu.memory_space<smem>>
    %157 = vector.broadcast %156 : f32 to vector<2x122xf32>
    %158 = arith.mulf %155, %157 : vector<2x122xf32>
    %c60 = arith.constant 60 : index
    %159 = memref.load %arg0[%c60] : memref<698xf32, #tpu.memory_space<smem>>
    %160 = vector.broadcast %159 : f32 to vector<2x122xf32>
    %161 = arith.addf %158, %160 : vector<2x122xf32>
    %c30 = arith.constant 30 : index
    %162 = memref.load %arg0[%c30] : memref<698xf32, #tpu.memory_space<smem>>
    %163 = vector.broadcast %162 : f32 to vector<2x243xf32>
    %164 = arith.mulf %163, %84 : vector<2x243xf32>
    %c31 = arith.constant 31 : index
    %165 = memref.load %arg0[%c31] : memref<698xf32, #tpu.memory_space<smem>>
    %166 = vector.broadcast %165 : f32 to vector<2x243xf32>
    %167 = arith.mulf %166, %85 : vector<2x243xf32>
    %168 = arith.addf %164, %167 : vector<2x243xf32>
    %c32 = arith.constant 32 : index
    %169 = memref.load %arg0[%c32] : memref<698xf32, #tpu.memory_space<smem>>
    %170 = vector.broadcast %169 : f32 to vector<2x243xf32>
    %171 = arith.mulf %170, %86 : vector<2x243xf32>
    %172 = arith.addf %168, %171 : vector<2x243xf32>
    %c33 = arith.constant 33 : index
    %173 = memref.load %arg0[%c33] : memref<698xf32, #tpu.memory_space<smem>>
    %174 = vector.broadcast %173 : f32 to vector<2x243xf32>
    %175 = arith.mulf %174, %87 : vector<2x243xf32>
    %176 = arith.addf %172, %175 : vector<2x243xf32>
    %c34 = arith.constant 34 : index
    %177 = memref.load %arg0[%c34] : memref<698xf32, #tpu.memory_space<smem>>
    %178 = vector.broadcast %177 : f32 to vector<2x243xf32>
    %179 = arith.mulf %178, %88 : vector<2x243xf32>
    %180 = arith.addf %176, %179 : vector<2x243xf32>
    %c35 = arith.constant 35 : index
    %181 = memref.load %arg0[%c35] : memref<698xf32, #tpu.memory_space<smem>>
    %182 = vector.broadcast %181 : f32 to vector<2x243xf32>
    %183 = arith.mulf %182, %89 : vector<2x243xf32>
    %184 = arith.addf %180, %183 : vector<2x243xf32>
    %c36 = arith.constant 36 : index
    %185 = memref.load %arg0[%c36] : memref<698xf32, #tpu.memory_space<smem>>
    %186 = vector.broadcast %185 : f32 to vector<2x243xf32>
    %187 = arith.mulf %186, %90 : vector<2x243xf32>
    %188 = arith.addf %184, %187 : vector<2x243xf32>
    %c37 = arith.constant 37 : index
    %189 = memref.load %arg0[%c37] : memref<698xf32, #tpu.memory_space<smem>>
    %190 = vector.broadcast %189 : f32 to vector<2x243xf32>
    %191 = arith.mulf %190, %91 : vector<2x243xf32>
    %192 = arith.addf %188, %191 : vector<2x243xf32>
    %c38 = arith.constant 38 : index
    %193 = memref.load %arg0[%c38] : memref<698xf32, #tpu.memory_space<smem>>
    %194 = vector.broadcast %193 : f32 to vector<2x243xf32>
    %195 = arith.mulf %194, %92 : vector<2x243xf32>
    %196 = arith.addf %192, %195 : vector<2x243xf32>
    %c39 = arith.constant 39 : index
    %197 = memref.load %arg0[%c39] : memref<698xf32, #tpu.memory_space<smem>>
    %198 = vector.broadcast %197 : f32 to vector<2x243xf32>
    %199 = arith.mulf %198, %93 : vector<2x243xf32>
    %200 = arith.addf %196, %199 : vector<2x243xf32>
    %c40 = arith.constant 40 : index
    %201 = memref.load %arg0[%c40] : memref<698xf32, #tpu.memory_space<smem>>
    %202 = vector.broadcast %201 : f32 to vector<2x243xf32>
    %203 = arith.mulf %202, %94 : vector<2x243xf32>
    %204 = arith.addf %200, %203 : vector<2x243xf32>
    %c41 = arith.constant 41 : index
    %205 = memref.load %arg0[%c41] : memref<698xf32, #tpu.memory_space<smem>>
    %206 = vector.broadcast %205 : f32 to vector<2x243xf32>
    %207 = arith.mulf %206, %95 : vector<2x243xf32>
    %208 = arith.addf %204, %207 : vector<2x243xf32>
    %cst_8 = arith.constant dense<0.000000e+00> : vector<2x122xf32>
    %209 = tpu.matmul %208, %102, %cst_8 {dimension_numbers = #tpu.dot_dimension_numbers<[1], [0], [0], [1], [0, 0, 1, 1], [], []>} : vector<2x243xf32>, vector<243x122xf32>, vector<2x122xf32> -> vector<2x122xf32>
    %c55 = arith.constant 55 : index
    %210 = memref.load %arg0[%c55] : memref<698xf32, #tpu.memory_space<smem>>
    %211 = vector.broadcast %210 : f32 to vector<2x122xf32>
    %212 = arith.addf %209, %211 : vector<2x122xf32>
    %cst_9 = arith.constant 0.000000e+00 : f32
    %213 = vector.broadcast %cst_9 : f32 to vector<2x122xf32>
    %214 = arith.maximumf %212, %213 : vector<2x122xf32>
    %c58 = arith.constant 58 : index
    %215 = memref.load %arg0[%c58] : memref<698xf32, #tpu.memory_space<smem>>
    %216 = vector.broadcast %215 : f32 to vector<2x122xf32>
    %217 = arith.mulf %214, %216 : vector<2x122xf32>
    %c61 = arith.constant 61 : index
    %218 = memref.load %arg0[%c61] : memref<698xf32, #tpu.memory_space<smem>>
    %219 = vector.broadcast %218 : f32 to vector<2x122xf32>
    %220 = arith.addf %217, %219 : vector<2x122xf32>
    %c42 = arith.constant 42 : index
    %221 = memref.load %arg0[%c42] : memref<698xf32, #tpu.memory_space<smem>>
    %222 = vector.broadcast %221 : f32 to vector<2x243xf32>
    %223 = arith.mulf %222, %84 : vector<2x243xf32>
    %c43 = arith.constant 43 : index
    %224 = memref.load %arg0[%c43] : memref<698xf32, #tpu.memory_space<smem>>
    %225 = vector.broadcast %224 : f32 to vector<2x243xf32>
    %226 = arith.mulf %225, %85 : vector<2x243xf32>
    %227 = arith.addf %223, %226 : vector<2x243xf32>
    %c44 = arith.constant 44 : index
    %228 = memref.load %arg0[%c44] : memref<698xf32, #tpu.memory_space<smem>>
    %229 = vector.broadcast %228 : f32 to vector<2x243xf32>
    %230 = arith.mulf %229, %86 : vector<2x243xf32>
    %231 = arith.addf %227, %230 : vector<2x243xf32>
    %c45 = arith.constant 45 : index
    %232 = memref.load %arg0[%c45] : memref<698xf32, #tpu.memory_space<smem>>
    %233 = vector.broadcast %232 : f32 to vector<2x243xf32>
    %234 = arith.mulf %233, %87 : vector<2x243xf32>
    %235 = arith.addf %231, %234 : vector<2x243xf32>
    %c46 = arith.constant 46 : index
    %236 = memref.load %arg0[%c46] : memref<698xf32, #tpu.memory_space<smem>>
    %237 = vector.broadcast %236 : f32 to vector<2x243xf32>
    %238 = arith.mulf %237, %88 : vector<2x243xf32>
    %239 = arith.addf %235, %238 : vector<2x243xf32>
    %c47 = arith.constant 47 : index
    %240 = memref.load %arg0[%c47] : memref<698xf32, #tpu.memory_space<smem>>
    %241 = vector.broadcast %240 : f32 to vector<2x243xf32>
    %242 = arith.mulf %241, %89 : vector<2x243xf32>
    %243 = arith.addf %239, %242 : vector<2x243xf32>
    %c48 = arith.constant 48 : index
    %244 = memref.load %arg0[%c48] : memref<698xf32, #tpu.memory_space<smem>>
    %245 = vector.broadcast %244 : f32 to vector<2x243xf32>
    %246 = arith.mulf %245, %90 : vector<2x243xf32>
    %247 = arith.addf %243, %246 : vector<2x243xf32>
    %c49 = arith.constant 49 : index
    %248 = memref.load %arg0[%c49] : memref<698xf32, #tpu.memory_space<smem>>
    %249 = vector.broadcast %248 : f32 to vector<2x243xf32>
    %250 = arith.mulf %249, %91 : vector<2x243xf32>
    %251 = arith.addf %247, %250 : vector<2x243xf32>
    %c50 = arith.constant 50 : index
    %252 = memref.load %arg0[%c50] : memref<698xf32, #tpu.memory_space<smem>>
    %253 = vector.broadcast %252 : f32 to vector<2x243xf32>
    %254 = arith.mulf %253, %92 : vector<2x243xf32>
    %255 = arith.addf %251, %254 : vector<2x243xf32>
    %c51 = arith.constant 51 : index
    %256 = memref.load %arg0[%c51] : memref<698xf32, #tpu.memory_space<smem>>
    %257 = vector.broadcast %256 : f32 to vector<2x243xf32>
    %258 = arith.mulf %257, %93 : vector<2x243xf32>
    %259 = arith.addf %255, %258 : vector<2x243xf32>
    %c52 = arith.constant 52 : index
    %260 = memref.load %arg0[%c52] : memref<698xf32, #tpu.memory_space<smem>>
    %261 = vector.broadcast %260 : f32 to vector<2x243xf32>
    %262 = arith.mulf %261, %94 : vector<2x243xf32>
    %263 = arith.addf %259, %262 : vector<2x243xf32>
    %c53 = arith.constant 53 : index
    %264 = memref.load %arg0[%c53] : memref<698xf32, #tpu.memory_space<smem>>
    %265 = vector.broadcast %264 : f32 to vector<2x243xf32>
    %266 = arith.mulf %265, %95 : vector<2x243xf32>
    %267 = arith.addf %263, %266 : vector<2x243xf32>
    %cst_10 = arith.constant dense<0.000000e+00> : vector<2x122xf32>
    %268 = tpu.matmul %267, %102, %cst_10 {dimension_numbers = #tpu.dot_dimension_numbers<[1], [0], [0], [1], [0, 0, 1, 1], [], []>} : vector<2x243xf32>, vector<243x122xf32>, vector<2x122xf32> -> vector<2x122xf32>
    %c56 = arith.constant 56 : index
    %269 = memref.load %arg0[%c56] : memref<698xf32, #tpu.memory_space<smem>>
    %270 = vector.broadcast %269 : f32 to vector<2x122xf32>
    %271 = arith.addf %268, %270 : vector<2x122xf32>
    %cst_11 = arith.constant 0.000000e+00 : f32
    %272 = vector.broadcast %cst_11 : f32 to vector<2x122xf32>
    %273 = arith.maximumf %271, %272 : vector<2x122xf32>
    %c59 = arith.constant 59 : index
    %274 = memref.load %arg0[%c59] : memref<698xf32, #tpu.memory_space<smem>>
    %275 = vector.broadcast %274 : f32 to vector<2x122xf32>
    %276 = arith.mulf %273, %275 : vector<2x122xf32>
    %c62 = arith.constant 62 : index
    %277 = memref.load %arg0[%c62] : memref<698xf32, #tpu.memory_space<smem>>
    %278 = vector.broadcast %277 : f32 to vector<2x122xf32>
    %279 = arith.addf %276, %278 : vector<2x122xf32>
    %280 = vector.extract_strided_slice %161 {offsets = [0, 0], sizes = [2, 119], strides = [1, 1]} : vector<2x122xf32> to vector<2x119xf32>
    %281 = vector.extract_strided_slice %161 {offsets = [0, 1], sizes = [2, 119], strides = [1, 1]} : vector<2x122xf32> to vector<2x119xf32>
    %282 = vector.extract_strided_slice %161 {offsets = [0, 2], sizes = [2, 119], strides = [1, 1]} : vector<2x122xf32> to vector<2x119xf32>
    %283 = vector.extract_strided_slice %161 {offsets = [0, 3], sizes = [2, 119], strides = [1, 1]} : vector<2x122xf32> to vector<2x119xf32>
    %284 = vector.extract_strided_slice %220 {offsets = [0, 0], sizes = [2, 119], strides = [1, 1]} : vector<2x122xf32> to vector<2x119xf32>
    %285 = vector.extract_strided_slice %220 {offsets = [0, 1], sizes = [2, 119], strides = [1, 1]} : vector<2x122xf32> to vector<2x119xf32>
    %286 = vector.extract_strided_slice %220 {offsets = [0, 2], sizes = [2, 119], strides = [1, 1]} : vector<2x122xf32> to vector<2x119xf32>
    %287 = vector.extract_strided_slice %220 {offsets = [0, 3], sizes = [2, 119], strides = [1, 1]} : vector<2x122xf32> to vector<2x119xf32>
    %288 = vector.extract_strided_slice %279 {offsets = [0, 0], sizes = [2, 119], strides = [1, 1]} : vector<2x122xf32> to vector<2x119xf32>
    %289 = vector.extract_strided_slice %279 {offsets = [0, 1], sizes = [2, 119], strides = [1, 1]} : vector<2x122xf32> to vector<2x119xf32>
    %290 = vector.extract_strided_slice %279 {offsets = [0, 2], sizes = [2, 119], strides = [1, 1]} : vector<2x122xf32> to vector<2x119xf32>
    %291 = vector.extract_strided_slice %279 {offsets = [0, 3], sizes = [2, 119], strides = [1, 1]} : vector<2x122xf32> to vector<2x119xf32>
    %292 = tpu.iota {dimensions = array<i32: 0>} : vector<119x60xi32>
    %293 = tpu.iota {dimensions = array<i32: 1>} : vector<119x60xi32>
    %c2_i32_12 = arith.constant 2 : i32
    %294 = vector.broadcast %c2_i32_12 : i32 to vector<119x60xi32>
    %295 = arith.muli %294, %293 : vector<119x60xi32>
    %296 = arith.cmpi eq, %292, %295 : vector<119x60xi32>
    %297 = arith.extui %296 : vector<119x60xi1> to vector<119x60xi32>
    %298 = arith.sitofp %297 : vector<119x60xi32> to vector<119x60xf32>
    %c63 = arith.constant 63 : index
    %299 = memref.load %arg0[%c63] : memref<698xf32, #tpu.memory_space<smem>>
    %300 = vector.broadcast %299 : f32 to vector<2x119xf32>
    %301 = arith.mulf %300, %280 : vector<2x119xf32>
    %c64 = arith.constant 64 : index
    %302 = memref.load %arg0[%c64] : memref<698xf32, #tpu.memory_space<smem>>
    %303 = vector.broadcast %302 : f32 to vector<2x119xf32>
    %304 = arith.mulf %303, %281 : vector<2x119xf32>
    %305 = arith.addf %301, %304 : vector<2x119xf32>
    %c65 = arith.constant 65 : index
    %306 = memref.load %arg0[%c65] : memref<698xf32, #tpu.memory_space<smem>>
    %307 = vector.broadcast %306 : f32 to vector<2x119xf32>
    %308 = arith.mulf %307, %282 : vector<2x119xf32>
    %309 = arith.addf %305, %308 : vector<2x119xf32>
    %c66 = arith.constant 66 : index
    %310 = memref.load %arg0[%c66] : memref<698xf32, #tpu.memory_space<smem>>
    %311 = vector.broadcast %310 : f32 to vector<2x119xf32>
    %312 = arith.mulf %311, %283 : vector<2x119xf32>
    %313 = arith.addf %309, %312 : vector<2x119xf32>
    %c67 = arith.constant 67 : index
    %314 = memref.load %arg0[%c67] : memref<698xf32, #tpu.memory_space<smem>>
    %315 = vector.broadcast %314 : f32 to vector<2x119xf32>
    %316 = arith.mulf %315, %284 : vector<2x119xf32>
    %317 = arith.addf %313, %316 : vector<2x119xf32>
    %c68 = arith.constant 68 : index
    %318 = memref.load %arg0[%c68] : memref<698xf32, #tpu.memory_space<smem>>
    %319 = vector.broadcast %318 : f32 to vector<2x119xf32>
    %320 = arith.mulf %319, %285 : vector<2x119xf32>
    %321 = arith.addf %317, %320 : vector<2x119xf32>
    %c69 = arith.constant 69 : index
    %322 = memref.load %arg0[%c69] : memref<698xf32, #tpu.memory_space<smem>>
    %323 = vector.broadcast %322 : f32 to vector<2x119xf32>
    %324 = arith.mulf %323, %286 : vector<2x119xf32>
    %325 = arith.addf %321, %324 : vector<2x119xf32>
    %c70 = arith.constant 70 : index
    %326 = memref.load %arg0[%c70] : memref<698xf32, #tpu.memory_space<smem>>
    %327 = vector.broadcast %326 : f32 to vector<2x119xf32>
    %328 = arith.mulf %327, %287 : vector<2x119xf32>
    %329 = arith.addf %325, %328 : vector<2x119xf32>
    %c71 = arith.constant 71 : index
    %330 = memref.load %arg0[%c71] : memref<698xf32, #tpu.memory_space<smem>>
    %331 = vector.broadcast %330 : f32 to vector<2x119xf32>
    %332 = arith.mulf %331, %288 : vector<2x119xf32>
    %333 = arith.addf %329, %332 : vector<2x119xf32>
    %c72 = arith.constant 72 : index
    %334 = memref.load %arg0[%c72] : memref<698xf32, #tpu.memory_space<smem>>
    %335 = vector.broadcast %334 : f32 to vector<2x119xf32>
    %336 = arith.mulf %335, %289 : vector<2x119xf32>
    %337 = arith.addf %333, %336 : vector<2x119xf32>
    %c73 = arith.constant 73 : index
    %338 = memref.load %arg0[%c73] : memref<698xf32, #tpu.memory_space<smem>>
    %339 = vector.broadcast %338 : f32 to vector<2x119xf32>
    %340 = arith.mulf %339, %290 : vector<2x119xf32>
    %341 = arith.addf %337, %340 : vector<2x119xf32>
    %c74 = arith.constant 74 : index
    %342 = memref.load %arg0[%c74] : memref<698xf32, #tpu.memory_space<smem>>
    %343 = vector.broadcast %342 : f32 to vector<2x119xf32>
    %344 = arith.mulf %343, %291 : vector<2x119xf32>
    %345 = arith.addf %341, %344 : vector<2x119xf32>
    %cst_13 = arith.constant dense<0.000000e+00> : vector<2x60xf32>
    %346 = tpu.matmul %345, %298, %cst_13 {dimension_numbers = #tpu.dot_dimension_numbers<[1], [0], [0], [1], [0, 0, 1, 1], [], []>} : vector<2x119xf32>, vector<119x60xf32>, vector<2x60xf32> -> vector<2x60xf32>
    %c123 = arith.constant 123 : index
    %347 = memref.load %arg0[%c123] : memref<698xf32, #tpu.memory_space<smem>>
    %348 = vector.broadcast %347 : f32 to vector<2x60xf32>
    %349 = arith.addf %346, %348 : vector<2x60xf32>
    %cst_14 = arith.constant 0.000000e+00 : f32
    %350 = vector.broadcast %cst_14 : f32 to vector<2x60xf32>
    %351 = arith.maximumf %349, %350 : vector<2x60xf32>
    %c128 = arith.constant 128 : index
    %352 = memref.load %arg0[%c128] : memref<698xf32, #tpu.memory_space<smem>>
    %353 = vector.broadcast %352 : f32 to vector<2x60xf32>
    %354 = arith.mulf %351, %353 : vector<2x60xf32>
    %c133 = arith.constant 133 : index
    %355 = memref.load %arg0[%c133] : memref<698xf32, #tpu.memory_space<smem>>
    %356 = vector.broadcast %355 : f32 to vector<2x60xf32>
    %357 = arith.addf %354, %356 : vector<2x60xf32>
    %c75 = arith.constant 75 : index
    %358 = memref.load %arg0[%c75] : memref<698xf32, #tpu.memory_space<smem>>
    %359 = vector.broadcast %358 : f32 to vector<2x119xf32>
    %360 = arith.mulf %359, %280 : vector<2x119xf32>
    %c76 = arith.constant 76 : index
    %361 = memref.load %arg0[%c76] : memref<698xf32, #tpu.memory_space<smem>>
    %362 = vector.broadcast %361 : f32 to vector<2x119xf32>
    %363 = arith.mulf %362, %281 : vector<2x119xf32>
    %364 = arith.addf %360, %363 : vector<2x119xf32>
    %c77 = arith.constant 77 : index
    %365 = memref.load %arg0[%c77] : memref<698xf32, #tpu.memory_space<smem>>
    %366 = vector.broadcast %365 : f32 to vector<2x119xf32>
    %367 = arith.mulf %366, %282 : vector<2x119xf32>
    %368 = arith.addf %364, %367 : vector<2x119xf32>
    %c78 = arith.constant 78 : index
    %369 = memref.load %arg0[%c78] : memref<698xf32, #tpu.memory_space<smem>>
    %370 = vector.broadcast %369 : f32 to vector<2x119xf32>
    %371 = arith.mulf %370, %283 : vector<2x119xf32>
    %372 = arith.addf %368, %371 : vector<2x119xf32>
    %c79 = arith.constant 79 : index
    %373 = memref.load %arg0[%c79] : memref<698xf32, #tpu.memory_space<smem>>
    %374 = vector.broadcast %373 : f32 to vector<2x119xf32>
    %375 = arith.mulf %374, %284 : vector<2x119xf32>
    %376 = arith.addf %372, %375 : vector<2x119xf32>
    %c80 = arith.constant 80 : index
    %377 = memref.load %arg0[%c80] : memref<698xf32, #tpu.memory_space<smem>>
    %378 = vector.broadcast %377 : f32 to vector<2x119xf32>
    %379 = arith.mulf %378, %285 : vector<2x119xf32>
    %380 = arith.addf %376, %379 : vector<2x119xf32>
    %c81 = arith.constant 81 : index
    %381 = memref.load %arg0[%c81] : memref<698xf32, #tpu.memory_space<smem>>
    %382 = vector.broadcast %381 : f32 to vector<2x119xf32>
    %383 = arith.mulf %382, %286 : vector<2x119xf32>
    %384 = arith.addf %380, %383 : vector<2x119xf32>
    %c82 = arith.constant 82 : index
    %385 = memref.load %arg0[%c82] : memref<698xf32, #tpu.memory_space<smem>>
    %386 = vector.broadcast %385 : f32 to vector<2x119xf32>
    %387 = arith.mulf %386, %287 : vector<2x119xf32>
    %388 = arith.addf %384, %387 : vector<2x119xf32>
    %c83 = arith.constant 83 : index
    %389 = memref.load %arg0[%c83] : memref<698xf32, #tpu.memory_space<smem>>
    %390 = vector.broadcast %389 : f32 to vector<2x119xf32>
    %391 = arith.mulf %390, %288 : vector<2x119xf32>
    %392 = arith.addf %388, %391 : vector<2x119xf32>
    %c84 = arith.constant 84 : index
    %393 = memref.load %arg0[%c84] : memref<698xf32, #tpu.memory_space<smem>>
    %394 = vector.broadcast %393 : f32 to vector<2x119xf32>
    %395 = arith.mulf %394, %289 : vector<2x119xf32>
    %396 = arith.addf %392, %395 : vector<2x119xf32>
    %c85 = arith.constant 85 : index
    %397 = memref.load %arg0[%c85] : memref<698xf32, #tpu.memory_space<smem>>
    %398 = vector.broadcast %397 : f32 to vector<2x119xf32>
    %399 = arith.mulf %398, %290 : vector<2x119xf32>
    %400 = arith.addf %396, %399 : vector<2x119xf32>
    %c86 = arith.constant 86 : index
    %401 = memref.load %arg0[%c86] : memref<698xf32, #tpu.memory_space<smem>>
    %402 = vector.broadcast %401 : f32 to vector<2x119xf32>
    %403 = arith.mulf %402, %291 : vector<2x119xf32>
    %404 = arith.addf %400, %403 : vector<2x119xf32>
    %cst_15 = arith.constant dense<0.000000e+00> : vector<2x60xf32>
    %405 = tpu.matmul %404, %298, %cst_15 {dimension_numbers = #tpu.dot_dimension_numbers<[1], [0], [0], [1], [0, 0, 1, 1], [], []>} : vector<2x119xf32>, vector<119x60xf32>, vector<2x60xf32> -> vector<2x60xf32>
    %c124 = arith.constant 124 : index
    %406 = memref.load %arg0[%c124] : memref<698xf32, #tpu.memory_space<smem>>
    %407 = vector.broadcast %406 : f32 to vector<2x60xf32>
    %408 = arith.addf %405, %407 : vector<2x60xf32>
    %cst_16 = arith.constant 0.000000e+00 : f32
    %409 = vector.broadcast %cst_16 : f32 to vector<2x60xf32>
    %410 = arith.maximumf %408, %409 : vector<2x60xf32>
    %c129 = arith.constant 129 : index
    %411 = memref.load %arg0[%c129] : memref<698xf32, #tpu.memory_space<smem>>
    %412 = vector.broadcast %411 : f32 to vector<2x60xf32>
    %413 = arith.mulf %410, %412 : vector<2x60xf32>
    %c134 = arith.constant 134 : index
    %414 = memref.load %arg0[%c134] : memref<698xf32, #tpu.memory_space<smem>>
    %415 = vector.broadcast %414 : f32 to vector<2x60xf32>
    %416 = arith.addf %413, %415 : vector<2x60xf32>
    %c87 = arith.constant 87 : index
    %417 = memref.load %arg0[%c87] : memref<698xf32, #tpu.memory_space<smem>>
    %418 = vector.broadcast %417 : f32 to vector<2x119xf32>
    %419 = arith.mulf %418, %280 : vector<2x119xf32>
    %c88 = arith.constant 88 : index
    %420 = memref.load %arg0[%c88] : memref<698xf32, #tpu.memory_space<smem>>
    %421 = vector.broadcast %420 : f32 to vector<2x119xf32>
    %422 = arith.mulf %421, %281 : vector<2x119xf32>
    %423 = arith.addf %419, %422 : vector<2x119xf32>
    %c89 = arith.constant 89 : index
    %424 = memref.load %arg0[%c89] : memref<698xf32, #tpu.memory_space<smem>>
    %425 = vector.broadcast %424 : f32 to vector<2x119xf32>
    %426 = arith.mulf %425, %282 : vector<2x119xf32>
    %427 = arith.addf %423, %426 : vector<2x119xf32>
    %c90 = arith.constant 90 : index
    %428 = memref.load %arg0[%c90] : memref<698xf32, #tpu.memory_space<smem>>
    %429 = vector.broadcast %428 : f32 to vector<2x119xf32>
    %430 = arith.mulf %429, %283 : vector<2x119xf32>
    %431 = arith.addf %427, %430 : vector<2x119xf32>
    %c91 = arith.constant 91 : index
    %432 = memref.load %arg0[%c91] : memref<698xf32, #tpu.memory_space<smem>>
    %433 = vector.broadcast %432 : f32 to vector<2x119xf32>
    %434 = arith.mulf %433, %284 : vector<2x119xf32>
    %435 = arith.addf %431, %434 : vector<2x119xf32>
    %c92 = arith.constant 92 : index
    %436 = memref.load %arg0[%c92] : memref<698xf32, #tpu.memory_space<smem>>
    %437 = vector.broadcast %436 : f32 to vector<2x119xf32>
    %438 = arith.mulf %437, %285 : vector<2x119xf32>
    %439 = arith.addf %435, %438 : vector<2x119xf32>
    %c93 = arith.constant 93 : index
    %440 = memref.load %arg0[%c93] : memref<698xf32, #tpu.memory_space<smem>>
    %441 = vector.broadcast %440 : f32 to vector<2x119xf32>
    %442 = arith.mulf %441, %286 : vector<2x119xf32>
    %443 = arith.addf %439, %442 : vector<2x119xf32>
    %c94 = arith.constant 94 : index
    %444 = memref.load %arg0[%c94] : memref<698xf32, #tpu.memory_space<smem>>
    %445 = vector.broadcast %444 : f32 to vector<2x119xf32>
    %446 = arith.mulf %445, %287 : vector<2x119xf32>
    %447 = arith.addf %443, %446 : vector<2x119xf32>
    %c95 = arith.constant 95 : index
    %448 = memref.load %arg0[%c95] : memref<698xf32, #tpu.memory_space<smem>>
    %449 = vector.broadcast %448 : f32 to vector<2x119xf32>
    %450 = arith.mulf %449, %288 : vector<2x119xf32>
    %451 = arith.addf %447, %450 : vector<2x119xf32>
    %c96 = arith.constant 96 : index
    %452 = memref.load %arg0[%c96] : memref<698xf32, #tpu.memory_space<smem>>
    %453 = vector.broadcast %452 : f32 to vector<2x119xf32>
    %454 = arith.mulf %453, %289 : vector<2x119xf32>
    %455 = arith.addf %451, %454 : vector<2x119xf32>
    %c97 = arith.constant 97 : index
    %456 = memref.load %arg0[%c97] : memref<698xf32, #tpu.memory_space<smem>>
    %457 = vector.broadcast %456 : f32 to vector<2x119xf32>
    %458 = arith.mulf %457, %290 : vector<2x119xf32>
    %459 = arith.addf %455, %458 : vector<2x119xf32>
    %c98 = arith.constant 98 : index
    %460 = memref.load %arg0[%c98] : memref<698xf32, #tpu.memory_space<smem>>
    %461 = vector.broadcast %460 : f32 to vector<2x119xf32>
    %462 = arith.mulf %461, %291 : vector<2x119xf32>
    %463 = arith.addf %459, %462 : vector<2x119xf32>
    %cst_17 = arith.constant dense<0.000000e+00> : vector<2x60xf32>
    %464 = tpu.matmul %463, %298, %cst_17 {dimension_numbers = #tpu.dot_dimension_numbers<[1], [0], [0], [1], [0, 0, 1, 1], [], []>} : vector<2x119xf32>, vector<119x60xf32>, vector<2x60xf32> -> vector<2x60xf32>
    %c125 = arith.constant 125 : index
    %465 = memref.load %arg0[%c125] : memref<698xf32, #tpu.memory_space<smem>>
    %466 = vector.broadcast %465 : f32 to vector<2x60xf32>
    %467 = arith.addf %464, %466 : vector<2x60xf32>
    %cst_18 = arith.constant 0.000000e+00 : f32
    %468 = vector.broadcast %cst_18 : f32 to vector<2x60xf32>
    %469 = arith.maximumf %467, %468 : vector<2x60xf32>
    %c130 = arith.constant 130 : index
    %470 = memref.load %arg0[%c130] : memref<698xf32, #tpu.memory_space<smem>>
    %471 = vector.broadcast %470 : f32 to vector<2x60xf32>
    %472 = arith.mulf %469, %471 : vector<2x60xf32>
    %c135 = arith.constant 135 : index
    %473 = memref.load %arg0[%c135] : memref<698xf32, #tpu.memory_space<smem>>
    %474 = vector.broadcast %473 : f32 to vector<2x60xf32>
    %475 = arith.addf %472, %474 : vector<2x60xf32>
    %c99 = arith.constant 99 : index
    %476 = memref.load %arg0[%c99] : memref<698xf32, #tpu.memory_space<smem>>
    %477 = vector.broadcast %476 : f32 to vector<2x119xf32>
    %478 = arith.mulf %477, %280 : vector<2x119xf32>
    %c100 = arith.constant 100 : index
    %479 = memref.load %arg0[%c100] : memref<698xf32, #tpu.memory_space<smem>>
    %480 = vector.broadcast %479 : f32 to vector<2x119xf32>
    %481 = arith.mulf %480, %281 : vector<2x119xf32>
    %482 = arith.addf %478, %481 : vector<2x119xf32>
    %c101 = arith.constant 101 : index
    %483 = memref.load %arg0[%c101] : memref<698xf32, #tpu.memory_space<smem>>
    %484 = vector.broadcast %483 : f32 to vector<2x119xf32>
    %485 = arith.mulf %484, %282 : vector<2x119xf32>
    %486 = arith.addf %482, %485 : vector<2x119xf32>
    %c102 = arith.constant 102 : index
    %487 = memref.load %arg0[%c102] : memref<698xf32, #tpu.memory_space<smem>>
    %488 = vector.broadcast %487 : f32 to vector<2x119xf32>
    %489 = arith.mulf %488, %283 : vector<2x119xf32>
    %490 = arith.addf %486, %489 : vector<2x119xf32>
    %c103 = arith.constant 103 : index
    %491 = memref.load %arg0[%c103] : memref<698xf32, #tpu.memory_space<smem>>
    %492 = vector.broadcast %491 : f32 to vector<2x119xf32>
    %493 = arith.mulf %492, %284 : vector<2x119xf32>
    %494 = arith.addf %490, %493 : vector<2x119xf32>
    %c104 = arith.constant 104 : index
    %495 = memref.load %arg0[%c104] : memref<698xf32, #tpu.memory_space<smem>>
    %496 = vector.broadcast %495 : f32 to vector<2x119xf32>
    %497 = arith.mulf %496, %285 : vector<2x119xf32>
    %498 = arith.addf %494, %497 : vector<2x119xf32>
    %c105 = arith.constant 105 : index
    %499 = memref.load %arg0[%c105] : memref<698xf32, #tpu.memory_space<smem>>
    %500 = vector.broadcast %499 : f32 to vector<2x119xf32>
    %501 = arith.mulf %500, %286 : vector<2x119xf32>
    %502 = arith.addf %498, %501 : vector<2x119xf32>
    %c106 = arith.constant 106 : index
    %503 = memref.load %arg0[%c106] : memref<698xf32, #tpu.memory_space<smem>>
    %504 = vector.broadcast %503 : f32 to vector<2x119xf32>
    %505 = arith.mulf %504, %287 : vector<2x119xf32>
    %506 = arith.addf %502, %505 : vector<2x119xf32>
    %c107 = arith.constant 107 : index
    %507 = memref.load %arg0[%c107] : memref<698xf32, #tpu.memory_space<smem>>
    %508 = vector.broadcast %507 : f32 to vector<2x119xf32>
    %509 = arith.mulf %508, %288 : vector<2x119xf32>
    %510 = arith.addf %506, %509 : vector<2x119xf32>
    %c108 = arith.constant 108 : index
    %511 = memref.load %arg0[%c108] : memref<698xf32, #tpu.memory_space<smem>>
    %512 = vector.broadcast %511 : f32 to vector<2x119xf32>
    %513 = arith.mulf %512, %289 : vector<2x119xf32>
    %514 = arith.addf %510, %513 : vector<2x119xf32>
    %c109 = arith.constant 109 : index
    %515 = memref.load %arg0[%c109] : memref<698xf32, #tpu.memory_space<smem>>
    %516 = vector.broadcast %515 : f32 to vector<2x119xf32>
    %517 = arith.mulf %516, %290 : vector<2x119xf32>
    %518 = arith.addf %514, %517 : vector<2x119xf32>
    %c110 = arith.constant 110 : index
    %519 = memref.load %arg0[%c110] : memref<698xf32, #tpu.memory_space<smem>>
    %520 = vector.broadcast %519 : f32 to vector<2x119xf32>
    %521 = arith.mulf %520, %291 : vector<2x119xf32>
    %522 = arith.addf %518, %521 : vector<2x119xf32>
    %cst_19 = arith.constant dense<0.000000e+00> : vector<2x60xf32>
    %523 = tpu.matmul %522, %298, %cst_19 {dimension_numbers = #tpu.dot_dimension_numbers<[1], [0], [0], [1], [0, 0, 1, 1], [], []>} : vector<2x119xf32>, vector<119x60xf32>, vector<2x60xf32> -> vector<2x60xf32>
    %c126 = arith.constant 126 : index
    %524 = memref.load %arg0[%c126] : memref<698xf32, #tpu.memory_space<smem>>
    %525 = vector.broadcast %524 : f32 to vector<2x60xf32>
    %526 = arith.addf %523, %525 : vector<2x60xf32>
    %cst_20 = arith.constant 0.000000e+00 : f32
    %527 = vector.broadcast %cst_20 : f32 to vector<2x60xf32>
    %528 = arith.maximumf %526, %527 : vector<2x60xf32>
    %c131 = arith.constant 131 : index
    %529 = memref.load %arg0[%c131] : memref<698xf32, #tpu.memory_space<smem>>
    %530 = vector.broadcast %529 : f32 to vector<2x60xf32>
    %531 = arith.mulf %528, %530 : vector<2x60xf32>
    %c136 = arith.constant 136 : index
    %532 = memref.load %arg0[%c136] : memref<698xf32, #tpu.memory_space<smem>>
    %533 = vector.broadcast %532 : f32 to vector<2x60xf32>
    %534 = arith.addf %531, %533 : vector<2x60xf32>
    %c111 = arith.constant 111 : index
    %535 = memref.load %arg0[%c111] : memref<698xf32, #tpu.memory_space<smem>>
    %536 = vector.broadcast %535 : f32 to vector<2x119xf32>
    %537 = arith.mulf %536, %280 : vector<2x119xf32>
    %c112 = arith.constant 112 : index
    %538 = memref.load %arg0[%c112] : memref<698xf32, #tpu.memory_space<smem>>
    %539 = vector.broadcast %538 : f32 to vector<2x119xf32>
    %540 = arith.mulf %539, %281 : vector<2x119xf32>
    %541 = arith.addf %537, %540 : vector<2x119xf32>
    %c113 = arith.constant 113 : index
    %542 = memref.load %arg0[%c113] : memref<698xf32, #tpu.memory_space<smem>>
    %543 = vector.broadcast %542 : f32 to vector<2x119xf32>
    %544 = arith.mulf %543, %282 : vector<2x119xf32>
    %545 = arith.addf %541, %544 : vector<2x119xf32>
    %c114 = arith.constant 114 : index
    %546 = memref.load %arg0[%c114] : memref<698xf32, #tpu.memory_space<smem>>
    %547 = vector.broadcast %546 : f32 to vector<2x119xf32>
    %548 = arith.mulf %547, %283 : vector<2x119xf32>
    %549 = arith.addf %545, %548 : vector<2x119xf32>
    %c115 = arith.constant 115 : index
    %550 = memref.load %arg0[%c115] : memref<698xf32, #tpu.memory_space<smem>>
    %551 = vector.broadcast %550 : f32 to vector<2x119xf32>
    %552 = arith.mulf %551, %284 : vector<2x119xf32>
    %553 = arith.addf %549, %552 : vector<2x119xf32>
    %c116 = arith.constant 116 : index
    %554 = memref.load %arg0[%c116] : memref<698xf32, #tpu.memory_space<smem>>
    %555 = vector.broadcast %554 : f32 to vector<2x119xf32>
    %556 = arith.mulf %555, %285 : vector<2x119xf32>
    %557 = arith.addf %553, %556 : vector<2x119xf32>
    %c117 = arith.constant 117 : index
    %558 = memref.load %arg0[%c117] : memref<698xf32, #tpu.memory_space<smem>>
    %559 = vector.broadcast %558 : f32 to vector<2x119xf32>
    %560 = arith.mulf %559, %286 : vector<2x119xf32>
    %561 = arith.addf %557, %560 : vector<2x119xf32>
    %c118 = arith.constant 118 : index
    %562 = memref.load %arg0[%c118] : memref<698xf32, #tpu.memory_space<smem>>
    %563 = vector.broadcast %562 : f32 to vector<2x119xf32>
    %564 = arith.mulf %563, %287 : vector<2x119xf32>
    %565 = arith.addf %561, %564 : vector<2x119xf32>
    %c119 = arith.constant 119 : index
    %566 = memref.load %arg0[%c119] : memref<698xf32, #tpu.memory_space<smem>>
    %567 = vector.broadcast %566 : f32 to vector<2x119xf32>
    %568 = arith.mulf %567, %288 : vector<2x119xf32>
    %569 = arith.addf %565, %568 : vector<2x119xf32>
    %c120 = arith.constant 120 : index
    %570 = memref.load %arg0[%c120] : memref<698xf32, #tpu.memory_space<smem>>
    %571 = vector.broadcast %570 : f32 to vector<2x119xf32>
    %572 = arith.mulf %571, %289 : vector<2x119xf32>
    %573 = arith.addf %569, %572 : vector<2x119xf32>
    %c121 = arith.constant 121 : index
    %574 = memref.load %arg0[%c121] : memref<698xf32, #tpu.memory_space<smem>>
    %575 = vector.broadcast %574 : f32 to vector<2x119xf32>
    %576 = arith.mulf %575, %290 : vector<2x119xf32>
    %577 = arith.addf %573, %576 : vector<2x119xf32>
    %c122 = arith.constant 122 : index
    %578 = memref.load %arg0[%c122] : memref<698xf32, #tpu.memory_space<smem>>
    %579 = vector.broadcast %578 : f32 to vector<2x119xf32>
    %580 = arith.mulf %579, %291 : vector<2x119xf32>
    %581 = arith.addf %577, %580 : vector<2x119xf32>
    %cst_21 = arith.constant dense<0.000000e+00> : vector<2x60xf32>
    %582 = tpu.matmul %581, %298, %cst_21 {dimension_numbers = #tpu.dot_dimension_numbers<[1], [0], [0], [1], [0, 0, 1, 1], [], []>} : vector<2x119xf32>, vector<119x60xf32>, vector<2x60xf32> -> vector<2x60xf32>
    %c127 = arith.constant 127 : index
    %583 = memref.load %arg0[%c127] : memref<698xf32, #tpu.memory_space<smem>>
    %584 = vector.broadcast %583 : f32 to vector<2x60xf32>
    %585 = arith.addf %582, %584 : vector<2x60xf32>
    %cst_22 = arith.constant 0.000000e+00 : f32
    %586 = vector.broadcast %cst_22 : f32 to vector<2x60xf32>
    %587 = arith.maximumf %585, %586 : vector<2x60xf32>
    %c132 = arith.constant 132 : index
    %588 = memref.load %arg0[%c132] : memref<698xf32, #tpu.memory_space<smem>>
    %589 = vector.broadcast %588 : f32 to vector<2x60xf32>
    %590 = arith.mulf %587, %589 : vector<2x60xf32>
    %c137 = arith.constant 137 : index
    %591 = memref.load %arg0[%c137] : memref<698xf32, #tpu.memory_space<smem>>
    %592 = vector.broadcast %591 : f32 to vector<2x60xf32>
    %593 = arith.addf %590, %592 : vector<2x60xf32>
    %594 = vector.extract_strided_slice %357 {offsets = [0, 0], sizes = [2, 57], strides = [1, 1]} : vector<2x60xf32> to vector<2x57xf32>
    %595 = vector.extract_strided_slice %357 {offsets = [0, 1], sizes = [2, 57], strides = [1, 1]} : vector<2x60xf32> to vector<2x57xf32>
    %596 = vector.extract_strided_slice %357 {offsets = [0, 2], sizes = [2, 57], strides = [1, 1]} : vector<2x60xf32> to vector<2x57xf32>
    %597 = vector.extract_strided_slice %357 {offsets = [0, 3], sizes = [2, 57], strides = [1, 1]} : vector<2x60xf32> to vector<2x57xf32>
    %598 = vector.extract_strided_slice %416 {offsets = [0, 0], sizes = [2, 57], strides = [1, 1]} : vector<2x60xf32> to vector<2x57xf32>
    %599 = vector.extract_strided_slice %416 {offsets = [0, 1], sizes = [2, 57], strides = [1, 1]} : vector<2x60xf32> to vector<2x57xf32>
    %600 = vector.extract_strided_slice %416 {offsets = [0, 2], sizes = [2, 57], strides = [1, 1]} : vector<2x60xf32> to vector<2x57xf32>
    %601 = vector.extract_strided_slice %416 {offsets = [0, 3], sizes = [2, 57], strides = [1, 1]} : vector<2x60xf32> to vector<2x57xf32>
    %602 = vector.extract_strided_slice %475 {offsets = [0, 0], sizes = [2, 57], strides = [1, 1]} : vector<2x60xf32> to vector<2x57xf32>
    %603 = vector.extract_strided_slice %475 {offsets = [0, 1], sizes = [2, 57], strides = [1, 1]} : vector<2x60xf32> to vector<2x57xf32>
    %604 = vector.extract_strided_slice %475 {offsets = [0, 2], sizes = [2, 57], strides = [1, 1]} : vector<2x60xf32> to vector<2x57xf32>
    %605 = vector.extract_strided_slice %475 {offsets = [0, 3], sizes = [2, 57], strides = [1, 1]} : vector<2x60xf32> to vector<2x57xf32>
    %606 = vector.extract_strided_slice %534 {offsets = [0, 0], sizes = [2, 57], strides = [1, 1]} : vector<2x60xf32> to vector<2x57xf32>
    %607 = vector.extract_strided_slice %534 {offsets = [0, 1], sizes = [2, 57], strides = [1, 1]} : vector<2x60xf32> to vector<2x57xf32>
    %608 = vector.extract_strided_slice %534 {offsets = [0, 2], sizes = [2, 57], strides = [1, 1]} : vector<2x60xf32> to vector<2x57xf32>
    %609 = vector.extract_strided_slice %534 {offsets = [0, 3], sizes = [2, 57], strides = [1, 1]} : vector<2x60xf32> to vector<2x57xf32>
    %610 = vector.extract_strided_slice %593 {offsets = [0, 0], sizes = [2, 57], strides = [1, 1]} : vector<2x60xf32> to vector<2x57xf32>
    %611 = vector.extract_strided_slice %593 {offsets = [0, 1], sizes = [2, 57], strides = [1, 1]} : vector<2x60xf32> to vector<2x57xf32>
    %612 = vector.extract_strided_slice %593 {offsets = [0, 2], sizes = [2, 57], strides = [1, 1]} : vector<2x60xf32> to vector<2x57xf32>
    %613 = vector.extract_strided_slice %593 {offsets = [0, 3], sizes = [2, 57], strides = [1, 1]} : vector<2x60xf32> to vector<2x57xf32>
    %614 = tpu.iota {dimensions = array<i32: 0>} : vector<57x29xi32>
    %615 = tpu.iota {dimensions = array<i32: 1>} : vector<57x29xi32>
    %c2_i32_23 = arith.constant 2 : i32
    %616 = vector.broadcast %c2_i32_23 : i32 to vector<57x29xi32>
    %617 = arith.muli %616, %615 : vector<57x29xi32>
    %618 = arith.cmpi eq, %614, %617 : vector<57x29xi32>
    %619 = arith.extui %618 : vector<57x29xi1> to vector<57x29xi32>
    %620 = arith.sitofp %619 : vector<57x29xi32> to vector<57x29xf32>
    %c138 = arith.constant 138 : index
    %621 = memref.load %arg0[%c138] : memref<698xf32, #tpu.memory_space<smem>>
    %622 = vector.broadcast %621 : f32 to vector<2x57xf32>
    %623 = arith.mulf %622, %594 : vector<2x57xf32>
    %c139 = arith.constant 139 : index
    %624 = memref.load %arg0[%c139] : memref<698xf32, #tpu.memory_space<smem>>
    %625 = vector.broadcast %624 : f32 to vector<2x57xf32>
    %626 = arith.mulf %625, %595 : vector<2x57xf32>
    %627 = arith.addf %623, %626 : vector<2x57xf32>
    %c140 = arith.constant 140 : index
    %628 = memref.load %arg0[%c140] : memref<698xf32, #tpu.memory_space<smem>>
    %629 = vector.broadcast %628 : f32 to vector<2x57xf32>
    %630 = arith.mulf %629, %596 : vector<2x57xf32>
    %631 = arith.addf %627, %630 : vector<2x57xf32>
    %c141 = arith.constant 141 : index
    %632 = memref.load %arg0[%c141] : memref<698xf32, #tpu.memory_space<smem>>
    %633 = vector.broadcast %632 : f32 to vector<2x57xf32>
    %634 = arith.mulf %633, %597 : vector<2x57xf32>
    %635 = arith.addf %631, %634 : vector<2x57xf32>
    %c142 = arith.constant 142 : index
    %636 = memref.load %arg0[%c142] : memref<698xf32, #tpu.memory_space<smem>>
    %637 = vector.broadcast %636 : f32 to vector<2x57xf32>
    %638 = arith.mulf %637, %598 : vector<2x57xf32>
    %639 = arith.addf %635, %638 : vector<2x57xf32>
    %c143 = arith.constant 143 : index
    %640 = memref.load %arg0[%c143] : memref<698xf32, #tpu.memory_space<smem>>
    %641 = vector.broadcast %640 : f32 to vector<2x57xf32>
    %642 = arith.mulf %641, %599 : vector<2x57xf32>
    %643 = arith.addf %639, %642 : vector<2x57xf32>
    %c144 = arith.constant 144 : index
    %644 = memref.load %arg0[%c144] : memref<698xf32, #tpu.memory_space<smem>>
    %645 = vector.broadcast %644 : f32 to vector<2x57xf32>
    %646 = arith.mulf %645, %600 : vector<2x57xf32>
    %647 = arith.addf %643, %646 : vector<2x57xf32>
    %c145 = arith.constant 145 : index
    %648 = memref.load %arg0[%c145] : memref<698xf32, #tpu.memory_space<smem>>
    %649 = vector.broadcast %648 : f32 to vector<2x57xf32>
    %650 = arith.mulf %649, %601 : vector<2x57xf32>
    %651 = arith.addf %647, %650 : vector<2x57xf32>
    %c146 = arith.constant 146 : index
    %652 = memref.load %arg0[%c146] : memref<698xf32, #tpu.memory_space<smem>>
    %653 = vector.broadcast %652 : f32 to vector<2x57xf32>
    %654 = arith.mulf %653, %602 : vector<2x57xf32>
    %655 = arith.addf %651, %654 : vector<2x57xf32>
    %c147 = arith.constant 147 : index
    %656 = memref.load %arg0[%c147] : memref<698xf32, #tpu.memory_space<smem>>
    %657 = vector.broadcast %656 : f32 to vector<2x57xf32>
    %658 = arith.mulf %657, %603 : vector<2x57xf32>
    %659 = arith.addf %655, %658 : vector<2x57xf32>
    %c148 = arith.constant 148 : index
    %660 = memref.load %arg0[%c148] : memref<698xf32, #tpu.memory_space<smem>>
    %661 = vector.broadcast %660 : f32 to vector<2x57xf32>
    %662 = arith.mulf %661, %604 : vector<2x57xf32>
    %663 = arith.addf %659, %662 : vector<2x57xf32>
    %c149 = arith.constant 149 : index
    %664 = memref.load %arg0[%c149] : memref<698xf32, #tpu.memory_space<smem>>
    %665 = vector.broadcast %664 : f32 to vector<2x57xf32>
    %666 = arith.mulf %665, %605 : vector<2x57xf32>
    %667 = arith.addf %663, %666 : vector<2x57xf32>
    %c150 = arith.constant 150 : index
    %668 = memref.load %arg0[%c150] : memref<698xf32, #tpu.memory_space<smem>>
    %669 = vector.broadcast %668 : f32 to vector<2x57xf32>
    %670 = arith.mulf %669, %606 : vector<2x57xf32>
    %671 = arith.addf %667, %670 : vector<2x57xf32>
    %c151 = arith.constant 151 : index
    %672 = memref.load %arg0[%c151] : memref<698xf32, #tpu.memory_space<smem>>
    %673 = vector.broadcast %672 : f32 to vector<2x57xf32>
    %674 = arith.mulf %673, %607 : vector<2x57xf32>
    %675 = arith.addf %671, %674 : vector<2x57xf32>
    %c152 = arith.constant 152 : index
    %676 = memref.load %arg0[%c152] : memref<698xf32, #tpu.memory_space<smem>>
    %677 = vector.broadcast %676 : f32 to vector<2x57xf32>
    %678 = arith.mulf %677, %608 : vector<2x57xf32>
    %679 = arith.addf %675, %678 : vector<2x57xf32>
    %c153 = arith.constant 153 : index
    %680 = memref.load %arg0[%c153] : memref<698xf32, #tpu.memory_space<smem>>
    %681 = vector.broadcast %680 : f32 to vector<2x57xf32>
    %682 = arith.mulf %681, %609 : vector<2x57xf32>
    %683 = arith.addf %679, %682 : vector<2x57xf32>
    %c154 = arith.constant 154 : index
    %684 = memref.load %arg0[%c154] : memref<698xf32, #tpu.memory_space<smem>>
    %685 = vector.broadcast %684 : f32 to vector<2x57xf32>
    %686 = arith.mulf %685, %610 : vector<2x57xf32>
    %687 = arith.addf %683, %686 : vector<2x57xf32>
    %c155 = arith.constant 155 : index
    %688 = memref.load %arg0[%c155] : memref<698xf32, #tpu.memory_space<smem>>
    %689 = vector.broadcast %688 : f32 to vector<2x57xf32>
    %690 = arith.mulf %689, %611 : vector<2x57xf32>
    %691 = arith.addf %687, %690 : vector<2x57xf32>
    %c156 = arith.constant 156 : index
    %692 = memref.load %arg0[%c156] : memref<698xf32, #tpu.memory_space<smem>>
    %693 = vector.broadcast %692 : f32 to vector<2x57xf32>
    %694 = arith.mulf %693, %612 : vector<2x57xf32>
    %695 = arith.addf %691, %694 : vector<2x57xf32>
    %c157 = arith.constant 157 : index
    %696 = memref.load %arg0[%c157] : memref<698xf32, #tpu.memory_space<smem>>
    %697 = vector.broadcast %696 : f32 to vector<2x57xf32>
    %698 = arith.mulf %697, %613 : vector<2x57xf32>
    %699 = arith.addf %695, %698 : vector<2x57xf32>
    %cst_24 = arith.constant dense<0.000000e+00> : vector<2x29xf32>
    %700 = tpu.matmul %699, %620, %cst_24 {dimension_numbers = #tpu.dot_dimension_numbers<[1], [0], [0], [1], [0, 0, 1, 1], [], []>} : vector<2x57xf32>, vector<57x29xf32>, vector<2x29xf32> -> vector<2x29xf32>
    %c338 = arith.constant 338 : index
    %701 = memref.load %arg0[%c338] : memref<698xf32, #tpu.memory_space<smem>>
    %702 = vector.broadcast %701 : f32 to vector<2x29xf32>
    %703 = arith.addf %700, %702 : vector<2x29xf32>
    %cst_25 = arith.constant 0.000000e+00 : f32
    %704 = vector.broadcast %cst_25 : f32 to vector<2x29xf32>
    %705 = arith.maximumf %703, %704 : vector<2x29xf32>
    %c348 = arith.constant 348 : index
    %706 = memref.load %arg0[%c348] : memref<698xf32, #tpu.memory_space<smem>>
    %707 = vector.broadcast %706 : f32 to vector<2x29xf32>
    %708 = arith.mulf %705, %707 : vector<2x29xf32>
    %c358 = arith.constant 358 : index
    %709 = memref.load %arg0[%c358] : memref<698xf32, #tpu.memory_space<smem>>
    %710 = vector.broadcast %709 : f32 to vector<2x29xf32>
    %711 = arith.addf %708, %710 : vector<2x29xf32>
    %c158 = arith.constant 158 : index
    %712 = memref.load %arg0[%c158] : memref<698xf32, #tpu.memory_space<smem>>
    %713 = vector.broadcast %712 : f32 to vector<2x57xf32>
    %714 = arith.mulf %713, %594 : vector<2x57xf32>
    %c159 = arith.constant 159 : index
    %715 = memref.load %arg0[%c159] : memref<698xf32, #tpu.memory_space<smem>>
    %716 = vector.broadcast %715 : f32 to vector<2x57xf32>
    %717 = arith.mulf %716, %595 : vector<2x57xf32>
    %718 = arith.addf %714, %717 : vector<2x57xf32>
    %c160 = arith.constant 160 : index
    %719 = memref.load %arg0[%c160] : memref<698xf32, #tpu.memory_space<smem>>
    %720 = vector.broadcast %719 : f32 to vector<2x57xf32>
    %721 = arith.mulf %720, %596 : vector<2x57xf32>
    %722 = arith.addf %718, %721 : vector<2x57xf32>
    %c161 = arith.constant 161 : index
    %723 = memref.load %arg0[%c161] : memref<698xf32, #tpu.memory_space<smem>>
    %724 = vector.broadcast %723 : f32 to vector<2x57xf32>
    %725 = arith.mulf %724, %597 : vector<2x57xf32>
    %726 = arith.addf %722, %725 : vector<2x57xf32>
    %c162 = arith.constant 162 : index
    %727 = memref.load %arg0[%c162] : memref<698xf32, #tpu.memory_space<smem>>
    %728 = vector.broadcast %727 : f32 to vector<2x57xf32>
    %729 = arith.mulf %728, %598 : vector<2x57xf32>
    %730 = arith.addf %726, %729 : vector<2x57xf32>
    %c163 = arith.constant 163 : index
    %731 = memref.load %arg0[%c163] : memref<698xf32, #tpu.memory_space<smem>>
    %732 = vector.broadcast %731 : f32 to vector<2x57xf32>
    %733 = arith.mulf %732, %599 : vector<2x57xf32>
    %734 = arith.addf %730, %733 : vector<2x57xf32>
    %c164 = arith.constant 164 : index
    %735 = memref.load %arg0[%c164] : memref<698xf32, #tpu.memory_space<smem>>
    %736 = vector.broadcast %735 : f32 to vector<2x57xf32>
    %737 = arith.mulf %736, %600 : vector<2x57xf32>
    %738 = arith.addf %734, %737 : vector<2x57xf32>
    %c165 = arith.constant 165 : index
    %739 = memref.load %arg0[%c165] : memref<698xf32, #tpu.memory_space<smem>>
    %740 = vector.broadcast %739 : f32 to vector<2x57xf32>
    %741 = arith.mulf %740, %601 : vector<2x57xf32>
    %742 = arith.addf %738, %741 : vector<2x57xf32>
    %c166 = arith.constant 166 : index
    %743 = memref.load %arg0[%c166] : memref<698xf32, #tpu.memory_space<smem>>
    %744 = vector.broadcast %743 : f32 to vector<2x57xf32>
    %745 = arith.mulf %744, %602 : vector<2x57xf32>
    %746 = arith.addf %742, %745 : vector<2x57xf32>
    %c167 = arith.constant 167 : index
    %747 = memref.load %arg0[%c167] : memref<698xf32, #tpu.memory_space<smem>>
    %748 = vector.broadcast %747 : f32 to vector<2x57xf32>
    %749 = arith.mulf %748, %603 : vector<2x57xf32>
    %750 = arith.addf %746, %749 : vector<2x57xf32>
    %c168 = arith.constant 168 : index
    %751 = memref.load %arg0[%c168] : memref<698xf32, #tpu.memory_space<smem>>
    %752 = vector.broadcast %751 : f32 to vector<2x57xf32>
    %753 = arith.mulf %752, %604 : vector<2x57xf32>
    %754 = arith.addf %750, %753 : vector<2x57xf32>
    %c169 = arith.constant 169 : index
    %755 = memref.load %arg0[%c169] : memref<698xf32, #tpu.memory_space<smem>>
    %756 = vector.broadcast %755 : f32 to vector<2x57xf32>
    %757 = arith.mulf %756, %605 : vector<2x57xf32>
    %758 = arith.addf %754, %757 : vector<2x57xf32>
    %c170 = arith.constant 170 : index
    %759 = memref.load %arg0[%c170] : memref<698xf32, #tpu.memory_space<smem>>
    %760 = vector.broadcast %759 : f32 to vector<2x57xf32>
    %761 = arith.mulf %760, %606 : vector<2x57xf32>
    %762 = arith.addf %758, %761 : vector<2x57xf32>
    %c171 = arith.constant 171 : index
    %763 = memref.load %arg0[%c171] : memref<698xf32, #tpu.memory_space<smem>>
    %764 = vector.broadcast %763 : f32 to vector<2x57xf32>
    %765 = arith.mulf %764, %607 : vector<2x57xf32>
    %766 = arith.addf %762, %765 : vector<2x57xf32>
    %c172 = arith.constant 172 : index
    %767 = memref.load %arg0[%c172] : memref<698xf32, #tpu.memory_space<smem>>
    %768 = vector.broadcast %767 : f32 to vector<2x57xf32>
    %769 = arith.mulf %768, %608 : vector<2x57xf32>
    %770 = arith.addf %766, %769 : vector<2x57xf32>
    %c173 = arith.constant 173 : index
    %771 = memref.load %arg0[%c173] : memref<698xf32, #tpu.memory_space<smem>>
    %772 = vector.broadcast %771 : f32 to vector<2x57xf32>
    %773 = arith.mulf %772, %609 : vector<2x57xf32>
    %774 = arith.addf %770, %773 : vector<2x57xf32>
    %c174 = arith.constant 174 : index
    %775 = memref.load %arg0[%c174] : memref<698xf32, #tpu.memory_space<smem>>
    %776 = vector.broadcast %775 : f32 to vector<2x57xf32>
    %777 = arith.mulf %776, %610 : vector<2x57xf32>
    %778 = arith.addf %774, %777 : vector<2x57xf32>
    %c175 = arith.constant 175 : index
    %779 = memref.load %arg0[%c175] : memref<698xf32, #tpu.memory_space<smem>>
    %780 = vector.broadcast %779 : f32 to vector<2x57xf32>
    %781 = arith.mulf %780, %611 : vector<2x57xf32>
    %782 = arith.addf %778, %781 : vector<2x57xf32>
    %c176 = arith.constant 176 : index
    %783 = memref.load %arg0[%c176] : memref<698xf32, #tpu.memory_space<smem>>
    %784 = vector.broadcast %783 : f32 to vector<2x57xf32>
    %785 = arith.mulf %784, %612 : vector<2x57xf32>
    %786 = arith.addf %782, %785 : vector<2x57xf32>
    %c177 = arith.constant 177 : index
    %787 = memref.load %arg0[%c177] : memref<698xf32, #tpu.memory_space<smem>>
    %788 = vector.broadcast %787 : f32 to vector<2x57xf32>
    %789 = arith.mulf %788, %613 : vector<2x57xf32>
    %790 = arith.addf %786, %789 : vector<2x57xf32>
    %cst_26 = arith.constant dense<0.000000e+00> : vector<2x29xf32>
    %791 = tpu.matmul %790, %620, %cst_26 {dimension_numbers = #tpu.dot_dimension_numbers<[1], [0], [0], [1], [0, 0, 1, 1], [], []>} : vector<2x57xf32>, vector<57x29xf32>, vector<2x29xf32> -> vector<2x29xf32>
    %c339 = arith.constant 339 : index
    %792 = memref.load %arg0[%c339] : memref<698xf32, #tpu.memory_space<smem>>
    %793 = vector.broadcast %792 : f32 to vector<2x29xf32>
    %794 = arith.addf %791, %793 : vector<2x29xf32>
    %cst_27 = arith.constant 0.000000e+00 : f32
    %795 = vector.broadcast %cst_27 : f32 to vector<2x29xf32>
    %796 = arith.maximumf %794, %795 : vector<2x29xf32>
    %c349 = arith.constant 349 : index
    %797 = memref.load %arg0[%c349] : memref<698xf32, #tpu.memory_space<smem>>
    %798 = vector.broadcast %797 : f32 to vector<2x29xf32>
    %799 = arith.mulf %796, %798 : vector<2x29xf32>
    %c359 = arith.constant 359 : index
    %800 = memref.load %arg0[%c359] : memref<698xf32, #tpu.memory_space<smem>>
    %801 = vector.broadcast %800 : f32 to vector<2x29xf32>
    %802 = arith.addf %799, %801 : vector<2x29xf32>
    %c178 = arith.constant 178 : index
    %803 = memref.load %arg0[%c178] : memref<698xf32, #tpu.memory_space<smem>>
    %804 = vector.broadcast %803 : f32 to vector<2x57xf32>
    %805 = arith.mulf %804, %594 : vector<2x57xf32>
    %c179 = arith.constant 179 : index
    %806 = memref.load %arg0[%c179] : memref<698xf32, #tpu.memory_space<smem>>
    %807 = vector.broadcast %806 : f32 to vector<2x57xf32>
    %808 = arith.mulf %807, %595 : vector<2x57xf32>
    %809 = arith.addf %805, %808 : vector<2x57xf32>
    %c180 = arith.constant 180 : index
    %810 = memref.load %arg0[%c180] : memref<698xf32, #tpu.memory_space<smem>>
    %811 = vector.broadcast %810 : f32 to vector<2x57xf32>
    %812 = arith.mulf %811, %596 : vector<2x57xf32>
    %813 = arith.addf %809, %812 : vector<2x57xf32>
    %c181 = arith.constant 181 : index
    %814 = memref.load %arg0[%c181] : memref<698xf32, #tpu.memory_space<smem>>
    %815 = vector.broadcast %814 : f32 to vector<2x57xf32>
    %816 = arith.mulf %815, %597 : vector<2x57xf32>
    %817 = arith.addf %813, %816 : vector<2x57xf32>
    %c182 = arith.constant 182 : index
    %818 = memref.load %arg0[%c182] : memref<698xf32, #tpu.memory_space<smem>>
    %819 = vector.broadcast %818 : f32 to vector<2x57xf32>
    %820 = arith.mulf %819, %598 : vector<2x57xf32>
    %821 = arith.addf %817, %820 : vector<2x57xf32>
    %c183 = arith.constant 183 : index
    %822 = memref.load %arg0[%c183] : memref<698xf32, #tpu.memory_space<smem>>
    %823 = vector.broadcast %822 : f32 to vector<2x57xf32>
    %824 = arith.mulf %823, %599 : vector<2x57xf32>
    %825 = arith.addf %821, %824 : vector<2x57xf32>
    %c184 = arith.constant 184 : index
    %826 = memref.load %arg0[%c184] : memref<698xf32, #tpu.memory_space<smem>>
    %827 = vector.broadcast %826 : f32 to vector<2x57xf32>
    %828 = arith.mulf %827, %600 : vector<2x57xf32>
    %829 = arith.addf %825, %828 : vector<2x57xf32>
    %c185 = arith.constant 185 : index
    %830 = memref.load %arg0[%c185] : memref<698xf32, #tpu.memory_space<smem>>
    %831 = vector.broadcast %830 : f32 to vector<2x57xf32>
    %832 = arith.mulf %831, %601 : vector<2x57xf32>
    %833 = arith.addf %829, %832 : vector<2x57xf32>
    %c186 = arith.constant 186 : index
    %834 = memref.load %arg0[%c186] : memref<698xf32, #tpu.memory_space<smem>>
    %835 = vector.broadcast %834 : f32 to vector<2x57xf32>
    %836 = arith.mulf %835, %602 : vector<2x57xf32>
    %837 = arith.addf %833, %836 : vector<2x57xf32>
    %c187 = arith.constant 187 : index
    %838 = memref.load %arg0[%c187] : memref<698xf32, #tpu.memory_space<smem>>
    %839 = vector.broadcast %838 : f32 to vector<2x57xf32>
    %840 = arith.mulf %839, %603 : vector<2x57xf32>
    %841 = arith.addf %837, %840 : vector<2x57xf32>
    %c188 = arith.constant 188 : index
    %842 = memref.load %arg0[%c188] : memref<698xf32, #tpu.memory_space<smem>>
    %843 = vector.broadcast %842 : f32 to vector<2x57xf32>
    %844 = arith.mulf %843, %604 : vector<2x57xf32>
    %845 = arith.addf %841, %844 : vector<2x57xf32>
    %c189 = arith.constant 189 : index
    %846 = memref.load %arg0[%c189] : memref<698xf32, #tpu.memory_space<smem>>
    %847 = vector.broadcast %846 : f32 to vector<2x57xf32>
    %848 = arith.mulf %847, %605 : vector<2x57xf32>
    %849 = arith.addf %845, %848 : vector<2x57xf32>
    %c190 = arith.constant 190 : index
    %850 = memref.load %arg0[%c190] : memref<698xf32, #tpu.memory_space<smem>>
    %851 = vector.broadcast %850 : f32 to vector<2x57xf32>
    %852 = arith.mulf %851, %606 : vector<2x57xf32>
    %853 = arith.addf %849, %852 : vector<2x57xf32>
    %c191 = arith.constant 191 : index
    %854 = memref.load %arg0[%c191] : memref<698xf32, #tpu.memory_space<smem>>
    %855 = vector.broadcast %854 : f32 to vector<2x57xf32>
    %856 = arith.mulf %855, %607 : vector<2x57xf32>
    %857 = arith.addf %853, %856 : vector<2x57xf32>
    %c192 = arith.constant 192 : index
    %858 = memref.load %arg0[%c192] : memref<698xf32, #tpu.memory_space<smem>>
    %859 = vector.broadcast %858 : f32 to vector<2x57xf32>
    %860 = arith.mulf %859, %608 : vector<2x57xf32>
    %861 = arith.addf %857, %860 : vector<2x57xf32>
    %c193 = arith.constant 193 : index
    %862 = memref.load %arg0[%c193] : memref<698xf32, #tpu.memory_space<smem>>
    %863 = vector.broadcast %862 : f32 to vector<2x57xf32>
    %864 = arith.mulf %863, %609 : vector<2x57xf32>
    %865 = arith.addf %861, %864 : vector<2x57xf32>
    %c194 = arith.constant 194 : index
    %866 = memref.load %arg0[%c194] : memref<698xf32, #tpu.memory_space<smem>>
    %867 = vector.broadcast %866 : f32 to vector<2x57xf32>
    %868 = arith.mulf %867, %610 : vector<2x57xf32>
    %869 = arith.addf %865, %868 : vector<2x57xf32>
    %c195 = arith.constant 195 : index
    %870 = memref.load %arg0[%c195] : memref<698xf32, #tpu.memory_space<smem>>
    %871 = vector.broadcast %870 : f32 to vector<2x57xf32>
    %872 = arith.mulf %871, %611 : vector<2x57xf32>
    %873 = arith.addf %869, %872 : vector<2x57xf32>
    %c196 = arith.constant 196 : index
    %874 = memref.load %arg0[%c196] : memref<698xf32, #tpu.memory_space<smem>>
    %875 = vector.broadcast %874 : f32 to vector<2x57xf32>
    %876 = arith.mulf %875, %612 : vector<2x57xf32>
    %877 = arith.addf %873, %876 : vector<2x57xf32>
    %c197 = arith.constant 197 : index
    %878 = memref.load %arg0[%c197] : memref<698xf32, #tpu.memory_space<smem>>
    %879 = vector.broadcast %878 : f32 to vector<2x57xf32>
    %880 = arith.mulf %879, %613 : vector<2x57xf32>
    %881 = arith.addf %877, %880 : vector<2x57xf32>
    %cst_28 = arith.constant dense<0.000000e+00> : vector<2x29xf32>
    %882 = tpu.matmul %881, %620, %cst_28 {dimension_numbers = #tpu.dot_dimension_numbers<[1], [0], [0], [1], [0, 0, 1, 1], [], []>} : vector<2x57xf32>, vector<57x29xf32>, vector<2x29xf32> -> vector<2x29xf32>
    %c340 = arith.constant 340 : index
    %883 = memref.load %arg0[%c340] : memref<698xf32, #tpu.memory_space<smem>>
    %884 = vector.broadcast %883 : f32 to vector<2x29xf32>
    %885 = arith.addf %882, %884 : vector<2x29xf32>
    %cst_29 = arith.constant 0.000000e+00 : f32
    %886 = vector.broadcast %cst_29 : f32 to vector<2x29xf32>
    %887 = arith.maximumf %885, %886 : vector<2x29xf32>
    %c350 = arith.constant 350 : index
    %888 = memref.load %arg0[%c350] : memref<698xf32, #tpu.memory_space<smem>>
    %889 = vector.broadcast %888 : f32 to vector<2x29xf32>
    %890 = arith.mulf %887, %889 : vector<2x29xf32>
    %c360 = arith.constant 360 : index
    %891 = memref.load %arg0[%c360] : memref<698xf32, #tpu.memory_space<smem>>
    %892 = vector.broadcast %891 : f32 to vector<2x29xf32>
    %893 = arith.addf %890, %892 : vector<2x29xf32>
    %c198 = arith.constant 198 : index
    %894 = memref.load %arg0[%c198] : memref<698xf32, #tpu.memory_space<smem>>
    %895 = vector.broadcast %894 : f32 to vector<2x57xf32>
    %896 = arith.mulf %895, %594 : vector<2x57xf32>
    %c199 = arith.constant 199 : index
    %897 = memref.load %arg0[%c199] : memref<698xf32, #tpu.memory_space<smem>>
    %898 = vector.broadcast %897 : f32 to vector<2x57xf32>
    %899 = arith.mulf %898, %595 : vector<2x57xf32>
    %900 = arith.addf %896, %899 : vector<2x57xf32>
    %c200 = arith.constant 200 : index
    %901 = memref.load %arg0[%c200] : memref<698xf32, #tpu.memory_space<smem>>
    %902 = vector.broadcast %901 : f32 to vector<2x57xf32>
    %903 = arith.mulf %902, %596 : vector<2x57xf32>
    %904 = arith.addf %900, %903 : vector<2x57xf32>
    %c201 = arith.constant 201 : index
    %905 = memref.load %arg0[%c201] : memref<698xf32, #tpu.memory_space<smem>>
    %906 = vector.broadcast %905 : f32 to vector<2x57xf32>
    %907 = arith.mulf %906, %597 : vector<2x57xf32>
    %908 = arith.addf %904, %907 : vector<2x57xf32>
    %c202 = arith.constant 202 : index
    %909 = memref.load %arg0[%c202] : memref<698xf32, #tpu.memory_space<smem>>
    %910 = vector.broadcast %909 : f32 to vector<2x57xf32>
    %911 = arith.mulf %910, %598 : vector<2x57xf32>
    %912 = arith.addf %908, %911 : vector<2x57xf32>
    %c203 = arith.constant 203 : index
    %913 = memref.load %arg0[%c203] : memref<698xf32, #tpu.memory_space<smem>>
    %914 = vector.broadcast %913 : f32 to vector<2x57xf32>
    %915 = arith.mulf %914, %599 : vector<2x57xf32>
    %916 = arith.addf %912, %915 : vector<2x57xf32>
    %c204 = arith.constant 204 : index
    %917 = memref.load %arg0[%c204] : memref<698xf32, #tpu.memory_space<smem>>
    %918 = vector.broadcast %917 : f32 to vector<2x57xf32>
    %919 = arith.mulf %918, %600 : vector<2x57xf32>
    %920 = arith.addf %916, %919 : vector<2x57xf32>
    %c205 = arith.constant 205 : index
    %921 = memref.load %arg0[%c205] : memref<698xf32, #tpu.memory_space<smem>>
    %922 = vector.broadcast %921 : f32 to vector<2x57xf32>
    %923 = arith.mulf %922, %601 : vector<2x57xf32>
    %924 = arith.addf %920, %923 : vector<2x57xf32>
    %c206 = arith.constant 206 : index
    %925 = memref.load %arg0[%c206] : memref<698xf32, #tpu.memory_space<smem>>
    %926 = vector.broadcast %925 : f32 to vector<2x57xf32>
    %927 = arith.mulf %926, %602 : vector<2x57xf32>
    %928 = arith.addf %924, %927 : vector<2x57xf32>
    %c207 = arith.constant 207 : index
    %929 = memref.load %arg0[%c207] : memref<698xf32, #tpu.memory_space<smem>>
    %930 = vector.broadcast %929 : f32 to vector<2x57xf32>
    %931 = arith.mulf %930, %603 : vector<2x57xf32>
    %932 = arith.addf %928, %931 : vector<2x57xf32>
    %c208 = arith.constant 208 : index
    %933 = memref.load %arg0[%c208] : memref<698xf32, #tpu.memory_space<smem>>
    %934 = vector.broadcast %933 : f32 to vector<2x57xf32>
    %935 = arith.mulf %934, %604 : vector<2x57xf32>
    %936 = arith.addf %932, %935 : vector<2x57xf32>
    %c209 = arith.constant 209 : index
    %937 = memref.load %arg0[%c209] : memref<698xf32, #tpu.memory_space<smem>>
    %938 = vector.broadcast %937 : f32 to vector<2x57xf32>
    %939 = arith.mulf %938, %605 : vector<2x57xf32>
    %940 = arith.addf %936, %939 : vector<2x57xf32>
    %c210 = arith.constant 210 : index
    %941 = memref.load %arg0[%c210] : memref<698xf32, #tpu.memory_space<smem>>
    %942 = vector.broadcast %941 : f32 to vector<2x57xf32>
    %943 = arith.mulf %942, %606 : vector<2x57xf32>
    %944 = arith.addf %940, %943 : vector<2x57xf32>
    %c211 = arith.constant 211 : index
    %945 = memref.load %arg0[%c211] : memref<698xf32, #tpu.memory_space<smem>>
    %946 = vector.broadcast %945 : f32 to vector<2x57xf32>
    %947 = arith.mulf %946, %607 : vector<2x57xf32>
    %948 = arith.addf %944, %947 : vector<2x57xf32>
    %c212 = arith.constant 212 : index
    %949 = memref.load %arg0[%c212] : memref<698xf32, #tpu.memory_space<smem>>
    %950 = vector.broadcast %949 : f32 to vector<2x57xf32>
    %951 = arith.mulf %950, %608 : vector<2x57xf32>
    %952 = arith.addf %948, %951 : vector<2x57xf32>
    %c213 = arith.constant 213 : index
    %953 = memref.load %arg0[%c213] : memref<698xf32, #tpu.memory_space<smem>>
    %954 = vector.broadcast %953 : f32 to vector<2x57xf32>
    %955 = arith.mulf %954, %609 : vector<2x57xf32>
    %956 = arith.addf %952, %955 : vector<2x57xf32>
    %c214 = arith.constant 214 : index
    %957 = memref.load %arg0[%c214] : memref<698xf32, #tpu.memory_space<smem>>
    %958 = vector.broadcast %957 : f32 to vector<2x57xf32>
    %959 = arith.mulf %958, %610 : vector<2x57xf32>
    %960 = arith.addf %956, %959 : vector<2x57xf32>
    %c215 = arith.constant 215 : index
    %961 = memref.load %arg0[%c215] : memref<698xf32, #tpu.memory_space<smem>>
    %962 = vector.broadcast %961 : f32 to vector<2x57xf32>
    %963 = arith.mulf %962, %611 : vector<2x57xf32>
    %964 = arith.addf %960, %963 : vector<2x57xf32>
    %c216 = arith.constant 216 : index
    %965 = memref.load %arg0[%c216] : memref<698xf32, #tpu.memory_space<smem>>
    %966 = vector.broadcast %965 : f32 to vector<2x57xf32>
    %967 = arith.mulf %966, %612 : vector<2x57xf32>
    %968 = arith.addf %964, %967 : vector<2x57xf32>
    %c217 = arith.constant 217 : index
    %969 = memref.load %arg0[%c217] : memref<698xf32, #tpu.memory_space<smem>>
    %970 = vector.broadcast %969 : f32 to vector<2x57xf32>
    %971 = arith.mulf %970, %613 : vector<2x57xf32>
    %972 = arith.addf %968, %971 : vector<2x57xf32>
    %cst_30 = arith.constant dense<0.000000e+00> : vector<2x29xf32>
    %973 = tpu.matmul %972, %620, %cst_30 {dimension_numbers = #tpu.dot_dimension_numbers<[1], [0], [0], [1], [0, 0, 1, 1], [], []>} : vector<2x57xf32>, vector<57x29xf32>, vector<2x29xf32> -> vector<2x29xf32>
    %c341 = arith.constant 341 : index
    %974 = memref.load %arg0[%c341] : memref<698xf32, #tpu.memory_space<smem>>
    %975 = vector.broadcast %974 : f32 to vector<2x29xf32>
    %976 = arith.addf %973, %975 : vector<2x29xf32>
    %cst_31 = arith.constant 0.000000e+00 : f32
    %977 = vector.broadcast %cst_31 : f32 to vector<2x29xf32>
    %978 = arith.maximumf %976, %977 : vector<2x29xf32>
    %c351 = arith.constant 351 : index
    %979 = memref.load %arg0[%c351] : memref<698xf32, #tpu.memory_space<smem>>
    %980 = vector.broadcast %979 : f32 to vector<2x29xf32>
    %981 = arith.mulf %978, %980 : vector<2x29xf32>
    %c361 = arith.constant 361 : index
    %982 = memref.load %arg0[%c361] : memref<698xf32, #tpu.memory_space<smem>>
    %983 = vector.broadcast %982 : f32 to vector<2x29xf32>
    %984 = arith.addf %981, %983 : vector<2x29xf32>
    %c218 = arith.constant 218 : index
    %985 = memref.load %arg0[%c218] : memref<698xf32, #tpu.memory_space<smem>>
    %986 = vector.broadcast %985 : f32 to vector<2x57xf32>
    %987 = arith.mulf %986, %594 : vector<2x57xf32>
    %c219 = arith.constant 219 : index
    %988 = memref.load %arg0[%c219] : memref<698xf32, #tpu.memory_space<smem>>
    %989 = vector.broadcast %988 : f32 to vector<2x57xf32>
    %990 = arith.mulf %989, %595 : vector<2x57xf32>
    %991 = arith.addf %987, %990 : vector<2x57xf32>
    %c220 = arith.constant 220 : index
    %992 = memref.load %arg0[%c220] : memref<698xf32, #tpu.memory_space<smem>>
    %993 = vector.broadcast %992 : f32 to vector<2x57xf32>
    %994 = arith.mulf %993, %596 : vector<2x57xf32>
    %995 = arith.addf %991, %994 : vector<2x57xf32>
    %c221 = arith.constant 221 : index
    %996 = memref.load %arg0[%c221] : memref<698xf32, #tpu.memory_space<smem>>
    %997 = vector.broadcast %996 : f32 to vector<2x57xf32>
    %998 = arith.mulf %997, %597 : vector<2x57xf32>
    %999 = arith.addf %995, %998 : vector<2x57xf32>
    %c222 = arith.constant 222 : index
    %1000 = memref.load %arg0[%c222] : memref<698xf32, #tpu.memory_space<smem>>
    %1001 = vector.broadcast %1000 : f32 to vector<2x57xf32>
    %1002 = arith.mulf %1001, %598 : vector<2x57xf32>
    %1003 = arith.addf %999, %1002 : vector<2x57xf32>
    %c223 = arith.constant 223 : index
    %1004 = memref.load %arg0[%c223] : memref<698xf32, #tpu.memory_space<smem>>
    %1005 = vector.broadcast %1004 : f32 to vector<2x57xf32>
    %1006 = arith.mulf %1005, %599 : vector<2x57xf32>
    %1007 = arith.addf %1003, %1006 : vector<2x57xf32>
    %c224 = arith.constant 224 : index
    %1008 = memref.load %arg0[%c224] : memref<698xf32, #tpu.memory_space<smem>>
    %1009 = vector.broadcast %1008 : f32 to vector<2x57xf32>
    %1010 = arith.mulf %1009, %600 : vector<2x57xf32>
    %1011 = arith.addf %1007, %1010 : vector<2x57xf32>
    %c225 = arith.constant 225 : index
    %1012 = memref.load %arg0[%c225] : memref<698xf32, #tpu.memory_space<smem>>
    %1013 = vector.broadcast %1012 : f32 to vector<2x57xf32>
    %1014 = arith.mulf %1013, %601 : vector<2x57xf32>
    %1015 = arith.addf %1011, %1014 : vector<2x57xf32>
    %c226 = arith.constant 226 : index
    %1016 = memref.load %arg0[%c226] : memref<698xf32, #tpu.memory_space<smem>>
    %1017 = vector.broadcast %1016 : f32 to vector<2x57xf32>
    %1018 = arith.mulf %1017, %602 : vector<2x57xf32>
    %1019 = arith.addf %1015, %1018 : vector<2x57xf32>
    %c227 = arith.constant 227 : index
    %1020 = memref.load %arg0[%c227] : memref<698xf32, #tpu.memory_space<smem>>
    %1021 = vector.broadcast %1020 : f32 to vector<2x57xf32>
    %1022 = arith.mulf %1021, %603 : vector<2x57xf32>
    %1023 = arith.addf %1019, %1022 : vector<2x57xf32>
    %c228 = arith.constant 228 : index
    %1024 = memref.load %arg0[%c228] : memref<698xf32, #tpu.memory_space<smem>>
    %1025 = vector.broadcast %1024 : f32 to vector<2x57xf32>
    %1026 = arith.mulf %1025, %604 : vector<2x57xf32>
    %1027 = arith.addf %1023, %1026 : vector<2x57xf32>
    %c229 = arith.constant 229 : index
    %1028 = memref.load %arg0[%c229] : memref<698xf32, #tpu.memory_space<smem>>
    %1029 = vector.broadcast %1028 : f32 to vector<2x57xf32>
    %1030 = arith.mulf %1029, %605 : vector<2x57xf32>
    %1031 = arith.addf %1027, %1030 : vector<2x57xf32>
    %c230 = arith.constant 230 : index
    %1032 = memref.load %arg0[%c230] : memref<698xf32, #tpu.memory_space<smem>>
    %1033 = vector.broadcast %1032 : f32 to vector<2x57xf32>
    %1034 = arith.mulf %1033, %606 : vector<2x57xf32>
    %1035 = arith.addf %1031, %1034 : vector<2x57xf32>
    %c231 = arith.constant 231 : index
    %1036 = memref.load %arg0[%c231] : memref<698xf32, #tpu.memory_space<smem>>
    %1037 = vector.broadcast %1036 : f32 to vector<2x57xf32>
    %1038 = arith.mulf %1037, %607 : vector<2x57xf32>
    %1039 = arith.addf %1035, %1038 : vector<2x57xf32>
    %c232 = arith.constant 232 : index
    %1040 = memref.load %arg0[%c232] : memref<698xf32, #tpu.memory_space<smem>>
    %1041 = vector.broadcast %1040 : f32 to vector<2x57xf32>
    %1042 = arith.mulf %1041, %608 : vector<2x57xf32>
    %1043 = arith.addf %1039, %1042 : vector<2x57xf32>
    %c233 = arith.constant 233 : index
    %1044 = memref.load %arg0[%c233] : memref<698xf32, #tpu.memory_space<smem>>
    %1045 = vector.broadcast %1044 : f32 to vector<2x57xf32>
    %1046 = arith.mulf %1045, %609 : vector<2x57xf32>
    %1047 = arith.addf %1043, %1046 : vector<2x57xf32>
    %c234 = arith.constant 234 : index
    %1048 = memref.load %arg0[%c234] : memref<698xf32, #tpu.memory_space<smem>>
    %1049 = vector.broadcast %1048 : f32 to vector<2x57xf32>
    %1050 = arith.mulf %1049, %610 : vector<2x57xf32>
    %1051 = arith.addf %1047, %1050 : vector<2x57xf32>
    %c235 = arith.constant 235 : index
    %1052 = memref.load %arg0[%c235] : memref<698xf32, #tpu.memory_space<smem>>
    %1053 = vector.broadcast %1052 : f32 to vector<2x57xf32>
    %1054 = arith.mulf %1053, %611 : vector<2x57xf32>
    %1055 = arith.addf %1051, %1054 : vector<2x57xf32>
    %c236 = arith.constant 236 : index
    %1056 = memref.load %arg0[%c236] : memref<698xf32, #tpu.memory_space<smem>>
    %1057 = vector.broadcast %1056 : f32 to vector<2x57xf32>
    %1058 = arith.mulf %1057, %612 : vector<2x57xf32>
    %1059 = arith.addf %1055, %1058 : vector<2x57xf32>
    %c237 = arith.constant 237 : index
    %1060 = memref.load %arg0[%c237] : memref<698xf32, #tpu.memory_space<smem>>
    %1061 = vector.broadcast %1060 : f32 to vector<2x57xf32>
    %1062 = arith.mulf %1061, %613 : vector<2x57xf32>
    %1063 = arith.addf %1059, %1062 : vector<2x57xf32>
    %cst_32 = arith.constant dense<0.000000e+00> : vector<2x29xf32>
    %1064 = tpu.matmul %1063, %620, %cst_32 {dimension_numbers = #tpu.dot_dimension_numbers<[1], [0], [0], [1], [0, 0, 1, 1], [], []>} : vector<2x57xf32>, vector<57x29xf32>, vector<2x29xf32> -> vector<2x29xf32>
    %c342 = arith.constant 342 : index
    %1065 = memref.load %arg0[%c342] : memref<698xf32, #tpu.memory_space<smem>>
    %1066 = vector.broadcast %1065 : f32 to vector<2x29xf32>
    %1067 = arith.addf %1064, %1066 : vector<2x29xf32>
    %cst_33 = arith.constant 0.000000e+00 : f32
    %1068 = vector.broadcast %cst_33 : f32 to vector<2x29xf32>
    %1069 = arith.maximumf %1067, %1068 : vector<2x29xf32>
    %c352 = arith.constant 352 : index
    %1070 = memref.load %arg0[%c352] : memref<698xf32, #tpu.memory_space<smem>>
    %1071 = vector.broadcast %1070 : f32 to vector<2x29xf32>
    %1072 = arith.mulf %1069, %1071 : vector<2x29xf32>
    %c362 = arith.constant 362 : index
    %1073 = memref.load %arg0[%c362] : memref<698xf32, #tpu.memory_space<smem>>
    %1074 = vector.broadcast %1073 : f32 to vector<2x29xf32>
    %1075 = arith.addf %1072, %1074 : vector<2x29xf32>
    %c238 = arith.constant 238 : index
    %1076 = memref.load %arg0[%c238] : memref<698xf32, #tpu.memory_space<smem>>
    %1077 = vector.broadcast %1076 : f32 to vector<2x57xf32>
    %1078 = arith.mulf %1077, %594 : vector<2x57xf32>
    %c239 = arith.constant 239 : index
    %1079 = memref.load %arg0[%c239] : memref<698xf32, #tpu.memory_space<smem>>
    %1080 = vector.broadcast %1079 : f32 to vector<2x57xf32>
    %1081 = arith.mulf %1080, %595 : vector<2x57xf32>
    %1082 = arith.addf %1078, %1081 : vector<2x57xf32>
    %c240 = arith.constant 240 : index
    %1083 = memref.load %arg0[%c240] : memref<698xf32, #tpu.memory_space<smem>>
    %1084 = vector.broadcast %1083 : f32 to vector<2x57xf32>
    %1085 = arith.mulf %1084, %596 : vector<2x57xf32>
    %1086 = arith.addf %1082, %1085 : vector<2x57xf32>
    %c241 = arith.constant 241 : index
    %1087 = memref.load %arg0[%c241] : memref<698xf32, #tpu.memory_space<smem>>
    %1088 = vector.broadcast %1087 : f32 to vector<2x57xf32>
    %1089 = arith.mulf %1088, %597 : vector<2x57xf32>
    %1090 = arith.addf %1086, %1089 : vector<2x57xf32>
    %c242 = arith.constant 242 : index
    %1091 = memref.load %arg0[%c242] : memref<698xf32, #tpu.memory_space<smem>>
    %1092 = vector.broadcast %1091 : f32 to vector<2x57xf32>
    %1093 = arith.mulf %1092, %598 : vector<2x57xf32>
    %1094 = arith.addf %1090, %1093 : vector<2x57xf32>
    %c243 = arith.constant 243 : index
    %1095 = memref.load %arg0[%c243] : memref<698xf32, #tpu.memory_space<smem>>
    %1096 = vector.broadcast %1095 : f32 to vector<2x57xf32>
    %1097 = arith.mulf %1096, %599 : vector<2x57xf32>
    %1098 = arith.addf %1094, %1097 : vector<2x57xf32>
    %c244 = arith.constant 244 : index
    %1099 = memref.load %arg0[%c244] : memref<698xf32, #tpu.memory_space<smem>>
    %1100 = vector.broadcast %1099 : f32 to vector<2x57xf32>
    %1101 = arith.mulf %1100, %600 : vector<2x57xf32>
    %1102 = arith.addf %1098, %1101 : vector<2x57xf32>
    %c245 = arith.constant 245 : index
    %1103 = memref.load %arg0[%c245] : memref<698xf32, #tpu.memory_space<smem>>
    %1104 = vector.broadcast %1103 : f32 to vector<2x57xf32>
    %1105 = arith.mulf %1104, %601 : vector<2x57xf32>
    %1106 = arith.addf %1102, %1105 : vector<2x57xf32>
    %c246 = arith.constant 246 : index
    %1107 = memref.load %arg0[%c246] : memref<698xf32, #tpu.memory_space<smem>>
    %1108 = vector.broadcast %1107 : f32 to vector<2x57xf32>
    %1109 = arith.mulf %1108, %602 : vector<2x57xf32>
    %1110 = arith.addf %1106, %1109 : vector<2x57xf32>
    %c247 = arith.constant 247 : index
    %1111 = memref.load %arg0[%c247] : memref<698xf32, #tpu.memory_space<smem>>
    %1112 = vector.broadcast %1111 : f32 to vector<2x57xf32>
    %1113 = arith.mulf %1112, %603 : vector<2x57xf32>
    %1114 = arith.addf %1110, %1113 : vector<2x57xf32>
    %c248 = arith.constant 248 : index
    %1115 = memref.load %arg0[%c248] : memref<698xf32, #tpu.memory_space<smem>>
    %1116 = vector.broadcast %1115 : f32 to vector<2x57xf32>
    %1117 = arith.mulf %1116, %604 : vector<2x57xf32>
    %1118 = arith.addf %1114, %1117 : vector<2x57xf32>
    %c249 = arith.constant 249 : index
    %1119 = memref.load %arg0[%c249] : memref<698xf32, #tpu.memory_space<smem>>
    %1120 = vector.broadcast %1119 : f32 to vector<2x57xf32>
    %1121 = arith.mulf %1120, %605 : vector<2x57xf32>
    %1122 = arith.addf %1118, %1121 : vector<2x57xf32>
    %c250 = arith.constant 250 : index
    %1123 = memref.load %arg0[%c250] : memref<698xf32, #tpu.memory_space<smem>>
    %1124 = vector.broadcast %1123 : f32 to vector<2x57xf32>
    %1125 = arith.mulf %1124, %606 : vector<2x57xf32>
    %1126 = arith.addf %1122, %1125 : vector<2x57xf32>
    %c251 = arith.constant 251 : index
    %1127 = memref.load %arg0[%c251] : memref<698xf32, #tpu.memory_space<smem>>
    %1128 = vector.broadcast %1127 : f32 to vector<2x57xf32>
    %1129 = arith.mulf %1128, %607 : vector<2x57xf32>
    %1130 = arith.addf %1126, %1129 : vector<2x57xf32>
    %c252 = arith.constant 252 : index
    %1131 = memref.load %arg0[%c252] : memref<698xf32, #tpu.memory_space<smem>>
    %1132 = vector.broadcast %1131 : f32 to vector<2x57xf32>
    %1133 = arith.mulf %1132, %608 : vector<2x57xf32>
    %1134 = arith.addf %1130, %1133 : vector<2x57xf32>
    %c253 = arith.constant 253 : index
    %1135 = memref.load %arg0[%c253] : memref<698xf32, #tpu.memory_space<smem>>
    %1136 = vector.broadcast %1135 : f32 to vector<2x57xf32>
    %1137 = arith.mulf %1136, %609 : vector<2x57xf32>
    %1138 = arith.addf %1134, %1137 : vector<2x57xf32>
    %c254 = arith.constant 254 : index
    %1139 = memref.load %arg0[%c254] : memref<698xf32, #tpu.memory_space<smem>>
    %1140 = vector.broadcast %1139 : f32 to vector<2x57xf32>
    %1141 = arith.mulf %1140, %610 : vector<2x57xf32>
    %1142 = arith.addf %1138, %1141 : vector<2x57xf32>
    %c255 = arith.constant 255 : index
    %1143 = memref.load %arg0[%c255] : memref<698xf32, #tpu.memory_space<smem>>
    %1144 = vector.broadcast %1143 : f32 to vector<2x57xf32>
    %1145 = arith.mulf %1144, %611 : vector<2x57xf32>
    %1146 = arith.addf %1142, %1145 : vector<2x57xf32>
    %c256 = arith.constant 256 : index
    %1147 = memref.load %arg0[%c256] : memref<698xf32, #tpu.memory_space<smem>>
    %1148 = vector.broadcast %1147 : f32 to vector<2x57xf32>
    %1149 = arith.mulf %1148, %612 : vector<2x57xf32>
    %1150 = arith.addf %1146, %1149 : vector<2x57xf32>
    %c257 = arith.constant 257 : index
    %1151 = memref.load %arg0[%c257] : memref<698xf32, #tpu.memory_space<smem>>
    %1152 = vector.broadcast %1151 : f32 to vector<2x57xf32>
    %1153 = arith.mulf %1152, %613 : vector<2x57xf32>
    %1154 = arith.addf %1150, %1153 : vector<2x57xf32>
    %cst_34 = arith.constant dense<0.000000e+00> : vector<2x29xf32>
    %1155 = tpu.matmul %1154, %620, %cst_34 {dimension_numbers = #tpu.dot_dimension_numbers<[1], [0], [0], [1], [0, 0, 1, 1], [], []>} : vector<2x57xf32>, vector<57x29xf32>, vector<2x29xf32> -> vector<2x29xf32>
    %c343 = arith.constant 343 : index
    %1156 = memref.load %arg0[%c343] : memref<698xf32, #tpu.memory_space<smem>>
    %1157 = vector.broadcast %1156 : f32 to vector<2x29xf32>
    %1158 = arith.addf %1155, %1157 : vector<2x29xf32>
    %cst_35 = arith.constant 0.000000e+00 : f32
    %1159 = vector.broadcast %cst_35 : f32 to vector<2x29xf32>
    %1160 = arith.maximumf %1158, %1159 : vector<2x29xf32>
    %c353 = arith.constant 353 : index
    %1161 = memref.load %arg0[%c353] : memref<698xf32, #tpu.memory_space<smem>>
    %1162 = vector.broadcast %1161 : f32 to vector<2x29xf32>
    %1163 = arith.mulf %1160, %1162 : vector<2x29xf32>
    %c363 = arith.constant 363 : index
    %1164 = memref.load %arg0[%c363] : memref<698xf32, #tpu.memory_space<smem>>
    %1165 = vector.broadcast %1164 : f32 to vector<2x29xf32>
    %1166 = arith.addf %1163, %1165 : vector<2x29xf32>
    %c258 = arith.constant 258 : index
    %1167 = memref.load %arg0[%c258] : memref<698xf32, #tpu.memory_space<smem>>
    %1168 = vector.broadcast %1167 : f32 to vector<2x57xf32>
    %1169 = arith.mulf %1168, %594 : vector<2x57xf32>
    %c259 = arith.constant 259 : index
    %1170 = memref.load %arg0[%c259] : memref<698xf32, #tpu.memory_space<smem>>
    %1171 = vector.broadcast %1170 : f32 to vector<2x57xf32>
    %1172 = arith.mulf %1171, %595 : vector<2x57xf32>
    %1173 = arith.addf %1169, %1172 : vector<2x57xf32>
    %c260 = arith.constant 260 : index
    %1174 = memref.load %arg0[%c260] : memref<698xf32, #tpu.memory_space<smem>>
    %1175 = vector.broadcast %1174 : f32 to vector<2x57xf32>
    %1176 = arith.mulf %1175, %596 : vector<2x57xf32>
    %1177 = arith.addf %1173, %1176 : vector<2x57xf32>
    %c261 = arith.constant 261 : index
    %1178 = memref.load %arg0[%c261] : memref<698xf32, #tpu.memory_space<smem>>
    %1179 = vector.broadcast %1178 : f32 to vector<2x57xf32>
    %1180 = arith.mulf %1179, %597 : vector<2x57xf32>
    %1181 = arith.addf %1177, %1180 : vector<2x57xf32>
    %c262 = arith.constant 262 : index
    %1182 = memref.load %arg0[%c262] : memref<698xf32, #tpu.memory_space<smem>>
    %1183 = vector.broadcast %1182 : f32 to vector<2x57xf32>
    %1184 = arith.mulf %1183, %598 : vector<2x57xf32>
    %1185 = arith.addf %1181, %1184 : vector<2x57xf32>
    %c263 = arith.constant 263 : index
    %1186 = memref.load %arg0[%c263] : memref<698xf32, #tpu.memory_space<smem>>
    %1187 = vector.broadcast %1186 : f32 to vector<2x57xf32>
    %1188 = arith.mulf %1187, %599 : vector<2x57xf32>
    %1189 = arith.addf %1185, %1188 : vector<2x57xf32>
    %c264 = arith.constant 264 : index
    %1190 = memref.load %arg0[%c264] : memref<698xf32, #tpu.memory_space<smem>>
    %1191 = vector.broadcast %1190 : f32 to vector<2x57xf32>
    %1192 = arith.mulf %1191, %600 : vector<2x57xf32>
    %1193 = arith.addf %1189, %1192 : vector<2x57xf32>
    %c265 = arith.constant 265 : index
    %1194 = memref.load %arg0[%c265] : memref<698xf32, #tpu.memory_space<smem>>
    %1195 = vector.broadcast %1194 : f32 to vector<2x57xf32>
    %1196 = arith.mulf %1195, %601 : vector<2x57xf32>
    %1197 = arith.addf %1193, %1196 : vector<2x57xf32>
    %c266 = arith.constant 266 : index
    %1198 = memref.load %arg0[%c266] : memref<698xf32, #tpu.memory_space<smem>>
    %1199 = vector.broadcast %1198 : f32 to vector<2x57xf32>
    %1200 = arith.mulf %1199, %602 : vector<2x57xf32>
    %1201 = arith.addf %1197, %1200 : vector<2x57xf32>
    %c267 = arith.constant 267 : index
    %1202 = memref.load %arg0[%c267] : memref<698xf32, #tpu.memory_space<smem>>
    %1203 = vector.broadcast %1202 : f32 to vector<2x57xf32>
    %1204 = arith.mulf %1203, %603 : vector<2x57xf32>
    %1205 = arith.addf %1201, %1204 : vector<2x57xf32>
    %c268 = arith.constant 268 : index
    %1206 = memref.load %arg0[%c268] : memref<698xf32, #tpu.memory_space<smem>>
    %1207 = vector.broadcast %1206 : f32 to vector<2x57xf32>
    %1208 = arith.mulf %1207, %604 : vector<2x57xf32>
    %1209 = arith.addf %1205, %1208 : vector<2x57xf32>
    %c269 = arith.constant 269 : index
    %1210 = memref.load %arg0[%c269] : memref<698xf32, #tpu.memory_space<smem>>
    %1211 = vector.broadcast %1210 : f32 to vector<2x57xf32>
    %1212 = arith.mulf %1211, %605 : vector<2x57xf32>
    %1213 = arith.addf %1209, %1212 : vector<2x57xf32>
    %c270 = arith.constant 270 : index
    %1214 = memref.load %arg0[%c270] : memref<698xf32, #tpu.memory_space<smem>>
    %1215 = vector.broadcast %1214 : f32 to vector<2x57xf32>
    %1216 = arith.mulf %1215, %606 : vector<2x57xf32>
    %1217 = arith.addf %1213, %1216 : vector<2x57xf32>
    %c271 = arith.constant 271 : index
    %1218 = memref.load %arg0[%c271] : memref<698xf32, #tpu.memory_space<smem>>
    %1219 = vector.broadcast %1218 : f32 to vector<2x57xf32>
    %1220 = arith.mulf %1219, %607 : vector<2x57xf32>
    %1221 = arith.addf %1217, %1220 : vector<2x57xf32>
    %c272 = arith.constant 272 : index
    %1222 = memref.load %arg0[%c272] : memref<698xf32, #tpu.memory_space<smem>>
    %1223 = vector.broadcast %1222 : f32 to vector<2x57xf32>
    %1224 = arith.mulf %1223, %608 : vector<2x57xf32>
    %1225 = arith.addf %1221, %1224 : vector<2x57xf32>
    %c273 = arith.constant 273 : index
    %1226 = memref.load %arg0[%c273] : memref<698xf32, #tpu.memory_space<smem>>
    %1227 = vector.broadcast %1226 : f32 to vector<2x57xf32>
    %1228 = arith.mulf %1227, %609 : vector<2x57xf32>
    %1229 = arith.addf %1225, %1228 : vector<2x57xf32>
    %c274 = arith.constant 274 : index
    %1230 = memref.load %arg0[%c274] : memref<698xf32, #tpu.memory_space<smem>>
    %1231 = vector.broadcast %1230 : f32 to vector<2x57xf32>
    %1232 = arith.mulf %1231, %610 : vector<2x57xf32>
    %1233 = arith.addf %1229, %1232 : vector<2x57xf32>
    %c275 = arith.constant 275 : index
    %1234 = memref.load %arg0[%c275] : memref<698xf32, #tpu.memory_space<smem>>
    %1235 = vector.broadcast %1234 : f32 to vector<2x57xf32>
    %1236 = arith.mulf %1235, %611 : vector<2x57xf32>
    %1237 = arith.addf %1233, %1236 : vector<2x57xf32>
    %c276 = arith.constant 276 : index
    %1238 = memref.load %arg0[%c276] : memref<698xf32, #tpu.memory_space<smem>>
    %1239 = vector.broadcast %1238 : f32 to vector<2x57xf32>
    %1240 = arith.mulf %1239, %612 : vector<2x57xf32>
    %1241 = arith.addf %1237, %1240 : vector<2x57xf32>
    %c277 = arith.constant 277 : index
    %1242 = memref.load %arg0[%c277] : memref<698xf32, #tpu.memory_space<smem>>
    %1243 = vector.broadcast %1242 : f32 to vector<2x57xf32>
    %1244 = arith.mulf %1243, %613 : vector<2x57xf32>
    %1245 = arith.addf %1241, %1244 : vector<2x57xf32>
    %cst_36 = arith.constant dense<0.000000e+00> : vector<2x29xf32>
    %1246 = tpu.matmul %1245, %620, %cst_36 {dimension_numbers = #tpu.dot_dimension_numbers<[1], [0], [0], [1], [0, 0, 1, 1], [], []>} : vector<2x57xf32>, vector<57x29xf32>, vector<2x29xf32> -> vector<2x29xf32>
    %c344 = arith.constant 344 : index
    %1247 = memref.load %arg0[%c344] : memref<698xf32, #tpu.memory_space<smem>>
    %1248 = vector.broadcast %1247 : f32 to vector<2x29xf32>
    %1249 = arith.addf %1246, %1248 : vector<2x29xf32>
    %cst_37 = arith.constant 0.000000e+00 : f32
    %1250 = vector.broadcast %cst_37 : f32 to vector<2x29xf32>
    %1251 = arith.maximumf %1249, %1250 : vector<2x29xf32>
    %c354 = arith.constant 354 : index
    %1252 = memref.load %arg0[%c354] : memref<698xf32, #tpu.memory_space<smem>>
    %1253 = vector.broadcast %1252 : f32 to vector<2x29xf32>
    %1254 = arith.mulf %1251, %1253 : vector<2x29xf32>
    %c364 = arith.constant 364 : index
    %1255 = memref.load %arg0[%c364] : memref<698xf32, #tpu.memory_space<smem>>
    %1256 = vector.broadcast %1255 : f32 to vector<2x29xf32>
    %1257 = arith.addf %1254, %1256 : vector<2x29xf32>
    %c278 = arith.constant 278 : index
    %1258 = memref.load %arg0[%c278] : memref<698xf32, #tpu.memory_space<smem>>
    %1259 = vector.broadcast %1258 : f32 to vector<2x57xf32>
    %1260 = arith.mulf %1259, %594 : vector<2x57xf32>
    %c279 = arith.constant 279 : index
    %1261 = memref.load %arg0[%c279] : memref<698xf32, #tpu.memory_space<smem>>
    %1262 = vector.broadcast %1261 : f32 to vector<2x57xf32>
    %1263 = arith.mulf %1262, %595 : vector<2x57xf32>
    %1264 = arith.addf %1260, %1263 : vector<2x57xf32>
    %c280 = arith.constant 280 : index
    %1265 = memref.load %arg0[%c280] : memref<698xf32, #tpu.memory_space<smem>>
    %1266 = vector.broadcast %1265 : f32 to vector<2x57xf32>
    %1267 = arith.mulf %1266, %596 : vector<2x57xf32>
    %1268 = arith.addf %1264, %1267 : vector<2x57xf32>
    %c281 = arith.constant 281 : index
    %1269 = memref.load %arg0[%c281] : memref<698xf32, #tpu.memory_space<smem>>
    %1270 = vector.broadcast %1269 : f32 to vector<2x57xf32>
    %1271 = arith.mulf %1270, %597 : vector<2x57xf32>
    %1272 = arith.addf %1268, %1271 : vector<2x57xf32>
    %c282 = arith.constant 282 : index
    %1273 = memref.load %arg0[%c282] : memref<698xf32, #tpu.memory_space<smem>>
    %1274 = vector.broadcast %1273 : f32 to vector<2x57xf32>
    %1275 = arith.mulf %1274, %598 : vector<2x57xf32>
    %1276 = arith.addf %1272, %1275 : vector<2x57xf32>
    %c283 = arith.constant 283 : index
    %1277 = memref.load %arg0[%c283] : memref<698xf32, #tpu.memory_space<smem>>
    %1278 = vector.broadcast %1277 : f32 to vector<2x57xf32>
    %1279 = arith.mulf %1278, %599 : vector<2x57xf32>
    %1280 = arith.addf %1276, %1279 : vector<2x57xf32>
    %c284 = arith.constant 284 : index
    %1281 = memref.load %arg0[%c284] : memref<698xf32, #tpu.memory_space<smem>>
    %1282 = vector.broadcast %1281 : f32 to vector<2x57xf32>
    %1283 = arith.mulf %1282, %600 : vector<2x57xf32>
    %1284 = arith.addf %1280, %1283 : vector<2x57xf32>
    %c285 = arith.constant 285 : index
    %1285 = memref.load %arg0[%c285] : memref<698xf32, #tpu.memory_space<smem>>
    %1286 = vector.broadcast %1285 : f32 to vector<2x57xf32>
    %1287 = arith.mulf %1286, %601 : vector<2x57xf32>
    %1288 = arith.addf %1284, %1287 : vector<2x57xf32>
    %c286 = arith.constant 286 : index
    %1289 = memref.load %arg0[%c286] : memref<698xf32, #tpu.memory_space<smem>>
    %1290 = vector.broadcast %1289 : f32 to vector<2x57xf32>
    %1291 = arith.mulf %1290, %602 : vector<2x57xf32>
    %1292 = arith.addf %1288, %1291 : vector<2x57xf32>
    %c287 = arith.constant 287 : index
    %1293 = memref.load %arg0[%c287] : memref<698xf32, #tpu.memory_space<smem>>
    %1294 = vector.broadcast %1293 : f32 to vector<2x57xf32>
    %1295 = arith.mulf %1294, %603 : vector<2x57xf32>
    %1296 = arith.addf %1292, %1295 : vector<2x57xf32>
    %c288 = arith.constant 288 : index
    %1297 = memref.load %arg0[%c288] : memref<698xf32, #tpu.memory_space<smem>>
    %1298 = vector.broadcast %1297 : f32 to vector<2x57xf32>
    %1299 = arith.mulf %1298, %604 : vector<2x57xf32>
    %1300 = arith.addf %1296, %1299 : vector<2x57xf32>
    %c289 = arith.constant 289 : index
    %1301 = memref.load %arg0[%c289] : memref<698xf32, #tpu.memory_space<smem>>
    %1302 = vector.broadcast %1301 : f32 to vector<2x57xf32>
    %1303 = arith.mulf %1302, %605 : vector<2x57xf32>
    %1304 = arith.addf %1300, %1303 : vector<2x57xf32>
    %c290 = arith.constant 290 : index
    %1305 = memref.load %arg0[%c290] : memref<698xf32, #tpu.memory_space<smem>>
    %1306 = vector.broadcast %1305 : f32 to vector<2x57xf32>
    %1307 = arith.mulf %1306, %606 : vector<2x57xf32>
    %1308 = arith.addf %1304, %1307 : vector<2x57xf32>
    %c291 = arith.constant 291 : index
    %1309 = memref.load %arg0[%c291] : memref<698xf32, #tpu.memory_space<smem>>
    %1310 = vector.broadcast %1309 : f32 to vector<2x57xf32>
    %1311 = arith.mulf %1310, %607 : vector<2x57xf32>
    %1312 = arith.addf %1308, %1311 : vector<2x57xf32>
    %c292 = arith.constant 292 : index
    %1313 = memref.load %arg0[%c292] : memref<698xf32, #tpu.memory_space<smem>>
    %1314 = vector.broadcast %1313 : f32 to vector<2x57xf32>
    %1315 = arith.mulf %1314, %608 : vector<2x57xf32>
    %1316 = arith.addf %1312, %1315 : vector<2x57xf32>
    %c293 = arith.constant 293 : index
    %1317 = memref.load %arg0[%c293] : memref<698xf32, #tpu.memory_space<smem>>
    %1318 = vector.broadcast %1317 : f32 to vector<2x57xf32>
    %1319 = arith.mulf %1318, %609 : vector<2x57xf32>
    %1320 = arith.addf %1316, %1319 : vector<2x57xf32>
    %c294 = arith.constant 294 : index
    %1321 = memref.load %arg0[%c294] : memref<698xf32, #tpu.memory_space<smem>>
    %1322 = vector.broadcast %1321 : f32 to vector<2x57xf32>
    %1323 = arith.mulf %1322, %610 : vector<2x57xf32>
    %1324 = arith.addf %1320, %1323 : vector<2x57xf32>
    %c295 = arith.constant 295 : index
    %1325 = memref.load %arg0[%c295] : memref<698xf32, #tpu.memory_space<smem>>
    %1326 = vector.broadcast %1325 : f32 to vector<2x57xf32>
    %1327 = arith.mulf %1326, %611 : vector<2x57xf32>
    %1328 = arith.addf %1324, %1327 : vector<2x57xf32>
    %c296 = arith.constant 296 : index
    %1329 = memref.load %arg0[%c296] : memref<698xf32, #tpu.memory_space<smem>>
    %1330 = vector.broadcast %1329 : f32 to vector<2x57xf32>
    %1331 = arith.mulf %1330, %612 : vector<2x57xf32>
    %1332 = arith.addf %1328, %1331 : vector<2x57xf32>
    %c297 = arith.constant 297 : index
    %1333 = memref.load %arg0[%c297] : memref<698xf32, #tpu.memory_space<smem>>
    %1334 = vector.broadcast %1333 : f32 to vector<2x57xf32>
    %1335 = arith.mulf %1334, %613 : vector<2x57xf32>
    %1336 = arith.addf %1332, %1335 : vector<2x57xf32>
    %cst_38 = arith.constant dense<0.000000e+00> : vector<2x29xf32>
    %1337 = tpu.matmul %1336, %620, %cst_38 {dimension_numbers = #tpu.dot_dimension_numbers<[1], [0], [0], [1], [0, 0, 1, 1], [], []>} : vector<2x57xf32>, vector<57x29xf32>, vector<2x29xf32> -> vector<2x29xf32>
    %c345 = arith.constant 345 : index
    %1338 = memref.load %arg0[%c345] : memref<698xf32, #tpu.memory_space<smem>>
    %1339 = vector.broadcast %1338 : f32 to vector<2x29xf32>
    %1340 = arith.addf %1337, %1339 : vector<2x29xf32>
    %cst_39 = arith.constant 0.000000e+00 : f32
    %1341 = vector.broadcast %cst_39 : f32 to vector<2x29xf32>
    %1342 = arith.maximumf %1340, %1341 : vector<2x29xf32>
    %c355 = arith.constant 355 : index
    %1343 = memref.load %arg0[%c355] : memref<698xf32, #tpu.memory_space<smem>>
    %1344 = vector.broadcast %1343 : f32 to vector<2x29xf32>
    %1345 = arith.mulf %1342, %1344 : vector<2x29xf32>
    %c365 = arith.constant 365 : index
    %1346 = memref.load %arg0[%c365] : memref<698xf32, #tpu.memory_space<smem>>
    %1347 = vector.broadcast %1346 : f32 to vector<2x29xf32>
    %1348 = arith.addf %1345, %1347 : vector<2x29xf32>
    %c298 = arith.constant 298 : index
    %1349 = memref.load %arg0[%c298] : memref<698xf32, #tpu.memory_space<smem>>
    %1350 = vector.broadcast %1349 : f32 to vector<2x57xf32>
    %1351 = arith.mulf %1350, %594 : vector<2x57xf32>
    %c299 = arith.constant 299 : index
    %1352 = memref.load %arg0[%c299] : memref<698xf32, #tpu.memory_space<smem>>
    %1353 = vector.broadcast %1352 : f32 to vector<2x57xf32>
    %1354 = arith.mulf %1353, %595 : vector<2x57xf32>
    %1355 = arith.addf %1351, %1354 : vector<2x57xf32>
    %c300 = arith.constant 300 : index
    %1356 = memref.load %arg0[%c300] : memref<698xf32, #tpu.memory_space<smem>>
    %1357 = vector.broadcast %1356 : f32 to vector<2x57xf32>
    %1358 = arith.mulf %1357, %596 : vector<2x57xf32>
    %1359 = arith.addf %1355, %1358 : vector<2x57xf32>
    %c301 = arith.constant 301 : index
    %1360 = memref.load %arg0[%c301] : memref<698xf32, #tpu.memory_space<smem>>
    %1361 = vector.broadcast %1360 : f32 to vector<2x57xf32>
    %1362 = arith.mulf %1361, %597 : vector<2x57xf32>
    %1363 = arith.addf %1359, %1362 : vector<2x57xf32>
    %c302 = arith.constant 302 : index
    %1364 = memref.load %arg0[%c302] : memref<698xf32, #tpu.memory_space<smem>>
    %1365 = vector.broadcast %1364 : f32 to vector<2x57xf32>
    %1366 = arith.mulf %1365, %598 : vector<2x57xf32>
    %1367 = arith.addf %1363, %1366 : vector<2x57xf32>
    %c303 = arith.constant 303 : index
    %1368 = memref.load %arg0[%c303] : memref<698xf32, #tpu.memory_space<smem>>
    %1369 = vector.broadcast %1368 : f32 to vector<2x57xf32>
    %1370 = arith.mulf %1369, %599 : vector<2x57xf32>
    %1371 = arith.addf %1367, %1370 : vector<2x57xf32>
    %c304 = arith.constant 304 : index
    %1372 = memref.load %arg0[%c304] : memref<698xf32, #tpu.memory_space<smem>>
    %1373 = vector.broadcast %1372 : f32 to vector<2x57xf32>
    %1374 = arith.mulf %1373, %600 : vector<2x57xf32>
    %1375 = arith.addf %1371, %1374 : vector<2x57xf32>
    %c305 = arith.constant 305 : index
    %1376 = memref.load %arg0[%c305] : memref<698xf32, #tpu.memory_space<smem>>
    %1377 = vector.broadcast %1376 : f32 to vector<2x57xf32>
    %1378 = arith.mulf %1377, %601 : vector<2x57xf32>
    %1379 = arith.addf %1375, %1378 : vector<2x57xf32>
    %c306 = arith.constant 306 : index
    %1380 = memref.load %arg0[%c306] : memref<698xf32, #tpu.memory_space<smem>>
    %1381 = vector.broadcast %1380 : f32 to vector<2x57xf32>
    %1382 = arith.mulf %1381, %602 : vector<2x57xf32>
    %1383 = arith.addf %1379, %1382 : vector<2x57xf32>
    %c307 = arith.constant 307 : index
    %1384 = memref.load %arg0[%c307] : memref<698xf32, #tpu.memory_space<smem>>
    %1385 = vector.broadcast %1384 : f32 to vector<2x57xf32>
    %1386 = arith.mulf %1385, %603 : vector<2x57xf32>
    %1387 = arith.addf %1383, %1386 : vector<2x57xf32>
    %c308 = arith.constant 308 : index
    %1388 = memref.load %arg0[%c308] : memref<698xf32, #tpu.memory_space<smem>>
    %1389 = vector.broadcast %1388 : f32 to vector<2x57xf32>
    %1390 = arith.mulf %1389, %604 : vector<2x57xf32>
    %1391 = arith.addf %1387, %1390 : vector<2x57xf32>
    %c309 = arith.constant 309 : index
    %1392 = memref.load %arg0[%c309] : memref<698xf32, #tpu.memory_space<smem>>
    %1393 = vector.broadcast %1392 : f32 to vector<2x57xf32>
    %1394 = arith.mulf %1393, %605 : vector<2x57xf32>
    %1395 = arith.addf %1391, %1394 : vector<2x57xf32>
    %c310 = arith.constant 310 : index
    %1396 = memref.load %arg0[%c310] : memref<698xf32, #tpu.memory_space<smem>>
    %1397 = vector.broadcast %1396 : f32 to vector<2x57xf32>
    %1398 = arith.mulf %1397, %606 : vector<2x57xf32>
    %1399 = arith.addf %1395, %1398 : vector<2x57xf32>
    %c311 = arith.constant 311 : index
    %1400 = memref.load %arg0[%c311] : memref<698xf32, #tpu.memory_space<smem>>
    %1401 = vector.broadcast %1400 : f32 to vector<2x57xf32>
    %1402 = arith.mulf %1401, %607 : vector<2x57xf32>
    %1403 = arith.addf %1399, %1402 : vector<2x57xf32>
    %c312 = arith.constant 312 : index
    %1404 = memref.load %arg0[%c312] : memref<698xf32, #tpu.memory_space<smem>>
    %1405 = vector.broadcast %1404 : f32 to vector<2x57xf32>
    %1406 = arith.mulf %1405, %608 : vector<2x57xf32>
    %1407 = arith.addf %1403, %1406 : vector<2x57xf32>
    %c313 = arith.constant 313 : index
    %1408 = memref.load %arg0[%c313] : memref<698xf32, #tpu.memory_space<smem>>
    %1409 = vector.broadcast %1408 : f32 to vector<2x57xf32>
    %1410 = arith.mulf %1409, %609 : vector<2x57xf32>
    %1411 = arith.addf %1407, %1410 : vector<2x57xf32>
    %c314 = arith.constant 314 : index
    %1412 = memref.load %arg0[%c314] : memref<698xf32, #tpu.memory_space<smem>>
    %1413 = vector.broadcast %1412 : f32 to vector<2x57xf32>
    %1414 = arith.mulf %1413, %610 : vector<2x57xf32>
    %1415 = arith.addf %1411, %1414 : vector<2x57xf32>
    %c315 = arith.constant 315 : index
    %1416 = memref.load %arg0[%c315] : memref<698xf32, #tpu.memory_space<smem>>
    %1417 = vector.broadcast %1416 : f32 to vector<2x57xf32>
    %1418 = arith.mulf %1417, %611 : vector<2x57xf32>
    %1419 = arith.addf %1415, %1418 : vector<2x57xf32>
    %c316 = arith.constant 316 : index
    %1420 = memref.load %arg0[%c316] : memref<698xf32, #tpu.memory_space<smem>>
    %1421 = vector.broadcast %1420 : f32 to vector<2x57xf32>
    %1422 = arith.mulf %1421, %612 : vector<2x57xf32>
    %1423 = arith.addf %1419, %1422 : vector<2x57xf32>
    %c317 = arith.constant 317 : index
    %1424 = memref.load %arg0[%c317] : memref<698xf32, #tpu.memory_space<smem>>
    %1425 = vector.broadcast %1424 : f32 to vector<2x57xf32>
    %1426 = arith.mulf %1425, %613 : vector<2x57xf32>
    %1427 = arith.addf %1423, %1426 : vector<2x57xf32>
    %cst_40 = arith.constant dense<0.000000e+00> : vector<2x29xf32>
    %1428 = tpu.matmul %1427, %620, %cst_40 {dimension_numbers = #tpu.dot_dimension_numbers<[1], [0], [0], [1], [0, 0, 1, 1], [], []>} : vector<2x57xf32>, vector<57x29xf32>, vector<2x29xf32> -> vector<2x29xf32>
    %c346 = arith.constant 346 : index
    %1429 = memref.load %arg0[%c346] : memref<698xf32, #tpu.memory_space<smem>>
    %1430 = vector.broadcast %1429 : f32 to vector<2x29xf32>
    %1431 = arith.addf %1428, %1430 : vector<2x29xf32>
    %cst_41 = arith.constant 0.000000e+00 : f32
    %1432 = vector.broadcast %cst_41 : f32 to vector<2x29xf32>
    %1433 = arith.maximumf %1431, %1432 : vector<2x29xf32>
    %c356 = arith.constant 356 : index
    %1434 = memref.load %arg0[%c356] : memref<698xf32, #tpu.memory_space<smem>>
    %1435 = vector.broadcast %1434 : f32 to vector<2x29xf32>
    %1436 = arith.mulf %1433, %1435 : vector<2x29xf32>
    %c366 = arith.constant 366 : index
    %1437 = memref.load %arg0[%c366] : memref<698xf32, #tpu.memory_space<smem>>
    %1438 = vector.broadcast %1437 : f32 to vector<2x29xf32>
    %1439 = arith.addf %1436, %1438 : vector<2x29xf32>
    %c318 = arith.constant 318 : index
    %1440 = memref.load %arg0[%c318] : memref<698xf32, #tpu.memory_space<smem>>
    %1441 = vector.broadcast %1440 : f32 to vector<2x57xf32>
    %1442 = arith.mulf %1441, %594 : vector<2x57xf32>
    %c319 = arith.constant 319 : index
    %1443 = memref.load %arg0[%c319] : memref<698xf32, #tpu.memory_space<smem>>
    %1444 = vector.broadcast %1443 : f32 to vector<2x57xf32>
    %1445 = arith.mulf %1444, %595 : vector<2x57xf32>
    %1446 = arith.addf %1442, %1445 : vector<2x57xf32>
    %c320 = arith.constant 320 : index
    %1447 = memref.load %arg0[%c320] : memref<698xf32, #tpu.memory_space<smem>>
    %1448 = vector.broadcast %1447 : f32 to vector<2x57xf32>
    %1449 = arith.mulf %1448, %596 : vector<2x57xf32>
    %1450 = arith.addf %1446, %1449 : vector<2x57xf32>
    %c321 = arith.constant 321 : index
    %1451 = memref.load %arg0[%c321] : memref<698xf32, #tpu.memory_space<smem>>
    %1452 = vector.broadcast %1451 : f32 to vector<2x57xf32>
    %1453 = arith.mulf %1452, %597 : vector<2x57xf32>
    %1454 = arith.addf %1450, %1453 : vector<2x57xf32>
    %c322 = arith.constant 322 : index
    %1455 = memref.load %arg0[%c322] : memref<698xf32, #tpu.memory_space<smem>>
    %1456 = vector.broadcast %1455 : f32 to vector<2x57xf32>
    %1457 = arith.mulf %1456, %598 : vector<2x57xf32>
    %1458 = arith.addf %1454, %1457 : vector<2x57xf32>
    %c323 = arith.constant 323 : index
    %1459 = memref.load %arg0[%c323] : memref<698xf32, #tpu.memory_space<smem>>
    %1460 = vector.broadcast %1459 : f32 to vector<2x57xf32>
    %1461 = arith.mulf %1460, %599 : vector<2x57xf32>
    %1462 = arith.addf %1458, %1461 : vector<2x57xf32>
    %c324 = arith.constant 324 : index
    %1463 = memref.load %arg0[%c324] : memref<698xf32, #tpu.memory_space<smem>>
    %1464 = vector.broadcast %1463 : f32 to vector<2x57xf32>
    %1465 = arith.mulf %1464, %600 : vector<2x57xf32>
    %1466 = arith.addf %1462, %1465 : vector<2x57xf32>
    %c325 = arith.constant 325 : index
    %1467 = memref.load %arg0[%c325] : memref<698xf32, #tpu.memory_space<smem>>
    %1468 = vector.broadcast %1467 : f32 to vector<2x57xf32>
    %1469 = arith.mulf %1468, %601 : vector<2x57xf32>
    %1470 = arith.addf %1466, %1469 : vector<2x57xf32>
    %c326 = arith.constant 326 : index
    %1471 = memref.load %arg0[%c326] : memref<698xf32, #tpu.memory_space<smem>>
    %1472 = vector.broadcast %1471 : f32 to vector<2x57xf32>
    %1473 = arith.mulf %1472, %602 : vector<2x57xf32>
    %1474 = arith.addf %1470, %1473 : vector<2x57xf32>
    %c327 = arith.constant 327 : index
    %1475 = memref.load %arg0[%c327] : memref<698xf32, #tpu.memory_space<smem>>
    %1476 = vector.broadcast %1475 : f32 to vector<2x57xf32>
    %1477 = arith.mulf %1476, %603 : vector<2x57xf32>
    %1478 = arith.addf %1474, %1477 : vector<2x57xf32>
    %c328 = arith.constant 328 : index
    %1479 = memref.load %arg0[%c328] : memref<698xf32, #tpu.memory_space<smem>>
    %1480 = vector.broadcast %1479 : f32 to vector<2x57xf32>
    %1481 = arith.mulf %1480, %604 : vector<2x57xf32>
    %1482 = arith.addf %1478, %1481 : vector<2x57xf32>
    %c329 = arith.constant 329 : index
    %1483 = memref.load %arg0[%c329] : memref<698xf32, #tpu.memory_space<smem>>
    %1484 = vector.broadcast %1483 : f32 to vector<2x57xf32>
    %1485 = arith.mulf %1484, %605 : vector<2x57xf32>
    %1486 = arith.addf %1482, %1485 : vector<2x57xf32>
    %c330 = arith.constant 330 : index
    %1487 = memref.load %arg0[%c330] : memref<698xf32, #tpu.memory_space<smem>>
    %1488 = vector.broadcast %1487 : f32 to vector<2x57xf32>
    %1489 = arith.mulf %1488, %606 : vector<2x57xf32>
    %1490 = arith.addf %1486, %1489 : vector<2x57xf32>
    %c331 = arith.constant 331 : index
    %1491 = memref.load %arg0[%c331] : memref<698xf32, #tpu.memory_space<smem>>
    %1492 = vector.broadcast %1491 : f32 to vector<2x57xf32>
    %1493 = arith.mulf %1492, %607 : vector<2x57xf32>
    %1494 = arith.addf %1490, %1493 : vector<2x57xf32>
    %c332 = arith.constant 332 : index
    %1495 = memref.load %arg0[%c332] : memref<698xf32, #tpu.memory_space<smem>>
    %1496 = vector.broadcast %1495 : f32 to vector<2x57xf32>
    %1497 = arith.mulf %1496, %608 : vector<2x57xf32>
    %1498 = arith.addf %1494, %1497 : vector<2x57xf32>
    %c333 = arith.constant 333 : index
    %1499 = memref.load %arg0[%c333] : memref<698xf32, #tpu.memory_space<smem>>
    %1500 = vector.broadcast %1499 : f32 to vector<2x57xf32>
    %1501 = arith.mulf %1500, %609 : vector<2x57xf32>
    %1502 = arith.addf %1498, %1501 : vector<2x57xf32>
    %c334 = arith.constant 334 : index
    %1503 = memref.load %arg0[%c334] : memref<698xf32, #tpu.memory_space<smem>>
    %1504 = vector.broadcast %1503 : f32 to vector<2x57xf32>
    %1505 = arith.mulf %1504, %610 : vector<2x57xf32>
    %1506 = arith.addf %1502, %1505 : vector<2x57xf32>
    %c335 = arith.constant 335 : index
    %1507 = memref.load %arg0[%c335] : memref<698xf32, #tpu.memory_space<smem>>
    %1508 = vector.broadcast %1507 : f32 to vector<2x57xf32>
    %1509 = arith.mulf %1508, %611 : vector<2x57xf32>
    %1510 = arith.addf %1506, %1509 : vector<2x57xf32>
    %c336 = arith.constant 336 : index
    %1511 = memref.load %arg0[%c336] : memref<698xf32, #tpu.memory_space<smem>>
    %1512 = vector.broadcast %1511 : f32 to vector<2x57xf32>
    %1513 = arith.mulf %1512, %612 : vector<2x57xf32>
    %1514 = arith.addf %1510, %1513 : vector<2x57xf32>
    %c337 = arith.constant 337 : index
    %1515 = memref.load %arg0[%c337] : memref<698xf32, #tpu.memory_space<smem>>
    %1516 = vector.broadcast %1515 : f32 to vector<2x57xf32>
    %1517 = arith.mulf %1516, %613 : vector<2x57xf32>
    %1518 = arith.addf %1514, %1517 : vector<2x57xf32>
    %cst_42 = arith.constant dense<0.000000e+00> : vector<2x29xf32>
    %1519 = tpu.matmul %1518, %620, %cst_42 {dimension_numbers = #tpu.dot_dimension_numbers<[1], [0], [0], [1], [0, 0, 1, 1], [], []>} : vector<2x57xf32>, vector<57x29xf32>, vector<2x29xf32> -> vector<2x29xf32>
    %c347 = arith.constant 347 : index
    %1520 = memref.load %arg0[%c347] : memref<698xf32, #tpu.memory_space<smem>>
    %1521 = vector.broadcast %1520 : f32 to vector<2x29xf32>
    %1522 = arith.addf %1519, %1521 : vector<2x29xf32>
    %cst_43 = arith.constant 0.000000e+00 : f32
    %1523 = vector.broadcast %cst_43 : f32 to vector<2x29xf32>
    %1524 = arith.maximumf %1522, %1523 : vector<2x29xf32>
    %c357 = arith.constant 357 : index
    %1525 = memref.load %arg0[%c357] : memref<698xf32, #tpu.memory_space<smem>>
    %1526 = vector.broadcast %1525 : f32 to vector<2x29xf32>
    %1527 = arith.mulf %1524, %1526 : vector<2x29xf32>
    %c367 = arith.constant 367 : index
    %1528 = memref.load %arg0[%c367] : memref<698xf32, #tpu.memory_space<smem>>
    %1529 = vector.broadcast %1528 : f32 to vector<2x29xf32>
    %1530 = arith.addf %1527, %1529 : vector<2x29xf32>
    %1531 = vector.extract_strided_slice %711 {offsets = [0, 0], sizes = [2, 27], strides = [1, 1]} : vector<2x29xf32> to vector<2x27xf32>
    %1532 = vector.extract_strided_slice %711 {offsets = [0, 1], sizes = [2, 27], strides = [1, 1]} : vector<2x29xf32> to vector<2x27xf32>
    %1533 = vector.extract_strided_slice %711 {offsets = [0, 2], sizes = [2, 27], strides = [1, 1]} : vector<2x29xf32> to vector<2x27xf32>
    %1534 = vector.extract_strided_slice %802 {offsets = [0, 0], sizes = [2, 27], strides = [1, 1]} : vector<2x29xf32> to vector<2x27xf32>
    %1535 = vector.extract_strided_slice %802 {offsets = [0, 1], sizes = [2, 27], strides = [1, 1]} : vector<2x29xf32> to vector<2x27xf32>
    %1536 = vector.extract_strided_slice %802 {offsets = [0, 2], sizes = [2, 27], strides = [1, 1]} : vector<2x29xf32> to vector<2x27xf32>
    %1537 = vector.extract_strided_slice %893 {offsets = [0, 0], sizes = [2, 27], strides = [1, 1]} : vector<2x29xf32> to vector<2x27xf32>
    %1538 = vector.extract_strided_slice %893 {offsets = [0, 1], sizes = [2, 27], strides = [1, 1]} : vector<2x29xf32> to vector<2x27xf32>
    %1539 = vector.extract_strided_slice %893 {offsets = [0, 2], sizes = [2, 27], strides = [1, 1]} : vector<2x29xf32> to vector<2x27xf32>
    %1540 = vector.extract_strided_slice %984 {offsets = [0, 0], sizes = [2, 27], strides = [1, 1]} : vector<2x29xf32> to vector<2x27xf32>
    %1541 = vector.extract_strided_slice %984 {offsets = [0, 1], sizes = [2, 27], strides = [1, 1]} : vector<2x29xf32> to vector<2x27xf32>
    %1542 = vector.extract_strided_slice %984 {offsets = [0, 2], sizes = [2, 27], strides = [1, 1]} : vector<2x29xf32> to vector<2x27xf32>
    %1543 = vector.extract_strided_slice %1075 {offsets = [0, 0], sizes = [2, 27], strides = [1, 1]} : vector<2x29xf32> to vector<2x27xf32>
    %1544 = vector.extract_strided_slice %1075 {offsets = [0, 1], sizes = [2, 27], strides = [1, 1]} : vector<2x29xf32> to vector<2x27xf32>
    %1545 = vector.extract_strided_slice %1075 {offsets = [0, 2], sizes = [2, 27], strides = [1, 1]} : vector<2x29xf32> to vector<2x27xf32>
    %1546 = vector.extract_strided_slice %1166 {offsets = [0, 0], sizes = [2, 27], strides = [1, 1]} : vector<2x29xf32> to vector<2x27xf32>
    %1547 = vector.extract_strided_slice %1166 {offsets = [0, 1], sizes = [2, 27], strides = [1, 1]} : vector<2x29xf32> to vector<2x27xf32>
    %1548 = vector.extract_strided_slice %1166 {offsets = [0, 2], sizes = [2, 27], strides = [1, 1]} : vector<2x29xf32> to vector<2x27xf32>
    %1549 = vector.extract_strided_slice %1257 {offsets = [0, 0], sizes = [2, 27], strides = [1, 1]} : vector<2x29xf32> to vector<2x27xf32>
    %1550 = vector.extract_strided_slice %1257 {offsets = [0, 1], sizes = [2, 27], strides = [1, 1]} : vector<2x29xf32> to vector<2x27xf32>
    %1551 = vector.extract_strided_slice %1257 {offsets = [0, 2], sizes = [2, 27], strides = [1, 1]} : vector<2x29xf32> to vector<2x27xf32>
    %1552 = vector.extract_strided_slice %1348 {offsets = [0, 0], sizes = [2, 27], strides = [1, 1]} : vector<2x29xf32> to vector<2x27xf32>
    %1553 = vector.extract_strided_slice %1348 {offsets = [0, 1], sizes = [2, 27], strides = [1, 1]} : vector<2x29xf32> to vector<2x27xf32>
    %1554 = vector.extract_strided_slice %1348 {offsets = [0, 2], sizes = [2, 27], strides = [1, 1]} : vector<2x29xf32> to vector<2x27xf32>
    %1555 = vector.extract_strided_slice %1439 {offsets = [0, 0], sizes = [2, 27], strides = [1, 1]} : vector<2x29xf32> to vector<2x27xf32>
    %1556 = vector.extract_strided_slice %1439 {offsets = [0, 1], sizes = [2, 27], strides = [1, 1]} : vector<2x29xf32> to vector<2x27xf32>
    %1557 = vector.extract_strided_slice %1439 {offsets = [0, 2], sizes = [2, 27], strides = [1, 1]} : vector<2x29xf32> to vector<2x27xf32>
    %1558 = vector.extract_strided_slice %1530 {offsets = [0, 0], sizes = [2, 27], strides = [1, 1]} : vector<2x29xf32> to vector<2x27xf32>
    %1559 = vector.extract_strided_slice %1530 {offsets = [0, 1], sizes = [2, 27], strides = [1, 1]} : vector<2x29xf32> to vector<2x27xf32>
    %1560 = vector.extract_strided_slice %1530 {offsets = [0, 2], sizes = [2, 27], strides = [1, 1]} : vector<2x29xf32> to vector<2x27xf32>
    %1561 = tpu.iota {dimensions = array<i32: 0>} : vector<27x14xi32>
    %1562 = tpu.iota {dimensions = array<i32: 1>} : vector<27x14xi32>
    %c2_i32_44 = arith.constant 2 : i32
    %1563 = vector.broadcast %c2_i32_44 : i32 to vector<27x14xi32>
    %1564 = arith.muli %1563, %1562 : vector<27x14xi32>
    %1565 = arith.cmpi eq, %1561, %1564 : vector<27x14xi32>
    %1566 = arith.extui %1565 : vector<27x14xi1> to vector<27x14xi32>
    %1567 = arith.sitofp %1566 : vector<27x14xi32> to vector<27x14xf32>
    %c368 = arith.constant 368 : index
    %1568 = memref.load %arg0[%c368] : memref<698xf32, #tpu.memory_space<smem>>
    %1569 = vector.broadcast %1568 : f32 to vector<2x27xf32>
    %1570 = arith.mulf %1569, %1531 : vector<2x27xf32>
    %c369 = arith.constant 369 : index
    %1571 = memref.load %arg0[%c369] : memref<698xf32, #tpu.memory_space<smem>>
    %1572 = vector.broadcast %1571 : f32 to vector<2x27xf32>
    %1573 = arith.mulf %1572, %1532 : vector<2x27xf32>
    %1574 = arith.addf %1570, %1573 : vector<2x27xf32>
    %c370 = arith.constant 370 : index
    %1575 = memref.load %arg0[%c370] : memref<698xf32, #tpu.memory_space<smem>>
    %1576 = vector.broadcast %1575 : f32 to vector<2x27xf32>
    %1577 = arith.mulf %1576, %1533 : vector<2x27xf32>
    %1578 = arith.addf %1574, %1577 : vector<2x27xf32>
    %c371 = arith.constant 371 : index
    %1579 = memref.load %arg0[%c371] : memref<698xf32, #tpu.memory_space<smem>>
    %1580 = vector.broadcast %1579 : f32 to vector<2x27xf32>
    %1581 = arith.mulf %1580, %1534 : vector<2x27xf32>
    %1582 = arith.addf %1578, %1581 : vector<2x27xf32>
    %c372 = arith.constant 372 : index
    %1583 = memref.load %arg0[%c372] : memref<698xf32, #tpu.memory_space<smem>>
    %1584 = vector.broadcast %1583 : f32 to vector<2x27xf32>
    %1585 = arith.mulf %1584, %1535 : vector<2x27xf32>
    %1586 = arith.addf %1582, %1585 : vector<2x27xf32>
    %c373 = arith.constant 373 : index
    %1587 = memref.load %arg0[%c373] : memref<698xf32, #tpu.memory_space<smem>>
    %1588 = vector.broadcast %1587 : f32 to vector<2x27xf32>
    %1589 = arith.mulf %1588, %1536 : vector<2x27xf32>
    %1590 = arith.addf %1586, %1589 : vector<2x27xf32>
    %c374 = arith.constant 374 : index
    %1591 = memref.load %arg0[%c374] : memref<698xf32, #tpu.memory_space<smem>>
    %1592 = vector.broadcast %1591 : f32 to vector<2x27xf32>
    %1593 = arith.mulf %1592, %1537 : vector<2x27xf32>
    %1594 = arith.addf %1590, %1593 : vector<2x27xf32>
    %c375 = arith.constant 375 : index
    %1595 = memref.load %arg0[%c375] : memref<698xf32, #tpu.memory_space<smem>>
    %1596 = vector.broadcast %1595 : f32 to vector<2x27xf32>
    %1597 = arith.mulf %1596, %1538 : vector<2x27xf32>
    %1598 = arith.addf %1594, %1597 : vector<2x27xf32>
    %c376 = arith.constant 376 : index
    %1599 = memref.load %arg0[%c376] : memref<698xf32, #tpu.memory_space<smem>>
    %1600 = vector.broadcast %1599 : f32 to vector<2x27xf32>
    %1601 = arith.mulf %1600, %1539 : vector<2x27xf32>
    %1602 = arith.addf %1598, %1601 : vector<2x27xf32>
    %c377 = arith.constant 377 : index
    %1603 = memref.load %arg0[%c377] : memref<698xf32, #tpu.memory_space<smem>>
    %1604 = vector.broadcast %1603 : f32 to vector<2x27xf32>
    %1605 = arith.mulf %1604, %1540 : vector<2x27xf32>
    %1606 = arith.addf %1602, %1605 : vector<2x27xf32>
    %c378 = arith.constant 378 : index
    %1607 = memref.load %arg0[%c378] : memref<698xf32, #tpu.memory_space<smem>>
    %1608 = vector.broadcast %1607 : f32 to vector<2x27xf32>
    %1609 = arith.mulf %1608, %1541 : vector<2x27xf32>
    %1610 = arith.addf %1606, %1609 : vector<2x27xf32>
    %c379 = arith.constant 379 : index
    %1611 = memref.load %arg0[%c379] : memref<698xf32, #tpu.memory_space<smem>>
    %1612 = vector.broadcast %1611 : f32 to vector<2x27xf32>
    %1613 = arith.mulf %1612, %1542 : vector<2x27xf32>
    %1614 = arith.addf %1610, %1613 : vector<2x27xf32>
    %c380 = arith.constant 380 : index
    %1615 = memref.load %arg0[%c380] : memref<698xf32, #tpu.memory_space<smem>>
    %1616 = vector.broadcast %1615 : f32 to vector<2x27xf32>
    %1617 = arith.mulf %1616, %1543 : vector<2x27xf32>
    %1618 = arith.addf %1614, %1617 : vector<2x27xf32>
    %c381 = arith.constant 381 : index
    %1619 = memref.load %arg0[%c381] : memref<698xf32, #tpu.memory_space<smem>>
    %1620 = vector.broadcast %1619 : f32 to vector<2x27xf32>
    %1621 = arith.mulf %1620, %1544 : vector<2x27xf32>
    %1622 = arith.addf %1618, %1621 : vector<2x27xf32>
    %c382 = arith.constant 382 : index
    %1623 = memref.load %arg0[%c382] : memref<698xf32, #tpu.memory_space<smem>>
    %1624 = vector.broadcast %1623 : f32 to vector<2x27xf32>
    %1625 = arith.mulf %1624, %1545 : vector<2x27xf32>
    %1626 = arith.addf %1622, %1625 : vector<2x27xf32>
    %c383 = arith.constant 383 : index
    %1627 = memref.load %arg0[%c383] : memref<698xf32, #tpu.memory_space<smem>>
    %1628 = vector.broadcast %1627 : f32 to vector<2x27xf32>
    %1629 = arith.mulf %1628, %1546 : vector<2x27xf32>
    %1630 = arith.addf %1626, %1629 : vector<2x27xf32>
    %c384 = arith.constant 384 : index
    %1631 = memref.load %arg0[%c384] : memref<698xf32, #tpu.memory_space<smem>>
    %1632 = vector.broadcast %1631 : f32 to vector<2x27xf32>
    %1633 = arith.mulf %1632, %1547 : vector<2x27xf32>
    %1634 = arith.addf %1630, %1633 : vector<2x27xf32>
    %c385 = arith.constant 385 : index
    %1635 = memref.load %arg0[%c385] : memref<698xf32, #tpu.memory_space<smem>>
    %1636 = vector.broadcast %1635 : f32 to vector<2x27xf32>
    %1637 = arith.mulf %1636, %1548 : vector<2x27xf32>
    %1638 = arith.addf %1634, %1637 : vector<2x27xf32>
    %c386 = arith.constant 386 : index
    %1639 = memref.load %arg0[%c386] : memref<698xf32, #tpu.memory_space<smem>>
    %1640 = vector.broadcast %1639 : f32 to vector<2x27xf32>
    %1641 = arith.mulf %1640, %1549 : vector<2x27xf32>
    %1642 = arith.addf %1638, %1641 : vector<2x27xf32>
    %c387 = arith.constant 387 : index
    %1643 = memref.load %arg0[%c387] : memref<698xf32, #tpu.memory_space<smem>>
    %1644 = vector.broadcast %1643 : f32 to vector<2x27xf32>
    %1645 = arith.mulf %1644, %1550 : vector<2x27xf32>
    %1646 = arith.addf %1642, %1645 : vector<2x27xf32>
    %c388 = arith.constant 388 : index
    %1647 = memref.load %arg0[%c388] : memref<698xf32, #tpu.memory_space<smem>>
    %1648 = vector.broadcast %1647 : f32 to vector<2x27xf32>
    %1649 = arith.mulf %1648, %1551 : vector<2x27xf32>
    %1650 = arith.addf %1646, %1649 : vector<2x27xf32>
    %c389 = arith.constant 389 : index
    %1651 = memref.load %arg0[%c389] : memref<698xf32, #tpu.memory_space<smem>>
    %1652 = vector.broadcast %1651 : f32 to vector<2x27xf32>
    %1653 = arith.mulf %1652, %1552 : vector<2x27xf32>
    %1654 = arith.addf %1650, %1653 : vector<2x27xf32>
    %c390 = arith.constant 390 : index
    %1655 = memref.load %arg0[%c390] : memref<698xf32, #tpu.memory_space<smem>>
    %1656 = vector.broadcast %1655 : f32 to vector<2x27xf32>
    %1657 = arith.mulf %1656, %1553 : vector<2x27xf32>
    %1658 = arith.addf %1654, %1657 : vector<2x27xf32>
    %c391 = arith.constant 391 : index
    %1659 = memref.load %arg0[%c391] : memref<698xf32, #tpu.memory_space<smem>>
    %1660 = vector.broadcast %1659 : f32 to vector<2x27xf32>
    %1661 = arith.mulf %1660, %1554 : vector<2x27xf32>
    %1662 = arith.addf %1658, %1661 : vector<2x27xf32>
    %c392 = arith.constant 392 : index
    %1663 = memref.load %arg0[%c392] : memref<698xf32, #tpu.memory_space<smem>>
    %1664 = vector.broadcast %1663 : f32 to vector<2x27xf32>
    %1665 = arith.mulf %1664, %1555 : vector<2x27xf32>
    %1666 = arith.addf %1662, %1665 : vector<2x27xf32>
    %c393 = arith.constant 393 : index
    %1667 = memref.load %arg0[%c393] : memref<698xf32, #tpu.memory_space<smem>>
    %1668 = vector.broadcast %1667 : f32 to vector<2x27xf32>
    %1669 = arith.mulf %1668, %1556 : vector<2x27xf32>
    %1670 = arith.addf %1666, %1669 : vector<2x27xf32>
    %c394 = arith.constant 394 : index
    %1671 = memref.load %arg0[%c394] : memref<698xf32, #tpu.memory_space<smem>>
    %1672 = vector.broadcast %1671 : f32 to vector<2x27xf32>
    %1673 = arith.mulf %1672, %1557 : vector<2x27xf32>
    %1674 = arith.addf %1670, %1673 : vector<2x27xf32>
    %c395 = arith.constant 395 : index
    %1675 = memref.load %arg0[%c395] : memref<698xf32, #tpu.memory_space<smem>>
    %1676 = vector.broadcast %1675 : f32 to vector<2x27xf32>
    %1677 = arith.mulf %1676, %1558 : vector<2x27xf32>
    %1678 = arith.addf %1674, %1677 : vector<2x27xf32>
    %c396 = arith.constant 396 : index
    %1679 = memref.load %arg0[%c396] : memref<698xf32, #tpu.memory_space<smem>>
    %1680 = vector.broadcast %1679 : f32 to vector<2x27xf32>
    %1681 = arith.mulf %1680, %1559 : vector<2x27xf32>
    %1682 = arith.addf %1678, %1681 : vector<2x27xf32>
    %c397 = arith.constant 397 : index
    %1683 = memref.load %arg0[%c397] : memref<698xf32, #tpu.memory_space<smem>>
    %1684 = vector.broadcast %1683 : f32 to vector<2x27xf32>
    %1685 = arith.mulf %1684, %1560 : vector<2x27xf32>
    %1686 = arith.addf %1682, %1685 : vector<2x27xf32>
    %cst_45 = arith.constant dense<0.000000e+00> : vector<2x14xf32>
    %1687 = tpu.matmul %1686, %1567, %cst_45 {dimension_numbers = #tpu.dot_dimension_numbers<[1], [0], [0], [1], [0, 0, 1, 1], [], []>} : vector<2x27xf32>, vector<27x14xf32>, vector<2x14xf32> -> vector<2x14xf32>
    %c668 = arith.constant 668 : index
    %1688 = memref.load %arg0[%c668] : memref<698xf32, #tpu.memory_space<smem>>
    %1689 = vector.broadcast %1688 : f32 to vector<2x14xf32>
    %1690 = arith.addf %1687, %1689 : vector<2x14xf32>
    %cst_46 = arith.constant 0.000000e+00 : f32
    %1691 = vector.broadcast %cst_46 : f32 to vector<2x14xf32>
    %1692 = arith.maximumf %1690, %1691 : vector<2x14xf32>
    %c678 = arith.constant 678 : index
    %1693 = memref.load %arg0[%c678] : memref<698xf32, #tpu.memory_space<smem>>
    %1694 = vector.broadcast %1693 : f32 to vector<2x14xf32>
    %1695 = arith.mulf %1692, %1694 : vector<2x14xf32>
    %c688 = arith.constant 688 : index
    %1696 = memref.load %arg0[%c688] : memref<698xf32, #tpu.memory_space<smem>>
    %1697 = vector.broadcast %1696 : f32 to vector<2x14xf32>
    %1698 = arith.addf %1695, %1697 : vector<2x14xf32>
    %c398 = arith.constant 398 : index
    %1699 = memref.load %arg0[%c398] : memref<698xf32, #tpu.memory_space<smem>>
    %1700 = vector.broadcast %1699 : f32 to vector<2x27xf32>
    %1701 = arith.mulf %1700, %1531 : vector<2x27xf32>
    %c399 = arith.constant 399 : index
    %1702 = memref.load %arg0[%c399] : memref<698xf32, #tpu.memory_space<smem>>
    %1703 = vector.broadcast %1702 : f32 to vector<2x27xf32>
    %1704 = arith.mulf %1703, %1532 : vector<2x27xf32>
    %1705 = arith.addf %1701, %1704 : vector<2x27xf32>
    %c400 = arith.constant 400 : index
    %1706 = memref.load %arg0[%c400] : memref<698xf32, #tpu.memory_space<smem>>
    %1707 = vector.broadcast %1706 : f32 to vector<2x27xf32>
    %1708 = arith.mulf %1707, %1533 : vector<2x27xf32>
    %1709 = arith.addf %1705, %1708 : vector<2x27xf32>
    %c401 = arith.constant 401 : index
    %1710 = memref.load %arg0[%c401] : memref<698xf32, #tpu.memory_space<smem>>
    %1711 = vector.broadcast %1710 : f32 to vector<2x27xf32>
    %1712 = arith.mulf %1711, %1534 : vector<2x27xf32>
    %1713 = arith.addf %1709, %1712 : vector<2x27xf32>
    %c402 = arith.constant 402 : index
    %1714 = memref.load %arg0[%c402] : memref<698xf32, #tpu.memory_space<smem>>
    %1715 = vector.broadcast %1714 : f32 to vector<2x27xf32>
    %1716 = arith.mulf %1715, %1535 : vector<2x27xf32>
    %1717 = arith.addf %1713, %1716 : vector<2x27xf32>
    %c403 = arith.constant 403 : index
    %1718 = memref.load %arg0[%c403] : memref<698xf32, #tpu.memory_space<smem>>
    %1719 = vector.broadcast %1718 : f32 to vector<2x27xf32>
    %1720 = arith.mulf %1719, %1536 : vector<2x27xf32>
    %1721 = arith.addf %1717, %1720 : vector<2x27xf32>
    %c404 = arith.constant 404 : index
    %1722 = memref.load %arg0[%c404] : memref<698xf32, #tpu.memory_space<smem>>
    %1723 = vector.broadcast %1722 : f32 to vector<2x27xf32>
    %1724 = arith.mulf %1723, %1537 : vector<2x27xf32>
    %1725 = arith.addf %1721, %1724 : vector<2x27xf32>
    %c405 = arith.constant 405 : index
    %1726 = memref.load %arg0[%c405] : memref<698xf32, #tpu.memory_space<smem>>
    %1727 = vector.broadcast %1726 : f32 to vector<2x27xf32>
    %1728 = arith.mulf %1727, %1538 : vector<2x27xf32>
    %1729 = arith.addf %1725, %1728 : vector<2x27xf32>
    %c406 = arith.constant 406 : index
    %1730 = memref.load %arg0[%c406] : memref<698xf32, #tpu.memory_space<smem>>
    %1731 = vector.broadcast %1730 : f32 to vector<2x27xf32>
    %1732 = arith.mulf %1731, %1539 : vector<2x27xf32>
    %1733 = arith.addf %1729, %1732 : vector<2x27xf32>
    %c407 = arith.constant 407 : index
    %1734 = memref.load %arg0[%c407] : memref<698xf32, #tpu.memory_space<smem>>
    %1735 = vector.broadcast %1734 : f32 to vector<2x27xf32>
    %1736 = arith.mulf %1735, %1540 : vector<2x27xf32>
    %1737 = arith.addf %1733, %1736 : vector<2x27xf32>
    %c408 = arith.constant 408 : index
    %1738 = memref.load %arg0[%c408] : memref<698xf32, #tpu.memory_space<smem>>
    %1739 = vector.broadcast %1738 : f32 to vector<2x27xf32>
    %1740 = arith.mulf %1739, %1541 : vector<2x27xf32>
    %1741 = arith.addf %1737, %1740 : vector<2x27xf32>
    %c409 = arith.constant 409 : index
    %1742 = memref.load %arg0[%c409] : memref<698xf32, #tpu.memory_space<smem>>
    %1743 = vector.broadcast %1742 : f32 to vector<2x27xf32>
    %1744 = arith.mulf %1743, %1542 : vector<2x27xf32>
    %1745 = arith.addf %1741, %1744 : vector<2x27xf32>
    %c410 = arith.constant 410 : index
    %1746 = memref.load %arg0[%c410] : memref<698xf32, #tpu.memory_space<smem>>
    %1747 = vector.broadcast %1746 : f32 to vector<2x27xf32>
    %1748 = arith.mulf %1747, %1543 : vector<2x27xf32>
    %1749 = arith.addf %1745, %1748 : vector<2x27xf32>
    %c411 = arith.constant 411 : index
    %1750 = memref.load %arg0[%c411] : memref<698xf32, #tpu.memory_space<smem>>
    %1751 = vector.broadcast %1750 : f32 to vector<2x27xf32>
    %1752 = arith.mulf %1751, %1544 : vector<2x27xf32>
    %1753 = arith.addf %1749, %1752 : vector<2x27xf32>
    %c412 = arith.constant 412 : index
    %1754 = memref.load %arg0[%c412] : memref<698xf32, #tpu.memory_space<smem>>
    %1755 = vector.broadcast %1754 : f32 to vector<2x27xf32>
    %1756 = arith.mulf %1755, %1545 : vector<2x27xf32>
    %1757 = arith.addf %1753, %1756 : vector<2x27xf32>
    %c413 = arith.constant 413 : index
    %1758 = memref.load %arg0[%c413] : memref<698xf32, #tpu.memory_space<smem>>
    %1759 = vector.broadcast %1758 : f32 to vector<2x27xf32>
    %1760 = arith.mulf %1759, %1546 : vector<2x27xf32>
    %1761 = arith.addf %1757, %1760 : vector<2x27xf32>
    %c414 = arith.constant 414 : index
    %1762 = memref.load %arg0[%c414] : memref<698xf32, #tpu.memory_space<smem>>
    %1763 = vector.broadcast %1762 : f32 to vector<2x27xf32>
    %1764 = arith.mulf %1763, %1547 : vector<2x27xf32>
    %1765 = arith.addf %1761, %1764 : vector<2x27xf32>
    %c415 = arith.constant 415 : index
    %1766 = memref.load %arg0[%c415] : memref<698xf32, #tpu.memory_space<smem>>
    %1767 = vector.broadcast %1766 : f32 to vector<2x27xf32>
    %1768 = arith.mulf %1767, %1548 : vector<2x27xf32>
    %1769 = arith.addf %1765, %1768 : vector<2x27xf32>
    %c416 = arith.constant 416 : index
    %1770 = memref.load %arg0[%c416] : memref<698xf32, #tpu.memory_space<smem>>
    %1771 = vector.broadcast %1770 : f32 to vector<2x27xf32>
    %1772 = arith.mulf %1771, %1549 : vector<2x27xf32>
    %1773 = arith.addf %1769, %1772 : vector<2x27xf32>
    %c417 = arith.constant 417 : index
    %1774 = memref.load %arg0[%c417] : memref<698xf32, #tpu.memory_space<smem>>
    %1775 = vector.broadcast %1774 : f32 to vector<2x27xf32>
    %1776 = arith.mulf %1775, %1550 : vector<2x27xf32>
    %1777 = arith.addf %1773, %1776 : vector<2x27xf32>
    %c418 = arith.constant 418 : index
    %1778 = memref.load %arg0[%c418] : memref<698xf32, #tpu.memory_space<smem>>
    %1779 = vector.broadcast %1778 : f32 to vector<2x27xf32>
    %1780 = arith.mulf %1779, %1551 : vector<2x27xf32>
    %1781 = arith.addf %1777, %1780 : vector<2x27xf32>
    %c419 = arith.constant 419 : index
    %1782 = memref.load %arg0[%c419] : memref<698xf32, #tpu.memory_space<smem>>
    %1783 = vector.broadcast %1782 : f32 to vector<2x27xf32>
    %1784 = arith.mulf %1783, %1552 : vector<2x27xf32>
    %1785 = arith.addf %1781, %1784 : vector<2x27xf32>
    %c420 = arith.constant 420 : index
    %1786 = memref.load %arg0[%c420] : memref<698xf32, #tpu.memory_space<smem>>
    %1787 = vector.broadcast %1786 : f32 to vector<2x27xf32>
    %1788 = arith.mulf %1787, %1553 : vector<2x27xf32>
    %1789 = arith.addf %1785, %1788 : vector<2x27xf32>
    %c421 = arith.constant 421 : index
    %1790 = memref.load %arg0[%c421] : memref<698xf32, #tpu.memory_space<smem>>
    %1791 = vector.broadcast %1790 : f32 to vector<2x27xf32>
    %1792 = arith.mulf %1791, %1554 : vector<2x27xf32>
    %1793 = arith.addf %1789, %1792 : vector<2x27xf32>
    %c422 = arith.constant 422 : index
    %1794 = memref.load %arg0[%c422] : memref<698xf32, #tpu.memory_space<smem>>
    %1795 = vector.broadcast %1794 : f32 to vector<2x27xf32>
    %1796 = arith.mulf %1795, %1555 : vector<2x27xf32>
    %1797 = arith.addf %1793, %1796 : vector<2x27xf32>
    %c423 = arith.constant 423 : index
    %1798 = memref.load %arg0[%c423] : memref<698xf32, #tpu.memory_space<smem>>
    %1799 = vector.broadcast %1798 : f32 to vector<2x27xf32>
    %1800 = arith.mulf %1799, %1556 : vector<2x27xf32>
    %1801 = arith.addf %1797, %1800 : vector<2x27xf32>
    %c424 = arith.constant 424 : index
    %1802 = memref.load %arg0[%c424] : memref<698xf32, #tpu.memory_space<smem>>
    %1803 = vector.broadcast %1802 : f32 to vector<2x27xf32>
    %1804 = arith.mulf %1803, %1557 : vector<2x27xf32>
    %1805 = arith.addf %1801, %1804 : vector<2x27xf32>
    %c425 = arith.constant 425 : index
    %1806 = memref.load %arg0[%c425] : memref<698xf32, #tpu.memory_space<smem>>
    %1807 = vector.broadcast %1806 : f32 to vector<2x27xf32>
    %1808 = arith.mulf %1807, %1558 : vector<2x27xf32>
    %1809 = arith.addf %1805, %1808 : vector<2x27xf32>
    %c426 = arith.constant 426 : index
    %1810 = memref.load %arg0[%c426] : memref<698xf32, #tpu.memory_space<smem>>
    %1811 = vector.broadcast %1810 : f32 to vector<2x27xf32>
    %1812 = arith.mulf %1811, %1559 : vector<2x27xf32>
    %1813 = arith.addf %1809, %1812 : vector<2x27xf32>
    %c427 = arith.constant 427 : index
    %1814 = memref.load %arg0[%c427] : memref<698xf32, #tpu.memory_space<smem>>
    %1815 = vector.broadcast %1814 : f32 to vector<2x27xf32>
    %1816 = arith.mulf %1815, %1560 : vector<2x27xf32>
    %1817 = arith.addf %1813, %1816 : vector<2x27xf32>
    %cst_47 = arith.constant dense<0.000000e+00> : vector<2x14xf32>
    %1818 = tpu.matmul %1817, %1567, %cst_47 {dimension_numbers = #tpu.dot_dimension_numbers<[1], [0], [0], [1], [0, 0, 1, 1], [], []>} : vector<2x27xf32>, vector<27x14xf32>, vector<2x14xf32> -> vector<2x14xf32>
    %c669 = arith.constant 669 : index
    %1819 = memref.load %arg0[%c669] : memref<698xf32, #tpu.memory_space<smem>>
    %1820 = vector.broadcast %1819 : f32 to vector<2x14xf32>
    %1821 = arith.addf %1818, %1820 : vector<2x14xf32>
    %cst_48 = arith.constant 0.000000e+00 : f32
    %1822 = vector.broadcast %cst_48 : f32 to vector<2x14xf32>
    %1823 = arith.maximumf %1821, %1822 : vector<2x14xf32>
    %c679 = arith.constant 679 : index
    %1824 = memref.load %arg0[%c679] : memref<698xf32, #tpu.memory_space<smem>>
    %1825 = vector.broadcast %1824 : f32 to vector<2x14xf32>
    %1826 = arith.mulf %1823, %1825 : vector<2x14xf32>
    %c689 = arith.constant 689 : index
    %1827 = memref.load %arg0[%c689] : memref<698xf32, #tpu.memory_space<smem>>
    %1828 = vector.broadcast %1827 : f32 to vector<2x14xf32>
    %1829 = arith.addf %1826, %1828 : vector<2x14xf32>
    %c428 = arith.constant 428 : index
    %1830 = memref.load %arg0[%c428] : memref<698xf32, #tpu.memory_space<smem>>
    %1831 = vector.broadcast %1830 : f32 to vector<2x27xf32>
    %1832 = arith.mulf %1831, %1531 : vector<2x27xf32>
    %c429 = arith.constant 429 : index
    %1833 = memref.load %arg0[%c429] : memref<698xf32, #tpu.memory_space<smem>>
    %1834 = vector.broadcast %1833 : f32 to vector<2x27xf32>
    %1835 = arith.mulf %1834, %1532 : vector<2x27xf32>
    %1836 = arith.addf %1832, %1835 : vector<2x27xf32>
    %c430 = arith.constant 430 : index
    %1837 = memref.load %arg0[%c430] : memref<698xf32, #tpu.memory_space<smem>>
    %1838 = vector.broadcast %1837 : f32 to vector<2x27xf32>
    %1839 = arith.mulf %1838, %1533 : vector<2x27xf32>
    %1840 = arith.addf %1836, %1839 : vector<2x27xf32>
    %c431 = arith.constant 431 : index
    %1841 = memref.load %arg0[%c431] : memref<698xf32, #tpu.memory_space<smem>>
    %1842 = vector.broadcast %1841 : f32 to vector<2x27xf32>
    %1843 = arith.mulf %1842, %1534 : vector<2x27xf32>
    %1844 = arith.addf %1840, %1843 : vector<2x27xf32>
    %c432 = arith.constant 432 : index
    %1845 = memref.load %arg0[%c432] : memref<698xf32, #tpu.memory_space<smem>>
    %1846 = vector.broadcast %1845 : f32 to vector<2x27xf32>
    %1847 = arith.mulf %1846, %1535 : vector<2x27xf32>
    %1848 = arith.addf %1844, %1847 : vector<2x27xf32>
    %c433 = arith.constant 433 : index
    %1849 = memref.load %arg0[%c433] : memref<698xf32, #tpu.memory_space<smem>>
    %1850 = vector.broadcast %1849 : f32 to vector<2x27xf32>
    %1851 = arith.mulf %1850, %1536 : vector<2x27xf32>
    %1852 = arith.addf %1848, %1851 : vector<2x27xf32>
    %c434 = arith.constant 434 : index
    %1853 = memref.load %arg0[%c434] : memref<698xf32, #tpu.memory_space<smem>>
    %1854 = vector.broadcast %1853 : f32 to vector<2x27xf32>
    %1855 = arith.mulf %1854, %1537 : vector<2x27xf32>
    %1856 = arith.addf %1852, %1855 : vector<2x27xf32>
    %c435 = arith.constant 435 : index
    %1857 = memref.load %arg0[%c435] : memref<698xf32, #tpu.memory_space<smem>>
    %1858 = vector.broadcast %1857 : f32 to vector<2x27xf32>
    %1859 = arith.mulf %1858, %1538 : vector<2x27xf32>
    %1860 = arith.addf %1856, %1859 : vector<2x27xf32>
    %c436 = arith.constant 436 : index
    %1861 = memref.load %arg0[%c436] : memref<698xf32, #tpu.memory_space<smem>>
    %1862 = vector.broadcast %1861 : f32 to vector<2x27xf32>
    %1863 = arith.mulf %1862, %1539 : vector<2x27xf32>
    %1864 = arith.addf %1860, %1863 : vector<2x27xf32>
    %c437 = arith.constant 437 : index
    %1865 = memref.load %arg0[%c437] : memref<698xf32, #tpu.memory_space<smem>>
    %1866 = vector.broadcast %1865 : f32 to vector<2x27xf32>
    %1867 = arith.mulf %1866, %1540 : vector<2x27xf32>
    %1868 = arith.addf %1864, %1867 : vector<2x27xf32>
    %c438 = arith.constant 438 : index
    %1869 = memref.load %arg0[%c438] : memref<698xf32, #tpu.memory_space<smem>>
    %1870 = vector.broadcast %1869 : f32 to vector<2x27xf32>
    %1871 = arith.mulf %1870, %1541 : vector<2x27xf32>
    %1872 = arith.addf %1868, %1871 : vector<2x27xf32>
    %c439 = arith.constant 439 : index
    %1873 = memref.load %arg0[%c439] : memref<698xf32, #tpu.memory_space<smem>>
    %1874 = vector.broadcast %1873 : f32 to vector<2x27xf32>
    %1875 = arith.mulf %1874, %1542 : vector<2x27xf32>
    %1876 = arith.addf %1872, %1875 : vector<2x27xf32>
    %c440 = arith.constant 440 : index
    %1877 = memref.load %arg0[%c440] : memref<698xf32, #tpu.memory_space<smem>>
    %1878 = vector.broadcast %1877 : f32 to vector<2x27xf32>
    %1879 = arith.mulf %1878, %1543 : vector<2x27xf32>
    %1880 = arith.addf %1876, %1879 : vector<2x27xf32>
    %c441 = arith.constant 441 : index
    %1881 = memref.load %arg0[%c441] : memref<698xf32, #tpu.memory_space<smem>>
    %1882 = vector.broadcast %1881 : f32 to vector<2x27xf32>
    %1883 = arith.mulf %1882, %1544 : vector<2x27xf32>
    %1884 = arith.addf %1880, %1883 : vector<2x27xf32>
    %c442 = arith.constant 442 : index
    %1885 = memref.load %arg0[%c442] : memref<698xf32, #tpu.memory_space<smem>>
    %1886 = vector.broadcast %1885 : f32 to vector<2x27xf32>
    %1887 = arith.mulf %1886, %1545 : vector<2x27xf32>
    %1888 = arith.addf %1884, %1887 : vector<2x27xf32>
    %c443 = arith.constant 443 : index
    %1889 = memref.load %arg0[%c443] : memref<698xf32, #tpu.memory_space<smem>>
    %1890 = vector.broadcast %1889 : f32 to vector<2x27xf32>
    %1891 = arith.mulf %1890, %1546 : vector<2x27xf32>
    %1892 = arith.addf %1888, %1891 : vector<2x27xf32>
    %c444 = arith.constant 444 : index
    %1893 = memref.load %arg0[%c444] : memref<698xf32, #tpu.memory_space<smem>>
    %1894 = vector.broadcast %1893 : f32 to vector<2x27xf32>
    %1895 = arith.mulf %1894, %1547 : vector<2x27xf32>
    %1896 = arith.addf %1892, %1895 : vector<2x27xf32>
    %c445 = arith.constant 445 : index
    %1897 = memref.load %arg0[%c445] : memref<698xf32, #tpu.memory_space<smem>>
    %1898 = vector.broadcast %1897 : f32 to vector<2x27xf32>
    %1899 = arith.mulf %1898, %1548 : vector<2x27xf32>
    %1900 = arith.addf %1896, %1899 : vector<2x27xf32>
    %c446 = arith.constant 446 : index
    %1901 = memref.load %arg0[%c446] : memref<698xf32, #tpu.memory_space<smem>>
    %1902 = vector.broadcast %1901 : f32 to vector<2x27xf32>
    %1903 = arith.mulf %1902, %1549 : vector<2x27xf32>
    %1904 = arith.addf %1900, %1903 : vector<2x27xf32>
    %c447 = arith.constant 447 : index
    %1905 = memref.load %arg0[%c447] : memref<698xf32, #tpu.memory_space<smem>>
    %1906 = vector.broadcast %1905 : f32 to vector<2x27xf32>
    %1907 = arith.mulf %1906, %1550 : vector<2x27xf32>
    %1908 = arith.addf %1904, %1907 : vector<2x27xf32>
    %c448 = arith.constant 448 : index
    %1909 = memref.load %arg0[%c448] : memref<698xf32, #tpu.memory_space<smem>>
    %1910 = vector.broadcast %1909 : f32 to vector<2x27xf32>
    %1911 = arith.mulf %1910, %1551 : vector<2x27xf32>
    %1912 = arith.addf %1908, %1911 : vector<2x27xf32>
    %c449 = arith.constant 449 : index
    %1913 = memref.load %arg0[%c449] : memref<698xf32, #tpu.memory_space<smem>>
    %1914 = vector.broadcast %1913 : f32 to vector<2x27xf32>
    %1915 = arith.mulf %1914, %1552 : vector<2x27xf32>
    %1916 = arith.addf %1912, %1915 : vector<2x27xf32>
    %c450 = arith.constant 450 : index
    %1917 = memref.load %arg0[%c450] : memref<698xf32, #tpu.memory_space<smem>>
    %1918 = vector.broadcast %1917 : f32 to vector<2x27xf32>
    %1919 = arith.mulf %1918, %1553 : vector<2x27xf32>
    %1920 = arith.addf %1916, %1919 : vector<2x27xf32>
    %c451 = arith.constant 451 : index
    %1921 = memref.load %arg0[%c451] : memref<698xf32, #tpu.memory_space<smem>>
    %1922 = vector.broadcast %1921 : f32 to vector<2x27xf32>
    %1923 = arith.mulf %1922, %1554 : vector<2x27xf32>
    %1924 = arith.addf %1920, %1923 : vector<2x27xf32>
    %c452 = arith.constant 452 : index
    %1925 = memref.load %arg0[%c452] : memref<698xf32, #tpu.memory_space<smem>>
    %1926 = vector.broadcast %1925 : f32 to vector<2x27xf32>
    %1927 = arith.mulf %1926, %1555 : vector<2x27xf32>
    %1928 = arith.addf %1924, %1927 : vector<2x27xf32>
    %c453 = arith.constant 453 : index
    %1929 = memref.load %arg0[%c453] : memref<698xf32, #tpu.memory_space<smem>>
    %1930 = vector.broadcast %1929 : f32 to vector<2x27xf32>
    %1931 = arith.mulf %1930, %1556 : vector<2x27xf32>
    %1932 = arith.addf %1928, %1931 : vector<2x27xf32>
    %c454 = arith.constant 454 : index
    %1933 = memref.load %arg0[%c454] : memref<698xf32, #tpu.memory_space<smem>>
    %1934 = vector.broadcast %1933 : f32 to vector<2x27xf32>
    %1935 = arith.mulf %1934, %1557 : vector<2x27xf32>
    %1936 = arith.addf %1932, %1935 : vector<2x27xf32>
    %c455 = arith.constant 455 : index
    %1937 = memref.load %arg0[%c455] : memref<698xf32, #tpu.memory_space<smem>>
    %1938 = vector.broadcast %1937 : f32 to vector<2x27xf32>
    %1939 = arith.mulf %1938, %1558 : vector<2x27xf32>
    %1940 = arith.addf %1936, %1939 : vector<2x27xf32>
    %c456 = arith.constant 456 : index
    %1941 = memref.load %arg0[%c456] : memref<698xf32, #tpu.memory_space<smem>>
    %1942 = vector.broadcast %1941 : f32 to vector<2x27xf32>
    %1943 = arith.mulf %1942, %1559 : vector<2x27xf32>
    %1944 = arith.addf %1940, %1943 : vector<2x27xf32>
    %c457 = arith.constant 457 : index
    %1945 = memref.load %arg0[%c457] : memref<698xf32, #tpu.memory_space<smem>>
    %1946 = vector.broadcast %1945 : f32 to vector<2x27xf32>
    %1947 = arith.mulf %1946, %1560 : vector<2x27xf32>
    %1948 = arith.addf %1944, %1947 : vector<2x27xf32>
    %cst_49 = arith.constant dense<0.000000e+00> : vector<2x14xf32>
    %1949 = tpu.matmul %1948, %1567, %cst_49 {dimension_numbers = #tpu.dot_dimension_numbers<[1], [0], [0], [1], [0, 0, 1, 1], [], []>} : vector<2x27xf32>, vector<27x14xf32>, vector<2x14xf32> -> vector<2x14xf32>
    %c670 = arith.constant 670 : index
    %1950 = memref.load %arg0[%c670] : memref<698xf32, #tpu.memory_space<smem>>
    %1951 = vector.broadcast %1950 : f32 to vector<2x14xf32>
    %1952 = arith.addf %1949, %1951 : vector<2x14xf32>
    %cst_50 = arith.constant 0.000000e+00 : f32
    %1953 = vector.broadcast %cst_50 : f32 to vector<2x14xf32>
    %1954 = arith.maximumf %1952, %1953 : vector<2x14xf32>
    %c680 = arith.constant 680 : index
    %1955 = memref.load %arg0[%c680] : memref<698xf32, #tpu.memory_space<smem>>
    %1956 = vector.broadcast %1955 : f32 to vector<2x14xf32>
    %1957 = arith.mulf %1954, %1956 : vector<2x14xf32>
    %c690 = arith.constant 690 : index
    %1958 = memref.load %arg0[%c690] : memref<698xf32, #tpu.memory_space<smem>>
    %1959 = vector.broadcast %1958 : f32 to vector<2x14xf32>
    %1960 = arith.addf %1957, %1959 : vector<2x14xf32>
    %c458 = arith.constant 458 : index
    %1961 = memref.load %arg0[%c458] : memref<698xf32, #tpu.memory_space<smem>>
    %1962 = vector.broadcast %1961 : f32 to vector<2x27xf32>
    %1963 = arith.mulf %1962, %1531 : vector<2x27xf32>
    %c459 = arith.constant 459 : index
    %1964 = memref.load %arg0[%c459] : memref<698xf32, #tpu.memory_space<smem>>
    %1965 = vector.broadcast %1964 : f32 to vector<2x27xf32>
    %1966 = arith.mulf %1965, %1532 : vector<2x27xf32>
    %1967 = arith.addf %1963, %1966 : vector<2x27xf32>
    %c460 = arith.constant 460 : index
    %1968 = memref.load %arg0[%c460] : memref<698xf32, #tpu.memory_space<smem>>
    %1969 = vector.broadcast %1968 : f32 to vector<2x27xf32>
    %1970 = arith.mulf %1969, %1533 : vector<2x27xf32>
    %1971 = arith.addf %1967, %1970 : vector<2x27xf32>
    %c461 = arith.constant 461 : index
    %1972 = memref.load %arg0[%c461] : memref<698xf32, #tpu.memory_space<smem>>
    %1973 = vector.broadcast %1972 : f32 to vector<2x27xf32>
    %1974 = arith.mulf %1973, %1534 : vector<2x27xf32>
    %1975 = arith.addf %1971, %1974 : vector<2x27xf32>
    %c462 = arith.constant 462 : index
    %1976 = memref.load %arg0[%c462] : memref<698xf32, #tpu.memory_space<smem>>
    %1977 = vector.broadcast %1976 : f32 to vector<2x27xf32>
    %1978 = arith.mulf %1977, %1535 : vector<2x27xf32>
    %1979 = arith.addf %1975, %1978 : vector<2x27xf32>
    %c463 = arith.constant 463 : index
    %1980 = memref.load %arg0[%c463] : memref<698xf32, #tpu.memory_space<smem>>
    %1981 = vector.broadcast %1980 : f32 to vector<2x27xf32>
    %1982 = arith.mulf %1981, %1536 : vector<2x27xf32>
    %1983 = arith.addf %1979, %1982 : vector<2x27xf32>
    %c464 = arith.constant 464 : index
    %1984 = memref.load %arg0[%c464] : memref<698xf32, #tpu.memory_space<smem>>
    %1985 = vector.broadcast %1984 : f32 to vector<2x27xf32>
    %1986 = arith.mulf %1985, %1537 : vector<2x27xf32>
    %1987 = arith.addf %1983, %1986 : vector<2x27xf32>
    %c465 = arith.constant 465 : index
    %1988 = memref.load %arg0[%c465] : memref<698xf32, #tpu.memory_space<smem>>
    %1989 = vector.broadcast %1988 : f32 to vector<2x27xf32>
    %1990 = arith.mulf %1989, %1538 : vector<2x27xf32>
    %1991 = arith.addf %1987, %1990 : vector<2x27xf32>
    %c466 = arith.constant 466 : index
    %1992 = memref.load %arg0[%c466] : memref<698xf32, #tpu.memory_space<smem>>
    %1993 = vector.broadcast %1992 : f32 to vector<2x27xf32>
    %1994 = arith.mulf %1993, %1539 : vector<2x27xf32>
    %1995 = arith.addf %1991, %1994 : vector<2x27xf32>
    %c467 = arith.constant 467 : index
    %1996 = memref.load %arg0[%c467] : memref<698xf32, #tpu.memory_space<smem>>
    %1997 = vector.broadcast %1996 : f32 to vector<2x27xf32>
    %1998 = arith.mulf %1997, %1540 : vector<2x27xf32>
    %1999 = arith.addf %1995, %1998 : vector<2x27xf32>
    %c468 = arith.constant 468 : index
    %2000 = memref.load %arg0[%c468] : memref<698xf32, #tpu.memory_space<smem>>
    %2001 = vector.broadcast %2000 : f32 to vector<2x27xf32>
    %2002 = arith.mulf %2001, %1541 : vector<2x27xf32>
    %2003 = arith.addf %1999, %2002 : vector<2x27xf32>
    %c469 = arith.constant 469 : index
    %2004 = memref.load %arg0[%c469] : memref<698xf32, #tpu.memory_space<smem>>
    %2005 = vector.broadcast %2004 : f32 to vector<2x27xf32>
    %2006 = arith.mulf %2005, %1542 : vector<2x27xf32>
    %2007 = arith.addf %2003, %2006 : vector<2x27xf32>
    %c470 = arith.constant 470 : index
    %2008 = memref.load %arg0[%c470] : memref<698xf32, #tpu.memory_space<smem>>
    %2009 = vector.broadcast %2008 : f32 to vector<2x27xf32>
    %2010 = arith.mulf %2009, %1543 : vector<2x27xf32>
    %2011 = arith.addf %2007, %2010 : vector<2x27xf32>
    %c471 = arith.constant 471 : index
    %2012 = memref.load %arg0[%c471] : memref<698xf32, #tpu.memory_space<smem>>
    %2013 = vector.broadcast %2012 : f32 to vector<2x27xf32>
    %2014 = arith.mulf %2013, %1544 : vector<2x27xf32>
    %2015 = arith.addf %2011, %2014 : vector<2x27xf32>
    %c472 = arith.constant 472 : index
    %2016 = memref.load %arg0[%c472] : memref<698xf32, #tpu.memory_space<smem>>
    %2017 = vector.broadcast %2016 : f32 to vector<2x27xf32>
    %2018 = arith.mulf %2017, %1545 : vector<2x27xf32>
    %2019 = arith.addf %2015, %2018 : vector<2x27xf32>
    %c473 = arith.constant 473 : index
    %2020 = memref.load %arg0[%c473] : memref<698xf32, #tpu.memory_space<smem>>
    %2021 = vector.broadcast %2020 : f32 to vector<2x27xf32>
    %2022 = arith.mulf %2021, %1546 : vector<2x27xf32>
    %2023 = arith.addf %2019, %2022 : vector<2x27xf32>
    %c474 = arith.constant 474 : index
    %2024 = memref.load %arg0[%c474] : memref<698xf32, #tpu.memory_space<smem>>
    %2025 = vector.broadcast %2024 : f32 to vector<2x27xf32>
    %2026 = arith.mulf %2025, %1547 : vector<2x27xf32>
    %2027 = arith.addf %2023, %2026 : vector<2x27xf32>
    %c475 = arith.constant 475 : index
    %2028 = memref.load %arg0[%c475] : memref<698xf32, #tpu.memory_space<smem>>
    %2029 = vector.broadcast %2028 : f32 to vector<2x27xf32>
    %2030 = arith.mulf %2029, %1548 : vector<2x27xf32>
    %2031 = arith.addf %2027, %2030 : vector<2x27xf32>
    %c476 = arith.constant 476 : index
    %2032 = memref.load %arg0[%c476] : memref<698xf32, #tpu.memory_space<smem>>
    %2033 = vector.broadcast %2032 : f32 to vector<2x27xf32>
    %2034 = arith.mulf %2033, %1549 : vector<2x27xf32>
    %2035 = arith.addf %2031, %2034 : vector<2x27xf32>
    %c477 = arith.constant 477 : index
    %2036 = memref.load %arg0[%c477] : memref<698xf32, #tpu.memory_space<smem>>
    %2037 = vector.broadcast %2036 : f32 to vector<2x27xf32>
    %2038 = arith.mulf %2037, %1550 : vector<2x27xf32>
    %2039 = arith.addf %2035, %2038 : vector<2x27xf32>
    %c478 = arith.constant 478 : index
    %2040 = memref.load %arg0[%c478] : memref<698xf32, #tpu.memory_space<smem>>
    %2041 = vector.broadcast %2040 : f32 to vector<2x27xf32>
    %2042 = arith.mulf %2041, %1551 : vector<2x27xf32>
    %2043 = arith.addf %2039, %2042 : vector<2x27xf32>
    %c479 = arith.constant 479 : index
    %2044 = memref.load %arg0[%c479] : memref<698xf32, #tpu.memory_space<smem>>
    %2045 = vector.broadcast %2044 : f32 to vector<2x27xf32>
    %2046 = arith.mulf %2045, %1552 : vector<2x27xf32>
    %2047 = arith.addf %2043, %2046 : vector<2x27xf32>
    %c480 = arith.constant 480 : index
    %2048 = memref.load %arg0[%c480] : memref<698xf32, #tpu.memory_space<smem>>
    %2049 = vector.broadcast %2048 : f32 to vector<2x27xf32>
    %2050 = arith.mulf %2049, %1553 : vector<2x27xf32>
    %2051 = arith.addf %2047, %2050 : vector<2x27xf32>
    %c481 = arith.constant 481 : index
    %2052 = memref.load %arg0[%c481] : memref<698xf32, #tpu.memory_space<smem>>
    %2053 = vector.broadcast %2052 : f32 to vector<2x27xf32>
    %2054 = arith.mulf %2053, %1554 : vector<2x27xf32>
    %2055 = arith.addf %2051, %2054 : vector<2x27xf32>
    %c482 = arith.constant 482 : index
    %2056 = memref.load %arg0[%c482] : memref<698xf32, #tpu.memory_space<smem>>
    %2057 = vector.broadcast %2056 : f32 to vector<2x27xf32>
    %2058 = arith.mulf %2057, %1555 : vector<2x27xf32>
    %2059 = arith.addf %2055, %2058 : vector<2x27xf32>
    %c483 = arith.constant 483 : index
    %2060 = memref.load %arg0[%c483] : memref<698xf32, #tpu.memory_space<smem>>
    %2061 = vector.broadcast %2060 : f32 to vector<2x27xf32>
    %2062 = arith.mulf %2061, %1556 : vector<2x27xf32>
    %2063 = arith.addf %2059, %2062 : vector<2x27xf32>
    %c484 = arith.constant 484 : index
    %2064 = memref.load %arg0[%c484] : memref<698xf32, #tpu.memory_space<smem>>
    %2065 = vector.broadcast %2064 : f32 to vector<2x27xf32>
    %2066 = arith.mulf %2065, %1557 : vector<2x27xf32>
    %2067 = arith.addf %2063, %2066 : vector<2x27xf32>
    %c485 = arith.constant 485 : index
    %2068 = memref.load %arg0[%c485] : memref<698xf32, #tpu.memory_space<smem>>
    %2069 = vector.broadcast %2068 : f32 to vector<2x27xf32>
    %2070 = arith.mulf %2069, %1558 : vector<2x27xf32>
    %2071 = arith.addf %2067, %2070 : vector<2x27xf32>
    %c486 = arith.constant 486 : index
    %2072 = memref.load %arg0[%c486] : memref<698xf32, #tpu.memory_space<smem>>
    %2073 = vector.broadcast %2072 : f32 to vector<2x27xf32>
    %2074 = arith.mulf %2073, %1559 : vector<2x27xf32>
    %2075 = arith.addf %2071, %2074 : vector<2x27xf32>
    %c487 = arith.constant 487 : index
    %2076 = memref.load %arg0[%c487] : memref<698xf32, #tpu.memory_space<smem>>
    %2077 = vector.broadcast %2076 : f32 to vector<2x27xf32>
    %2078 = arith.mulf %2077, %1560 : vector<2x27xf32>
    %2079 = arith.addf %2075, %2078 : vector<2x27xf32>
    %cst_51 = arith.constant dense<0.000000e+00> : vector<2x14xf32>
    %2080 = tpu.matmul %2079, %1567, %cst_51 {dimension_numbers = #tpu.dot_dimension_numbers<[1], [0], [0], [1], [0, 0, 1, 1], [], []>} : vector<2x27xf32>, vector<27x14xf32>, vector<2x14xf32> -> vector<2x14xf32>
    %c671 = arith.constant 671 : index
    %2081 = memref.load %arg0[%c671] : memref<698xf32, #tpu.memory_space<smem>>
    %2082 = vector.broadcast %2081 : f32 to vector<2x14xf32>
    %2083 = arith.addf %2080, %2082 : vector<2x14xf32>
    %cst_52 = arith.constant 0.000000e+00 : f32
    %2084 = vector.broadcast %cst_52 : f32 to vector<2x14xf32>
    %2085 = arith.maximumf %2083, %2084 : vector<2x14xf32>
    %c681 = arith.constant 681 : index
    %2086 = memref.load %arg0[%c681] : memref<698xf32, #tpu.memory_space<smem>>
    %2087 = vector.broadcast %2086 : f32 to vector<2x14xf32>
    %2088 = arith.mulf %2085, %2087 : vector<2x14xf32>
    %c691 = arith.constant 691 : index
    %2089 = memref.load %arg0[%c691] : memref<698xf32, #tpu.memory_space<smem>>
    %2090 = vector.broadcast %2089 : f32 to vector<2x14xf32>
    %2091 = arith.addf %2088, %2090 : vector<2x14xf32>
    %c488 = arith.constant 488 : index
    %2092 = memref.load %arg0[%c488] : memref<698xf32, #tpu.memory_space<smem>>
    %2093 = vector.broadcast %2092 : f32 to vector<2x27xf32>
    %2094 = arith.mulf %2093, %1531 : vector<2x27xf32>
    %c489 = arith.constant 489 : index
    %2095 = memref.load %arg0[%c489] : memref<698xf32, #tpu.memory_space<smem>>
    %2096 = vector.broadcast %2095 : f32 to vector<2x27xf32>
    %2097 = arith.mulf %2096, %1532 : vector<2x27xf32>
    %2098 = arith.addf %2094, %2097 : vector<2x27xf32>
    %c490 = arith.constant 490 : index
    %2099 = memref.load %arg0[%c490] : memref<698xf32, #tpu.memory_space<smem>>
    %2100 = vector.broadcast %2099 : f32 to vector<2x27xf32>
    %2101 = arith.mulf %2100, %1533 : vector<2x27xf32>
    %2102 = arith.addf %2098, %2101 : vector<2x27xf32>
    %c491 = arith.constant 491 : index
    %2103 = memref.load %arg0[%c491] : memref<698xf32, #tpu.memory_space<smem>>
    %2104 = vector.broadcast %2103 : f32 to vector<2x27xf32>
    %2105 = arith.mulf %2104, %1534 : vector<2x27xf32>
    %2106 = arith.addf %2102, %2105 : vector<2x27xf32>
    %c492 = arith.constant 492 : index
    %2107 = memref.load %arg0[%c492] : memref<698xf32, #tpu.memory_space<smem>>
    %2108 = vector.broadcast %2107 : f32 to vector<2x27xf32>
    %2109 = arith.mulf %2108, %1535 : vector<2x27xf32>
    %2110 = arith.addf %2106, %2109 : vector<2x27xf32>
    %c493 = arith.constant 493 : index
    %2111 = memref.load %arg0[%c493] : memref<698xf32, #tpu.memory_space<smem>>
    %2112 = vector.broadcast %2111 : f32 to vector<2x27xf32>
    %2113 = arith.mulf %2112, %1536 : vector<2x27xf32>
    %2114 = arith.addf %2110, %2113 : vector<2x27xf32>
    %c494 = arith.constant 494 : index
    %2115 = memref.load %arg0[%c494] : memref<698xf32, #tpu.memory_space<smem>>
    %2116 = vector.broadcast %2115 : f32 to vector<2x27xf32>
    %2117 = arith.mulf %2116, %1537 : vector<2x27xf32>
    %2118 = arith.addf %2114, %2117 : vector<2x27xf32>
    %c495 = arith.constant 495 : index
    %2119 = memref.load %arg0[%c495] : memref<698xf32, #tpu.memory_space<smem>>
    %2120 = vector.broadcast %2119 : f32 to vector<2x27xf32>
    %2121 = arith.mulf %2120, %1538 : vector<2x27xf32>
    %2122 = arith.addf %2118, %2121 : vector<2x27xf32>
    %c496 = arith.constant 496 : index
    %2123 = memref.load %arg0[%c496] : memref<698xf32, #tpu.memory_space<smem>>
    %2124 = vector.broadcast %2123 : f32 to vector<2x27xf32>
    %2125 = arith.mulf %2124, %1539 : vector<2x27xf32>
    %2126 = arith.addf %2122, %2125 : vector<2x27xf32>
    %c497 = arith.constant 497 : index
    %2127 = memref.load %arg0[%c497] : memref<698xf32, #tpu.memory_space<smem>>
    %2128 = vector.broadcast %2127 : f32 to vector<2x27xf32>
    %2129 = arith.mulf %2128, %1540 : vector<2x27xf32>
    %2130 = arith.addf %2126, %2129 : vector<2x27xf32>
    %c498 = arith.constant 498 : index
    %2131 = memref.load %arg0[%c498] : memref<698xf32, #tpu.memory_space<smem>>
    %2132 = vector.broadcast %2131 : f32 to vector<2x27xf32>
    %2133 = arith.mulf %2132, %1541 : vector<2x27xf32>
    %2134 = arith.addf %2130, %2133 : vector<2x27xf32>
    %c499 = arith.constant 499 : index
    %2135 = memref.load %arg0[%c499] : memref<698xf32, #tpu.memory_space<smem>>
    %2136 = vector.broadcast %2135 : f32 to vector<2x27xf32>
    %2137 = arith.mulf %2136, %1542 : vector<2x27xf32>
    %2138 = arith.addf %2134, %2137 : vector<2x27xf32>
    %c500 = arith.constant 500 : index
    %2139 = memref.load %arg0[%c500] : memref<698xf32, #tpu.memory_space<smem>>
    %2140 = vector.broadcast %2139 : f32 to vector<2x27xf32>
    %2141 = arith.mulf %2140, %1543 : vector<2x27xf32>
    %2142 = arith.addf %2138, %2141 : vector<2x27xf32>
    %c501 = arith.constant 501 : index
    %2143 = memref.load %arg0[%c501] : memref<698xf32, #tpu.memory_space<smem>>
    %2144 = vector.broadcast %2143 : f32 to vector<2x27xf32>
    %2145 = arith.mulf %2144, %1544 : vector<2x27xf32>
    %2146 = arith.addf %2142, %2145 : vector<2x27xf32>
    %c502 = arith.constant 502 : index
    %2147 = memref.load %arg0[%c502] : memref<698xf32, #tpu.memory_space<smem>>
    %2148 = vector.broadcast %2147 : f32 to vector<2x27xf32>
    %2149 = arith.mulf %2148, %1545 : vector<2x27xf32>
    %2150 = arith.addf %2146, %2149 : vector<2x27xf32>
    %c503 = arith.constant 503 : index
    %2151 = memref.load %arg0[%c503] : memref<698xf32, #tpu.memory_space<smem>>
    %2152 = vector.broadcast %2151 : f32 to vector<2x27xf32>
    %2153 = arith.mulf %2152, %1546 : vector<2x27xf32>
    %2154 = arith.addf %2150, %2153 : vector<2x27xf32>
    %c504 = arith.constant 504 : index
    %2155 = memref.load %arg0[%c504] : memref<698xf32, #tpu.memory_space<smem>>
    %2156 = vector.broadcast %2155 : f32 to vector<2x27xf32>
    %2157 = arith.mulf %2156, %1547 : vector<2x27xf32>
    %2158 = arith.addf %2154, %2157 : vector<2x27xf32>
    %c505 = arith.constant 505 : index
    %2159 = memref.load %arg0[%c505] : memref<698xf32, #tpu.memory_space<smem>>
    %2160 = vector.broadcast %2159 : f32 to vector<2x27xf32>
    %2161 = arith.mulf %2160, %1548 : vector<2x27xf32>
    %2162 = arith.addf %2158, %2161 : vector<2x27xf32>
    %c506 = arith.constant 506 : index
    %2163 = memref.load %arg0[%c506] : memref<698xf32, #tpu.memory_space<smem>>
    %2164 = vector.broadcast %2163 : f32 to vector<2x27xf32>
    %2165 = arith.mulf %2164, %1549 : vector<2x27xf32>
    %2166 = arith.addf %2162, %2165 : vector<2x27xf32>
    %c507 = arith.constant 507 : index
    %2167 = memref.load %arg0[%c507] : memref<698xf32, #tpu.memory_space<smem>>
    %2168 = vector.broadcast %2167 : f32 to vector<2x27xf32>
    %2169 = arith.mulf %2168, %1550 : vector<2x27xf32>
    %2170 = arith.addf %2166, %2169 : vector<2x27xf32>
    %c508 = arith.constant 508 : index
    %2171 = memref.load %arg0[%c508] : memref<698xf32, #tpu.memory_space<smem>>
    %2172 = vector.broadcast %2171 : f32 to vector<2x27xf32>
    %2173 = arith.mulf %2172, %1551 : vector<2x27xf32>
    %2174 = arith.addf %2170, %2173 : vector<2x27xf32>
    %c509 = arith.constant 509 : index
    %2175 = memref.load %arg0[%c509] : memref<698xf32, #tpu.memory_space<smem>>
    %2176 = vector.broadcast %2175 : f32 to vector<2x27xf32>
    %2177 = arith.mulf %2176, %1552 : vector<2x27xf32>
    %2178 = arith.addf %2174, %2177 : vector<2x27xf32>
    %c510 = arith.constant 510 : index
    %2179 = memref.load %arg0[%c510] : memref<698xf32, #tpu.memory_space<smem>>
    %2180 = vector.broadcast %2179 : f32 to vector<2x27xf32>
    %2181 = arith.mulf %2180, %1553 : vector<2x27xf32>
    %2182 = arith.addf %2178, %2181 : vector<2x27xf32>
    %c511 = arith.constant 511 : index
    %2183 = memref.load %arg0[%c511] : memref<698xf32, #tpu.memory_space<smem>>
    %2184 = vector.broadcast %2183 : f32 to vector<2x27xf32>
    %2185 = arith.mulf %2184, %1554 : vector<2x27xf32>
    %2186 = arith.addf %2182, %2185 : vector<2x27xf32>
    %c512 = arith.constant 512 : index
    %2187 = memref.load %arg0[%c512] : memref<698xf32, #tpu.memory_space<smem>>
    %2188 = vector.broadcast %2187 : f32 to vector<2x27xf32>
    %2189 = arith.mulf %2188, %1555 : vector<2x27xf32>
    %2190 = arith.addf %2186, %2189 : vector<2x27xf32>
    %c513 = arith.constant 513 : index
    %2191 = memref.load %arg0[%c513] : memref<698xf32, #tpu.memory_space<smem>>
    %2192 = vector.broadcast %2191 : f32 to vector<2x27xf32>
    %2193 = arith.mulf %2192, %1556 : vector<2x27xf32>
    %2194 = arith.addf %2190, %2193 : vector<2x27xf32>
    %c514 = arith.constant 514 : index
    %2195 = memref.load %arg0[%c514] : memref<698xf32, #tpu.memory_space<smem>>
    %2196 = vector.broadcast %2195 : f32 to vector<2x27xf32>
    %2197 = arith.mulf %2196, %1557 : vector<2x27xf32>
    %2198 = arith.addf %2194, %2197 : vector<2x27xf32>
    %c515 = arith.constant 515 : index
    %2199 = memref.load %arg0[%c515] : memref<698xf32, #tpu.memory_space<smem>>
    %2200 = vector.broadcast %2199 : f32 to vector<2x27xf32>
    %2201 = arith.mulf %2200, %1558 : vector<2x27xf32>
    %2202 = arith.addf %2198, %2201 : vector<2x27xf32>
    %c516 = arith.constant 516 : index
    %2203 = memref.load %arg0[%c516] : memref<698xf32, #tpu.memory_space<smem>>
    %2204 = vector.broadcast %2203 : f32 to vector<2x27xf32>
    %2205 = arith.mulf %2204, %1559 : vector<2x27xf32>
    %2206 = arith.addf %2202, %2205 : vector<2x27xf32>
    %c517 = arith.constant 517 : index
    %2207 = memref.load %arg0[%c517] : memref<698xf32, #tpu.memory_space<smem>>
    %2208 = vector.broadcast %2207 : f32 to vector<2x27xf32>
    %2209 = arith.mulf %2208, %1560 : vector<2x27xf32>
    %2210 = arith.addf %2206, %2209 : vector<2x27xf32>
    %cst_53 = arith.constant dense<0.000000e+00> : vector<2x14xf32>
    %2211 = tpu.matmul %2210, %1567, %cst_53 {dimension_numbers = #tpu.dot_dimension_numbers<[1], [0], [0], [1], [0, 0, 1, 1], [], []>} : vector<2x27xf32>, vector<27x14xf32>, vector<2x14xf32> -> vector<2x14xf32>
    %c672 = arith.constant 672 : index
    %2212 = memref.load %arg0[%c672] : memref<698xf32, #tpu.memory_space<smem>>
    %2213 = vector.broadcast %2212 : f32 to vector<2x14xf32>
    %2214 = arith.addf %2211, %2213 : vector<2x14xf32>
    %cst_54 = arith.constant 0.000000e+00 : f32
    %2215 = vector.broadcast %cst_54 : f32 to vector<2x14xf32>
    %2216 = arith.maximumf %2214, %2215 : vector<2x14xf32>
    %c682 = arith.constant 682 : index
    %2217 = memref.load %arg0[%c682] : memref<698xf32, #tpu.memory_space<smem>>
    %2218 = vector.broadcast %2217 : f32 to vector<2x14xf32>
    %2219 = arith.mulf %2216, %2218 : vector<2x14xf32>
    %c692 = arith.constant 692 : index
    %2220 = memref.load %arg0[%c692] : memref<698xf32, #tpu.memory_space<smem>>
    %2221 = vector.broadcast %2220 : f32 to vector<2x14xf32>
    %2222 = arith.addf %2219, %2221 : vector<2x14xf32>
    %c518 = arith.constant 518 : index
    %2223 = memref.load %arg0[%c518] : memref<698xf32, #tpu.memory_space<smem>>
    %2224 = vector.broadcast %2223 : f32 to vector<2x27xf32>
    %2225 = arith.mulf %2224, %1531 : vector<2x27xf32>
    %c519 = arith.constant 519 : index
    %2226 = memref.load %arg0[%c519] : memref<698xf32, #tpu.memory_space<smem>>
    %2227 = vector.broadcast %2226 : f32 to vector<2x27xf32>
    %2228 = arith.mulf %2227, %1532 : vector<2x27xf32>
    %2229 = arith.addf %2225, %2228 : vector<2x27xf32>
    %c520 = arith.constant 520 : index
    %2230 = memref.load %arg0[%c520] : memref<698xf32, #tpu.memory_space<smem>>
    %2231 = vector.broadcast %2230 : f32 to vector<2x27xf32>
    %2232 = arith.mulf %2231, %1533 : vector<2x27xf32>
    %2233 = arith.addf %2229, %2232 : vector<2x27xf32>
    %c521 = arith.constant 521 : index
    %2234 = memref.load %arg0[%c521] : memref<698xf32, #tpu.memory_space<smem>>
    %2235 = vector.broadcast %2234 : f32 to vector<2x27xf32>
    %2236 = arith.mulf %2235, %1534 : vector<2x27xf32>
    %2237 = arith.addf %2233, %2236 : vector<2x27xf32>
    %c522 = arith.constant 522 : index
    %2238 = memref.load %arg0[%c522] : memref<698xf32, #tpu.memory_space<smem>>
    %2239 = vector.broadcast %2238 : f32 to vector<2x27xf32>
    %2240 = arith.mulf %2239, %1535 : vector<2x27xf32>
    %2241 = arith.addf %2237, %2240 : vector<2x27xf32>
    %c523 = arith.constant 523 : index
    %2242 = memref.load %arg0[%c523] : memref<698xf32, #tpu.memory_space<smem>>
    %2243 = vector.broadcast %2242 : f32 to vector<2x27xf32>
    %2244 = arith.mulf %2243, %1536 : vector<2x27xf32>
    %2245 = arith.addf %2241, %2244 : vector<2x27xf32>
    %c524 = arith.constant 524 : index
    %2246 = memref.load %arg0[%c524] : memref<698xf32, #tpu.memory_space<smem>>
    %2247 = vector.broadcast %2246 : f32 to vector<2x27xf32>
    %2248 = arith.mulf %2247, %1537 : vector<2x27xf32>
    %2249 = arith.addf %2245, %2248 : vector<2x27xf32>
    %c525 = arith.constant 525 : index
    %2250 = memref.load %arg0[%c525] : memref<698xf32, #tpu.memory_space<smem>>
    %2251 = vector.broadcast %2250 : f32 to vector<2x27xf32>
    %2252 = arith.mulf %2251, %1538 : vector<2x27xf32>
    %2253 = arith.addf %2249, %2252 : vector<2x27xf32>
    %c526 = arith.constant 526 : index
    %2254 = memref.load %arg0[%c526] : memref<698xf32, #tpu.memory_space<smem>>
    %2255 = vector.broadcast %2254 : f32 to vector<2x27xf32>
    %2256 = arith.mulf %2255, %1539 : vector<2x27xf32>
    %2257 = arith.addf %2253, %2256 : vector<2x27xf32>
    %c527 = arith.constant 527 : index
    %2258 = memref.load %arg0[%c527] : memref<698xf32, #tpu.memory_space<smem>>
    %2259 = vector.broadcast %2258 : f32 to vector<2x27xf32>
    %2260 = arith.mulf %2259, %1540 : vector<2x27xf32>
    %2261 = arith.addf %2257, %2260 : vector<2x27xf32>
    %c528 = arith.constant 528 : index
    %2262 = memref.load %arg0[%c528] : memref<698xf32, #tpu.memory_space<smem>>
    %2263 = vector.broadcast %2262 : f32 to vector<2x27xf32>
    %2264 = arith.mulf %2263, %1541 : vector<2x27xf32>
    %2265 = arith.addf %2261, %2264 : vector<2x27xf32>
    %c529 = arith.constant 529 : index
    %2266 = memref.load %arg0[%c529] : memref<698xf32, #tpu.memory_space<smem>>
    %2267 = vector.broadcast %2266 : f32 to vector<2x27xf32>
    %2268 = arith.mulf %2267, %1542 : vector<2x27xf32>
    %2269 = arith.addf %2265, %2268 : vector<2x27xf32>
    %c530 = arith.constant 530 : index
    %2270 = memref.load %arg0[%c530] : memref<698xf32, #tpu.memory_space<smem>>
    %2271 = vector.broadcast %2270 : f32 to vector<2x27xf32>
    %2272 = arith.mulf %2271, %1543 : vector<2x27xf32>
    %2273 = arith.addf %2269, %2272 : vector<2x27xf32>
    %c531 = arith.constant 531 : index
    %2274 = memref.load %arg0[%c531] : memref<698xf32, #tpu.memory_space<smem>>
    %2275 = vector.broadcast %2274 : f32 to vector<2x27xf32>
    %2276 = arith.mulf %2275, %1544 : vector<2x27xf32>
    %2277 = arith.addf %2273, %2276 : vector<2x27xf32>
    %c532 = arith.constant 532 : index
    %2278 = memref.load %arg0[%c532] : memref<698xf32, #tpu.memory_space<smem>>
    %2279 = vector.broadcast %2278 : f32 to vector<2x27xf32>
    %2280 = arith.mulf %2279, %1545 : vector<2x27xf32>
    %2281 = arith.addf %2277, %2280 : vector<2x27xf32>
    %c533 = arith.constant 533 : index
    %2282 = memref.load %arg0[%c533] : memref<698xf32, #tpu.memory_space<smem>>
    %2283 = vector.broadcast %2282 : f32 to vector<2x27xf32>
    %2284 = arith.mulf %2283, %1546 : vector<2x27xf32>
    %2285 = arith.addf %2281, %2284 : vector<2x27xf32>
    %c534 = arith.constant 534 : index
    %2286 = memref.load %arg0[%c534] : memref<698xf32, #tpu.memory_space<smem>>
    %2287 = vector.broadcast %2286 : f32 to vector<2x27xf32>
    %2288 = arith.mulf %2287, %1547 : vector<2x27xf32>
    %2289 = arith.addf %2285, %2288 : vector<2x27xf32>
    %c535 = arith.constant 535 : index
    %2290 = memref.load %arg0[%c535] : memref<698xf32, #tpu.memory_space<smem>>
    %2291 = vector.broadcast %2290 : f32 to vector<2x27xf32>
    %2292 = arith.mulf %2291, %1548 : vector<2x27xf32>
    %2293 = arith.addf %2289, %2292 : vector<2x27xf32>
    %c536 = arith.constant 536 : index
    %2294 = memref.load %arg0[%c536] : memref<698xf32, #tpu.memory_space<smem>>
    %2295 = vector.broadcast %2294 : f32 to vector<2x27xf32>
    %2296 = arith.mulf %2295, %1549 : vector<2x27xf32>
    %2297 = arith.addf %2293, %2296 : vector<2x27xf32>
    %c537 = arith.constant 537 : index
    %2298 = memref.load %arg0[%c537] : memref<698xf32, #tpu.memory_space<smem>>
    %2299 = vector.broadcast %2298 : f32 to vector<2x27xf32>
    %2300 = arith.mulf %2299, %1550 : vector<2x27xf32>
    %2301 = arith.addf %2297, %2300 : vector<2x27xf32>
    %c538 = arith.constant 538 : index
    %2302 = memref.load %arg0[%c538] : memref<698xf32, #tpu.memory_space<smem>>
    %2303 = vector.broadcast %2302 : f32 to vector<2x27xf32>
    %2304 = arith.mulf %2303, %1551 : vector<2x27xf32>
    %2305 = arith.addf %2301, %2304 : vector<2x27xf32>
    %c539 = arith.constant 539 : index
    %2306 = memref.load %arg0[%c539] : memref<698xf32, #tpu.memory_space<smem>>
    %2307 = vector.broadcast %2306 : f32 to vector<2x27xf32>
    %2308 = arith.mulf %2307, %1552 : vector<2x27xf32>
    %2309 = arith.addf %2305, %2308 : vector<2x27xf32>
    %c540 = arith.constant 540 : index
    %2310 = memref.load %arg0[%c540] : memref<698xf32, #tpu.memory_space<smem>>
    %2311 = vector.broadcast %2310 : f32 to vector<2x27xf32>
    %2312 = arith.mulf %2311, %1553 : vector<2x27xf32>
    %2313 = arith.addf %2309, %2312 : vector<2x27xf32>
    %c541 = arith.constant 541 : index
    %2314 = memref.load %arg0[%c541] : memref<698xf32, #tpu.memory_space<smem>>
    %2315 = vector.broadcast %2314 : f32 to vector<2x27xf32>
    %2316 = arith.mulf %2315, %1554 : vector<2x27xf32>
    %2317 = arith.addf %2313, %2316 : vector<2x27xf32>
    %c542 = arith.constant 542 : index
    %2318 = memref.load %arg0[%c542] : memref<698xf32, #tpu.memory_space<smem>>
    %2319 = vector.broadcast %2318 : f32 to vector<2x27xf32>
    %2320 = arith.mulf %2319, %1555 : vector<2x27xf32>
    %2321 = arith.addf %2317, %2320 : vector<2x27xf32>
    %c543 = arith.constant 543 : index
    %2322 = memref.load %arg0[%c543] : memref<698xf32, #tpu.memory_space<smem>>
    %2323 = vector.broadcast %2322 : f32 to vector<2x27xf32>
    %2324 = arith.mulf %2323, %1556 : vector<2x27xf32>
    %2325 = arith.addf %2321, %2324 : vector<2x27xf32>
    %c544 = arith.constant 544 : index
    %2326 = memref.load %arg0[%c544] : memref<698xf32, #tpu.memory_space<smem>>
    %2327 = vector.broadcast %2326 : f32 to vector<2x27xf32>
    %2328 = arith.mulf %2327, %1557 : vector<2x27xf32>
    %2329 = arith.addf %2325, %2328 : vector<2x27xf32>
    %c545 = arith.constant 545 : index
    %2330 = memref.load %arg0[%c545] : memref<698xf32, #tpu.memory_space<smem>>
    %2331 = vector.broadcast %2330 : f32 to vector<2x27xf32>
    %2332 = arith.mulf %2331, %1558 : vector<2x27xf32>
    %2333 = arith.addf %2329, %2332 : vector<2x27xf32>
    %c546 = arith.constant 546 : index
    %2334 = memref.load %arg0[%c546] : memref<698xf32, #tpu.memory_space<smem>>
    %2335 = vector.broadcast %2334 : f32 to vector<2x27xf32>
    %2336 = arith.mulf %2335, %1559 : vector<2x27xf32>
    %2337 = arith.addf %2333, %2336 : vector<2x27xf32>
    %c547 = arith.constant 547 : index
    %2338 = memref.load %arg0[%c547] : memref<698xf32, #tpu.memory_space<smem>>
    %2339 = vector.broadcast %2338 : f32 to vector<2x27xf32>
    %2340 = arith.mulf %2339, %1560 : vector<2x27xf32>
    %2341 = arith.addf %2337, %2340 : vector<2x27xf32>
    %cst_55 = arith.constant dense<0.000000e+00> : vector<2x14xf32>
    %2342 = tpu.matmul %2341, %1567, %cst_55 {dimension_numbers = #tpu.dot_dimension_numbers<[1], [0], [0], [1], [0, 0, 1, 1], [], []>} : vector<2x27xf32>, vector<27x14xf32>, vector<2x14xf32> -> vector<2x14xf32>
    %c673 = arith.constant 673 : index
    %2343 = memref.load %arg0[%c673] : memref<698xf32, #tpu.memory_space<smem>>
    %2344 = vector.broadcast %2343 : f32 to vector<2x14xf32>
    %2345 = arith.addf %2342, %2344 : vector<2x14xf32>
    %cst_56 = arith.constant 0.000000e+00 : f32
    %2346 = vector.broadcast %cst_56 : f32 to vector<2x14xf32>
    %2347 = arith.maximumf %2345, %2346 : vector<2x14xf32>
    %c683 = arith.constant 683 : index
    %2348 = memref.load %arg0[%c683] : memref<698xf32, #tpu.memory_space<smem>>
    %2349 = vector.broadcast %2348 : f32 to vector<2x14xf32>
    %2350 = arith.mulf %2347, %2349 : vector<2x14xf32>
    %c693 = arith.constant 693 : index
    %2351 = memref.load %arg0[%c693] : memref<698xf32, #tpu.memory_space<smem>>
    %2352 = vector.broadcast %2351 : f32 to vector<2x14xf32>
    %2353 = arith.addf %2350, %2352 : vector<2x14xf32>
    %c548 = arith.constant 548 : index
    %2354 = memref.load %arg0[%c548] : memref<698xf32, #tpu.memory_space<smem>>
    %2355 = vector.broadcast %2354 : f32 to vector<2x27xf32>
    %2356 = arith.mulf %2355, %1531 : vector<2x27xf32>
    %c549 = arith.constant 549 : index
    %2357 = memref.load %arg0[%c549] : memref<698xf32, #tpu.memory_space<smem>>
    %2358 = vector.broadcast %2357 : f32 to vector<2x27xf32>
    %2359 = arith.mulf %2358, %1532 : vector<2x27xf32>
    %2360 = arith.addf %2356, %2359 : vector<2x27xf32>
    %c550 = arith.constant 550 : index
    %2361 = memref.load %arg0[%c550] : memref<698xf32, #tpu.memory_space<smem>>
    %2362 = vector.broadcast %2361 : f32 to vector<2x27xf32>
    %2363 = arith.mulf %2362, %1533 : vector<2x27xf32>
    %2364 = arith.addf %2360, %2363 : vector<2x27xf32>
    %c551 = arith.constant 551 : index
    %2365 = memref.load %arg0[%c551] : memref<698xf32, #tpu.memory_space<smem>>
    %2366 = vector.broadcast %2365 : f32 to vector<2x27xf32>
    %2367 = arith.mulf %2366, %1534 : vector<2x27xf32>
    %2368 = arith.addf %2364, %2367 : vector<2x27xf32>
    %c552 = arith.constant 552 : index
    %2369 = memref.load %arg0[%c552] : memref<698xf32, #tpu.memory_space<smem>>
    %2370 = vector.broadcast %2369 : f32 to vector<2x27xf32>
    %2371 = arith.mulf %2370, %1535 : vector<2x27xf32>
    %2372 = arith.addf %2368, %2371 : vector<2x27xf32>
    %c553 = arith.constant 553 : index
    %2373 = memref.load %arg0[%c553] : memref<698xf32, #tpu.memory_space<smem>>
    %2374 = vector.broadcast %2373 : f32 to vector<2x27xf32>
    %2375 = arith.mulf %2374, %1536 : vector<2x27xf32>
    %2376 = arith.addf %2372, %2375 : vector<2x27xf32>
    %c554 = arith.constant 554 : index
    %2377 = memref.load %arg0[%c554] : memref<698xf32, #tpu.memory_space<smem>>
    %2378 = vector.broadcast %2377 : f32 to vector<2x27xf32>
    %2379 = arith.mulf %2378, %1537 : vector<2x27xf32>
    %2380 = arith.addf %2376, %2379 : vector<2x27xf32>
    %c555 = arith.constant 555 : index
    %2381 = memref.load %arg0[%c555] : memref<698xf32, #tpu.memory_space<smem>>
    %2382 = vector.broadcast %2381 : f32 to vector<2x27xf32>
    %2383 = arith.mulf %2382, %1538 : vector<2x27xf32>
    %2384 = arith.addf %2380, %2383 : vector<2x27xf32>
    %c556 = arith.constant 556 : index
    %2385 = memref.load %arg0[%c556] : memref<698xf32, #tpu.memory_space<smem>>
    %2386 = vector.broadcast %2385 : f32 to vector<2x27xf32>
    %2387 = arith.mulf %2386, %1539 : vector<2x27xf32>
    %2388 = arith.addf %2384, %2387 : vector<2x27xf32>
    %c557 = arith.constant 557 : index
    %2389 = memref.load %arg0[%c557] : memref<698xf32, #tpu.memory_space<smem>>
    %2390 = vector.broadcast %2389 : f32 to vector<2x27xf32>
    %2391 = arith.mulf %2390, %1540 : vector<2x27xf32>
    %2392 = arith.addf %2388, %2391 : vector<2x27xf32>
    %c558 = arith.constant 558 : index
    %2393 = memref.load %arg0[%c558] : memref<698xf32, #tpu.memory_space<smem>>
    %2394 = vector.broadcast %2393 : f32 to vector<2x27xf32>
    %2395 = arith.mulf %2394, %1541 : vector<2x27xf32>
    %2396 = arith.addf %2392, %2395 : vector<2x27xf32>
    %c559 = arith.constant 559 : index
    %2397 = memref.load %arg0[%c559] : memref<698xf32, #tpu.memory_space<smem>>
    %2398 = vector.broadcast %2397 : f32 to vector<2x27xf32>
    %2399 = arith.mulf %2398, %1542 : vector<2x27xf32>
    %2400 = arith.addf %2396, %2399 : vector<2x27xf32>
    %c560 = arith.constant 560 : index
    %2401 = memref.load %arg0[%c560] : memref<698xf32, #tpu.memory_space<smem>>
    %2402 = vector.broadcast %2401 : f32 to vector<2x27xf32>
    %2403 = arith.mulf %2402, %1543 : vector<2x27xf32>
    %2404 = arith.addf %2400, %2403 : vector<2x27xf32>
    %c561 = arith.constant 561 : index
    %2405 = memref.load %arg0[%c561] : memref<698xf32, #tpu.memory_space<smem>>
    %2406 = vector.broadcast %2405 : f32 to vector<2x27xf32>
    %2407 = arith.mulf %2406, %1544 : vector<2x27xf32>
    %2408 = arith.addf %2404, %2407 : vector<2x27xf32>
    %c562 = arith.constant 562 : index
    %2409 = memref.load %arg0[%c562] : memref<698xf32, #tpu.memory_space<smem>>
    %2410 = vector.broadcast %2409 : f32 to vector<2x27xf32>
    %2411 = arith.mulf %2410, %1545 : vector<2x27xf32>
    %2412 = arith.addf %2408, %2411 : vector<2x27xf32>
    %c563 = arith.constant 563 : index
    %2413 = memref.load %arg0[%c563] : memref<698xf32, #tpu.memory_space<smem>>
    %2414 = vector.broadcast %2413 : f32 to vector<2x27xf32>
    %2415 = arith.mulf %2414, %1546 : vector<2x27xf32>
    %2416 = arith.addf %2412, %2415 : vector<2x27xf32>
    %c564 = arith.constant 564 : index
    %2417 = memref.load %arg0[%c564] : memref<698xf32, #tpu.memory_space<smem>>
    %2418 = vector.broadcast %2417 : f32 to vector<2x27xf32>
    %2419 = arith.mulf %2418, %1547 : vector<2x27xf32>
    %2420 = arith.addf %2416, %2419 : vector<2x27xf32>
    %c565 = arith.constant 565 : index
    %2421 = memref.load %arg0[%c565] : memref<698xf32, #tpu.memory_space<smem>>
    %2422 = vector.broadcast %2421 : f32 to vector<2x27xf32>
    %2423 = arith.mulf %2422, %1548 : vector<2x27xf32>
    %2424 = arith.addf %2420, %2423 : vector<2x27xf32>
    %c566 = arith.constant 566 : index
    %2425 = memref.load %arg0[%c566] : memref<698xf32, #tpu.memory_space<smem>>
    %2426 = vector.broadcast %2425 : f32 to vector<2x27xf32>
    %2427 = arith.mulf %2426, %1549 : vector<2x27xf32>
    %2428 = arith.addf %2424, %2427 : vector<2x27xf32>
    %c567 = arith.constant 567 : index
    %2429 = memref.load %arg0[%c567] : memref<698xf32, #tpu.memory_space<smem>>
    %2430 = vector.broadcast %2429 : f32 to vector<2x27xf32>
    %2431 = arith.mulf %2430, %1550 : vector<2x27xf32>
    %2432 = arith.addf %2428, %2431 : vector<2x27xf32>
    %c568 = arith.constant 568 : index
    %2433 = memref.load %arg0[%c568] : memref<698xf32, #tpu.memory_space<smem>>
    %2434 = vector.broadcast %2433 : f32 to vector<2x27xf32>
    %2435 = arith.mulf %2434, %1551 : vector<2x27xf32>
    %2436 = arith.addf %2432, %2435 : vector<2x27xf32>
    %c569 = arith.constant 569 : index
    %2437 = memref.load %arg0[%c569] : memref<698xf32, #tpu.memory_space<smem>>
    %2438 = vector.broadcast %2437 : f32 to vector<2x27xf32>
    %2439 = arith.mulf %2438, %1552 : vector<2x27xf32>
    %2440 = arith.addf %2436, %2439 : vector<2x27xf32>
    %c570 = arith.constant 570 : index
    %2441 = memref.load %arg0[%c570] : memref<698xf32, #tpu.memory_space<smem>>
    %2442 = vector.broadcast %2441 : f32 to vector<2x27xf32>
    %2443 = arith.mulf %2442, %1553 : vector<2x27xf32>
    %2444 = arith.addf %2440, %2443 : vector<2x27xf32>
    %c571 = arith.constant 571 : index
    %2445 = memref.load %arg0[%c571] : memref<698xf32, #tpu.memory_space<smem>>
    %2446 = vector.broadcast %2445 : f32 to vector<2x27xf32>
    %2447 = arith.mulf %2446, %1554 : vector<2x27xf32>
    %2448 = arith.addf %2444, %2447 : vector<2x27xf32>
    %c572 = arith.constant 572 : index
    %2449 = memref.load %arg0[%c572] : memref<698xf32, #tpu.memory_space<smem>>
    %2450 = vector.broadcast %2449 : f32 to vector<2x27xf32>
    %2451 = arith.mulf %2450, %1555 : vector<2x27xf32>
    %2452 = arith.addf %2448, %2451 : vector<2x27xf32>
    %c573 = arith.constant 573 : index
    %2453 = memref.load %arg0[%c573] : memref<698xf32, #tpu.memory_space<smem>>
    %2454 = vector.broadcast %2453 : f32 to vector<2x27xf32>
    %2455 = arith.mulf %2454, %1556 : vector<2x27xf32>
    %2456 = arith.addf %2452, %2455 : vector<2x27xf32>
    %c574 = arith.constant 574 : index
    %2457 = memref.load %arg0[%c574] : memref<698xf32, #tpu.memory_space<smem>>
    %2458 = vector.broadcast %2457 : f32 to vector<2x27xf32>
    %2459 = arith.mulf %2458, %1557 : vector<2x27xf32>
    %2460 = arith.addf %2456, %2459 : vector<2x27xf32>
    %c575 = arith.constant 575 : index
    %2461 = memref.load %arg0[%c575] : memref<698xf32, #tpu.memory_space<smem>>
    %2462 = vector.broadcast %2461 : f32 to vector<2x27xf32>
    %2463 = arith.mulf %2462, %1558 : vector<2x27xf32>
    %2464 = arith.addf %2460, %2463 : vector<2x27xf32>
    %c576 = arith.constant 576 : index
    %2465 = memref.load %arg0[%c576] : memref<698xf32, #tpu.memory_space<smem>>
    %2466 = vector.broadcast %2465 : f32 to vector<2x27xf32>
    %2467 = arith.mulf %2466, %1559 : vector<2x27xf32>
    %2468 = arith.addf %2464, %2467 : vector<2x27xf32>
    %c577 = arith.constant 577 : index
    %2469 = memref.load %arg0[%c577] : memref<698xf32, #tpu.memory_space<smem>>
    %2470 = vector.broadcast %2469 : f32 to vector<2x27xf32>
    %2471 = arith.mulf %2470, %1560 : vector<2x27xf32>
    %2472 = arith.addf %2468, %2471 : vector<2x27xf32>
    %cst_57 = arith.constant dense<0.000000e+00> : vector<2x14xf32>
    %2473 = tpu.matmul %2472, %1567, %cst_57 {dimension_numbers = #tpu.dot_dimension_numbers<[1], [0], [0], [1], [0, 0, 1, 1], [], []>} : vector<2x27xf32>, vector<27x14xf32>, vector<2x14xf32> -> vector<2x14xf32>
    %c674 = arith.constant 674 : index
    %2474 = memref.load %arg0[%c674] : memref<698xf32, #tpu.memory_space<smem>>
    %2475 = vector.broadcast %2474 : f32 to vector<2x14xf32>
    %2476 = arith.addf %2473, %2475 : vector<2x14xf32>
    %cst_58 = arith.constant 0.000000e+00 : f32
    %2477 = vector.broadcast %cst_58 : f32 to vector<2x14xf32>
    %2478 = arith.maximumf %2476, %2477 : vector<2x14xf32>
    %c684 = arith.constant 684 : index
    %2479 = memref.load %arg0[%c684] : memref<698xf32, #tpu.memory_space<smem>>
    %2480 = vector.broadcast %2479 : f32 to vector<2x14xf32>
    %2481 = arith.mulf %2478, %2480 : vector<2x14xf32>
    %c694 = arith.constant 694 : index
    %2482 = memref.load %arg0[%c694] : memref<698xf32, #tpu.memory_space<smem>>
    %2483 = vector.broadcast %2482 : f32 to vector<2x14xf32>
    %2484 = arith.addf %2481, %2483 : vector<2x14xf32>
    %c578 = arith.constant 578 : index
    %2485 = memref.load %arg0[%c578] : memref<698xf32, #tpu.memory_space<smem>>
    %2486 = vector.broadcast %2485 : f32 to vector<2x27xf32>
    %2487 = arith.mulf %2486, %1531 : vector<2x27xf32>
    %c579 = arith.constant 579 : index
    %2488 = memref.load %arg0[%c579] : memref<698xf32, #tpu.memory_space<smem>>
    %2489 = vector.broadcast %2488 : f32 to vector<2x27xf32>
    %2490 = arith.mulf %2489, %1532 : vector<2x27xf32>
    %2491 = arith.addf %2487, %2490 : vector<2x27xf32>
    %c580 = arith.constant 580 : index
    %2492 = memref.load %arg0[%c580] : memref<698xf32, #tpu.memory_space<smem>>
    %2493 = vector.broadcast %2492 : f32 to vector<2x27xf32>
    %2494 = arith.mulf %2493, %1533 : vector<2x27xf32>
    %2495 = arith.addf %2491, %2494 : vector<2x27xf32>
    %c581 = arith.constant 581 : index
    %2496 = memref.load %arg0[%c581] : memref<698xf32, #tpu.memory_space<smem>>
    %2497 = vector.broadcast %2496 : f32 to vector<2x27xf32>
    %2498 = arith.mulf %2497, %1534 : vector<2x27xf32>
    %2499 = arith.addf %2495, %2498 : vector<2x27xf32>
    %c582 = arith.constant 582 : index
    %2500 = memref.load %arg0[%c582] : memref<698xf32, #tpu.memory_space<smem>>
    %2501 = vector.broadcast %2500 : f32 to vector<2x27xf32>
    %2502 = arith.mulf %2501, %1535 : vector<2x27xf32>
    %2503 = arith.addf %2499, %2502 : vector<2x27xf32>
    %c583 = arith.constant 583 : index
    %2504 = memref.load %arg0[%c583] : memref<698xf32, #tpu.memory_space<smem>>
    %2505 = vector.broadcast %2504 : f32 to vector<2x27xf32>
    %2506 = arith.mulf %2505, %1536 : vector<2x27xf32>
    %2507 = arith.addf %2503, %2506 : vector<2x27xf32>
    %c584 = arith.constant 584 : index
    %2508 = memref.load %arg0[%c584] : memref<698xf32, #tpu.memory_space<smem>>
    %2509 = vector.broadcast %2508 : f32 to vector<2x27xf32>
    %2510 = arith.mulf %2509, %1537 : vector<2x27xf32>
    %2511 = arith.addf %2507, %2510 : vector<2x27xf32>
    %c585 = arith.constant 585 : index
    %2512 = memref.load %arg0[%c585] : memref<698xf32, #tpu.memory_space<smem>>
    %2513 = vector.broadcast %2512 : f32 to vector<2x27xf32>
    %2514 = arith.mulf %2513, %1538 : vector<2x27xf32>
    %2515 = arith.addf %2511, %2514 : vector<2x27xf32>
    %c586 = arith.constant 586 : index
    %2516 = memref.load %arg0[%c586] : memref<698xf32, #tpu.memory_space<smem>>
    %2517 = vector.broadcast %2516 : f32 to vector<2x27xf32>
    %2518 = arith.mulf %2517, %1539 : vector<2x27xf32>
    %2519 = arith.addf %2515, %2518 : vector<2x27xf32>
    %c587 = arith.constant 587 : index
    %2520 = memref.load %arg0[%c587] : memref<698xf32, #tpu.memory_space<smem>>
    %2521 = vector.broadcast %2520 : f32 to vector<2x27xf32>
    %2522 = arith.mulf %2521, %1540 : vector<2x27xf32>
    %2523 = arith.addf %2519, %2522 : vector<2x27xf32>
    %c588 = arith.constant 588 : index
    %2524 = memref.load %arg0[%c588] : memref<698xf32, #tpu.memory_space<smem>>
    %2525 = vector.broadcast %2524 : f32 to vector<2x27xf32>
    %2526 = arith.mulf %2525, %1541 : vector<2x27xf32>
    %2527 = arith.addf %2523, %2526 : vector<2x27xf32>
    %c589 = arith.constant 589 : index
    %2528 = memref.load %arg0[%c589] : memref<698xf32, #tpu.memory_space<smem>>
    %2529 = vector.broadcast %2528 : f32 to vector<2x27xf32>
    %2530 = arith.mulf %2529, %1542 : vector<2x27xf32>
    %2531 = arith.addf %2527, %2530 : vector<2x27xf32>
    %c590 = arith.constant 590 : index
    %2532 = memref.load %arg0[%c590] : memref<698xf32, #tpu.memory_space<smem>>
    %2533 = vector.broadcast %2532 : f32 to vector<2x27xf32>
    %2534 = arith.mulf %2533, %1543 : vector<2x27xf32>
    %2535 = arith.addf %2531, %2534 : vector<2x27xf32>
    %c591 = arith.constant 591 : index
    %2536 = memref.load %arg0[%c591] : memref<698xf32, #tpu.memory_space<smem>>
    %2537 = vector.broadcast %2536 : f32 to vector<2x27xf32>
    %2538 = arith.mulf %2537, %1544 : vector<2x27xf32>
    %2539 = arith.addf %2535, %2538 : vector<2x27xf32>
    %c592 = arith.constant 592 : index
    %2540 = memref.load %arg0[%c592] : memref<698xf32, #tpu.memory_space<smem>>
    %2541 = vector.broadcast %2540 : f32 to vector<2x27xf32>
    %2542 = arith.mulf %2541, %1545 : vector<2x27xf32>
    %2543 = arith.addf %2539, %2542 : vector<2x27xf32>
    %c593 = arith.constant 593 : index
    %2544 = memref.load %arg0[%c593] : memref<698xf32, #tpu.memory_space<smem>>
    %2545 = vector.broadcast %2544 : f32 to vector<2x27xf32>
    %2546 = arith.mulf %2545, %1546 : vector<2x27xf32>
    %2547 = arith.addf %2543, %2546 : vector<2x27xf32>
    %c594 = arith.constant 594 : index
    %2548 = memref.load %arg0[%c594] : memref<698xf32, #tpu.memory_space<smem>>
    %2549 = vector.broadcast %2548 : f32 to vector<2x27xf32>
    %2550 = arith.mulf %2549, %1547 : vector<2x27xf32>
    %2551 = arith.addf %2547, %2550 : vector<2x27xf32>
    %c595 = arith.constant 595 : index
    %2552 = memref.load %arg0[%c595] : memref<698xf32, #tpu.memory_space<smem>>
    %2553 = vector.broadcast %2552 : f32 to vector<2x27xf32>
    %2554 = arith.mulf %2553, %1548 : vector<2x27xf32>
    %2555 = arith.addf %2551, %2554 : vector<2x27xf32>
    %c596 = arith.constant 596 : index
    %2556 = memref.load %arg0[%c596] : memref<698xf32, #tpu.memory_space<smem>>
    %2557 = vector.broadcast %2556 : f32 to vector<2x27xf32>
    %2558 = arith.mulf %2557, %1549 : vector<2x27xf32>
    %2559 = arith.addf %2555, %2558 : vector<2x27xf32>
    %c597 = arith.constant 597 : index
    %2560 = memref.load %arg0[%c597] : memref<698xf32, #tpu.memory_space<smem>>
    %2561 = vector.broadcast %2560 : f32 to vector<2x27xf32>
    %2562 = arith.mulf %2561, %1550 : vector<2x27xf32>
    %2563 = arith.addf %2559, %2562 : vector<2x27xf32>
    %c598 = arith.constant 598 : index
    %2564 = memref.load %arg0[%c598] : memref<698xf32, #tpu.memory_space<smem>>
    %2565 = vector.broadcast %2564 : f32 to vector<2x27xf32>
    %2566 = arith.mulf %2565, %1551 : vector<2x27xf32>
    %2567 = arith.addf %2563, %2566 : vector<2x27xf32>
    %c599 = arith.constant 599 : index
    %2568 = memref.load %arg0[%c599] : memref<698xf32, #tpu.memory_space<smem>>
    %2569 = vector.broadcast %2568 : f32 to vector<2x27xf32>
    %2570 = arith.mulf %2569, %1552 : vector<2x27xf32>
    %2571 = arith.addf %2567, %2570 : vector<2x27xf32>
    %c600 = arith.constant 600 : index
    %2572 = memref.load %arg0[%c600] : memref<698xf32, #tpu.memory_space<smem>>
    %2573 = vector.broadcast %2572 : f32 to vector<2x27xf32>
    %2574 = arith.mulf %2573, %1553 : vector<2x27xf32>
    %2575 = arith.addf %2571, %2574 : vector<2x27xf32>
    %c601 = arith.constant 601 : index
    %2576 = memref.load %arg0[%c601] : memref<698xf32, #tpu.memory_space<smem>>
    %2577 = vector.broadcast %2576 : f32 to vector<2x27xf32>
    %2578 = arith.mulf %2577, %1554 : vector<2x27xf32>
    %2579 = arith.addf %2575, %2578 : vector<2x27xf32>
    %c602 = arith.constant 602 : index
    %2580 = memref.load %arg0[%c602] : memref<698xf32, #tpu.memory_space<smem>>
    %2581 = vector.broadcast %2580 : f32 to vector<2x27xf32>
    %2582 = arith.mulf %2581, %1555 : vector<2x27xf32>
    %2583 = arith.addf %2579, %2582 : vector<2x27xf32>
    %c603 = arith.constant 603 : index
    %2584 = memref.load %arg0[%c603] : memref<698xf32, #tpu.memory_space<smem>>
    %2585 = vector.broadcast %2584 : f32 to vector<2x27xf32>
    %2586 = arith.mulf %2585, %1556 : vector<2x27xf32>
    %2587 = arith.addf %2583, %2586 : vector<2x27xf32>
    %c604 = arith.constant 604 : index
    %2588 = memref.load %arg0[%c604] : memref<698xf32, #tpu.memory_space<smem>>
    %2589 = vector.broadcast %2588 : f32 to vector<2x27xf32>
    %2590 = arith.mulf %2589, %1557 : vector<2x27xf32>
    %2591 = arith.addf %2587, %2590 : vector<2x27xf32>
    %c605 = arith.constant 605 : index
    %2592 = memref.load %arg0[%c605] : memref<698xf32, #tpu.memory_space<smem>>
    %2593 = vector.broadcast %2592 : f32 to vector<2x27xf32>
    %2594 = arith.mulf %2593, %1558 : vector<2x27xf32>
    %2595 = arith.addf %2591, %2594 : vector<2x27xf32>
    %c606 = arith.constant 606 : index
    %2596 = memref.load %arg0[%c606] : memref<698xf32, #tpu.memory_space<smem>>
    %2597 = vector.broadcast %2596 : f32 to vector<2x27xf32>
    %2598 = arith.mulf %2597, %1559 : vector<2x27xf32>
    %2599 = arith.addf %2595, %2598 : vector<2x27xf32>
    %c607 = arith.constant 607 : index
    %2600 = memref.load %arg0[%c607] : memref<698xf32, #tpu.memory_space<smem>>
    %2601 = vector.broadcast %2600 : f32 to vector<2x27xf32>
    %2602 = arith.mulf %2601, %1560 : vector<2x27xf32>
    %2603 = arith.addf %2599, %2602 : vector<2x27xf32>
    %cst_59 = arith.constant dense<0.000000e+00> : vector<2x14xf32>
    %2604 = tpu.matmul %2603, %1567, %cst_59 {dimension_numbers = #tpu.dot_dimension_numbers<[1], [0], [0], [1], [0, 0, 1, 1], [], []>} : vector<2x27xf32>, vector<27x14xf32>, vector<2x14xf32> -> vector<2x14xf32>
    %c675 = arith.constant 675 : index
    %2605 = memref.load %arg0[%c675] : memref<698xf32, #tpu.memory_space<smem>>
    %2606 = vector.broadcast %2605 : f32 to vector<2x14xf32>
    %2607 = arith.addf %2604, %2606 : vector<2x14xf32>
    %cst_60 = arith.constant 0.000000e+00 : f32
    %2608 = vector.broadcast %cst_60 : f32 to vector<2x14xf32>
    %2609 = arith.maximumf %2607, %2608 : vector<2x14xf32>
    %c685 = arith.constant 685 : index
    %2610 = memref.load %arg0[%c685] : memref<698xf32, #tpu.memory_space<smem>>
    %2611 = vector.broadcast %2610 : f32 to vector<2x14xf32>
    %2612 = arith.mulf %2609, %2611 : vector<2x14xf32>
    %c695 = arith.constant 695 : index
    %2613 = memref.load %arg0[%c695] : memref<698xf32, #tpu.memory_space<smem>>
    %2614 = vector.broadcast %2613 : f32 to vector<2x14xf32>
    %2615 = arith.addf %2612, %2614 : vector<2x14xf32>
    %c608 = arith.constant 608 : index
    %2616 = memref.load %arg0[%c608] : memref<698xf32, #tpu.memory_space<smem>>
    %2617 = vector.broadcast %2616 : f32 to vector<2x27xf32>
    %2618 = arith.mulf %2617, %1531 : vector<2x27xf32>
    %c609 = arith.constant 609 : index
    %2619 = memref.load %arg0[%c609] : memref<698xf32, #tpu.memory_space<smem>>
    %2620 = vector.broadcast %2619 : f32 to vector<2x27xf32>
    %2621 = arith.mulf %2620, %1532 : vector<2x27xf32>
    %2622 = arith.addf %2618, %2621 : vector<2x27xf32>
    %c610 = arith.constant 610 : index
    %2623 = memref.load %arg0[%c610] : memref<698xf32, #tpu.memory_space<smem>>
    %2624 = vector.broadcast %2623 : f32 to vector<2x27xf32>
    %2625 = arith.mulf %2624, %1533 : vector<2x27xf32>
    %2626 = arith.addf %2622, %2625 : vector<2x27xf32>
    %c611 = arith.constant 611 : index
    %2627 = memref.load %arg0[%c611] : memref<698xf32, #tpu.memory_space<smem>>
    %2628 = vector.broadcast %2627 : f32 to vector<2x27xf32>
    %2629 = arith.mulf %2628, %1534 : vector<2x27xf32>
    %2630 = arith.addf %2626, %2629 : vector<2x27xf32>
    %c612 = arith.constant 612 : index
    %2631 = memref.load %arg0[%c612] : memref<698xf32, #tpu.memory_space<smem>>
    %2632 = vector.broadcast %2631 : f32 to vector<2x27xf32>
    %2633 = arith.mulf %2632, %1535 : vector<2x27xf32>
    %2634 = arith.addf %2630, %2633 : vector<2x27xf32>
    %c613 = arith.constant 613 : index
    %2635 = memref.load %arg0[%c613] : memref<698xf32, #tpu.memory_space<smem>>
    %2636 = vector.broadcast %2635 : f32 to vector<2x27xf32>
    %2637 = arith.mulf %2636, %1536 : vector<2x27xf32>
    %2638 = arith.addf %2634, %2637 : vector<2x27xf32>
    %c614 = arith.constant 614 : index
    %2639 = memref.load %arg0[%c614] : memref<698xf32, #tpu.memory_space<smem>>
    %2640 = vector.broadcast %2639 : f32 to vector<2x27xf32>
    %2641 = arith.mulf %2640, %1537 : vector<2x27xf32>
    %2642 = arith.addf %2638, %2641 : vector<2x27xf32>
    %c615 = arith.constant 615 : index
    %2643 = memref.load %arg0[%c615] : memref<698xf32, #tpu.memory_space<smem>>
    %2644 = vector.broadcast %2643 : f32 to vector<2x27xf32>
    %2645 = arith.mulf %2644, %1538 : vector<2x27xf32>
    %2646 = arith.addf %2642, %2645 : vector<2x27xf32>
    %c616 = arith.constant 616 : index
    %2647 = memref.load %arg0[%c616] : memref<698xf32, #tpu.memory_space<smem>>
    %2648 = vector.broadcast %2647 : f32 to vector<2x27xf32>
    %2649 = arith.mulf %2648, %1539 : vector<2x27xf32>
    %2650 = arith.addf %2646, %2649 : vector<2x27xf32>
    %c617 = arith.constant 617 : index
    %2651 = memref.load %arg0[%c617] : memref<698xf32, #tpu.memory_space<smem>>
    %2652 = vector.broadcast %2651 : f32 to vector<2x27xf32>
    %2653 = arith.mulf %2652, %1540 : vector<2x27xf32>
    %2654 = arith.addf %2650, %2653 : vector<2x27xf32>
    %c618 = arith.constant 618 : index
    %2655 = memref.load %arg0[%c618] : memref<698xf32, #tpu.memory_space<smem>>
    %2656 = vector.broadcast %2655 : f32 to vector<2x27xf32>
    %2657 = arith.mulf %2656, %1541 : vector<2x27xf32>
    %2658 = arith.addf %2654, %2657 : vector<2x27xf32>
    %c619 = arith.constant 619 : index
    %2659 = memref.load %arg0[%c619] : memref<698xf32, #tpu.memory_space<smem>>
    %2660 = vector.broadcast %2659 : f32 to vector<2x27xf32>
    %2661 = arith.mulf %2660, %1542 : vector<2x27xf32>
    %2662 = arith.addf %2658, %2661 : vector<2x27xf32>
    %c620 = arith.constant 620 : index
    %2663 = memref.load %arg0[%c620] : memref<698xf32, #tpu.memory_space<smem>>
    %2664 = vector.broadcast %2663 : f32 to vector<2x27xf32>
    %2665 = arith.mulf %2664, %1543 : vector<2x27xf32>
    %2666 = arith.addf %2662, %2665 : vector<2x27xf32>
    %c621 = arith.constant 621 : index
    %2667 = memref.load %arg0[%c621] : memref<698xf32, #tpu.memory_space<smem>>
    %2668 = vector.broadcast %2667 : f32 to vector<2x27xf32>
    %2669 = arith.mulf %2668, %1544 : vector<2x27xf32>
    %2670 = arith.addf %2666, %2669 : vector<2x27xf32>
    %c622 = arith.constant 622 : index
    %2671 = memref.load %arg0[%c622] : memref<698xf32, #tpu.memory_space<smem>>
    %2672 = vector.broadcast %2671 : f32 to vector<2x27xf32>
    %2673 = arith.mulf %2672, %1545 : vector<2x27xf32>
    %2674 = arith.addf %2670, %2673 : vector<2x27xf32>
    %c623 = arith.constant 623 : index
    %2675 = memref.load %arg0[%c623] : memref<698xf32, #tpu.memory_space<smem>>
    %2676 = vector.broadcast %2675 : f32 to vector<2x27xf32>
    %2677 = arith.mulf %2676, %1546 : vector<2x27xf32>
    %2678 = arith.addf %2674, %2677 : vector<2x27xf32>
    %c624 = arith.constant 624 : index
    %2679 = memref.load %arg0[%c624] : memref<698xf32, #tpu.memory_space<smem>>
    %2680 = vector.broadcast %2679 : f32 to vector<2x27xf32>
    %2681 = arith.mulf %2680, %1547 : vector<2x27xf32>
    %2682 = arith.addf %2678, %2681 : vector<2x27xf32>
    %c625 = arith.constant 625 : index
    %2683 = memref.load %arg0[%c625] : memref<698xf32, #tpu.memory_space<smem>>
    %2684 = vector.broadcast %2683 : f32 to vector<2x27xf32>
    %2685 = arith.mulf %2684, %1548 : vector<2x27xf32>
    %2686 = arith.addf %2682, %2685 : vector<2x27xf32>
    %c626 = arith.constant 626 : index
    %2687 = memref.load %arg0[%c626] : memref<698xf32, #tpu.memory_space<smem>>
    %2688 = vector.broadcast %2687 : f32 to vector<2x27xf32>
    %2689 = arith.mulf %2688, %1549 : vector<2x27xf32>
    %2690 = arith.addf %2686, %2689 : vector<2x27xf32>
    %c627 = arith.constant 627 : index
    %2691 = memref.load %arg0[%c627] : memref<698xf32, #tpu.memory_space<smem>>
    %2692 = vector.broadcast %2691 : f32 to vector<2x27xf32>
    %2693 = arith.mulf %2692, %1550 : vector<2x27xf32>
    %2694 = arith.addf %2690, %2693 : vector<2x27xf32>
    %c628 = arith.constant 628 : index
    %2695 = memref.load %arg0[%c628] : memref<698xf32, #tpu.memory_space<smem>>
    %2696 = vector.broadcast %2695 : f32 to vector<2x27xf32>
    %2697 = arith.mulf %2696, %1551 : vector<2x27xf32>
    %2698 = arith.addf %2694, %2697 : vector<2x27xf32>
    %c629 = arith.constant 629 : index
    %2699 = memref.load %arg0[%c629] : memref<698xf32, #tpu.memory_space<smem>>
    %2700 = vector.broadcast %2699 : f32 to vector<2x27xf32>
    %2701 = arith.mulf %2700, %1552 : vector<2x27xf32>
    %2702 = arith.addf %2698, %2701 : vector<2x27xf32>
    %c630 = arith.constant 630 : index
    %2703 = memref.load %arg0[%c630] : memref<698xf32, #tpu.memory_space<smem>>
    %2704 = vector.broadcast %2703 : f32 to vector<2x27xf32>
    %2705 = arith.mulf %2704, %1553 : vector<2x27xf32>
    %2706 = arith.addf %2702, %2705 : vector<2x27xf32>
    %c631 = arith.constant 631 : index
    %2707 = memref.load %arg0[%c631] : memref<698xf32, #tpu.memory_space<smem>>
    %2708 = vector.broadcast %2707 : f32 to vector<2x27xf32>
    %2709 = arith.mulf %2708, %1554 : vector<2x27xf32>
    %2710 = arith.addf %2706, %2709 : vector<2x27xf32>
    %c632 = arith.constant 632 : index
    %2711 = memref.load %arg0[%c632] : memref<698xf32, #tpu.memory_space<smem>>
    %2712 = vector.broadcast %2711 : f32 to vector<2x27xf32>
    %2713 = arith.mulf %2712, %1555 : vector<2x27xf32>
    %2714 = arith.addf %2710, %2713 : vector<2x27xf32>
    %c633 = arith.constant 633 : index
    %2715 = memref.load %arg0[%c633] : memref<698xf32, #tpu.memory_space<smem>>
    %2716 = vector.broadcast %2715 : f32 to vector<2x27xf32>
    %2717 = arith.mulf %2716, %1556 : vector<2x27xf32>
    %2718 = arith.addf %2714, %2717 : vector<2x27xf32>
    %c634 = arith.constant 634 : index
    %2719 = memref.load %arg0[%c634] : memref<698xf32, #tpu.memory_space<smem>>
    %2720 = vector.broadcast %2719 : f32 to vector<2x27xf32>
    %2721 = arith.mulf %2720, %1557 : vector<2x27xf32>
    %2722 = arith.addf %2718, %2721 : vector<2x27xf32>
    %c635 = arith.constant 635 : index
    %2723 = memref.load %arg0[%c635] : memref<698xf32, #tpu.memory_space<smem>>
    %2724 = vector.broadcast %2723 : f32 to vector<2x27xf32>
    %2725 = arith.mulf %2724, %1558 : vector<2x27xf32>
    %2726 = arith.addf %2722, %2725 : vector<2x27xf32>
    %c636 = arith.constant 636 : index
    %2727 = memref.load %arg0[%c636] : memref<698xf32, #tpu.memory_space<smem>>
    %2728 = vector.broadcast %2727 : f32 to vector<2x27xf32>
    %2729 = arith.mulf %2728, %1559 : vector<2x27xf32>
    %2730 = arith.addf %2726, %2729 : vector<2x27xf32>
    %c637 = arith.constant 637 : index
    %2731 = memref.load %arg0[%c637] : memref<698xf32, #tpu.memory_space<smem>>
    %2732 = vector.broadcast %2731 : f32 to vector<2x27xf32>
    %2733 = arith.mulf %2732, %1560 : vector<2x27xf32>
    %2734 = arith.addf %2730, %2733 : vector<2x27xf32>
    %cst_61 = arith.constant dense<0.000000e+00> : vector<2x14xf32>
    %2735 = tpu.matmul %2734, %1567, %cst_61 {dimension_numbers = #tpu.dot_dimension_numbers<[1], [0], [0], [1], [0, 0, 1, 1], [], []>} : vector<2x27xf32>, vector<27x14xf32>, vector<2x14xf32> -> vector<2x14xf32>
    %c676 = arith.constant 676 : index
    %2736 = memref.load %arg0[%c676] : memref<698xf32, #tpu.memory_space<smem>>
    %2737 = vector.broadcast %2736 : f32 to vector<2x14xf32>
    %2738 = arith.addf %2735, %2737 : vector<2x14xf32>
    %cst_62 = arith.constant 0.000000e+00 : f32
    %2739 = vector.broadcast %cst_62 : f32 to vector<2x14xf32>
    %2740 = arith.maximumf %2738, %2739 : vector<2x14xf32>
    %c686 = arith.constant 686 : index
    %2741 = memref.load %arg0[%c686] : memref<698xf32, #tpu.memory_space<smem>>
    %2742 = vector.broadcast %2741 : f32 to vector<2x14xf32>
    %2743 = arith.mulf %2740, %2742 : vector<2x14xf32>
    %c696 = arith.constant 696 : index
    %2744 = memref.load %arg0[%c696] : memref<698xf32, #tpu.memory_space<smem>>
    %2745 = vector.broadcast %2744 : f32 to vector<2x14xf32>
    %2746 = arith.addf %2743, %2745 : vector<2x14xf32>
    %c638 = arith.constant 638 : index
    %2747 = memref.load %arg0[%c638] : memref<698xf32, #tpu.memory_space<smem>>
    %2748 = vector.broadcast %2747 : f32 to vector<2x27xf32>
    %2749 = arith.mulf %2748, %1531 : vector<2x27xf32>
    %c639 = arith.constant 639 : index
    %2750 = memref.load %arg0[%c639] : memref<698xf32, #tpu.memory_space<smem>>
    %2751 = vector.broadcast %2750 : f32 to vector<2x27xf32>
    %2752 = arith.mulf %2751, %1532 : vector<2x27xf32>
    %2753 = arith.addf %2749, %2752 : vector<2x27xf32>
    %c640 = arith.constant 640 : index
    %2754 = memref.load %arg0[%c640] : memref<698xf32, #tpu.memory_space<smem>>
    %2755 = vector.broadcast %2754 : f32 to vector<2x27xf32>
    %2756 = arith.mulf %2755, %1533 : vector<2x27xf32>
    %2757 = arith.addf %2753, %2756 : vector<2x27xf32>
    %c641 = arith.constant 641 : index
    %2758 = memref.load %arg0[%c641] : memref<698xf32, #tpu.memory_space<smem>>
    %2759 = vector.broadcast %2758 : f32 to vector<2x27xf32>
    %2760 = arith.mulf %2759, %1534 : vector<2x27xf32>
    %2761 = arith.addf %2757, %2760 : vector<2x27xf32>
    %c642 = arith.constant 642 : index
    %2762 = memref.load %arg0[%c642] : memref<698xf32, #tpu.memory_space<smem>>
    %2763 = vector.broadcast %2762 : f32 to vector<2x27xf32>
    %2764 = arith.mulf %2763, %1535 : vector<2x27xf32>
    %2765 = arith.addf %2761, %2764 : vector<2x27xf32>
    %c643 = arith.constant 643 : index
    %2766 = memref.load %arg0[%c643] : memref<698xf32, #tpu.memory_space<smem>>
    %2767 = vector.broadcast %2766 : f32 to vector<2x27xf32>
    %2768 = arith.mulf %2767, %1536 : vector<2x27xf32>
    %2769 = arith.addf %2765, %2768 : vector<2x27xf32>
    %c644 = arith.constant 644 : index
    %2770 = memref.load %arg0[%c644] : memref<698xf32, #tpu.memory_space<smem>>
    %2771 = vector.broadcast %2770 : f32 to vector<2x27xf32>
    %2772 = arith.mulf %2771, %1537 : vector<2x27xf32>
    %2773 = arith.addf %2769, %2772 : vector<2x27xf32>
    %c645 = arith.constant 645 : index
    %2774 = memref.load %arg0[%c645] : memref<698xf32, #tpu.memory_space<smem>>
    %2775 = vector.broadcast %2774 : f32 to vector<2x27xf32>
    %2776 = arith.mulf %2775, %1538 : vector<2x27xf32>
    %2777 = arith.addf %2773, %2776 : vector<2x27xf32>
    %c646 = arith.constant 646 : index
    %2778 = memref.load %arg0[%c646] : memref<698xf32, #tpu.memory_space<smem>>
    %2779 = vector.broadcast %2778 : f32 to vector<2x27xf32>
    %2780 = arith.mulf %2779, %1539 : vector<2x27xf32>
    %2781 = arith.addf %2777, %2780 : vector<2x27xf32>
    %c647 = arith.constant 647 : index
    %2782 = memref.load %arg0[%c647] : memref<698xf32, #tpu.memory_space<smem>>
    %2783 = vector.broadcast %2782 : f32 to vector<2x27xf32>
    %2784 = arith.mulf %2783, %1540 : vector<2x27xf32>
    %2785 = arith.addf %2781, %2784 : vector<2x27xf32>
    %c648 = arith.constant 648 : index
    %2786 = memref.load %arg0[%c648] : memref<698xf32, #tpu.memory_space<smem>>
    %2787 = vector.broadcast %2786 : f32 to vector<2x27xf32>
    %2788 = arith.mulf %2787, %1541 : vector<2x27xf32>
    %2789 = arith.addf %2785, %2788 : vector<2x27xf32>
    %c649 = arith.constant 649 : index
    %2790 = memref.load %arg0[%c649] : memref<698xf32, #tpu.memory_space<smem>>
    %2791 = vector.broadcast %2790 : f32 to vector<2x27xf32>
    %2792 = arith.mulf %2791, %1542 : vector<2x27xf32>
    %2793 = arith.addf %2789, %2792 : vector<2x27xf32>
    %c650 = arith.constant 650 : index
    %2794 = memref.load %arg0[%c650] : memref<698xf32, #tpu.memory_space<smem>>
    %2795 = vector.broadcast %2794 : f32 to vector<2x27xf32>
    %2796 = arith.mulf %2795, %1543 : vector<2x27xf32>
    %2797 = arith.addf %2793, %2796 : vector<2x27xf32>
    %c651 = arith.constant 651 : index
    %2798 = memref.load %arg0[%c651] : memref<698xf32, #tpu.memory_space<smem>>
    %2799 = vector.broadcast %2798 : f32 to vector<2x27xf32>
    %2800 = arith.mulf %2799, %1544 : vector<2x27xf32>
    %2801 = arith.addf %2797, %2800 : vector<2x27xf32>
    %c652 = arith.constant 652 : index
    %2802 = memref.load %arg0[%c652] : memref<698xf32, #tpu.memory_space<smem>>
    %2803 = vector.broadcast %2802 : f32 to vector<2x27xf32>
    %2804 = arith.mulf %2803, %1545 : vector<2x27xf32>
    %2805 = arith.addf %2801, %2804 : vector<2x27xf32>
    %c653 = arith.constant 653 : index
    %2806 = memref.load %arg0[%c653] : memref<698xf32, #tpu.memory_space<smem>>
    %2807 = vector.broadcast %2806 : f32 to vector<2x27xf32>
    %2808 = arith.mulf %2807, %1546 : vector<2x27xf32>
    %2809 = arith.addf %2805, %2808 : vector<2x27xf32>
    %c654 = arith.constant 654 : index
    %2810 = memref.load %arg0[%c654] : memref<698xf32, #tpu.memory_space<smem>>
    %2811 = vector.broadcast %2810 : f32 to vector<2x27xf32>
    %2812 = arith.mulf %2811, %1547 : vector<2x27xf32>
    %2813 = arith.addf %2809, %2812 : vector<2x27xf32>
    %c655 = arith.constant 655 : index
    %2814 = memref.load %arg0[%c655] : memref<698xf32, #tpu.memory_space<smem>>
    %2815 = vector.broadcast %2814 : f32 to vector<2x27xf32>
    %2816 = arith.mulf %2815, %1548 : vector<2x27xf32>
    %2817 = arith.addf %2813, %2816 : vector<2x27xf32>
    %c656 = arith.constant 656 : index
    %2818 = memref.load %arg0[%c656] : memref<698xf32, #tpu.memory_space<smem>>
    %2819 = vector.broadcast %2818 : f32 to vector<2x27xf32>
    %2820 = arith.mulf %2819, %1549 : vector<2x27xf32>
    %2821 = arith.addf %2817, %2820 : vector<2x27xf32>
    %c657 = arith.constant 657 : index
    %2822 = memref.load %arg0[%c657] : memref<698xf32, #tpu.memory_space<smem>>
    %2823 = vector.broadcast %2822 : f32 to vector<2x27xf32>
    %2824 = arith.mulf %2823, %1550 : vector<2x27xf32>
    %2825 = arith.addf %2821, %2824 : vector<2x27xf32>
    %c658 = arith.constant 658 : index
    %2826 = memref.load %arg0[%c658] : memref<698xf32, #tpu.memory_space<smem>>
    %2827 = vector.broadcast %2826 : f32 to vector<2x27xf32>
    %2828 = arith.mulf %2827, %1551 : vector<2x27xf32>
    %2829 = arith.addf %2825, %2828 : vector<2x27xf32>
    %c659 = arith.constant 659 : index
    %2830 = memref.load %arg0[%c659] : memref<698xf32, #tpu.memory_space<smem>>
    %2831 = vector.broadcast %2830 : f32 to vector<2x27xf32>
    %2832 = arith.mulf %2831, %1552 : vector<2x27xf32>
    %2833 = arith.addf %2829, %2832 : vector<2x27xf32>
    %c660 = arith.constant 660 : index
    %2834 = memref.load %arg0[%c660] : memref<698xf32, #tpu.memory_space<smem>>
    %2835 = vector.broadcast %2834 : f32 to vector<2x27xf32>
    %2836 = arith.mulf %2835, %1553 : vector<2x27xf32>
    %2837 = arith.addf %2833, %2836 : vector<2x27xf32>
    %c661 = arith.constant 661 : index
    %2838 = memref.load %arg0[%c661] : memref<698xf32, #tpu.memory_space<smem>>
    %2839 = vector.broadcast %2838 : f32 to vector<2x27xf32>
    %2840 = arith.mulf %2839, %1554 : vector<2x27xf32>
    %2841 = arith.addf %2837, %2840 : vector<2x27xf32>
    %c662 = arith.constant 662 : index
    %2842 = memref.load %arg0[%c662] : memref<698xf32, #tpu.memory_space<smem>>
    %2843 = vector.broadcast %2842 : f32 to vector<2x27xf32>
    %2844 = arith.mulf %2843, %1555 : vector<2x27xf32>
    %2845 = arith.addf %2841, %2844 : vector<2x27xf32>
    %c663 = arith.constant 663 : index
    %2846 = memref.load %arg0[%c663] : memref<698xf32, #tpu.memory_space<smem>>
    %2847 = vector.broadcast %2846 : f32 to vector<2x27xf32>
    %2848 = arith.mulf %2847, %1556 : vector<2x27xf32>
    %2849 = arith.addf %2845, %2848 : vector<2x27xf32>
    %c664 = arith.constant 664 : index
    %2850 = memref.load %arg0[%c664] : memref<698xf32, #tpu.memory_space<smem>>
    %2851 = vector.broadcast %2850 : f32 to vector<2x27xf32>
    %2852 = arith.mulf %2851, %1557 : vector<2x27xf32>
    %2853 = arith.addf %2849, %2852 : vector<2x27xf32>
    %c665 = arith.constant 665 : index
    %2854 = memref.load %arg0[%c665] : memref<698xf32, #tpu.memory_space<smem>>
    %2855 = vector.broadcast %2854 : f32 to vector<2x27xf32>
    %2856 = arith.mulf %2855, %1558 : vector<2x27xf32>
    %2857 = arith.addf %2853, %2856 : vector<2x27xf32>
    %c666 = arith.constant 666 : index
    %2858 = memref.load %arg0[%c666] : memref<698xf32, #tpu.memory_space<smem>>
    %2859 = vector.broadcast %2858 : f32 to vector<2x27xf32>
    %2860 = arith.mulf %2859, %1559 : vector<2x27xf32>
    %2861 = arith.addf %2857, %2860 : vector<2x27xf32>
    %c667 = arith.constant 667 : index
    %2862 = memref.load %arg0[%c667] : memref<698xf32, #tpu.memory_space<smem>>
    %2863 = vector.broadcast %2862 : f32 to vector<2x27xf32>
    %2864 = arith.mulf %2863, %1560 : vector<2x27xf32>
    %2865 = arith.addf %2861, %2864 : vector<2x27xf32>
    %cst_63 = arith.constant dense<0.000000e+00> : vector<2x14xf32>
    %2866 = tpu.matmul %2865, %1567, %cst_63 {dimension_numbers = #tpu.dot_dimension_numbers<[1], [0], [0], [1], [0, 0, 1, 1], [], []>} : vector<2x27xf32>, vector<27x14xf32>, vector<2x14xf32> -> vector<2x14xf32>
    %c677 = arith.constant 677 : index
    %2867 = memref.load %arg0[%c677] : memref<698xf32, #tpu.memory_space<smem>>
    %2868 = vector.broadcast %2867 : f32 to vector<2x14xf32>
    %2869 = arith.addf %2866, %2868 : vector<2x14xf32>
    %cst_64 = arith.constant 0.000000e+00 : f32
    %2870 = vector.broadcast %cst_64 : f32 to vector<2x14xf32>
    %2871 = arith.maximumf %2869, %2870 : vector<2x14xf32>
    %c687 = arith.constant 687 : index
    %2872 = memref.load %arg0[%c687] : memref<698xf32, #tpu.memory_space<smem>>
    %2873 = vector.broadcast %2872 : f32 to vector<2x14xf32>
    %2874 = arith.mulf %2871, %2873 : vector<2x14xf32>
    %c697 = arith.constant 697 : index
    %2875 = memref.load %arg0[%c697] : memref<698xf32, #tpu.memory_space<smem>>
    %2876 = vector.broadcast %2875 : f32 to vector<2x14xf32>
    %2877 = arith.addf %2874, %2876 : vector<2x14xf32>
    %c0_65 = arith.constant 0 : index
    %c0_66 = arith.constant 0 : index
    %2878 = vector.load %arg3[%c0_65, %c0_66] : memref<1x2xf32, #tpu.memory_space<vmem>>, vector<1x2xf32>
    %c0_67 = arith.constant 0 : index
    %c0_68 = arith.constant 0 : index
    %c0_69 = arith.constant 0 : index
    %2879 = vector.load %arg2[%c0_67, %c0_68, %c0_69] : memref<10x14x2xf32, #tpu.memory_space<vmem>>, vector<1x14x2xf32>
    %2880 = vector.shape_cast %2879 : vector<1x14x2xf32> to vector<14x2xf32>
    %cst_70 = arith.constant dense<0.000000e+00> : vector<2x2xf32>
    %2881 = tpu.matmul %1698, %2880, %cst_70 {dimension_numbers = #tpu.dot_dimension_numbers<[1], [0], [0], [1], [0, 0, 1, 1], [], []>} : vector<2x14xf32>, vector<14x2xf32>, vector<2x2xf32> -> vector<2x2xf32>
    %2882 = vector.broadcast %2878 : vector<1x2xf32> to vector<2x2xf32>
    %2883 = arith.addf %2882, %2881 : vector<2x2xf32>
    %c1_71 = arith.constant 1 : index
    %c0_72 = arith.constant 0 : index
    %c0_73 = arith.constant 0 : index
    %2884 = vector.load %arg2[%c1_71, %c0_72, %c0_73] : memref<10x14x2xf32, #tpu.memory_space<vmem>>, vector<1x14x2xf32>
    %2885 = vector.shape_cast %2884 : vector<1x14x2xf32> to vector<14x2xf32>
    %cst_74 = arith.constant dense<0.000000e+00> : vector<2x2xf32>
    %2886 = tpu.matmul %1829, %2885, %cst_74 {dimension_numbers = #tpu.dot_dimension_numbers<[1], [0], [0], [1], [0, 0, 1, 1], [], []>} : vector<2x14xf32>, vector<14x2xf32>, vector<2x2xf32> -> vector<2x2xf32>
    %2887 = arith.addf %2883, %2886 : vector<2x2xf32>
    %c2_75 = arith.constant 2 : index
    %c0_76 = arith.constant 0 : index
    %c0_77 = arith.constant 0 : index
    %2888 = vector.load %arg2[%c2_75, %c0_76, %c0_77] : memref<10x14x2xf32, #tpu.memory_space<vmem>>, vector<1x14x2xf32>
    %2889 = vector.shape_cast %2888 : vector<1x14x2xf32> to vector<14x2xf32>
    %cst_78 = arith.constant dense<0.000000e+00> : vector<2x2xf32>
    %2890 = tpu.matmul %1960, %2889, %cst_78 {dimension_numbers = #tpu.dot_dimension_numbers<[1], [0], [0], [1], [0, 0, 1, 1], [], []>} : vector<2x14xf32>, vector<14x2xf32>, vector<2x2xf32> -> vector<2x2xf32>
    %2891 = arith.addf %2887, %2890 : vector<2x2xf32>
    %c3_79 = arith.constant 3 : index
    %c0_80 = arith.constant 0 : index
    %c0_81 = arith.constant 0 : index
    %2892 = vector.load %arg2[%c3_79, %c0_80, %c0_81] : memref<10x14x2xf32, #tpu.memory_space<vmem>>, vector<1x14x2xf32>
    %2893 = vector.shape_cast %2892 : vector<1x14x2xf32> to vector<14x2xf32>
    %cst_82 = arith.constant dense<0.000000e+00> : vector<2x2xf32>
    %2894 = tpu.matmul %2091, %2893, %cst_82 {dimension_numbers = #tpu.dot_dimension_numbers<[1], [0], [0], [1], [0, 0, 1, 1], [], []>} : vector<2x14xf32>, vector<14x2xf32>, vector<2x2xf32> -> vector<2x2xf32>
    %2895 = arith.addf %2891, %2894 : vector<2x2xf32>
    %c4_83 = arith.constant 4 : index
    %c0_84 = arith.constant 0 : index
    %c0_85 = arith.constant 0 : index
    %2896 = vector.load %arg2[%c4_83, %c0_84, %c0_85] : memref<10x14x2xf32, #tpu.memory_space<vmem>>, vector<1x14x2xf32>
    %2897 = vector.shape_cast %2896 : vector<1x14x2xf32> to vector<14x2xf32>
    %cst_86 = arith.constant dense<0.000000e+00> : vector<2x2xf32>
    %2898 = tpu.matmul %2222, %2897, %cst_86 {dimension_numbers = #tpu.dot_dimension_numbers<[1], [0], [0], [1], [0, 0, 1, 1], [], []>} : vector<2x14xf32>, vector<14x2xf32>, vector<2x2xf32> -> vector<2x2xf32>
    %2899 = arith.addf %2895, %2898 : vector<2x2xf32>
    %c5_87 = arith.constant 5 : index
    %c0_88 = arith.constant 0 : index
    %c0_89 = arith.constant 0 : index
    %2900 = vector.load %arg2[%c5_87, %c0_88, %c0_89] : memref<10x14x2xf32, #tpu.memory_space<vmem>>, vector<1x14x2xf32>
    %2901 = vector.shape_cast %2900 : vector<1x14x2xf32> to vector<14x2xf32>
    %cst_90 = arith.constant dense<0.000000e+00> : vector<2x2xf32>
    %2902 = tpu.matmul %2353, %2901, %cst_90 {dimension_numbers = #tpu.dot_dimension_numbers<[1], [0], [0], [1], [0, 0, 1, 1], [], []>} : vector<2x14xf32>, vector<14x2xf32>, vector<2x2xf32> -> vector<2x2xf32>
    %2903 = arith.addf %2899, %2902 : vector<2x2xf32>
    %c6_91 = arith.constant 6 : index
    %c0_92 = arith.constant 0 : index
    %c0_93 = arith.constant 0 : index
    %2904 = vector.load %arg2[%c6_91, %c0_92, %c0_93] : memref<10x14x2xf32, #tpu.memory_space<vmem>>, vector<1x14x2xf32>
    %2905 = vector.shape_cast %2904 : vector<1x14x2xf32> to vector<14x2xf32>
    %cst_94 = arith.constant dense<0.000000e+00> : vector<2x2xf32>
    %2906 = tpu.matmul %2484, %2905, %cst_94 {dimension_numbers = #tpu.dot_dimension_numbers<[1], [0], [0], [1], [0, 0, 1, 1], [], []>} : vector<2x14xf32>, vector<14x2xf32>, vector<2x2xf32> -> vector<2x2xf32>
    %2907 = arith.addf %2903, %2906 : vector<2x2xf32>
    %c7_95 = arith.constant 7 : index
    %c0_96 = arith.constant 0 : index
    %c0_97 = arith.constant 0 : index
    %2908 = vector.load %arg2[%c7_95, %c0_96, %c0_97] : memref<10x14x2xf32, #tpu.memory_space<vmem>>, vector<1x14x2xf32>
    %2909 = vector.shape_cast %2908 : vector<1x14x2xf32> to vector<14x2xf32>
    %cst_98 = arith.constant dense<0.000000e+00> : vector<2x2xf32>
    %2910 = tpu.matmul %2615, %2909, %cst_98 {dimension_numbers = #tpu.dot_dimension_numbers<[1], [0], [0], [1], [0, 0, 1, 1], [], []>} : vector<2x14xf32>, vector<14x2xf32>, vector<2x2xf32> -> vector<2x2xf32>
    %2911 = arith.addf %2907, %2910 : vector<2x2xf32>
    %c8_99 = arith.constant 8 : index
    %c0_100 = arith.constant 0 : index
    %c0_101 = arith.constant 0 : index
    %2912 = vector.load %arg2[%c8_99, %c0_100, %c0_101] : memref<10x14x2xf32, #tpu.memory_space<vmem>>, vector<1x14x2xf32>
    %2913 = vector.shape_cast %2912 : vector<1x14x2xf32> to vector<14x2xf32>
    %cst_102 = arith.constant dense<0.000000e+00> : vector<2x2xf32>
    %2914 = tpu.matmul %2746, %2913, %cst_102 {dimension_numbers = #tpu.dot_dimension_numbers<[1], [0], [0], [1], [0, 0, 1, 1], [], []>} : vector<2x14xf32>, vector<14x2xf32>, vector<2x2xf32> -> vector<2x2xf32>
    %2915 = arith.addf %2911, %2914 : vector<2x2xf32>
    %c9_103 = arith.constant 9 : index
    %c0_104 = arith.constant 0 : index
    %c0_105 = arith.constant 0 : index
    %2916 = vector.load %arg2[%c9_103, %c0_104, %c0_105] : memref<10x14x2xf32, #tpu.memory_space<vmem>>, vector<1x14x2xf32>
    %2917 = vector.shape_cast %2916 : vector<1x14x2xf32> to vector<14x2xf32>
    %cst_106 = arith.constant dense<0.000000e+00> : vector<2x2xf32>
    %2918 = tpu.matmul %2877, %2917, %cst_106 {dimension_numbers = #tpu.dot_dimension_numbers<[1], [0], [0], [1], [0, 0, 1, 1], [], []>} : vector<2x14xf32>, vector<14x2xf32>, vector<2x2xf32> -> vector<2x2xf32>
    %2919 = arith.addf %2915, %2918 : vector<2x2xf32>
    %c0_107 = arith.constant 0 : index
    %c0_108 = arith.constant 0 : index
    %2920 = vector.load %arg4[%c0_107, %c0_108] : memref<2x2xf32, #tpu.memory_space<vmem>>, vector<2x2xf32>
    tpu.vector_store %arg4[%c0_107, %c0_108], %2919 {strides = array<i32>} : memref<2x2xf32, #tpu.memory_space<vmem>>, vector<2x2xf32>,
    return
  }
}

</mosaic_0001>

<llo_original>
// kernel: forward.1
$region0: #{forward.1}
  #allocation0 [shape = 'u32[]', space=smem, size = 0x4, offset = 0x4, fixed_abs, tag = 'smem constant byte address 0x4 - core index']
  #allocation1 [shape = 'u32[72,128]{1,0:T(1,128)}', space=vmem, size = 0x9000, scoped, tag = 'internal scratch']
  %s0 = inlined_call_operand.vmem [shape: f32[698], index: 0, kind: input, shape index: {}]
  %s1 = inlined_call_operand.vmem [shape: f32[2,500], index: 1, kind: input, shape index: {}]
  %s2 = inlined_call_operand.vmem [shape: f32[10,14,2], index: 2, kind: input, shape index: {}]
  %s3 = inlined_call_operand.vmem [shape: f32[1,2], index: 3, kind: input, shape index: {}]
  %s4 = inlined_call_operand.hbm [shape: f32[2,2], index: 4, kind: output, shape index: {}]
  %s5 = sld [smem:[#allocation0]]
  $region30: #{forward.1} parent=0
    _
  %s7 = ssub.s32 1, %s5
  %s8 = scalar_select 0, %s7, %s5
  $region1: #{forward.1} parent=0
    #allocation2 [shape = 'u8[3072]{0}', space=smem, size = 0xc00, scoped, tag = 'input window, operand 0, single buffered']
    #allocation3 [shape = 's32[1]{0}', space=sflag, size = 0x4, scoped, tag = 'scoped memory for forward.1']
    #allocation4 [shape = 's32[1]{0}', space=sflag, size = 0x4, scoped, tag = 'scoped memory for forward.1']
    #allocation5 [shape = 'u8[1024]{0}', space=vmem, size = 0x400, scoped, tag = 'output window, operand 0, single buffered']
    %9 = vsyncpa [#allocation4], 0
    %10 = vsyncpa [#allocation3], 0
    // Predicated region
    $region2: #{forward.1} parent=1 // pred_check
      _
    $region3: #{forward.1} parent=1 // pred_check_branch
      %12 = sbr.rel (0) target = $region5
    $region4: #{forward.1} parent=1 // pred_region
      %14 = vsyncadd [#allocation4], 0
      %s16 = sshll.u32 %s0, 4
      %s17 = int_to_ptr.vmem [resolvable:$true] %s16
      %19 = dma.vmem_to_smem %s17, 96, [#allocation2], [#allocation4]
    $region5: #{forward.1} parent=1 // pred_fallthru
      _
    // Predicated region
    $region6: #{forward.1} parent=1 // pred_check
      _
    $region7: #{forward.1} parent=1 // pred_check_branch
      %21 = sbr.rel (0) target = $region9
    $region8: #{forward.1} parent=1 // pred_region
      _
    $region9: #{forward.1} parent=1 // pred_fallthru
      _
    // Predicated region
    $region10: #{forward.1} parent=1 // pred_check
      _
    $region11: #{forward.1} parent=1 // pred_check_branch
      %23 = sbr.rel (0) target = $region13
    $region12: #{forward.1} parent=1 // pred_region
      _
    $region13: #{forward.1} parent=1 // pred_fallthru
      _
    // Predicated region
    $region14: #{forward.1} parent=1 // pred_check
      _
    $region15: #{forward.1} parent=1 // pred_check_branch
      %25 = sbr.rel (0) target = $region17
    $region16: #{forward.1} parent=1 // pred_region
      _
    $region17: #{forward.1} parent=1 // pred_fallthru
      _
    // Predicated region
    $region18: #{forward.1} parent=1 // pred_check
      _
    $region19: #{forward.1} parent=1 // pred_check_branch
      %27 = sbr.rel (0) target = $region21
    $region20: #{forward.1} parent=1 // pred_region
      %29 = dma.done [#allocation4], 96
    $region21: #{forward.1} parent=1 // pred_fallthru
      _
    %30 = sfence
    %v31 = vld [vmem:[%s1] sm:$0xff]
    %v32 = vlaneseq
    %v33 = vshrl.u32 %v32, 7
    %v34 = vadd.s32 %v33, 8
    %v35 = vadd.s32 %v33, 16
    %v36 = vadd.s32 %v33, 24
    %v37 = vadd.s32 %v33, 32
    %v38 = vadd.s32 %v33, 40
    %v39 = vadd.s32 %v33, 48
    %v40 = vadd.s32 %v33, 56
    %v41 = vadd.s32 %v33, 64
    %v42 = vadd.s32 %v33, 72
    %v43 = vadd.s32 %v33, 80
    %v44 = vadd.s32 %v33, 88
    %v45 = vadd.s32 %v33, 96
    %v46 = vadd.s32 %v33, 104
    %v47 = vadd.s32 %v33, 112
    %v48 = vadd.s32 %v33, 120
    %v49 = vadd.s32 %v33, 128
    %v50 = vadd.s32 %v33, 136
    %v51 = vadd.s32 %v33, 144
    %v52 = vadd.s32 %v33, 152
    %v53 = vadd.s32 %v33, 160
    %v54 = vadd.s32 %v33, 168
    %v55 = vadd.s32 %v33, 176
    %v56 = vadd.s32 %v33, 184
    %v57 = vadd.s32 %v33, 192
    %v58 = vadd.s32 %v33, 200
    %v59 = vadd.s32 %v33, 208
    %v60 = vadd.s32 %v33, 216
    %v61 = vadd.s32 %v33, 224
    %v62 = vadd.s32 %v33, 232
    %v63 = vadd.s32 %v33, 240
    %v64 = vadd.s32 %v33, 248
    %v65 = vadd.s32 %v33, 256
    %v66 = vadd.s32 %v33, 264
    %v67 = vadd.s32 %v33, 272
    %v68 = vadd.s32 %v33, 280
    %v69 = vadd.s32 %v33, 288
    %v70 = vadd.s32 %v33, 296
    %v71 = vadd.s32 %v33, 304
    %v72 = vadd.s32 %v33, 312
    %v73 = vadd.s32 %v33, 320
    %v74 = vadd.s32 %v33, 328
    %v75 = vadd.s32 %v33, 336
    %v76 = vadd.s32 %v33, 344
    %v77 = vadd.s32 %v33, 352
    %v78 = vadd.s32 %v33, 360
    %v79 = vadd.s32 %v33, 368
    %v80 = vadd.s32 %v33, 376
    %v81 = vadd.s32 %v33, 384
    %v82 = vadd.s32 %v33, 392
    %v83 = vadd.s32 %v33, 400
    %v84 = vadd.s32 %v33, 408
    %v85 = vadd.s32 %v33, 416
    %v86 = vadd.s32 %v33, 424
    %v87 = vadd.s32 %v33, 432
    %v88 = vadd.s32 %v33, 440
    %v89 = vadd.s32 %v33, 448
    %v90 = vadd.s32 %v33, 456
    %v91 = vadd.s32 %v33, 464
    %v92 = vadd.s32 %v33, 472
    %v93 = vadd.s32 %v33, 480
    %v94 = vadd.s32 %v33, 488
    %v95 = vlaneseq
    %v96 = vand.u32 %v95, 127
    %v97 = vadd.s32 %v96, 128
    %v98 = vmul.u32 %v96, 2
    %v99 = vmul.u32 %v97, 2
    %vm100 = vcmp.eq.s32.totalorder %v33, %v98
    %vm101 = vcmp.eq.s32.totalorder %v33, %v99
    %vm102 = vcmp.eq.s32.totalorder %v34, %v98
    %vm103 = vcmp.eq.s32.totalorder %v34, %v99
    %vm104 = vcmp.eq.s32.totalorder %v35, %v98
    %vm105 = vcmp.eq.s32.totalorder %v35, %v99
    %vm106 = vcmp.eq.s32.totalorder %v36, %v98
    %vm107 = vcmp.eq.s32.totalorder %v36, %v99
    %vm108 = vcmp.eq.s32.totalorder %v37, %v98
    %vm109 = vcmp.eq.s32.totalorder %v37, %v99
    %vm110 = vcmp.eq.s32.totalorder %v38, %v98
    %vm111 = vcmp.eq.s32.totalorder %v38, %v99
    %vm112 = vcmp.eq.s32.totalorder %v39, %v98
    %vm113 = vcmp.eq.s32.totalorder %v39, %v99
    %vm114 = vcmp.eq.s32.totalorder %v40, %v98
    %vm115 = vcmp.eq.s32.totalorder %v40, %v99
    %vm116 = vcmp.eq.s32.totalorder %v41, %v98
    %vm117 = vcmp.eq.s32.totalorder %v41, %v99
    %vm118 = vcmp.eq.s32.totalorder %v42, %v98
    %vm119 = vcmp.eq.s32.totalorder %v42, %v99
    %vm120 = vcmp.eq.s32.totalorder %v43, %v98
    %vm121 = vcmp.eq.s32.totalorder %v43, %v99
    %vm122 = vcmp.eq.s32.totalorder %v44, %v98
    %vm123 = vcmp.eq.s32.totalorder %v44, %v99
    %vm124 = vcmp.eq.s32.totalorder %v45, %v98
    %vm125 = vcmp.eq.s32.totalorder %v45, %v99
    %vm126 = vcmp.eq.s32.totalorder %v46, %v98
    %vm127 = vcmp.eq.s32.totalorder %v46, %v99
    %vm128 = vcmp.eq.s32.totalorder %v47, %v98
    %vm129 = vcmp.eq.s32.totalorder %v47, %v99
    %vm130 = vcmp.eq.s32.totalorder %v48, %v98
    %vm131 = vcmp.eq.s32.totalorder %v48, %v99
    %vm132 = vcmp.eq.s32.totalorder %v49, %v98
    %vm133 = vcmp.eq.s32.totalorder %v49, %v99
    %vm134 = vcmp.eq.s32.totalorder %v50, %v98
    %vm135 = vcmp.eq.s32.totalorder %v50, %v99
    %vm136 = vcmp.eq.s32.totalorder %v51, %v98
    %vm137 = vcmp.eq.s32.totalorder %v51, %v99
    %vm138 = vcmp.eq.s32.totalorder %v52, %v98
    %vm139 = vcmp.eq.s32.totalorder %v52, %v99
    %vm140 = vcmp.eq.s32.totalorder %v53, %v98
    %vm141 = vcmp.eq.s32.totalorder %v53, %v99
    %vm142 = vcmp.eq.s32.totalorder %v54, %v98
    %vm143 = vcmp.eq.s32.totalorder %v54, %v99
    %vm144 = vcmp.eq.s32.totalorder %v55, %v98
    %vm145 = vcmp.eq.s32.totalorder %v55, %v99
    %vm146 = vcmp.eq.s32.totalorder %v56, %v98
    %vm147 = vcmp.eq.s32.totalorder %v56, %v99
    %vm148 = vcmp.eq.s32.totalorder %v57, %v98
    %vm149 = vcmp.eq.s32.totalorder %v57, %v99
    %vm150 = vcmp.eq.s32.totalorder %v58, %v98
    %vm151 = vcmp.eq.s32.totalorder %v58, %v99
    %vm152 = vcmp.eq.s32.totalorder %v59, %v98
    %vm153 = vcmp.eq.s32.totalorder %v59, %v99
    %vm154 = vcmp.eq.s32.totalorder %v60, %v98
    %vm155 = vcmp.eq.s32.totalorder %v60, %v99
    %vm156 = vcmp.eq.s32.totalorder %v61, %v98
    %vm157 = vcmp.eq.s32.totalorder %v61, %v99
    %vm158 = vcmp.eq.s32.totalorder %v62, %v98
    %vm159 = vcmp.eq.s32.totalorder %v62, %v99
    %vm160 = vcmp.eq.s32.totalorder %v63, %v98
    %vm161 = vcmp.eq.s32.totalorder %v63, %v99
    %vm162 = vcmp.eq.s32.totalorder %v64, %v98
    %vm163 = vcmp.eq.s32.totalorder %v64, %v99
    %vm164 = vcmp.eq.s32.totalorder %v65, %v98
    %vm165 = vcmp.eq.s32.totalorder %v65, %v99
    %vm166 = vcmp.eq.s32.totalorder %v66, %v98
    %vm167 = vcmp.eq.s32.totalorder %v66, %v99
    %vm168 = vcmp.eq.s32.totalorder %v67, %v98
    %vm169 = vcmp.eq.s32.totalorder %v67, %v99
    %vm170 = vcmp.eq.s32.totalorder %v68, %v98
    %vm171 = vcmp.eq.s32.totalorder %v68, %v99
    %vm172 = vcmp.eq.s32.totalorder %v69, %v98
    %vm173 = vcmp.eq.s32.totalorder %v69, %v99
    %vm174 = vcmp.eq.s32.totalorder %v70, %v98
    %vm175 = vcmp.eq.s32.totalorder %v70, %v99
    %vm176 = vcmp.eq.s32.totalorder %v71, %v98
    %vm177 = vcmp.eq.s32.totalorder %v71, %v99
    %vm178 = vcmp.eq.s32.totalorder %v72, %v98
    %vm179 = vcmp.eq.s32.totalorder %v72, %v99
    %vm180 = vcmp.eq.s32.totalorder %v73, %v98
    %vm181 = vcmp.eq.s32.totalorder %v73, %v99
    %vm182 = vcmp.eq.s32.totalorder %v74, %v98
    %vm183 = vcmp.eq.s32.totalorder %v74, %v99
    %vm184 = vcmp.eq.s32.totalorder %v75, %v98
    %vm185 = vcmp.eq.s32.totalorder %v75, %v99
    %vm186 = vcmp.eq.s32.totalorder %v76, %v98
    %vm187 = vcmp.eq.s32.totalorder %v76, %v99
    %vm188 = vcmp.eq.s32.totalorder %v77, %v98
    %vm189 = vcmp.eq.s32.totalorder %v77, %v99
    %vm190 = vcmp.eq.s32.totalorder %v78, %v98
    %vm191 = vcmp.eq.s32.totalorder %v78, %v99
    %vm192 = vcmp.eq.s32.totalorder %v79, %v98
    %vm193 = vcmp.eq.s32.totalorder %v79, %v99
    %vm194 = vcmp.eq.s32.totalorder %v80, %v98
    %vm195 = vcmp.eq.s32.totalorder %v80, %v99
    %vm196 = vcmp.eq.s32.totalorder %v81, %v98
    %vm197 = vcmp.eq.s32.totalorder %v81, %v99
    %vm198 = vcmp.eq.s32.totalorder %v82, %v98
    %vm199 = vcmp.eq.s32.totalorder %v82, %v99
    %vm200 = vcmp.eq.s32.totalorder %v83, %v98
    %vm201 = vcmp.eq.s32.totalorder %v83, %v99
    %vm202 = vcmp.eq.s32.totalorder %v84, %v98
    %vm203 = vcmp.eq.s32.totalorder %v84, %v99
    %vm204 = vcmp.eq.s32.totalorder %v85, %v98
    %vm205 = vcmp.eq.s32.totalorder %v85, %v99
    %vm206 = vcmp.eq.s32.totalorder %v86, %v98
    %vm207 = vcmp.eq.s32.totalorder %v86, %v99
    %vm208 = vcmp.eq.s32.totalorder %v87, %v98
    %vm209 = vcmp.eq.s32.totalorder %v87, %v99
    %vm210 = vcmp.eq.s32.totalorder %v88, %v98
    %vm211 = vcmp.eq.s32.totalorder %v88, %v99
    %vm212 = vcmp.eq.s32.totalorder %v89, %v98
    %vm213 = vcmp.eq.s32.totalorder %v89, %v99
    %vm214 = vcmp.eq.s32.totalorder %v90, %v98
    %vm215 = vcmp.eq.s32.totalorder %v90, %v99
    %vm216 = vcmp.eq.s32.totalorder %v91, %v98
    %vm217 = vcmp.eq.s32.totalorder %v91, %v99
    %vm218 = vcmp.eq.s32.totalorder %v92, %v98
    %vm219 = vcmp.eq.s32.totalorder %v92, %v99
    %vm220 = vcmp.eq.s32.totalorder %v93, %v98
    %vm221 = vcmp.eq.s32.totalorder %v93, %v99
    %vm222 = vcmp.eq.s32.totalorder %v94, %v98
    %vm223 = vcmp.eq.s32.totalorder %v94, %v99
    %v224 = vsel %vm100, 1, 0
    %v225 = vsel %vm101, 1, 0
    %v226 = vsel %vm102, 1, 0
    %v227 = vsel %vm103, 1, 0
    %v228 = vsel %vm104, 1, 0
    %v229 = vsel %vm105, 1, 0
    %v230 = vsel %vm106, 1, 0
    %v231 = vsel %vm107, 1, 0
    %v232 = vsel %vm108, 1, 0
    %v233 = vsel %vm109, 1, 0
    %v234 = vsel %vm110, 1, 0
    %v235 = vsel %vm111, 1, 0
    %v236 = vsel %vm112, 1, 0
    %v237 = vsel %vm113, 1, 0
    %v238 = vsel %vm114, 1, 0
    %v239 = vsel %vm115, 1, 0
    %v240 = vsel %vm116, 1, 0
    %v241 = vsel %vm117, 1, 0
    %v242 = vsel %vm118, 1, 0
    %v243 = vsel %vm119, 1, 0
    %v244 = vsel %vm120, 1, 0
    %v245 = vsel %vm121, 1, 0
    %v246 = vsel %vm122, 1, 0
    %v247 = vsel %vm123, 1, 0
    %v248 = vsel %vm124, 1, 0
    %v249 = vsel %vm125, 1, 0
    %v250 = vsel %vm126, 1, 0
    %v251 = vsel %vm127, 1, 0
    %v252 = vsel %vm128, 1, 0
    %v253 = vsel %vm129, 1, 0
    %v254 = vsel %vm130, 1, 0
    %v255 = vsel %vm131, 1, 0
    %v256 = vsel %vm132, 1, 0
    %v257 = vsel %vm133, 1, 0
    %v258 = vsel %vm134, 1, 0
    %v259 = vsel %vm135, 1, 0
    %v260 = vsel %vm136, 1, 0
    %v261 = vsel %vm137, 1, 0
    %v262 = vsel %vm138, 1, 0
    %v263 = vsel %vm139, 1, 0
    %v264 = vsel %vm140, 1, 0
    %v265 = vsel %vm141, 1, 0
    %v266 = vsel %vm142, 1, 0
    %v267 = vsel %vm143, 1, 0
    %v268 = vsel %vm144, 1, 0
    %v269 = vsel %vm145, 1, 0
    %v270 = vsel %vm146, 1, 0
    %v271 = vsel %vm147, 1, 0
    %v272 = vsel %vm148, 1, 0
    %v273 = vsel %vm149, 1, 0
    %v274 = vsel %vm150, 1, 0
    %v275 = vsel %vm151, 1, 0
    %v276 = vsel %vm152, 1, 0
    %v277 = vsel %vm153, 1, 0
    %v278 = vsel %vm154, 1, 0
    %v279 = vsel %vm155, 1, 0
    %v280 = vsel %vm156, 1, 0
    %v281 = vsel %vm157, 1, 0
    %v282 = vsel %vm158, 1, 0
    %v283 = vsel %vm159, 1, 0
    %v284 = vsel %vm160, 1, 0
    %v285 = vsel %vm161, 1, 0
    %v286 = vsel %vm162, 1, 0
    %v287 = vsel %vm163, 1, 0
    %v288 = vsel %vm164, 1, 0
    %v289 = vsel %vm165, 1, 0
    %v290 = vsel %vm166, 1, 0
    %v291 = vsel %vm167, 1, 0
    %v292 = vsel %vm168, 1, 0
    %v293 = vsel %vm169, 1, 0
    %v294 = vsel %vm170, 1, 0
    %v295 = vsel %vm171, 1, 0
    %v296 = vsel %vm172, 1, 0
    %v297 = vsel %vm173, 1, 0
    %v298 = vsel %vm174, 1, 0
    %v299 = vsel %vm175, 1, 0
    %v300 = vsel %vm176, 1, 0
    %v301 = vsel %vm177, 1, 0
    %v302 = vsel %vm178, 1, 0
    %v303 = vsel %vm179, 1, 0
    %v304 = vsel %vm180, 1, 0
    %v305 = vsel %vm181, 1, 0
    %v306 = vsel %vm182, 1, 0
    %v307 = vsel %vm183, 1, 0
    %v308 = vsel %vm184, 1, 0
    %v309 = vsel %vm185, 1, 0
    %v310 = vsel %vm186, 1, 0
    %v311 = vsel %vm187, 1, 0
    %v312 = vsel %vm188, 1, 0
    %v313 = vsel %vm189, 1, 0
    %v314 = vsel %vm190, 1, 0
    %v315 = vsel %vm191, 1, 0
    %v316 = vsel %vm192, 1, 0
    %v317 = vsel %vm193, 1, 0
    %v318 = vsel %vm194, 1, 0
    %v319 = vsel %vm195, 1, 0
    %v320 = vsel %vm196, 1, 0
    %v321 = vsel %vm197, 1, 0
    %v322 = vsel %vm198, 1, 0
    %v323 = vsel %vm199, 1, 0
    %v324 = vsel %vm200, 1, 0
    %v325 = vsel %vm201, 1, 0
    %v326 = vsel %vm202, 1, 0
    %v327 = vsel %vm203, 1, 0
    %v328 = vsel %vm204, 1, 0
    %v329 = vsel %vm205, 1, 0
    %v330 = vsel %vm206, 1, 0
    %v331 = vsel %vm207, 1, 0
    %v332 = vsel %vm208, 1, 0
    %v333 = vsel %vm209, 1, 0
    %v334 = vsel %vm210, 1, 0
    %v335 = vsel %vm211, 1, 0
    %v336 = vsel %vm212, 1, 0
    %v337 = vsel %vm213, 1, 0
    %v338 = vsel %vm214, 1, 0
    %v339 = vsel %vm215, 1, 0
    %v340 = vsel %vm216, 1, 0
    %v341 = vsel %vm217, 1, 0
    %v342 = vsel %vm218, 1, 0
    %v343 = vsel %vm219, 1, 0
    %v344 = vsel %vm220, 1, 0
    %v345 = vsel %vm221, 1, 0
    %v346 = vsel %vm222, 1, 0
    %v347 = vsel %vm223, 1, 0
    %v348 = vcvt.s32.f32 %v224
    %v349 = vcvt.s32.f32 %v225
    %v350 = vcvt.s32.f32 %v226
    %v351 = vcvt.s32.f32 %v227
    %v352 = vcvt.s32.f32 %v228
    %v353 = vcvt.s32.f32 %v229
    %v354 = vcvt.s32.f32 %v230
    %v355 = vcvt.s32.f32 %v231
    %v356 = vcvt.s32.f32 %v232
    %v357 = vcvt.s32.f32 %v233
    %v358 = vcvt.s32.f32 %v234
    %v359 = vcvt.s32.f32 %v235
    %v360 = vcvt.s32.f32 %v236
    %v361 = vcvt.s32.f32 %v237
    %v362 = vcvt.s32.f32 %v238
    %v363 = vcvt.s32.f32 %v239
    %v364 = vcvt.s32.f32 %v240
    %v365 = vcvt.s32.f32 %v241
    %v366 = vcvt.s32.f32 %v242
    %v367 = vcvt.s32.f32 %v243
    %v368 = vcvt.s32.f32 %v244
    %v369 = vcvt.s32.f32 %v245
    %v370 = vcvt.s32.f32 %v246
    %v371 = vcvt.s32.f32 %v247
    %v372 = vcvt.s32.f32 %v248
    %v373 = vcvt.s32.f32 %v249
    %v374 = vcvt.s32.f32 %v250
    %v375 = vcvt.s32.f32 %v251
    %v376 = vcvt.s32.f32 %v252
    %v377 = vcvt.s32.f32 %v253
    %v378 = vcvt.s32.f32 %v254
    %v379 = vcvt.s32.f32 %v255
    %v380 = vcvt.s32.f32 %v256
    %v381 = vcvt.s32.f32 %v257
    %v382 = vcvt.s32.f32 %v258
    %v383 = vcvt.s32.f32 %v259
    %v384 = vcvt.s32.f32 %v260
    %v385 = vcvt.s32.f32 %v261
    %v386 = vcvt.s32.f32 %v262
    %v387 = vcvt.s32.f32 %v263
    %v388 = vcvt.s32.f32 %v264
    %v389 = vcvt.s32.f32 %v265
    %v390 = vcvt.s32.f32 %v266
    %v391 = vcvt.s32.f32 %v267
    %v392 = vcvt.s32.f32 %v268
    %v393 = vcvt.s32.f32 %v269
    %v394 = vcvt.s32.f32 %v270
    %v395 = vcvt.s32.f32 %v271
    %v396 = vcvt.s32.f32 %v272
    %v397 = vcvt.s32.f32 %v273
    %v398 = vcvt.s32.f32 %v274
    %v399 = vcvt.s32.f32 %v275
    %v400 = vcvt.s32.f32 %v276
    %v401 = vcvt.s32.f32 %v277
    %v402 = vcvt.s32.f32 %v278
    %v403 = vcvt.s32.f32 %v279
    %v404 = vcvt.s32.f32 %v280
    %v405 = vcvt.s32.f32 %v281
    %v406 = vcvt.s32.f32 %v282
    %v407 = vcvt.s32.f32 %v283
    %v408 = vcvt.s32.f32 %v284
    %v409 = vcvt.s32.f32 %v285
    %v410 = vcvt.s32.f32 %v286
    %v411 = vcvt.s32.f32 %v287
    %v412 = vcvt.s32.f32 %v288
    %v413 = vcvt.s32.f32 %v289
    %v414 = vcvt.s32.f32 %v290
    %v415 = vcvt.s32.f32 %v291
    %v416 = vcvt.s32.f32 %v292
    %v417 = vcvt.s32.f32 %v293
    %v418 = vcvt.s32.f32 %v294
    %v419 = vcvt.s32.f32 %v295
    %v420 = vcvt.s32.f32 %v296
    %v421 = vcvt.s32.f32 %v297
    %v422 = vcvt.s32.f32 %v298
    %v423 = vcvt.s32.f32 %v299
    %v424 = vcvt.s32.f32 %v300
    %v425 = vcvt.s32.f32 %v301
    %v426 = vcvt.s32.f32 %v302
    %v427 = vcvt.s32.f32 %v303
    %v428 = vcvt.s32.f32 %v304
    %v429 = vcvt.s32.f32 %v305
    %v430 = vcvt.s32.f32 %v306
    %v431 = vcvt.s32.f32 %v307
    %v432 = vcvt.s32.f32 %v308
    %v433 = vcvt.s32.f32 %v309
    %v434 = vcvt.s32.f32 %v310
    %v435 = vcvt.s32.f32 %v311
    %v436 = vcvt.s32.f32 %v312
    %v437 = vcvt.s32.f32 %v313
    %v438 = vcvt.s32.f32 %v314
    %v439 = vcvt.s32.f32 %v315
    %v440 = vcvt.s32.f32 %v316
    %v441 = vcvt.s32.f32 %v317
    %v442 = vcvt.s32.f32 %v318
    %v443 = vcvt.s32.f32 %v319
    %v444 = vcvt.s32.f32 %v320
    %v445 = vcvt.s32.f32 %v321
    %v446 = vcvt.s32.f32 %v322
    %v447 = vcvt.s32.f32 %v323
    %v448 = vcvt.s32.f32 %v324
    %v449 = vcvt.s32.f32 %v325
    %v450 = vcvt.s32.f32 %v326
    %v451 = vcvt.s32.f32 %v327
    %v452 = vcvt.s32.f32 %v328
    %v453 = vcvt.s32.f32 %v329
    %v454 = vcvt.s32.f32 %v330
    %v455 = vcvt.s32.f32 %v331
    %v456 = vcvt.s32.f32 %v332
    %v457 = vcvt.s32.f32 %v333
    %v458 = vcvt.s32.f32 %v334
    %v459 = vcvt.s32.f32 %v335
    %v460 = vcvt.s32.f32 %v336
    %v461 = vcvt.s32.f32 %v337
    %v462 = vcvt.s32.f32 %v338
    %v463 = vcvt.s32.f32 %v339
    %v464 = vcvt.s32.f32 %v340
    %v465 = vcvt.s32.f32 %v341
    %v466 = vcvt.s32.f32 %v342
    %v467 = vcvt.s32.f32 %v343
    %v468 = vcvt.s32.f32 %v344
    %v469 = vcvt.s32.f32 %v345
    %v470 = vcvt.s32.f32 %v346
    %v471 = vcvt.s32.f32 %v347
    %s472 = sld [smem:[#allocation2]]
    %v473 = vstv %s472
    %v474 = vmul.f32 %v473, %v31
    %s475 = sld [smem:[#allocation2 + $0x1]]
    %v476 = vstv %s475
    %v477 = vmul.f32 %v476, %v31
    %479 = vrot.lane.b32.xlu0 %v477, 127
    %v480 = vpop.permute.xlu0 %479
    %v481 = vrot.slane %v480, 2
    %vm482 = vcmask 1039360
    %v483 = vsel %vm482, %v480, %v481
    %v485 = vadd.f32 %v474, %v483
    %s486 = sld [smem:[#allocation2 + $0x2]]
    %v487 = vstv %s486
    %v488 = vmul.f32 %v487, %v31
    %490 = vrot.lane.b32.xlu0 %v488, 126
    %v491 = vpop.permute.xlu0 %490
    %v492 = vrot.slane %v491, 2
    %vm493 = vcmask 1031168
    %v494 = vsel %vm493, %v491, %v492
    %v496 = vadd.f32 %v485, %v494
    %s497 = sld [smem:[#allocation2 + $0x3]]
    %v498 = vstv %s497
    %v499 = vmul.f32 %v498, %v31
    %501 = vrot.lane.b32.xlu0 %v499, 125
    %v502 = vpop.permute.xlu0 %501
    %v503 = vrot.slane %v502, 2
    %vm504 = vcmask 1022976
    %v505 = vsel %vm504, %v502, %v503
    %v507 = vadd.f32 %v496, %v505
    %s508 = sld [smem:[#allocation2 + $0x4]]
    %v509 = vstv %s508
    %v510 = vmul.f32 %v509, %v31
    %512 = vrot.lane.b32.xlu0 %v510, 124
    %v513 = vpop.permute.xlu0 %512
    %v514 = vrot.slane %v513, 2
    %vm515 = vcmask 1014784
    %v516 = vsel %vm515, %v513, %v514
    %v518 = vadd.f32 %v507, %v516
    %s519 = sld [smem:[#allocation2 + $0x5]]
    %v520 = vstv %s519
    %v521 = vmul.f32 %v520, %v31
    %523 = vrot.lane.b32.xlu0 %v521, 123
    %v524 = vpop.permute.xlu0 %523
    %v525 = vrot.slane %v524, 2
    %vm526 = vcmask 1006592
    %v527 = vsel %vm526, %v524, %v525
    %v529 = vadd.f32 %v518, %v527
    %s530 = sld [smem:[#allocation2 + $0xc]]
    %v531 = vstv %s530
    %533 = vst [vmem:[#allocation1] ss:$4 sm:$0xff] %v529
    %v534 = vld.sshfl [vmem:[#allocation1] sm:$0xff pattern:$0x73625140]
    %v535 = vld.sshfl [vmem:[#allocation1 + $0x8] sm:$0xff pattern:$0x73625140]
    %v536 = vld.sshfl [vmem:[#allocation1 + $0x10] sm:$0xff pattern:$0x73625140]
    %v537 = vld.sshfl [vmem:[#allocation1 + $0x18] sm:$0xff pattern:$0x73625140]
    %vm541 = vcmask 908288
    %v542 = vsel %vm541, %v537, 0
    %vm544 = vcmask 1046528
    %v546 = vsel %vm544, %v470, 0
    %v549 = vsel %vm544, %v471, 0
    %551 = vmatpush.msra.mxu0 %v378
    %552 = vmatpush.msra.mxu0 %v376
    %553 = vmatpush.msra.mxu0 %v374
    %554 = vmatpush.msra.mxu0 %v372
    %555 = vmatpush.msra.mxu0 %v370
    %556 = vmatpush.msra.mxu0 %v368
    %557 = vmatpush.msra.mxu0 %v366
    %558 = vmatpush.msra.mxu0 %v364
    %559 = vmatpush.msra.mxu0 %v362
    %560 = vmatpush.msra.mxu0 %v360
    %561 = vmatpush.msra.mxu0 %v358
    %562 = vmatpush.msra.mxu0 %v356
    %563 = vmatpush.msra.mxu0 %v354
    %564 = vmatpush.msra.mxu0 %v352
    %565 = vmatpush.msra.mxu0 %v350
    %566 = vmatpush.msra.mxu0 %v348
    %567 = vmatmul.f32.gmra.mxu0 %v534
    %v568 = vpop.f32.mrf.mxu0
    %v569 = vadd.f32 %v531, %v568
    %570 = vdwg.mxu0
    %571 = vmatpush.msra.mxu0 %v410
    %572 = vmatpush.msra.mxu0 %v408
    %573 = vmatpush.msra.mxu0 %v406
    %574 = vmatpush.msra.mxu0 %v404
    %575 = vmatpush.msra.mxu0 %v402
    %576 = vmatpush.msra.mxu0 %v400
    %577 = vmatpush.msra.mxu0 %v398
    %578 = vmatpush.msra.mxu0 %v396
    %579 = vmatpush.msra.mxu0 %v394
    %580 = vmatpush.msra.mxu0 %v392
    %581 = vmatpush.msra.mxu0 %v390
    %582 = vmatpush.msra.mxu0 %v388
    %583 = vmatpush.msra.mxu0 %v386
    %584 = vmatpush.msra.mxu0 %v384
    %585 = vmatpush.msra.mxu0 %v382
    %586 = vmatpush.msra.mxu0 %v380
    %587 = vmatmul.f32.gmra.mxu0 %v535
    %v588 = vpop.f32.mrf.mxu0
    %v589 = vadd.f32 %v569, %v588
    %590 = vdwg.mxu0
    %591 = vmatpush.msra.mxu0 %v442
    %592 = vmatpush.msra.mxu0 %v440
    %593 = vmatpush.msra.mxu0 %v438
    %594 = vmatpush.msra.mxu0 %v436
    %595 = vmatpush.msra.mxu0 %v434
    %596 = vmatpush.msra.mxu0 %v432
    %597 = vmatpush.msra.mxu0 %v430
    %598 = vmatpush.msra.mxu0 %v428
    %599 = vmatpush.msra.mxu0 %v426
    %600 = vmatpush.msra.mxu0 %v424
    %601 = vmatpush.msra.mxu0 %v422
    %602 = vmatpush.msra.mxu0 %v420
    %603 = vmatpush.msra.mxu0 %v418
    %604 = vmatpush.msra.mxu0 %v416
    %605 = vmatpush.msra.mxu0 %v414
    %606 = vmatpush.msra.mxu0 %v412
    %607 = vmatmul.f32.gmra.mxu0 %v536
    %v608 = vpop.f32.mrf.mxu0
    %v609 = vadd.f32 %v589, %v608
    %610 = vdwg.mxu0
    %611 = vmatpush.msra.mxu0 0.0
    %612 = vmatpush.msra.mxu0 0.0
    %613 = vmatpush.msra.mxu0 %v546
    %614 = vmatpush.msra.mxu0 %v468
    %615 = vmatpush.msra.mxu0 %v466
    %616 = vmatpush.msra.mxu0 %v464
    %617 = vmatpush.msra.mxu0 %v462
    %618 = vmatpush.msra.mxu0 %v460
    %619 = vmatpush.msra.mxu0 %v458
    %620 = vmatpush.msra.mxu0 %v456
    %621 = vmatpush.msra.mxu0 %v454
    %622 = vmatpush.msra.mxu0 %v452
    %623 = vmatpush.msra.mxu0 %v450
    %624 = vmatpush.msra.mxu0 %v448
    %625 = vmatpush.msra.mxu0 %v446
    %626 = vmatpush.msra.mxu0 %v444
    %627 = vmatmul.f32.gmra.mxu0 %v542
    %v628 = vpop.f32.mrf.mxu0
    %v629 = vadd.f32 %v609, %v628
    %630 = vdwg.mxu0
    %631 = vmatpush.msra.mxu0 %v379
    %632 = vmatpush.msra.mxu0 %v377
    %633 = vmatpush.msra.mxu0 %v375
    %634 = vmatpush.msra.mxu0 %v373
    %635 = vmatpush.msra.mxu0 %v371
    %636 = vmatpush.msra.mxu0 %v369
    %637 = vmatpush.msra.mxu0 %v367
    %638 = vmatpush.msra.mxu0 %v365
    %639 = vmatpush.msra.mxu0 %v363
    %640 = vmatpush.msra.mxu0 %v361
    %641 = vmatpush.msra.mxu0 %v359
    %642 = vmatpush.msra.mxu0 %v357
    %643 = vmatpush.msra.mxu0 %v355
    %644 = vmatpush.msra.mxu0 %v353
    %645 = vmatpush.msra.mxu0 %v351
    %646 = vmatpush.msra.mxu0 %v349
    %647 = vmatmul.f32.gmra.mxu0 %v534
    %v648 = vpop.f32.mrf.mxu0
    %v649 = vadd.f32 %v531, %v648
    %650 = vdwg.mxu0
    %651 = vmatpush.msra.mxu0 %v411
    %652 = vmatpush.msra.mxu0 %v409
    %653 = vmatpush.msra.mxu0 %v407
    %654 = vmatpush.msra.mxu0 %v405
    %655 = vmatpush.msra.mxu0 %v403
    %656 = vmatpush.msra.mxu0 %v401
    %657 = vmatpush.msra.mxu0 %v399
    %658 = vmatpush.msra.mxu0 %v397
    %659 = vmatpush.msra.mxu0 %v395
    %660 = vmatpush.msra.mxu0 %v393
    %661 = vmatpush.msra.mxu0 %v391
    %662 = vmatpush.msra.mxu0 %v389
    %663 = vmatpush.msra.mxu0 %v387
    %664 = vmatpush.msra.mxu0 %v385
    %665 = vmatpush.msra.mxu0 %v383
    %666 = vmatpush.msra.mxu0 %v381
    %667 = vmatmul.f32.gmra.mxu0 %v535
    %v668 = vpop.f32.mrf.mxu0
    %v669 = vadd.f32 %v649, %v668
    %670 = vdwg.mxu0
    %671 = vmatpush.msra.mxu0 %v443
    %672 = vmatpush.msra.mxu0 %v441
    %673 = vmatpush.msra.mxu0 %v439
    %674 = vmatpush.msra.mxu0 %v437
    %675 = vmatpush.msra.mxu0 %v435
    %676 = vmatpush.msra.mxu0 %v433
    %677 = vmatpush.msra.mxu0 %v431
    %678 = vmatpush.msra.mxu0 %v429
    %679 = vmatpush.msra.mxu0 %v427
    %680 = vmatpush.msra.mxu0 %v425
    %681 = vmatpush.msra.mxu0 %v423
    %682 = vmatpush.msra.mxu0 %v421
    %683 = vmatpush.msra.mxu0 %v419
    %684 = vmatpush.msra.mxu0 %v417
    %685 = vmatpush.msra.mxu0 %v415
    %686 = vmatpush.msra.mxu0 %v413
    %687 = vmatmul.f32.gmra.mxu0 %v536
    %v688 = vpop.f32.mrf.mxu0
    %v689 = vadd.f32 %v669, %v688
    %690 = vdwg.mxu0
    %691 = vmatpush.msra.mxu0 0.0
    %692 = vmatpush.msra.mxu0 0.0
    %693 = vmatpush.msra.mxu0 %v549
    %694 = vmatpush.msra.mxu0 %v469
    %695 = vmatpush.msra.mxu0 %v467
    %696 = vmatpush.msra.mxu0 %v465
    %697 = vmatpush.msra.mxu0 %v463
    %698 = vmatpush.msra.mxu0 %v461
    %699 = vmatpush.msra.mxu0 %v459
    %700 = vmatpush.msra.mxu0 %v457
    %701 = vmatpush.msra.mxu0 %v455
    %702 = vmatpush.msra.mxu0 %v453
    %703 = vmatpush.msra.mxu0 %v451
    %704 = vmatpush.msra.mxu0 %v449
    %705 = vmatpush.msra.mxu0 %v447
    %706 = vmatpush.msra.mxu0 %v445
    %707 = vmatmul.f32.gmra.mxu0 %v542
    %v708 = vpop.f32.mrf.mxu0
    %v709 = vadd.f32 %v689, %v708
    %710 = vdwg.mxu0
    %v711 = vmax.f32 %v629, 0.0
    %v712 = vmax.f32 %v709, 0.0
    %s713 = sld [smem:[#allocation2 + $0xe]]
    %v714 = vstv %s713
    %v715 = vmul.f32 %v711, %v714
    %v716 = vmul.f32 %v712, %v714
    %s717 = sld [smem:[#allocation2 + $0x10]]
    %v718 = vstv %s717
    %v719 = vadd.f32 %v715, %v718
    %v720 = vadd.f32 %v716, %v718
    %s721 = sld [smem:[#allocation2 + $0x6]]
    %v722 = vstv %s721
    %v723 = vmul.f32 %v722, %v31
    %s724 = sld [smem:[#allocation2 + $0x7]]
    %v725 = vstv %s724
    %v726 = vmul.f32 %v725, %v31
    %728 = vrot.lane.b32.xlu0 %v726, 127
    %v729 = vpop.permute.xlu0 %728
    %v730 = vrot.slane %v729, 2
    %v731 = vsel %vm482, %v729, %v730
    %v733 = vadd.f32 %v723, %v731
    %s734 = sld [smem:[#allocation2 + $0x8]]
    %v735 = vstv %s734
    %v736 = vmul.f32 %v735, %v31
    %738 = vrot.lane.b32.xlu0 %v736, 126
    %v739 = vpop.permute.xlu0 %738
    %v740 = vrot.slane %v739, 2
    %v741 = vsel %vm493, %v739, %v740
    %v743 = vadd.f32 %v733, %v741
    %s744 = sld [smem:[#allocation2 + $0x9]]
    %v745 = vstv %s744
    %v746 = vmul.f32 %v745, %v31
    %748 = vrot.lane.b32.xlu0 %v746, 125
    %v749 = vpop.permute.xlu0 %748
    %v750 = vrot.slane %v749, 2
    %v751 = vsel %vm504, %v749, %v750
    %v753 = vadd.f32 %v743, %v751
    %s754 = sld [smem:[#allocation2 + $0xa]]
    %v755 = vstv %s754
    %v756 = vmul.f32 %v755, %v31
    %758 = vrot.lane.b32.xlu0 %v756, 124
    %v759 = vpop.permute.xlu0 %758
    %v760 = vrot.slane %v759, 2
    %v761 = vsel %vm515, %v759, %v760
    %v763 = vadd.f32 %v753, %v761
    %s764 = sld [smem:[#allocation2 + $0xb]]
    %v765 = vstv %s764
    %v766 = vmul.f32 %v765, %v31
    %768 = vrot.lane.b32.xlu0 %v766, 123
    %v769 = vpop.permute.xlu0 %768
    %v770 = vrot.slane %v769, 2
    %v771 = vsel %vm526, %v769, %v770
    %v773 = vadd.f32 %v763, %v771
    %s774 = sld [smem:[#allocation2 + $0xd]]
    %v775 = vstv %s774
    %777 = vst [vmem:[#allocation1] ss:$4 sm:$0xff] %v773
    %v778 = vld.sshfl [vmem:[#allocation1] sm:$0xff pattern:$0x73625140]
    %v779 = vld.sshfl [vmem:[#allocation1 + $0x8] sm:$0xff pattern:$0x73625140]
    %v780 = vld.sshfl [vmem:[#allocation1 + $0x10] sm:$0xff pattern:$0x73625140]
    %v781 = vld.sshfl [vmem:[#allocation1 + $0x18] sm:$0xff pattern:$0x73625140]
    %v785 = vsel %vm541, %v781, 0
    %787 = vmatpush.msra.mxu0 %v378
    %788 = vmatpush.msra.mxu0 %v376
    %789 = vmatpush.msra.mxu0 %v374
    %790 = vmatpush.msra.mxu0 %v372
    %791 = vmatpush.msra.mxu0 %v370
    %792 = vmatpush.msra.mxu0 %v368
    %793 = vmatpush.msra.mxu0 %v366
    %794 = vmatpush.msra.mxu0 %v364
    %795 = vmatpush.msra.mxu0 %v362
    %796 = vmatpush.msra.mxu0 %v360
    %797 = vmatpush.msra.mxu0 %v358
    %798 = vmatpush.msra.mxu0 %v356
    %799 = vmatpush.msra.mxu0 %v354
    %800 = vmatpush.msra.mxu0 %v352
    %801 = vmatpush.msra.mxu0 %v350
    %802 = vmatpush.msra.mxu0 %v348
    %803 = vmatmul.f32.gmra.mxu0 %v778
    %v804 = vpop.f32.mrf.mxu0
    %v805 = vadd.f32 %v775, %v804
    %806 = vdwg.mxu0
    %807 = vmatpush.msra.mxu0 %v410
    %808 = vmatpush.msra.mxu0 %v408
    %809 = vmatpush.msra.mxu0 %v406
    %810 = vmatpush.msra.mxu0 %v404
    %811 = vmatpush.msra.mxu0 %v402
    %812 = vmatpush.msra.mxu0 %v400
    %813 = vmatpush.msra.mxu0 %v398
    %814 = vmatpush.msra.mxu0 %v396
    %815 = vmatpush.msra.mxu0 %v394
    %816 = vmatpush.msra.mxu0 %v392
    %817 = vmatpush.msra.mxu0 %v390
    %818 = vmatpush.msra.mxu0 %v388
    %819 = vmatpush.msra.mxu0 %v386
    %820 = vmatpush.msra.mxu0 %v384
    %821 = vmatpush.msra.mxu0 %v382
    %822 = vmatpush.msra.mxu0 %v380
    %823 = vmatmul.f32.gmra.mxu0 %v779
    %v824 = vpop.f32.mrf.mxu0
    %v825 = vadd.f32 %v805, %v824
    %826 = vdwg.mxu0
    %827 = vmatpush.msra.mxu0 %v442
    %828 = vmatpush.msra.mxu0 %v440
    %829 = vmatpush.msra.mxu0 %v438
    %830 = vmatpush.msra.mxu0 %v436
    %831 = vmatpush.msra.mxu0 %v434
    %832 = vmatpush.msra.mxu0 %v432
    %833 = vmatpush.msra.mxu0 %v430
    %834 = vmatpush.msra.mxu0 %v428
    %835 = vmatpush.msra.mxu0 %v426
    %836 = vmatpush.msra.mxu0 %v424
    %837 = vmatpush.msra.mxu0 %v422
    %838 = vmatpush.msra.mxu0 %v420
    %839 = vmatpush.msra.mxu0 %v418
    %840 = vmatpush.msra.mxu0 %v416
    %841 = vmatpush.msra.mxu0 %v414
    %842 = vmatpush.msra.mxu0 %v412
    %843 = vmatmul.f32.gmra.mxu0 %v780
    %v844 = vpop.f32.mrf.mxu0
    %v845 = vadd.f32 %v825, %v844
    %846 = vdwg.mxu0
    %847 = vmatpush.msra.mxu0 0.0
    %848 = vmatpush.msra.mxu0 0.0
    %849 = vmatpush.msra.mxu0 %v546
    %850 = vmatpush.msra.mxu0 %v468
    %851 = vmatpush.msra.mxu0 %v466
    %852 = vmatpush.msra.mxu0 %v464
    %853 = vmatpush.msra.mxu0 %v462
    %854 = vmatpush.msra.mxu0 %v460
    %855 = vmatpush.msra.mxu0 %v458
    %856 = vmatpush.msra.mxu0 %v456
    %857 = vmatpush.msra.mxu0 %v454
    %858 = vmatpush.msra.mxu0 %v452
    %859 = vmatpush.msra.mxu0 %v450
    %860 = vmatpush.msra.mxu0 %v448
    %861 = vmatpush.msra.mxu0 %v446
    %862 = vmatpush.msra.mxu0 %v444
    %863 = vmatmul.f32.gmra.mxu0 %v785
    %v864 = vpop.f32.mrf.mxu0
    %v865 = vadd.f32 %v845, %v864
    %866 = vdwg.mxu0
    %867 = vmatpush.msra.mxu0 %v379
    %868 = vmatpush.msra.mxu0 %v377
    %869 = vmatpush.msra.mxu0 %v375
    %870 = vmatpush.msra.mxu0 %v373
    %871 = vmatpush.msra.mxu0 %v371
    %872 = vmatpush.msra.mxu0 %v369
    %873 = vmatpush.msra.mxu0 %v367
    %874 = vmatpush.msra.mxu0 %v365
    %875 = vmatpush.msra.mxu0 %v363
    %876 = vmatpush.msra.mxu0 %v361
    %877 = vmatpush.msra.mxu0 %v359
    %878 = vmatpush.msra.mxu0 %v357
    %879 = vmatpush.msra.mxu0 %v355
    %880 = vmatpush.msra.mxu0 %v353
    %881 = vmatpush.msra.mxu0 %v351
    %882 = vmatpush.msra.mxu0 %v349
    %883 = vmatmul.f32.gmra.mxu0 %v778
    %v884 = vpop.f32.mrf.mxu0
    %v885 = vadd.f32 %v775, %v884
    %886 = vdwg.mxu0
    %887 = vmatpush.msra.mxu0 %v411
    %888 = vmatpush.msra.mxu0 %v409
    %889 = vmatpush.msra.mxu0 %v407
    %890 = vmatpush.msra.mxu0 %v405
    %891 = vmatpush.msra.mxu0 %v403
    %892 = vmatpush.msra.mxu0 %v401
    %893 = vmatpush.msra.mxu0 %v399
    %894 = vmatpush.msra.mxu0 %v397
    %895 = vmatpush.msra.mxu0 %v395
    %896 = vmatpush.msra.mxu0 %v393
    %897 = vmatpush.msra.mxu0 %v391
    %898 = vmatpush.msra.mxu0 %v389
    %899 = vmatpush.msra.mxu0 %v387
    %900 = vmatpush.msra.mxu0 %v385
    %901 = vmatpush.msra.mxu0 %v383
    %902 = vmatpush.msra.mxu0 %v381
    %903 = vmatmul.f32.gmra.mxu0 %v779
    %v904 = vpop.f32.mrf.mxu0
    %v905 = vadd.f32 %v885, %v904
    %906 = vdwg.mxu0
    %907 = vmatpush.msra.mxu0 %v443
    %908 = vmatpush.msra.mxu0 %v441
    %909 = vmatpush.msra.mxu0 %v439
    %910 = vmatpush.msra.mxu0 %v437
    %911 = vmatpush.msra.mxu0 %v435
    %912 = vmatpush.msra.mxu0 %v433
    %913 = vmatpush.msra.mxu0 %v431
    %914 = vmatpush.msra.mxu0 %v429
    %915 = vmatpush.msra.mxu0 %v427
    %916 = vmatpush.msra.mxu0 %v425
    %917 = vmatpush.msra.mxu0 %v423
    %918 = vmatpush.msra.mxu0 %v421
    %919 = vmatpush.msra.mxu0 %v419
    %920 = vmatpush.msra.mxu0 %v417
    %921 = vmatpush.msra.mxu0 %v415
    %922 = vmatpush.msra.mxu0 %v413
    %923 = vmatmul.f32.gmra.mxu0 %v780
    %v924 = vpop.f32.mrf.mxu0
    %v925 = vadd.f32 %v905, %v924
    %926 = vdwg.mxu0
    %927 = vmatpush.msra.mxu0 0.0
    %928 = vmatpush.msra.mxu0 0.0
    %929 = vmatpush.msra.mxu0 %v549
    %930 = vmatpush.msra.mxu0 %v469
    %931 = vmatpush.msra.mxu0 %v467
    %932 = vmatpush.msra.mxu0 %v465
    %933 = vmatpush.msra.mxu0 %v463
    %934 = vmatpush.msra.mxu0 %v461
    %935 = vmatpush.msra.mxu0 %v459
    %936 = vmatpush.msra.mxu0 %v457
    %937 = vmatpush.msra.mxu0 %v455
    %938 = vmatpush.msra.mxu0 %v453
    %939 = vmatpush.msra.mxu0 %v451
    %940 = vmatpush.msra.mxu0 %v449
    %941 = vmatpush.msra.mxu0 %v447
    %942 = vmatpush.msra.mxu0 %v445
    %943 = vmatmul.f32.gmra.mxu0 %v785
    %v944 = vpop.f32.mrf.mxu0
    %v945 = vadd.f32 %v925, %v944
    %946 = vdwg.mxu0
    %v947 = vmax.f32 %v865, 0.0
    %v948 = vmax.f32 %v945, 0.0
    %s949 = sld [smem:[#allocation2 + $0xf]]
    %v950 = vstv %s949
    %v951 = vmul.f32 %v947, %v950
    %v952 = vmul.f32 %v948, %v950
    %s953 = sld [smem:[#allocation2 + $0x11]]
    %v954 = vstv %s953
    %v955 = vadd.f32 %v951, %v954
    %v956 = vadd.f32 %v952, %v954
    %s957 = sld [smem:[#allocation2 + $0x12]]
    %v958 = vstv %s957
    %v959 = vmul.f32 %v958, %v719
    %v960 = vmul.f32 %v958, %v720
    %s961 = sld [smem:[#allocation2 + $0x13]]
    %v962 = vstv %s961
    %v963 = vmul.f32 %v962, %v719
    %v964 = vmul.f32 %v962, %v720
    %967 = vrot.lane.b32.xlu0 %v963, 127
    %v968 = vpop.permute.xlu0 %967
    %969 = vrot.lane.b32.xlu0 %v964, 127
    %v970 = vpop.permute.xlu0 %969
    %v971 = vsel %vm482, %v968, %v970
    %v974 = vadd.f32 %v959, %v971
    %v975 = vadd.f32 %v960, %v970
    %s976 = sld [smem:[#allocation2 + $0x14]]
    %v977 = vstv %s976
    %v978 = vmul.f32 %v977, %v719
    %v979 = vmul.f32 %v977, %v720
    %982 = vrot.lane.b32.xlu0 %v978, 126
    %v983 = vpop.permute.xlu0 %982
    %984 = vrot.lane.b32.xlu0 %v979, 126
    %v985 = vpop.permute.xlu0 %984
    %v986 = vsel %vm493, %v983, %v985
    %v989 = vadd.f32 %v974, %v986
    %v990 = vadd.f32 %v975, %v985
    %s991 = sld [smem:[#allocation2 + $0x15]]
    %v992 = vstv %s991
    %v993 = vmul.f32 %v992, %v719
    %v994 = vmul.f32 %v992, %v720
    %997 = vrot.lane.b32.xlu0 %v993, 125
    %v998 = vpop.permute.xlu0 %997
    %999 = vrot.lane.b32.xlu0 %v994, 125
    %v1000 = vpop.permute.xlu0 %999
    %v1001 = vsel %vm504, %v998, %v1000
    %v1004 = vadd.f32 %v989, %v1001
    %v1005 = vadd.f32 %v990, %v1000
    %s1006 = sld [smem:[#allocation2 + $0x16]]
    %v1007 = vstv %s1006
    %v1008 = vmul.f32 %v1007, %v719
    %v1009 = vmul.f32 %v1007, %v720
    %1012 = vrot.lane.b32.xlu0 %v1008, 124
    %v1013 = vpop.permute.xlu0 %1012
    %1014 = vrot.lane.b32.xlu0 %v1009, 124
    %v1015 = vpop.permute.xlu0 %1014
    %v1016 = vsel %vm515, %v1013, %v1015
    %v1019 = vadd.f32 %v1004, %v1016
    %v1020 = vadd.f32 %v1005, %v1015
    %s1021 = sld [smem:[#allocation2 + $0x17]]
    %v1022 = vstv %s1021
    %v1023 = vmul.f32 %v1022, %v719
    %v1024 = vmul.f32 %v1022, %v720
    %1027 = vrot.lane.b32.xlu0 %v1023, 123
    %v1028 = vpop.permute.xlu0 %1027
    %1029 = vrot.lane.b32.xlu0 %v1024, 123
    %v1030 = vpop.permute.xlu0 %1029
    %v1031 = vsel %vm526, %v1028, %v1030
    %v1034 = vadd.f32 %v1019, %v1031
    %v1035 = vadd.f32 %v1020, %v1030
    %s1036 = sld [smem:[#allocation2 + $0x18]]
    %v1037 = vstv %s1036
    %v1038 = vmul.f32 %v1037, %v955
    %v1039 = vmul.f32 %v1037, %v956
    %v1040 = vadd.f32 %v1034, %v1038
    %v1041 = vadd.f32 %v1035, %v1039
    %s1042 = sld [smem:[#allocation2 + $0x19]]
    %v1043 = vstv %s1042
    %v1044 = vmul.f32 %v1043, %v955
    %v1045 = vmul.f32 %v1043, %v956
    %1048 = vrot.lane.b32.xlu0 %v1044, 127
    %v1049 = vpop.permute.xlu0 %1048
    %1050 = vrot.lane.b32.xlu0 %v1045, 127
    %v1051 = vpop.permute.xlu0 %1050
    %v1052 = vsel %vm482, %v1049, %v1051
    %v1055 = vadd.f32 %v1040, %v1052
    %v1056 = vadd.f32 %v1041, %v1051
    %s1057 = sld [smem:[#allocation2 + $0x1a]]
    %v1058 = vstv %s1057
    %v1059 = vmul.f32 %v1058, %v955
    %v1060 = vmul.f32 %v1058, %v956
    %1063 = vrot.lane.b32.xlu0 %v1059, 126
    %v1064 = vpop.permute.xlu0 %1063
    %1065 = vrot.lane.b32.xlu0 %v1060, 126
    %v1066 = vpop.permute.xlu0 %1065
    %v1067 = vsel %vm493, %v1064, %v1066
    %v1070 = vadd.f32 %v1055, %v1067
    %v1071 = vadd.f32 %v1056, %v1066
    %s1072 = sld [smem:[#allocation2 + $0x1b]]
    %v1073 = vstv %s1072
    %v1074 = vmul.f32 %v1073, %v955
    %v1075 = vmul.f32 %v1073, %v956
    %1078 = vrot.lane.b32.xlu0 %v1074, 125
    %v1079 = vpop.permute.xlu0 %1078
    %1080 = vrot.lane.b32.xlu0 %v1075, 125
    %v1081 = vpop.permute.xlu0 %1080
    %v1082 = vsel %vm504, %v1079, %v1081
    %v1085 = vadd.f32 %v1070, %v1082
    %v1086 = vadd.f32 %v1071, %v1081
    %s1087 = sld [smem:[#allocation2 + $0x1c]]
    %v1088 = vstv %s1087
    %v1089 = vmul.f32 %v1088, %v955
    %v1090 = vmul.f32 %v1088, %v956
    %1093 = vrot.lane.b32.xlu0 %v1089, 124
    %v1094 = vpop.permute.xlu0 %1093
    %1095 = vrot.lane.b32.xlu0 %v1090, 124
    %v1096 = vpop.permute.xlu0 %1095
    %v1097 = vsel %vm515, %v1094, %v1096
    %v1100 = vadd.f32 %v1085, %v1097
    %v1101 = vadd.f32 %v1086, %v1096
    %s1102 = sld [smem:[#allocation2 + $0x1d]]
    %v1103 = vstv %s1102
    %v1104 = vmul.f32 %v1103, %v955
    %v1105 = vmul.f32 %v1103, %v956
    %1108 = vrot.lane.b32.xlu0 %v1104, 123
    %v1109 = vpop.permute.xlu0 %1108
    %1110 = vrot.lane.b32.xlu0 %v1105, 123
    %v1111 = vpop.permute.xlu0 %1110
    %v1112 = vsel %vm526, %v1109, %v1111
    %v1115 = vadd.f32 %v1100, %v1112
    %v1116 = vadd.f32 %v1101, %v1111
    %s1117 = sld [smem:[#allocation2 + $0x36]]
    %v1118 = vstv %s1117
    %vm1119 = vcmask 941056
    %v1121 = vsel %vm1119, %v1116, 0
    %vm1123 = vcmask 1042432
    %v1125 = vsel %vm1123, %v408, 0
    %1127 = vmatpush.msra.mxu0 %v378
    %1128 = vmatpush.msra.mxu0 %v376
    %1129 = vmatpush.msra.mxu0 %v374
    %1130 = vmatpush.msra.mxu0 %v372
    %1131 = vmatpush.msra.mxu0 %v370
    %1132 = vmatpush.msra.mxu0 %v368
    %1133 = vmatpush.msra.mxu0 %v366
    %1134 = vmatpush.msra.mxu0 %v364
    %1135 = vmatpush.msra.mxu0 %v362
    %1136 = vmatpush.msra.mxu0 %v360
    %1137 = vmatpush.msra.mxu0 %v358
    %1138 = vmatpush.msra.mxu0 %v356
    %1139 = vmatpush.msra.mxu0 %v354
    %1140 = vmatpush.msra.mxu0 %v352
    %1141 = vmatpush.msra.mxu0 %v350
    %1142 = vmatpush.msra.mxu0 %v348
    %1143 = vmatmul.f32.gmra.mxu0 %v1115
    %v1144 = vpop.f32.mrf.mxu0
    %v1145 = vadd.f32 %v1118, %v1144
    %1146 = vdwg.mxu0
    %1147 = vmatpush.msra.mxu0 0.0
    %1148 = vmatpush.msra.mxu0 %v1125
    %1149 = vmatpush.msra.mxu0 %v406
    %1150 = vmatpush.msra.mxu0 %v404
    %1151 = vmatpush.msra.mxu0 %v402
    %1152 = vmatpush.msra.mxu0 %v400
    %1153 = vmatpush.msra.mxu0 %v398
    %1154 = vmatpush.msra.mxu0 %v396
    %1155 = vmatpush.msra.mxu0 %v394
    %1156 = vmatpush.msra.mxu0 %v392
    %1157 = vmatpush.msra.mxu0 %v390
    %1158 = vmatpush.msra.mxu0 %v388
    %1159 = vmatpush.msra.mxu0 %v386
    %1160 = vmatpush.msra.mxu0 %v384
    %1161 = vmatpush.msra.mxu0 %v382
    %1162 = vmatpush.msra.mxu0 %v380
    %1163 = vmatmul.f32.gmra.mxu0 %v1121
    %v1164 = vpop.f32.mrf.mxu0
    %v1165 = vadd.f32 %v1145, %v1164
    %1166 = vdwg.mxu0
    %v1167 = vmax.f32 %v1165, 0.0
    %s1168 = sld [smem:[#allocation2 + $0x39]]
    %v1169 = vstv %s1168
    %v1170 = vmul.f32 %v1167, %v1169
    %s1171 = sld [smem:[#allocation2 + $0x3c]]
    %v1172 = vstv %s1171
    %v1173 = vadd.f32 %v1170, %v1172
    %s1174 = sld [smem:[#allocation2 + $0x1e]]
    %v1175 = vstv %s1174
    %v1176 = vmul.f32 %v1175, %v719
    %v1177 = vmul.f32 %v1175, %v720
    %s1178 = sld [smem:[#allocation2 + $0x1f]]
    %v1179 = vstv %s1178
    %v1180 = vmul.f32 %v1179, %v719
    %v1181 = vmul.f32 %v1179, %v720
    %1184 = vrot.lane.b32.xlu0 %v1180, 127
    %v1185 = vpop.permute.xlu0 %1184
    %1186 = vrot.lane.b32.xlu0 %v1181, 127
    %v1187 = vpop.permute.xlu0 %1186
    %v1188 = vsel %vm482, %v1185, %v1187
    %v1191 = vadd.f32 %v1176, %v1188
    %v1192 = vadd.f32 %v1177, %v1187
    %s1193 = sld [smem:[#allocation2 + $0x20]]
    %v1194 = vstv %s1193
    %v1195 = vmul.f32 %v1194, %v719
    %v1196 = vmul.f32 %v1194, %v720
    %1199 = vrot.lane.b32.xlu0 %v1195, 126
    %v1200 = vpop.permute.xlu0 %1199
    %1201 = vrot.lane.b32.xlu0 %v1196, 126
    %v1202 = vpop.permute.xlu0 %1201
    %v1203 = vsel %vm493, %v1200, %v1202
    %v1206 = vadd.f32 %v1191, %v1203
    %v1207 = vadd.f32 %v1192, %v1202
    %s1208 = sld [smem:[#allocation2 + $0x21]]
    %v1209 = vstv %s1208
    %v1210 = vmul.f32 %v1209, %v719
    %v1211 = vmul.f32 %v1209, %v720
    %1214 = vrot.lane.b32.xlu0 %v1210, 125
    %v1215 = vpop.permute.xlu0 %1214
    %1216 = vrot.lane.b32.xlu0 %v1211, 125
    %v1217 = vpop.permute.xlu0 %1216
    %v1218 = vsel %vm504, %v1215, %v1217
    %v1221 = vadd.f32 %v1206, %v1218
    %v1222 = vadd.f32 %v1207, %v1217
    %s1223 = sld [smem:[#allocation2 + $0x22]]
    %v1224 = vstv %s1223
    %v1225 = vmul.f32 %v1224, %v719
    %v1226 = vmul.f32 %v1224, %v720
    %1229 = vrot.lane.b32.xlu0 %v1225, 124
    %v1230 = vpop.permute.xlu0 %1229
    %1231 = vrot.lane.b32.xlu0 %v1226, 124
    %v1232 = vpop.permute.xlu0 %1231
    %v1233 = vsel %vm515, %v1230, %v1232
    %v1236 = vadd.f32 %v1221, %v1233
    %v1237 = vadd.f32 %v1222, %v1232
    %s1238 = sld [smem:[#allocation2 + $0x23]]
    %v1239 = vstv %s1238
    %v1240 = vmul.f32 %v1239, %v719
    %v1241 = vmul.f32 %v1239, %v720
    %1244 = vrot.lane.b32.xlu0 %v1240, 123
    %v1245 = vpop.permute.xlu0 %1244
    %1246 = vrot.lane.b32.xlu0 %v1241, 123
    %v1247 = vpop.permute.xlu0 %1246
    %v1248 = vsel %vm526, %v1245, %v1247
    %v1251 = vadd.f32 %v1236, %v1248
    %v1252 = vadd.f32 %v1237, %v1247
    %s1253 = sld [smem:[#allocation2 + $0x24]]
    %v1254 = vstv %s1253
    %v1255 = vmul.f32 %v1254, %v955
    %v1256 = vmul.f32 %v1254, %v956
    %v1257 = vadd.f32 %v1251, %v1255
    %v1258 = vadd.f32 %v1252, %v1256
    %s1259 = sld [smem:[#allocation2 + $0x25]]
    %v1260 = vstv %s1259
    %v1261 = vmul.f32 %v1260, %v955
    %v1262 = vmul.f32 %v1260, %v956
    %1265 = vrot.lane.b32.xlu0 %v1261, 127
    %v1266 = vpop.permute.xlu0 %1265
    %1267 = vrot.lane.b32.xlu0 %v1262, 127
    %v1268 = vpop.permute.xlu0 %1267
    %v1269 = vsel %vm482, %v1266, %v1268
    %v1272 = vadd.f32 %v1257, %v1269
    %v1273 = vadd.f32 %v1258, %v1268
    %s1274 = sld [smem:[#allocation2 + $0x26]]
    %v1275 = vstv %s1274
    %v1276 = vmul.f32 %v1275, %v955
    %v1277 = vmul.f32 %v1275, %v956
    %1280 = vrot.lane.b32.xlu0 %v1276, 126
    %v1281 = vpop.permute.xlu0 %1280
    %1282 = vrot.lane.b32.xlu0 %v1277, 126
    %v1283 = vpop.permute.xlu0 %1282
    %v1284 = vsel %vm493, %v1281, %v1283
    %v1287 = vadd.f32 %v1272, %v1284
    %v1288 = vadd.f32 %v1273, %v1283
    %s1289 = sld [smem:[#allocation2 + $0x27]]
    %v1290 = vstv %s1289
    %v1291 = vmul.f32 %v1290, %v955
    %v1292 = vmul.f32 %v1290, %v956
    %1295 = vrot.lane.b32.xlu0 %v1291, 125
    %v1296 = vpop.permute.xlu0 %1295
    %1297 = vrot.lane.b32.xlu0 %v1292, 125
    %v1298 = vpop.permute.xlu0 %1297
    %v1299 = vsel %vm504, %v1296, %v1298
    %v1302 = vadd.f32 %v1287, %v1299
    %v1303 = vadd.f32 %v1288, %v1298
    %s1304 = sld [smem:[#allocation2 + $0x28]]
    %v1305 = vstv %s1304
    %v1306 = vmul.f32 %v1305, %v955
    %v1307 = vmul.f32 %v1305, %v956
    %1310 = vrot.lane.b32.xlu0 %v1306, 124
    %v1311 = vpop.permute.xlu0 %1310
    %1312 = vrot.lane.b32.xlu0 %v1307, 124
    %v1313 = vpop.permute.xlu0 %1312
    %v1314 = vsel %vm515, %v1311, %v1313
    %v1317 = vadd.f32 %v1302, %v1314
    %v1318 = vadd.f32 %v1303, %v1313
    %s1319 = sld [smem:[#allocation2 + $0x29]]
    %v1320 = vstv %s1319
    %v1321 = vmul.f32 %v1320, %v955
    %v1322 = vmul.f32 %v1320, %v956
    %1325 = vrot.lane.b32.xlu0 %v1321, 123
    %v1326 = vpop.permute.xlu0 %1325
    %1327 = vrot.lane.b32.xlu0 %v1322, 123
    %v1328 = vpop.permute.xlu0 %1327
    %v1329 = vsel %vm526, %v1326, %v1328
    %v1332 = vadd.f32 %v1317, %v1329
    %v1333 = vadd.f32 %v1318, %v1328
    %s1334 = sld [smem:[#allocation2 + $0x37]]
    %v1335 = vstv %s1334
    %v1337 = vsel %vm1119, %v1333, 0
    %1339 = vmatpush.msra.mxu0 %v378
    %1340 = vmatpush.msra.mxu0 %v376
    %1341 = vmatpush.msra.mxu0 %v374
    %1342 = vmatpush.msra.mxu0 %v372
    %1343 = vmatpush.msra.mxu0 %v370
    %1344 = vmatpush.msra.mxu0 %v368
    %1345 = vmatpush.msra.mxu0 %v366
    %1346 = vmatpush.msra.mxu0 %v364
    %1347 = vmatpush.msra.mxu0 %v362
    %1348 = vmatpush.msra.mxu0 %v360
    %1349 = vmatpush.msra.mxu0 %v358
    %1350 = vmatpush.msra.mxu0 %v356
    %1351 = vmatpush.msra.mxu0 %v354
    %1352 = vmatpush.msra.mxu0 %v352
    %1353 = vmatpush.msra.mxu0 %v350
    %1354 = vmatpush.msra.mxu0 %v348
    %1355 = vmatmul.f32.gmra.mxu0 %v1332
    %v1356 = vpop.f32.mrf.mxu0
    %v1357 = vadd.f32 %v1335, %v1356
    %1358 = vdwg.mxu0
    %1359 = vmatpush.msra.mxu0 0.0
    %1360 = vmatpush.msra.mxu0 %v1125
    %1361 = vmatpush.msra.mxu0 %v406
    %1362 = vmatpush.msra.mxu0 %v404
    %1363 = vmatpush.msra.mxu0 %v402
    %1364 = vmatpush.msra.mxu0 %v400
    %1365 = vmatpush.msra.mxu0 %v398
    %1366 = vmatpush.msra.mxu0 %v396
    %1367 = vmatpush.msra.mxu0 %v394
    %1368 = vmatpush.msra.mxu0 %v392
    %1369 = vmatpush.msra.mxu0 %v390
    %1370 = vmatpush.msra.mxu0 %v388
    %1371 = vmatpush.msra.mxu0 %v386
    %1372 = vmatpush.msra.mxu0 %v384
    %1373 = vmatpush.msra.mxu0 %v382
    %1374 = vmatpush.msra.mxu0 %v380
    %1375 = vmatmul.f32.gmra.mxu0 %v1337
    %v1376 = vpop.f32.mrf.mxu0
    %v1377 = vadd.f32 %v1357, %v1376
    %1378 = vdwg.mxu0
    %v1379 = vmax.f32 %v1377, 0.0
    %s1380 = sld [smem:[#allocation2 + $0x3a]]
    %v1381 = vstv %s1380
    %v1382 = vmul.f32 %v1379, %v1381
    %s1383 = sld [smem:[#allocation2 + $0x3d]]
    %v1384 = vstv %s1383
    %v1385 = vadd.f32 %v1382, %v1384
    %s1386 = sld [smem:[#allocation2 + $0x2a]]
    %v1387 = vstv %s1386
    %v1388 = vmul.f32 %v1387, %v719
    %v1389 = vmul.f32 %v1387, %v720
    %s1390 = sld [smem:[#allocation2 + $0x2b]]
    %v1391 = vstv %s1390
    %v1392 = vmul.f32 %v1391, %v719
    %v1393 = vmul.f32 %v1391, %v720
    %1396 = vrot.lane.b32.xlu0 %v1392, 127
    %v1397 = vpop.permute.xlu0 %1396
    %1398 = vrot.lane.b32.xlu0 %v1393, 127
    %v1399 = vpop.permute.xlu0 %1398
    %v1400 = vsel %vm482, %v1397, %v1399
    %v1403 = vadd.f32 %v1388, %v1400
    %v1404 = vadd.f32 %v1389, %v1399
    %s1405 = sld [smem:[#allocation2 + $0x2c]]
    %v1406 = vstv %s1405
    %v1407 = vmul.f32 %v1406, %v719
    %v1408 = vmul.f32 %v1406, %v720
    %1411 = vrot.lane.b32.xlu0 %v1407, 126
    %v1412 = vpop.permute.xlu0 %1411
    %1413 = vrot.lane.b32.xlu0 %v1408, 126
    %v1414 = vpop.permute.xlu0 %1413
    %v1415 = vsel %vm493, %v1412, %v1414
    %v1418 = vadd.f32 %v1403, %v1415
    %v1419 = vadd.f32 %v1404, %v1414
    %s1420 = sld [smem:[#allocation2 + $0x2d]]
    %v1421 = vstv %s1420
    %v1422 = vmul.f32 %v1421, %v719
    %v1423 = vmul.f32 %v1421, %v720
    %1426 = vrot.lane.b32.xlu0 %v1422, 125
    %v1427 = vpop.permute.xlu0 %1426
    %1428 = vrot.lane.b32.xlu0 %v1423, 125
    %v1429 = vpop.permute.xlu0 %1428
    %v1430 = vsel %vm504, %v1427, %v1429
    %v1433 = vadd.f32 %v1418, %v1430
    %v1434 = vadd.f32 %v1419, %v1429
    %s1435 = sld [smem:[#allocation2 + $0x2e]]
    %v1436 = vstv %s1435
    %v1437 = vmul.f32 %v1436, %v719
    %v1438 = vmul.f32 %v1436, %v720
    %1441 = vrot.lane.b32.xlu0 %v1437, 124
    %v1442 = vpop.permute.xlu0 %1441
    %1443 = vrot.lane.b32.xlu0 %v1438, 124
    %v1444 = vpop.permute.xlu0 %1443
    %v1445 = vsel %vm515, %v1442, %v1444
    %v1448 = vadd.f32 %v1433, %v1445
    %v1449 = vadd.f32 %v1434, %v1444
    %s1450 = sld [smem:[#allocation2 + $0x2f]]
    %v1451 = vstv %s1450
    %v1452 = vmul.f32 %v1451, %v719
    %v1453 = vmul.f32 %v1451, %v720
    %1456 = vrot.lane.b32.xlu0 %v1452, 123
    %v1457 = vpop.permute.xlu0 %1456
    %1458 = vrot.lane.b32.xlu0 %v1453, 123
    %v1459 = vpop.permute.xlu0 %1458
    %v1460 = vsel %vm526, %v1457, %v1459
    %v1463 = vadd.f32 %v1448, %v1460
    %v1464 = vadd.f32 %v1449, %v1459
    %s1465 = sld [smem:[#allocation2 + $0x30]]
    %v1466 = vstv %s1465
    %v1467 = vmul.f32 %v1466, %v955
    %v1468 = vmul.f32 %v1466, %v956
    %v1469 = vadd.f32 %v1463, %v1467
    %v1470 = vadd.f32 %v1464, %v1468
    %s1471 = sld [smem:[#allocation2 + $0x31]]
    %v1472 = vstv %s1471
    %v1473 = vmul.f32 %v1472, %v955
    %v1474 = vmul.f32 %v1472, %v956
    %1477 = vrot.lane.b32.xlu0 %v1473, 127
    %v1478 = vpop.permute.xlu0 %1477
    %1479 = vrot.lane.b32.xlu0 %v1474, 127
    %v1480 = vpop.permute.xlu0 %1479
    %v1481 = vsel %vm482, %v1478, %v1480
    %v1484 = vadd.f32 %v1469, %v1481
    %v1485 = vadd.f32 %v1470, %v1480
    %s1486 = sld [smem:[#allocation2 + $0x32]]
    %v1487 = vstv %s1486
    %v1488 = vmul.f32 %v1487, %v955
    %v1489 = vmul.f32 %v1487, %v956
    %1492 = vrot.lane.b32.xlu0 %v1488, 126
    %v1493 = vpop.permute.xlu0 %1492
    %1494 = vrot.lane.b32.xlu0 %v1489, 126
    %v1495 = vpop.permute.xlu0 %1494
    %v1496 = vsel %vm493, %v1493, %v1495
    %v1499 = vadd.f32 %v1484, %v1496
    %v1500 = vadd.f32 %v1485, %v1495
    %s1501 = sld [smem:[#allocation2 + $0x33]]
    %v1502 = vstv %s1501
    %v1503 = vmul.f32 %v1502, %v955
    %v1504 = vmul.f32 %v1502, %v956
    %1507 = vrot.lane.b32.xlu0 %v1503, 125
    %v1508 = vpop.permute.xlu0 %1507
    %1509 = vrot.lane.b32.xlu0 %v1504, 125
    %v1510 = vpop.permute.xlu0 %1509
    %v1511 = vsel %vm504, %v1508, %v1510
    %v1514 = vadd.f32 %v1499, %v1511
    %v1515 = vadd.f32 %v1500, %v1510
    %s1516 = sld [smem:[#allocation2 + $0x34]]
    %v1517 = vstv %s1516
    %v1518 = vmul.f32 %v1517, %v955
    %v1519 = vmul.f32 %v1517, %v956
    %1522 = vrot.lane.b32.xlu0 %v1518, 124
    %v1523 = vpop.permute.xlu0 %1522
    %1524 = vrot.lane.b32.xlu0 %v1519, 124
    %v1525 = vpop.permute.xlu0 %1524
    %v1526 = vsel %vm515, %v1523, %v1525
    %v1529 = vadd.f32 %v1514, %v1526
    %v1530 = vadd.f32 %v1515, %v1525
    %s1531 = sld [smem:[#allocation2 + $0x35]]
    %v1532 = vstv %s1531
    %v1533 = vmul.f32 %v1532, %v955
    %v1534 = vmul.f32 %v1532, %v956
    %1537 = vrot.lane.b32.xlu0 %v1533, 123
    %v1538 = vpop.permute.xlu0 %1537
    %1539 = vrot.lane.b32.xlu0 %v1534, 123
    %v1540 = vpop.permute.xlu0 %1539
    %v1541 = vsel %vm526, %v1538, %v1540
    %v1544 = vadd.f32 %v1529, %v1541
    %v1545 = vadd.f32 %v1530, %v1540
    %s1546 = sld [smem:[#allocation2 + $0x38]]
    %v1547 = vstv %s1546
    %v1549 = vsel %vm1119, %v1545, 0
    %1551 = vmatpush.msra.mxu0 %v378
    %1552 = vmatpush.msra.mxu0 %v376
    %1553 = vmatpush.msra.mxu0 %v374
    %1554 = vmatpush.msra.mxu0 %v372
    %1555 = vmatpush.msra.mxu0 %v370
    %1556 = vmatpush.msra.mxu0 %v368
    %1557 = vmatpush.msra.mxu0 %v366
    %1558 = vmatpush.msra.mxu0 %v364
    %1559 = vmatpush.msra.mxu0 %v362
    %1560 = vmatpush.msra.mxu0 %v360
    %1561 = vmatpush.msra.mxu0 %v358
    %1562 = vmatpush.msra.mxu0 %v356
    %1563 = vmatpush.msra.mxu0 %v354
    %1564 = vmatpush.msra.mxu0 %v352
    %1565 = vmatpush.msra.mxu0 %v350
    %1566 = vmatpush.msra.mxu0 %v348
    %1567 = vmatmul.f32.gmra.mxu0 %v1544
    %v1568 = vpop.f32.mrf.mxu0
    %v1569 = vadd.f32 %v1547, %v1568
    %1570 = vdwg.mxu0
    %1571 = vmatpush.msra.mxu0 0.0
    %1572 = vmatpush.msra.mxu0 %v1125
    %1573 = vmatpush.msra.mxu0 %v406
    %1574 = vmatpush.msra.mxu0 %v404
    %1575 = vmatpush.msra.mxu0 %v402
    %1576 = vmatpush.msra.mxu0 %v400
    %1577 = vmatpush.msra.mxu0 %v398
    %1578 = vmatpush.msra.mxu0 %v396
    %1579 = vmatpush.msra.mxu0 %v394
    %1580 = vmatpush.msra.mxu0 %v392
    %1581 = vmatpush.msra.mxu0 %v390
    %1582 = vmatpush.msra.mxu0 %v388
    %1583 = vmatpush.msra.mxu0 %v386
    %1584 = vmatpush.msra.mxu0 %v384
    %1585 = vmatpush.msra.mxu0 %v382
    %1586 = vmatpush.msra.mxu0 %v380
    %1587 = vmatmul.f32.gmra.mxu0 %v1549
    %v1588 = vpop.f32.mrf.mxu0
    %v1589 = vadd.f32 %v1569, %v1588
    %1590 = vdwg.mxu0
    %v1591 = vmax.f32 %v1589, 0.0
    %s1592 = sld [smem:[#allocation2 + $0x3b]]
    %v1593 = vstv %s1592
    %v1594 = vmul.f32 %v1591, %v1593
    %s1595 = sld [smem:[#allocation2 + $0x3e]]
    %v1596 = vstv %s1595
    %v1597 = vadd.f32 %v1594, %v1596
    %s1598 = sld [smem:[#allocation2 + $0x3f]]
    %v1599 = vstv %s1598
    %v1600 = vmul.f32 %v1599, %v1173
    %s1601 = sld [smem:[#allocation2 + $0x40]]
    %v1602 = vstv %s1601
    %v1603 = vmul.f32 %v1602, %v1173
    %1605 = vrot.lane.b32.xlu0 %v1603, 127
    %v1606 = vpop.permute.xlu0 %1605
    %v1608 = vadd.f32 %v1600, %v1606
    %s1609 = sld [smem:[#allocation2 + $0x41]]
    %v1610 = vstv %s1609
    %v1611 = vmul.f32 %v1610, %v1173
    %1613 = vrot.lane.b32.xlu0 %v1611, 126
    %v1614 = vpop.permute.xlu0 %1613
    %v1616 = vadd.f32 %v1608, %v1614
    %s1617 = sld [smem:[#allocation2 + $0x42]]
    %v1618 = vstv %s1617
    %v1619 = vmul.f32 %v1618, %v1173
    %1621 = vrot.lane.b32.xlu0 %v1619, 125
    %v1622 = vpop.permute.xlu0 %1621
    %v1624 = vadd.f32 %v1616, %v1622
    %s1625 = sld [smem:[#allocation2 + $0x43]]
    %v1626 = vstv %s1625
    %v1627 = vmul.f32 %v1626, %v1385
    %v1628 = vadd.f32 %v1624, %v1627
    %s1629 = sld [smem:[#allocation2 + $0x44]]
    %v1630 = vstv %s1629
    %v1631 = vmul.f32 %v1630, %v1385
    %1633 = vrot.lane.b32.xlu0 %v1631, 127
    %v1634 = vpop.permute.xlu0 %1633
    %v1636 = vadd.f32 %v1628, %v1634
    %s1637 = sld [smem:[#allocation2 + $0x45]]
    %v1638 = vstv %s1637
    %v1639 = vmul.f32 %v1638, %v1385
    %1641 = vrot.lane.b32.xlu0 %v1639, 126
    %v1642 = vpop.permute.xlu0 %1641
    %v1644 = vadd.f32 %v1636, %v1642
    %s1645 = sld [smem:[#allocation2 + $0x46]]
    %v1646 = vstv %s1645
    %v1647 = vmul.f32 %v1646, %v1385
    %1649 = vrot.lane.b32.xlu0 %v1647, 125
    %v1650 = vpop.permute.xlu0 %1649
    %v1652 = vadd.f32 %v1644, %v1650
    %s1653 = sld [smem:[#allocation2 + $0x47]]
    %v1654 = vstv %s1653
    %v1655 = vmul.f32 %v1654, %v1597
    %v1656 = vadd.f32 %v1652, %v1655
    %s1657 = sld [smem:[#allocation2 + $0x48]]
    %v1658 = vstv %s1657
    %v1659 = vmul.f32 %v1658, %v1597
    %1661 = vrot.lane.b32.xlu0 %v1659, 127
    %v1662 = vpop.permute.xlu0 %1661
    %v1664 = vadd.f32 %v1656, %v1662
    %s1665 = sld [smem:[#allocation2 + $0x49]]
    %v1666 = vstv %s1665
    %v1667 = vmul.f32 %v1666, %v1597
    %1669 = vrot.lane.b32.xlu0 %v1667, 126
    %v1670 = vpop.permute.xlu0 %1669
    %v1672 = vadd.f32 %v1664, %v1670
    %s1673 = sld [smem:[#allocation2 + $0x4a]]
    %v1674 = vstv %s1673
    %v1675 = vmul.f32 %v1674, %v1597
    %1677 = vrot.lane.b32.xlu0 %v1675, 125
    %v1678 = vpop.permute.xlu0 %1677
    %v1680 = vadd.f32 %v1672, %v1678
    %s1681 = sld [smem:[#allocation2 + $0x7b]]
    %v1682 = vstv %s1681
    %vm1683 = vcmask 973824
    %v1685 = vsel %vm1683, %v1680, 0
    %v1688 = vsel %vm544, %v376, 0
    %1690 = vmatpush.msra.mxu0 0.0
    %1691 = vmatpush.msra.mxu0 %v1688
    %1692 = vmatpush.msra.mxu0 %v374
    %1693 = vmatpush.msra.mxu0 %v372
    %1694 = vmatpush.msra.mxu0 %v370
    %1695 = vmatpush.msra.mxu0 %v368
    %1696 = vmatpush.msra.mxu0 %v366
    %1697 = vmatpush.msra.mxu0 %v364
    %1698 = vmatpush.msra.mxu0 %v362
    %1699 = vmatpush.msra.mxu0 %v360
    %1700 = vmatpush.msra.mxu0 %v358
    %1701 = vmatpush.msra.mxu0 %v356
    %1702 = vmatpush.msra.mxu0 %v354
    %1703 = vmatpush.msra.mxu0 %v352
    %1704 = vmatpush.msra.mxu0 %v350
    %1705 = vmatpush.msra.mxu0 %v348
    %1706 = vmatmul.f32.gmra.mxu0 %v1685
    %v1707 = vpop.f32.mrf.mxu0
    %v1708 = vadd.f32 %v1682, %v1707
    %1709 = vdwg.mxu0
    %v1710 = vmax.f32 %v1708, 0.0
    %s1711 = sld [smem:[#allocation2 + $0x80]]
    %v1712 = vstv %s1711
    %v1713 = vmul.f32 %v1710, %v1712
    %s1714 = sld [smem:[#allocation2 + $0x85]]
    %v1715 = vstv %s1714
    %v1716 = vadd.f32 %v1713, %v1715
    %s1717 = sld [smem:[#allocation2 + $0x4b]]
    %v1718 = vstv %s1717
    %v1719 = vmul.f32 %v1718, %v1173
    %s1720 = sld [smem:[#allocation2 + $0x4c]]
    %v1721 = vstv %s1720
    %v1722 = vmul.f32 %v1721, %v1173
    %1724 = vrot.lane.b32.xlu0 %v1722, 127
    %v1725 = vpop.permute.xlu0 %1724
    %v1727 = vadd.f32 %v1719, %v1725
    %s1728 = sld [smem:[#allocation2 + $0x4d]]
    %v1729 = vstv %s1728
    %v1730 = vmul.f32 %v1729, %v1173
    %1732 = vrot.lane.b32.xlu0 %v1730, 126
    %v1733 = vpop.permute.xlu0 %1732
    %v1735 = vadd.f32 %v1727, %v1733
    %s1736 = sld [smem:[#allocation2 + $0x4e]]
    %v1737 = vstv %s1736
    %v1738 = vmul.f32 %v1737, %v1173
    %1740 = vrot.lane.b32.xlu0 %v1738, 125
    %v1741 = vpop.permute.xlu0 %1740
    %v1743 = vadd.f32 %v1735, %v1741
    %s1744 = sld [smem:[#allocation2 + $0x4f]]
    %v1745 = vstv %s1744
    %v1746 = vmul.f32 %v1745, %v1385
    %v1747 = vadd.f32 %v1743, %v1746
    %s1748 = sld [smem:[#allocation2 + $0x50]]
    %v1749 = vstv %s1748
    %v1750 = vmul.f32 %v1749, %v1385
    %1752 = vrot.lane.b32.xlu0 %v1750, 127
    %v1753 = vpop.permute.xlu0 %1752
    %v1755 = vadd.f32 %v1747, %v1753
    %s1756 = sld [smem:[#allocation2 + $0x51]]
    %v1757 = vstv %s1756
    %v1758 = vmul.f32 %v1757, %v1385
    %1760 = vrot.lane.b32.xlu0 %v1758, 126
    %v1761 = vpop.permute.xlu0 %1760
    %v1763 = vadd.f32 %v1755, %v1761
    %s1764 = sld [smem:[#allocation2 + $0x52]]
    %v1765 = vstv %s1764
    %v1766 = vmul.f32 %v1765, %v1385
    %1768 = vrot.lane.b32.xlu0 %v1766, 125
    %v1769 = vpop.permute.xlu0 %1768
    %v1771 = vadd.f32 %v1763, %v1769
    %s1772 = sld [smem:[#allocation2 + $0x53]]
    %v1773 = vstv %s1772
    %v1774 = vmul.f32 %v1773, %v1597
    %v1775 = vadd.f32 %v1771, %v1774
    %s1776 = sld [smem:[#allocation2 + $0x54]]
    %v1777 = vstv %s1776
    %v1778 = vmul.f32 %v1777, %v1597
    %1780 = vrot.lane.b32.xlu0 %v1778, 127
    %v1781 = vpop.permute.xlu0 %1780
    %v1783 = vadd.f32 %v1775, %v1781
    %s1784 = sld [smem:[#allocation2 + $0x55]]
    %v1785 = vstv %s1784
    %v1786 = vmul.f32 %v1785, %v1597
    %1788 = vrot.lane.b32.xlu0 %v1786, 126
    %v1789 = vpop.permute.xlu0 %1788
    %v1791 = vadd.f32 %v1783, %v1789
    %s1792 = sld [smem:[#allocation2 + $0x56]]
    %v1793 = vstv %s1792
    %v1794 = vmul.f32 %v1793, %v1597
    %1796 = vrot.lane.b32.xlu0 %v1794, 125
    %v1797 = vpop.permute.xlu0 %1796
    %v1799 = vadd.f32 %v1791, %v1797
    %s1800 = sld [smem:[#allocation2 + $0x7c]]
    %v1801 = vstv %s1800
    %v1803 = vsel %vm1683, %v1799, 0
    %1805 = vmatpush.msra.mxu0 0.0
    %1806 = vmatpush.msra.mxu0 %v1688
    %1807 = vmatpush.msra.mxu0 %v374
    %1808 = vmatpush.msra.mxu0 %v372
    %1809 = vmatpush.msra.mxu0 %v370
    %1810 = vmatpush.msra.mxu0 %v368
    %1811 = vmatpush.msra.mxu0 %v366
    %1812 = vmatpush.msra.mxu0 %v364
    %1813 = vmatpush.msra.mxu0 %v362
    %1814 = vmatpush.msra.mxu0 %v360
    %1815 = vmatpush.msra.mxu0 %v358
    %1816 = vmatpush.msra.mxu0 %v356
    %1817 = vmatpush.msra.mxu0 %v354
    %1818 = vmatpush.msra.mxu0 %v352
    %1819 = vmatpush.msra.mxu0 %v350
    %1820 = vmatpush.msra.mxu0 %v348
    %1821 = vmatmul.f32.gmra.mxu0 %v1803
    %v1822 = vpop.f32.mrf.mxu0
    %v1823 = vadd.f32 %v1801, %v1822
    %1824 = vdwg.mxu0
    %v1825 = vmax.f32 %v1823, 0.0
    %s1826 = sld [smem:[#allocation2 + $0x81]]
    %v1827 = vstv %s1826
    %v1828 = vmul.f32 %v1825, %v1827
    %s1829 = sld [smem:[#allocation2 + $0x86]]
    %v1830 = vstv %s1829
    %v1831 = vadd.f32 %v1828, %v1830
    %s1832 = sld [smem:[#allocation2 + $0x57]]
    %v1833 = vstv %s1832
    %v1834 = vmul.f32 %v1833, %v1173
    %s1835 = sld [smem:[#allocation2 + $0x58]]
    %v1836 = vstv %s1835
    %v1837 = vmul.f32 %v1836, %v1173
    %1839 = vrot.lane.b32.xlu0 %v1837, 127
    %v1840 = vpop.permute.xlu0 %1839
    %v1842 = vadd.f32 %v1834, %v1840
    %s1843 = sld [smem:[#allocation2 + $0x59]]
    %v1844 = vstv %s1843
    %v1845 = vmul.f32 %v1844, %v1173
    %1847 = vrot.lane.b32.xlu0 %v1845, 126
    %v1848 = vpop.permute.xlu0 %1847
    %v1850 = vadd.f32 %v1842, %v1848
    %s1851 = sld [smem:[#allocation2 + $0x5a]]
    %v1852 = vstv %s1851
    %v1853 = vmul.f32 %v1852, %v1173
    %1855 = vrot.lane.b32.xlu0 %v1853, 125
    %v1856 = vpop.permute.xlu0 %1855
    %v1858 = vadd.f32 %v1850, %v1856
    %s1859 = sld [smem:[#allocation2 + $0x5b]]
    %v1860 = vstv %s1859
    %v1861 = vmul.f32 %v1860, %v1385
    %v1862 = vadd.f32 %v1858, %v1861
    %s1863 = sld [smem:[#allocation2 + $0x5c]]
    %v1864 = vstv %s1863
    %v1865 = vmul.f32 %v1864, %v1385
    %1867 = vrot.lane.b32.xlu0 %v1865, 127
    %v1868 = vpop.permute.xlu0 %1867
    %v1870 = vadd.f32 %v1862, %v1868
    %s1871 = sld [smem:[#allocation2 + $0x5d]]
    %v1872 = vstv %s1871
    %v1873 = vmul.f32 %v1872, %v1385
    %1875 = vrot.lane.b32.xlu0 %v1873, 126
    %v1876 = vpop.permute.xlu0 %1875
    %v1878 = vadd.f32 %v1870, %v1876
    %s1879 = sld [smem:[#allocation2 + $0x5e]]
    %v1880 = vstv %s1879
    %v1881 = vmul.f32 %v1880, %v1385
    %1883 = vrot.lane.b32.xlu0 %v1881, 125
    %v1884 = vpop.permute.xlu0 %1883
    %v1886 = vadd.f32 %v1878, %v1884
    %s1887 = sld [smem:[#allocation2 + $0x5f]]
    %v1888 = vstv %s1887
    %v1889 = vmul.f32 %v1888, %v1597
    %v1890 = vadd.f32 %v1886, %v1889
    %s1891 = sld [smem:[#allocation2 + $0x60]]
    %v1892 = vstv %s1891
    %v1893 = vmul.f32 %v1892, %v1597
    %1895 = vrot.lane.b32.xlu0 %v1893, 127
    %v1896 = vpop.permute.xlu0 %1895
    %v1898 = vadd.f32 %v1890, %v1896
    %s1899 = sld [smem:[#allocation2 + $0x61]]
    %v1900 = vstv %s1899
    %v1901 = vmul.f32 %v1900, %v1597
    %1903 = vrot.lane.b32.xlu0 %v1901, 126
    %v1904 = vpop.permute.xlu0 %1903
    %v1906 = vadd.f32 %v1898, %v1904
    %s1907 = sld [smem:[#allocation2 + $0x62]]
    %v1908 = vstv %s1907
    %v1909 = vmul.f32 %v1908, %v1597
    %1911 = vrot.lane.b32.xlu0 %v1909, 125
    %v1912 = vpop.permute.xlu0 %1911
    %v1914 = vadd.f32 %v1906, %v1912
    %s1915 = sld [smem:[#allocation2 + $0x7d]]
    %v1916 = vstv %s1915
    %v1918 = vsel %vm1683, %v1914, 0
    %1920 = vmatpush.msra.mxu0 0.0
    %1921 = vmatpush.msra.mxu0 %v1688
    %1922 = vmatpush.msra.mxu0 %v374
    %1923 = vmatpush.msra.mxu0 %v372
    %1924 = vmatpush.msra.mxu0 %v370
    %1925 = vmatpush.msra.mxu0 %v368
    %1926 = vmatpush.msra.mxu0 %v366
    %1927 = vmatpush.msra.mxu0 %v364
    %1928 = vmatpush.msra.mxu0 %v362
    %1929 = vmatpush.msra.mxu0 %v360
    %1930 = vmatpush.msra.mxu0 %v358
    %1931 = vmatpush.msra.mxu0 %v356
    %1932 = vmatpush.msra.mxu0 %v354
    %1933 = vmatpush.msra.mxu0 %v352
    %1934 = vmatpush.msra.mxu0 %v350
    %1935 = vmatpush.msra.mxu0 %v348
    %1936 = vmatmul.f32.gmra.mxu0 %v1918
    %v1937 = vpop.f32.mrf.mxu0
    %v1938 = vadd.f32 %v1916, %v1937
    %1939 = vdwg.mxu0
    %v1940 = vmax.f32 %v1938, 0.0
    %s1941 = sld [smem:[#allocation2 + $0x82]]
    %v1942 = vstv %s1941
    %v1943 = vmul.f32 %v1940, %v1942
    %s1944 = sld [smem:[#allocation2 + $0x87]]
    %v1945 = vstv %s1944
    %v1946 = vadd.f32 %v1943, %v1945
    %s1947 = sld [smem:[#allocation2 + $0x63]]
    %v1948 = vstv %s1947
    %v1949 = vmul.f32 %v1948, %v1173
    %s1950 = sld [smem:[#allocation2 + $0x64]]
    %v1951 = vstv %s1950
    %v1952 = vmul.f32 %v1951, %v1173
    %1954 = vrot.lane.b32.xlu0 %v1952, 127
    %v1955 = vpop.permute.xlu0 %1954
    %v1957 = vadd.f32 %v1949, %v1955
    %s1958 = sld [smem:[#allocation2 + $0x65]]
    %v1959 = vstv %s1958
    %v1960 = vmul.f32 %v1959, %v1173
    %1962 = vrot.lane.b32.xlu0 %v1960, 126
    %v1963 = vpop.permute.xlu0 %1962
    %v1965 = vadd.f32 %v1957, %v1963
    %s1966 = sld [smem:[#allocation2 + $0x66]]
    %v1967 = vstv %s1966
    %v1968 = vmul.f32 %v1967, %v1173
    %1970 = vrot.lane.b32.xlu0 %v1968, 125
    %v1971 = vpop.permute.xlu0 %1970
    %v1973 = vadd.f32 %v1965, %v1971
    %s1974 = sld [smem:[#allocation2 + $0x67]]
    %v1975 = vstv %s1974
    %v1976 = vmul.f32 %v1975, %v1385
    %v1977 = vadd.f32 %v1973, %v1976
    %s1978 = sld [smem:[#allocation2 + $0x68]]
    %v1979 = vstv %s1978
    %v1980 = vmul.f32 %v1979, %v1385
    %1982 = vrot.lane.b32.xlu0 %v1980, 127
    %v1983 = vpop.permute.xlu0 %1982
    %v1985 = vadd.f32 %v1977, %v1983
    %s1986 = sld [smem:[#allocation2 + $0x69]]
    %v1987 = vstv %s1986
    %v1988 = vmul.f32 %v1987, %v1385
    %1990 = vrot.lane.b32.xlu0 %v1988, 126
    %v1991 = vpop.permute.xlu0 %1990
    %v1993 = vadd.f32 %v1985, %v1991
    %s1994 = sld [smem:[#allocation2 + $0x6a]]
    %v1995 = vstv %s1994
    %v1996 = vmul.f32 %v1995, %v1385
    %1998 = vrot.lane.b32.xlu0 %v1996, 125
    %v1999 = vpop.permute.xlu0 %1998
    %v2001 = vadd.f32 %v1993, %v1999
    %s2002 = sld [smem:[#allocation2 + $0x6b]]
    %v2003 = vstv %s2002
    %v2004 = vmul.f32 %v2003, %v1597
    %v2005 = vadd.f32 %v2001, %v2004
    %s2006 = sld [smem:[#allocation2 + $0x6c]]
    %v2007 = vstv %s2006
    %v2008 = vmul.f32 %v2007, %v1597
    %2010 = vrot.lane.b32.xlu0 %v2008, 127
    %v2011 = vpop.permute.xlu0 %2010
    %v2013 = vadd.f32 %v2005, %v2011
    %s2014 = sld [smem:[#allocation2 + $0x6d]]
    %v2015 = vstv %s2014
    %v2016 = vmul.f32 %v2015, %v1597
    %2018 = vrot.lane.b32.xlu0 %v2016, 126
    %v2019 = vpop.permute.xlu0 %2018
    %v2021 = vadd.f32 %v2013, %v2019
    %s2022 = sld [smem:[#allocation2 + $0x6e]]
    %v2023 = vstv %s2022
    %v2024 = vmul.f32 %v2023, %v1597
    %2026 = vrot.lane.b32.xlu0 %v2024, 125
    %v2027 = vpop.permute.xlu0 %2026
    %v2029 = vadd.f32 %v2021, %v2027
    %s2030 = sld [smem:[#allocation2 + $0x7e]]
    %v2031 = vstv %s2030
    %v2033 = vsel %vm1683, %v2029, 0
    %2035 = vmatpush.msra.mxu0 0.0
    %2036 = vmatpush.msra.mxu0 %v1688
    %2037 = vmatpush.msra.mxu0 %v374
    %2038 = vmatpush.msra.mxu0 %v372
    %2039 = vmatpush.msra.mxu0 %v370
    %2040 = vmatpush.msra.mxu0 %v368
    %2041 = vmatpush.msra.mxu0 %v366
    %2042 = vmatpush.msra.mxu0 %v364
    %2043 = vmatpush.msra.mxu0 %v362
    %2044 = vmatpush.msra.mxu0 %v360
    %2045 = vmatpush.msra.mxu0 %v358
    %2046 = vmatpush.msra.mxu0 %v356
    %2047 = vmatpush.msra.mxu0 %v354
    %2048 = vmatpush.msra.mxu0 %v352
    %2049 = vmatpush.msra.mxu0 %v350
    %2050 = vmatpush.msra.mxu0 %v348
    %2051 = vmatmul.f32.gmra.mxu0 %v2033
    %v2052 = vpop.f32.mrf.mxu0
    %v2053 = vadd.f32 %v2031, %v2052
    %2054 = vdwg.mxu0
    %v2055 = vmax.f32 %v2053, 0.0
    %s2056 = sld [smem:[#allocation2 + $0x83]]
    %v2057 = vstv %s2056
    %v2058 = vmul.f32 %v2055, %v2057
    %s2059 = sld [smem:[#allocation2 + $0x88]]
    %v2060 = vstv %s2059
    %v2061 = vadd.f32 %v2058, %v2060
    %s2062 = sld [smem:[#allocation2 + $0x6f]]
    %v2063 = vstv %s2062
    %v2064 = vmul.f32 %v2063, %v1173
    %s2065 = sld [smem:[#allocation2 + $0x70]]
    %v2066 = vstv %s2065
    %v2067 = vmul.f32 %v2066, %v1173
    %2069 = vrot.lane.b32.xlu0 %v2067, 127
    %v2070 = vpop.permute.xlu0 %2069
    %v2072 = vadd.f32 %v2064, %v2070
    %s2073 = sld [smem:[#allocation2 + $0x71]]
    %v2074 = vstv %s2073
    %v2075 = vmul.f32 %v2074, %v1173
    %2077 = vrot.lane.b32.xlu0 %v2075, 126
    %v2078 = vpop.permute.xlu0 %2077
    %v2080 = vadd.f32 %v2072, %v2078
    %s2081 = sld [smem:[#allocation2 + $0x72]]
    %v2082 = vstv %s2081
    %v2083 = vmul.f32 %v2082, %v1173
    %2085 = vrot.lane.b32.xlu0 %v2083, 125
    %v2086 = vpop.permute.xlu0 %2085
    %v2088 = vadd.f32 %v2080, %v2086
    %s2089 = sld [smem:[#allocation2 + $0x73]]
    %v2090 = vstv %s2089
    %v2091 = vmul.f32 %v2090, %v1385
    %v2092 = vadd.f32 %v2088, %v2091
    %s2093 = sld [smem:[#allocation2 + $0x74]]
    %v2094 = vstv %s2093
    %v2095 = vmul.f32 %v2094, %v1385
    %2097 = vrot.lane.b32.xlu0 %v2095, 127
    %v2098 = vpop.permute.xlu0 %2097
    %v2100 = vadd.f32 %v2092, %v2098
    %s2101 = sld [smem:[#allocation2 + $0x75]]
    %v2102 = vstv %s2101
    %v2103 = vmul.f32 %v2102, %v1385
    %2105 = vrot.lane.b32.xlu0 %v2103, 126
    %v2106 = vpop.permute.xlu0 %2105
    %v2108 = vadd.f32 %v2100, %v2106
    %s2109 = sld [smem:[#allocation2 + $0x76]]
    %v2110 = vstv %s2109
    %v2111 = vmul.f32 %v2110, %v1385
    %2113 = vrot.lane.b32.xlu0 %v2111, 125
    %v2114 = vpop.permute.xlu0 %2113
    %v2116 = vadd.f32 %v2108, %v2114
    %s2117 = sld [smem:[#allocation2 + $0x77]]
    %v2118 = vstv %s2117
    %v2119 = vmul.f32 %v2118, %v1597
    %v2120 = vadd.f32 %v2116, %v2119
    %s2121 = sld [smem:[#allocation2 + $0x78]]
    %v2122 = vstv %s2121
    %v2123 = vmul.f32 %v2122, %v1597
    %2125 = vrot.lane.b32.xlu0 %v2123, 127
    %v2126 = vpop.permute.xlu0 %2125
    %v2128 = vadd.f32 %v2120, %v2126
    %s2129 = sld [smem:[#allocation2 + $0x79]]
    %v2130 = vstv %s2129
    %v2131 = vmul.f32 %v2130, %v1597
    %2133 = vrot.lane.b32.xlu0 %v2131, 126
    %v2134 = vpop.permute.xlu0 %2133
    %v2136 = vadd.f32 %v2128, %v2134
    %s2137 = sld [smem:[#allocation2 + $0x7a]]
    %v2138 = vstv %s2137
    %v2139 = vmul.f32 %v2138, %v1597
    %2141 = vrot.lane.b32.xlu0 %v2139, 125
    %v2142 = vpop.permute.xlu0 %2141
    %v2144 = vadd.f32 %v2136, %v2142
    %s2145 = sld [smem:[#allocation2 + $0x7f]]
    %v2146 = vstv %s2145
    %v2148 = vsel %vm1683, %v2144, 0
    %2150 = vmatpush.msra.mxu0 0.0
    %2151 = vmatpush.msra.mxu0 %v1688
    %2152 = vmatpush.msra.mxu0 %v374
    %2153 = vmatpush.msra.mxu0 %v372
    %2154 = vmatpush.msra.mxu0 %v370
    %2155 = vmatpush.msra.mxu0 %v368
    %2156 = vmatpush.msra.mxu0 %v366
    %2157 = vmatpush.msra.mxu0 %v364
    %2158 = vmatpush.msra.mxu0 %v362
    %2159 = vmatpush.msra.mxu0 %v360
    %2160 = vmatpush.msra.mxu0 %v358
    %2161 = vmatpush.msra.mxu0 %v356
    %2162 = vmatpush.msra.mxu0 %v354
    %2163 = vmatpush.msra.mxu0 %v352
    %2164 = vmatpush.msra.mxu0 %v350
    %2165 = vmatpush.msra.mxu0 %v348
    %2166 = vmatmul.f32.gmra.mxu0 %v2148
    %v2167 = vpop.f32.mrf.mxu0
    %v2168 = vadd.f32 %v2146, %v2167
    %2169 = vdwg.mxu0
    %v2170 = vmax.f32 %v2168, 0.0
    %s2171 = sld [smem:[#allocation2 + $0x84]]
    %v2172 = vstv %s2171
    %v2173 = vmul.f32 %v2170, %v2172
    %s2174 = sld [smem:[#allocation2 + $0x89]]
    %v2175 = vstv %s2174
    %v2176 = vadd.f32 %v2173, %v2175
    %s2177 = sld [smem:[#allocation2 + $0x8a]]
    %v2178 = vstv %s2177
    %v2179 = vmul.f32 %v2178, %v1716
    %s2180 = sld [smem:[#allocation2 + $0x8b]]
    %v2181 = vstv %s2180
    %v2182 = vmul.f32 %v2181, %v1716
    %2184 = vrot.lane.b32.xlu0 %v2182, 127
    %v2185 = vpop.permute.xlu0 %2184
    %v2187 = vadd.f32 %v2179, %v2185
    %s2188 = sld [smem:[#allocation2 + $0x8c]]
    %v2189 = vstv %s2188
    %v2190 = vmul.f32 %v2189, %v1716
    %2192 = vrot.lane.b32.xlu0 %v2190, 126
    %v2193 = vpop.permute.xlu0 %2192
    %v2195 = vadd.f32 %v2187, %v2193
    %s2196 = sld [smem:[#allocation2 + $0x8d]]
    %v2197 = vstv %s2196
    %v2198 = vmul.f32 %v2197, %v1716
    %2200 = vrot.lane.b32.xlu0 %v2198, 125
    %v2201 = vpop.permute.xlu0 %2200
    %v2203 = vadd.f32 %v2195, %v2201
    %s2204 = sld [smem:[#allocation2 + $0x8e]]
    %v2205 = vstv %s2204
    %v2206 = vmul.f32 %v2205, %v1831
    %v2207 = vadd.f32 %v2203, %v2206
    %s2208 = sld [smem:[#allocation2 + $0x8f]]
    %v2209 = vstv %s2208
    %v2210 = vmul.f32 %v2209, %v1831
    %2212 = vrot.lane.b32.xlu0 %v2210, 127
    %v2213 = vpop.permute.xlu0 %2212
    %v2215 = vadd.f32 %v2207, %v2213
    %s2216 = sld [smem:[#allocation2 + $0x90]]
    %v2217 = vstv %s2216
    %v2218 = vmul.f32 %v2217, %v1831
    %2220 = vrot.lane.b32.xlu0 %v2218, 126
    %v2221 = vpop.permute.xlu0 %2220
    %v2223 = vadd.f32 %v2215, %v2221
    %s2224 = sld [smem:[#allocation2 + $0x91]]
    %v2225 = vstv %s2224
    %v2226 = vmul.f32 %v2225, %v1831
    %2228 = vrot.lane.b32.xlu0 %v2226, 125
    %v2229 = vpop.permute.xlu0 %2228
    %v2231 = vadd.f32 %v2223, %v2229
    %s2232 = sld [smem:[#allocation2 + $0x92]]
    %v2233 = vstv %s2232
    %v2234 = vmul.f32 %v2233, %v1946
    %v2235 = vadd.f32 %v2231, %v2234
    %s2236 = sld [smem:[#allocation2 + $0x93]]
    %v2237 = vstv %s2236
    %v2238 = vmul.f32 %v2237, %v1946
    %2240 = vrot.lane.b32.xlu0 %v2238, 127
    %v2241 = vpop.permute.xlu0 %2240
    %v2243 = vadd.f32 %v2235, %v2241
    %s2244 = sld [smem:[#allocation2 + $0x94]]
    %v2245 = vstv %s2244
    %v2246 = vmul.f32 %v2245, %v1946
    %2248 = vrot.lane.b32.xlu0 %v2246, 126
    %v2249 = vpop.permute.xlu0 %2248
    %v2251 = vadd.f32 %v2243, %v2249
    %s2252 = sld [smem:[#allocation2 + $0x95]]
    %v2253 = vstv %s2252
    %v2254 = vmul.f32 %v2253, %v1946
    %2256 = vrot.lane.b32.xlu0 %v2254, 125
    %v2257 = vpop.permute.xlu0 %2256
    %v2259 = vadd.f32 %v2251, %v2257
    %s2260 = sld [smem:[#allocation2 + $0x96]]
    %v2261 = vstv %s2260
    %v2262 = vmul.f32 %v2261, %v2061
    %v2263 = vadd.f32 %v2259, %v2262
    %s2264 = sld [smem:[#allocation2 + $0x97]]
    %v2265 = vstv %s2264
    %v2266 = vmul.f32 %v2265, %v2061
    %2268 = vrot.lane.b32.xlu0 %v2266, 127
    %v2269 = vpop.permute.xlu0 %2268
    %v2271 = vadd.f32 %v2263, %v2269
    %s2272 = sld [smem:[#allocation2 + $0x98]]
    %v2273 = vstv %s2272
    %v2274 = vmul.f32 %v2273, %v2061
    %2276 = vrot.lane.b32.xlu0 %v2274, 126
    %v2277 = vpop.permute.xlu0 %2276
    %v2279 = vadd.f32 %v2271, %v2277
    %s2280 = sld [smem:[#allocation2 + $0x99]]
    %v2281 = vstv %s2280
    %v2282 = vmul.f32 %v2281, %v2061
    %2284 = vrot.lane.b32.xlu0 %v2282, 125
    %v2285 = vpop.permute.xlu0 %2284
    %v2287 = vadd.f32 %v2279, %v2285
    %s2288 = sld [smem:[#allocation2 + $0x9a]]
    %v2289 = vstv %s2288
    %v2290 = vmul.f32 %v2289, %v2176
    %v2291 = vadd.f32 %v2287, %v2290
    %s2292 = sld [smem:[#allocation2 + $0x9b]]
    %v2293 = vstv %s2292
    %v2294 = vmul.f32 %v2293, %v2176
    %2296 = vrot.lane.b32.xlu0 %v2294, 127
    %v2297 = vpop.permute.xlu0 %2296
    %v2299 = vadd.f32 %v2291, %v2297
    %s2300 = sld [smem:[#allocation2 + $0x9c]]
    %v2301 = vstv %s2300
    %v2302 = vmul.f32 %v2301, %v2176
    %2304 = vrot.lane.b32.xlu0 %v2302, 126
    %v2305 = vpop.permute.xlu0 %2304
    %v2307 = vadd.f32 %v2299, %v2305
    %s2308 = sld [smem:[#allocation2 + $0x9d]]
    %v2309 = vstv %s2308
    %v2310 = vmul.f32 %v2309, %v2176
    %2312 = vrot.lane.b32.xlu0 %v2310, 125
    %v2313 = vpop.permute.xlu0 %2312
    %v2315 = vadd.f32 %v2307, %v2313
    %s2316 = sld [smem:[#allocation2 + $0x152]]
    %v2317 = vstv %s2316
    %vm2318 = vcmask 465920
    %v2320 = vsel %vm2318, %v2315, 0
    %vm2322 = vcmask 1040384
    %v2324 = vsel %vm2322, %v362, 0
    %2326 = vmatpush.msra.mxu0 0.0
    %2327 = vmatpush.msra.mxu0 0.0
    %2328 = vmatpush.msra.mxu0 0.0
    %2329 = vmatpush.msra.mxu0 0.0
    %2330 = vmatpush.msra.mxu0 0.0
    %2331 = vmatpush.msra.mxu0 0.0
    %2332 = vmatpush.msra.mxu0 0.0
    %2333 = vmatpush.msra.mxu0 0.0
    %2334 = vmatpush.msra.mxu0 %v2324
    %2335 = vmatpush.msra.mxu0 %v360
    %2336 = vmatpush.msra.mxu0 %v358
    %2337 = vmatpush.msra.mxu0 %v356
    %2338 = vmatpush.msra.mxu0 %v354
    %2339 = vmatpush.msra.mxu0 %v352
    %2340 = vmatpush.msra.mxu0 %v350
    %2341 = vmatpush.msra.mxu0 %v348
    %2342 = vmatmul.f32.gmra.mxu0 %v2320
    %v2343 = vpop.f32.mrf.mxu0
    %v2344 = vadd.f32 %v2317, %v2343
    %2345 = vdwg.mxu0
    %v2346 = vmax.f32 %v2344, 0.0
    %s2347 = sld [smem:[#allocation2 + $0x15c]]
    %v2348 = vstv %s2347
    %v2349 = vmul.f32 %v2346, %v2348
    %s2350 = sld [smem:[#allocation2 + $0x166]]
    %v2351 = vstv %s2350
    %v2352 = vadd.f32 %v2349, %v2351
    %s2353 = sld [smem:[#allocation2 + $0x9e]]
    %v2354 = vstv %s2353
    %v2355 = vmul.f32 %v2354, %v1716
    %s2356 = sld [smem:[#allocation2 + $0x9f]]
    %v2357 = vstv %s2356
    %v2358 = vmul.f32 %v2357, %v1716
    %2360 = vrot.lane.b32.xlu0 %v2358, 127
    %v2361 = vpop.permute.xlu0 %2360
    %v2363 = vadd.f32 %v2355, %v2361
    %s2364 = sld [smem:[#allocation2 + $0xa0]]
    %v2365 = vstv %s2364
    %v2366 = vmul.f32 %v2365, %v1716
    %2368 = vrot.lane.b32.xlu0 %v2366, 126
    %v2369 = vpop.permute.xlu0 %2368
    %v2371 = vadd.f32 %v2363, %v2369
    %s2372 = sld [smem:[#allocation2 + $0xa1]]
    %v2373 = vstv %s2372
    %v2374 = vmul.f32 %v2373, %v1716
    %2376 = vrot.lane.b32.xlu0 %v2374, 125
    %v2377 = vpop.permute.xlu0 %2376
    %v2379 = vadd.f32 %v2371, %v2377
    %s2380 = sld [smem:[#allocation2 + $0xa2]]
    %v2381 = vstv %s2380
    %v2382 = vmul.f32 %v2381, %v1831
    %v2383 = vadd.f32 %v2379, %v2382
    %s2384 = sld [smem:[#allocation2 + $0xa3]]
    %v2385 = vstv %s2384
    %v2386 = vmul.f32 %v2385, %v1831
    %2388 = vrot.lane.b32.xlu0 %v2386, 127
    %v2389 = vpop.permute.xlu0 %2388
    %v2391 = vadd.f32 %v2383, %v2389
    %s2392 = sld [smem:[#allocation2 + $0xa4]]
    %v2393 = vstv %s2392
    %v2394 = vmul.f32 %v2393, %v1831
    %2396 = vrot.lane.b32.xlu0 %v2394, 126
    %v2397 = vpop.permute.xlu0 %2396
    %v2399 = vadd.f32 %v2391, %v2397
    %s2400 = sld [smem:[#allocation2 + $0xa5]]
    %v2401 = vstv %s2400
    %v2402 = vmul.f32 %v2401, %v1831
    %2404 = vrot.lane.b32.xlu0 %v2402, 125
    %v2405 = vpop.permute.xlu0 %2404
    %v2407 = vadd.f32 %v2399, %v2405
    %s2408 = sld [smem:[#allocation2 + $0xa6]]
    %v2409 = vstv %s2408
    %v2410 = vmul.f32 %v2409, %v1946
    %v2411 = vadd.f32 %v2407, %v2410
    %s2412 = sld [smem:[#allocation2 + $0xa7]]
    %v2413 = vstv %s2412
    %v2414 = vmul.f32 %v2413, %v1946
    %2416 = vrot.lane.b32.xlu0 %v2414, 127
    %v2417 = vpop.permute.xlu0 %2416
    %v2419 = vadd.f32 %v2411, %v2417
    %s2420 = sld [smem:[#allocation2 + $0xa8]]
    %v2421 = vstv %s2420
    %v2422 = vmul.f32 %v2421, %v1946
    %2424 = vrot.lane.b32.xlu0 %v2422, 126
    %v2425 = vpop.permute.xlu0 %2424
    %v2427 = vadd.f32 %v2419, %v2425
    %s2428 = sld [smem:[#allocation2 + $0xa9]]
    %v2429 = vstv %s2428
    %v2430 = vmul.f32 %v2429, %v1946
    %2432 = vrot.lane.b32.xlu0 %v2430, 125
    %v2433 = vpop.permute.xlu0 %2432
    %v2435 = vadd.f32 %v2427, %v2433
    %s2436 = sld [smem:[#allocation2 + $0xaa]]
    %v2437 = vstv %s2436
    %v2438 = vmul.f32 %v2437, %v2061
    %v2439 = vadd.f32 %v2435, %v2438
    %s2440 = sld [smem:[#allocation2 + $0xab]]
    %v2441 = vstv %s2440
    %v2442 = vmul.f32 %v2441, %v2061
    %2444 = vrot.lane.b32.xlu0 %v2442, 127
    %v2445 = vpop.permute.xlu0 %2444
    %v2447 = vadd.f32 %v2439, %v2445
    %s2448 = sld [smem:[#allocation2 + $0xac]]
    %v2449 = vstv %s2448
    %v2450 = vmul.f32 %v2449, %v2061
    %2452 = vrot.lane.b32.xlu0 %v2450, 126
    %v2453 = vpop.permute.xlu0 %2452
    %v2455 = vadd.f32 %v2447, %v2453
    %s2456 = sld [smem:[#allocation2 + $0xad]]
    %v2457 = vstv %s2456
    %v2458 = vmul.f32 %v2457, %v2061
    %2460 = vrot.lane.b32.xlu0 %v2458, 125
    %v2461 = vpop.permute.xlu0 %2460
    %v2463 = vadd.f32 %v2455, %v2461
    %s2464 = sld [smem:[#allocation2 + $0xae]]
    %v2465 = vstv %s2464
    %v2466 = vmul.f32 %v2465, %v2176
    %v2467 = vadd.f32 %v2463, %v2466
    %s2468 = sld [smem:[#allocation2 + $0xaf]]
    %v2469 = vstv %s2468
    %v2470 = vmul.f32 %v2469, %v2176
    %2472 = vrot.lane.b32.xlu0 %v2470, 127
    %v2473 = vpop.permute.xlu0 %2472
    %v2475 = vadd.f32 %v2467, %v2473
    %s2476 = sld [smem:[#allocation2 + $0xb0]]
    %v2477 = vstv %s2476
    %v2478 = vmul.f32 %v2477, %v2176
    %2480 = vrot.lane.b32.xlu0 %v2478, 126
    %v2481 = vpop.permute.xlu0 %2480
    %v2483 = vadd.f32 %v2475, %v2481
    %s2484 = sld [smem:[#allocation2 + $0xb1]]
    %v2485 = vstv %s2484
    %v2486 = vmul.f32 %v2485, %v2176
    %2488 = vrot.lane.b32.xlu0 %v2486, 125
    %v2489 = vpop.permute.xlu0 %2488
    %v2491 = vadd.f32 %v2483, %v2489
    %s2492 = sld [smem:[#allocation2 + $0x153]]
    %v2493 = vstv %s2492
    %v2495 = vsel %vm2318, %v2491, 0
    %2497 = vmatpush.msra.mxu0 0.0
    %2498 = vmatpush.msra.mxu0 0.0
    %2499 = vmatpush.msra.mxu0 0.0
    %2500 = vmatpush.msra.mxu0 0.0
    %2501 = vmatpush.msra.mxu0 0.0
    %2502 = vmatpush.msra.mxu0 0.0
    %2503 = vmatpush.msra.mxu0 0.0
    %2504 = vmatpush.msra.mxu0 0.0
    %2505 = vmatpush.msra.mxu0 %v2324
    %2506 = vmatpush.msra.mxu0 %v360
    %2507 = vmatpush.msra.mxu0 %v358
    %2508 = vmatpush.msra.mxu0 %v356
    %2509 = vmatpush.msra.mxu0 %v354
    %2510 = vmatpush.msra.mxu0 %v352
    %2511 = vmatpush.msra.mxu0 %v350
    %2512 = vmatpush.msra.mxu0 %v348
    %2513 = vmatmul.f32.gmra.mxu0 %v2495
    %v2514 = vpop.f32.mrf.mxu0
    %v2515 = vadd.f32 %v2493, %v2514
    %2516 = vdwg.mxu0
    %v2517 = vmax.f32 %v2515, 0.0
    %s2518 = sld [smem:[#allocation2 + $0x15d]]
    %v2519 = vstv %s2518
    %v2520 = vmul.f32 %v2517, %v2519
    %s2521 = sld [smem:[#allocation2 + $0x167]]
    %v2522 = vstv %s2521
    %v2523 = vadd.f32 %v2520, %v2522
    %s2524 = sld [smem:[#allocation2 + $0xb2]]
    %v2525 = vstv %s2524
    %v2526 = vmul.f32 %v2525, %v1716
    %s2527 = sld [smem:[#allocation2 + $0xb3]]
    %v2528 = vstv %s2527
    %v2529 = vmul.f32 %v2528, %v1716
    %2531 = vrot.lane.b32.xlu0 %v2529, 127
    %v2532 = vpop.permute.xlu0 %2531
    %v2534 = vadd.f32 %v2526, %v2532
    %s2535 = sld [smem:[#allocation2 + $0xb4]]
    %v2536 = vstv %s2535
    %v2537 = vmul.f32 %v2536, %v1716
    %2539 = vrot.lane.b32.xlu0 %v2537, 126
    %v2540 = vpop.permute.xlu0 %2539
    %v2542 = vadd.f32 %v2534, %v2540
    %s2543 = sld [smem:[#allocation2 + $0xb5]]
    %v2544 = vstv %s2543
    %v2545 = vmul.f32 %v2544, %v1716
    %2547 = vrot.lane.b32.xlu0 %v2545, 125
    %v2548 = vpop.permute.xlu0 %2547
    %v2550 = vadd.f32 %v2542, %v2548
    %s2551 = sld [smem:[#allocation2 + $0xb6]]
    %v2552 = vstv %s2551
    %v2553 = vmul.f32 %v2552, %v1831
    %v2554 = vadd.f32 %v2550, %v2553
    %s2555 = sld [smem:[#allocation2 + $0xb7]]
    %v2556 = vstv %s2555
    %v2557 = vmul.f32 %v2556, %v1831
    %2559 = vrot.lane.b32.xlu0 %v2557, 127
    %v2560 = vpop.permute.xlu0 %2559
    %v2562 = vadd.f32 %v2554, %v2560
    %s2563 = sld [smem:[#allocation2 + $0xb8]]
    %v2564 = vstv %s2563
    %v2565 = vmul.f32 %v2564, %v1831
    %2567 = vrot.lane.b32.xlu0 %v2565, 126
    %v2568 = vpop.permute.xlu0 %2567
    %v2570 = vadd.f32 %v2562, %v2568
    %s2571 = sld [smem:[#allocation2 + $0xb9]]
    %v2572 = vstv %s2571
    %v2573 = vmul.f32 %v2572, %v1831
    %2575 = vrot.lane.b32.xlu0 %v2573, 125
    %v2576 = vpop.permute.xlu0 %2575
    %v2578 = vadd.f32 %v2570, %v2576
    %s2579 = sld [smem:[#allocation2 + $0xba]]
    %v2580 = vstv %s2579
    %v2581 = vmul.f32 %v2580, %v1946
    %v2582 = vadd.f32 %v2578, %v2581
    %s2583 = sld [smem:[#allocation2 + $0xbb]]
    %v2584 = vstv %s2583
    %v2585 = vmul.f32 %v2584, %v1946
    %2587 = vrot.lane.b32.xlu0 %v2585, 127
    %v2588 = vpop.permute.xlu0 %2587
    %v2590 = vadd.f32 %v2582, %v2588
    %s2591 = sld [smem:[#allocation2 + $0xbc]]
    %v2592 = vstv %s2591
    %v2593 = vmul.f32 %v2592, %v1946
    %2595 = vrot.lane.b32.xlu0 %v2593, 126
    %v2596 = vpop.permute.xlu0 %2595
    %v2598 = vadd.f32 %v2590, %v2596
    %s2599 = sld [smem:[#allocation2 + $0xbd]]
    %v2600 = vstv %s2599
    %v2601 = vmul.f32 %v2600, %v1946
    %2603 = vrot.lane.b32.xlu0 %v2601, 125
    %v2604 = vpop.permute.xlu0 %2603
    %v2606 = vadd.f32 %v2598, %v2604
    %s2607 = sld [smem:[#allocation2 + $0xbe]]
    %v2608 = vstv %s2607
    %v2609 = vmul.f32 %v2608, %v2061
    %v2610 = vadd.f32 %v2606, %v2609
    %s2611 = sld [smem:[#allocation2 + $0xbf]]
    %v2612 = vstv %s2611
    %v2613 = vmul.f32 %v2612, %v2061
    %2615 = vrot.lane.b32.xlu0 %v2613, 127
    %v2616 = vpop.permute.xlu0 %2615
    %v2618 = vadd.f32 %v2610, %v2616
    %s2619 = sld [smem:[#allocation2 + $0xc0]]
    %v2620 = vstv %s2619
    %v2621 = vmul.f32 %v2620, %v2061
    %2623 = vrot.lane.b32.xlu0 %v2621, 126
    %v2624 = vpop.permute.xlu0 %2623
    %v2626 = vadd.f32 %v2618, %v2624
    %s2627 = sld [smem:[#allocation2 + $0xc1]]
    %v2628 = vstv %s2627
    %v2629 = vmul.f32 %v2628, %v2061
    %2631 = vrot.lane.b32.xlu0 %v2629, 125
    %v2632 = vpop.permute.xlu0 %2631
    %v2634 = vadd.f32 %v2626, %v2632
    %s2635 = sld [smem:[#allocation2 + $0xc2]]
    %v2636 = vstv %s2635
    %v2637 = vmul.f32 %v2636, %v2176
    %v2638 = vadd.f32 %v2634, %v2637
    %s2639 = sld [smem:[#allocation2 + $0xc3]]
    %v2640 = vstv %s2639
    %v2641 = vmul.f32 %v2640, %v2176
    %2643 = vrot.lane.b32.xlu0 %v2641, 127
    %v2644 = vpop.permute.xlu0 %2643
    %v2646 = vadd.f32 %v2638, %v2644
    %s2647 = sld [smem:[#allocation2 + $0xc4]]
    %v2648 = vstv %s2647
    %v2649 = vmul.f32 %v2648, %v2176
    %2651 = vrot.lane.b32.xlu0 %v2649, 126
    %v2652 = vpop.permute.xlu0 %2651
    %v2654 = vadd.f32 %v2646, %v2652
    %s2655 = sld [smem:[#allocation2 + $0xc5]]
    %v2656 = vstv %s2655
    %v2657 = vmul.f32 %v2656, %v2176
    %2659 = vrot.lane.b32.xlu0 %v2657, 125
    %v2660 = vpop.permute.xlu0 %2659
    %v2662 = vadd.f32 %v2654, %v2660
    %s2663 = sld [smem:[#allocation2 + $0x154]]
    %v2664 = vstv %s2663
    %v2666 = vsel %vm2318, %v2662, 0
    %2668 = vmatpush.msra.mxu0 0.0
    %2669 = vmatpush.msra.mxu0 0.0
    %2670 = vmatpush.msra.mxu0 0.0
    %2671 = vmatpush.msra.mxu0 0.0
    %2672 = vmatpush.msra.mxu0 0.0
    %2673 = vmatpush.msra.mxu0 0.0
    %2674 = vmatpush.msra.mxu0 0.0
    %2675 = vmatpush.msra.mxu0 0.0
    %2676 = vmatpush.msra.mxu0 %v2324
    %2677 = vmatpush.msra.mxu0 %v360
    %2678 = vmatpush.msra.mxu0 %v358
    %2679 = vmatpush.msra.mxu0 %v356
    %2680 = vmatpush.msra.mxu0 %v354
    %2681 = vmatpush.msra.mxu0 %v352
    %2682 = vmatpush.msra.mxu0 %v350
    %2683 = vmatpush.msra.mxu0 %v348
    %2684 = vmatmul.f32.gmra.mxu0 %v2666
    %v2685 = vpop.f32.mrf.mxu0
    %v2686 = vadd.f32 %v2664, %v2685
    %2687 = vdwg.mxu0
    %v2688 = vmax.f32 %v2686, 0.0
    %s2689 = sld [smem:[#allocation2 + $0x15e]]
    %v2690 = vstv %s2689
    %v2691 = vmul.f32 %v2688, %v2690
    %s2692 = sld [smem:[#allocation2 + $0x168]]
    %v2693 = vstv %s2692
    %v2694 = vadd.f32 %v2691, %v2693
    %s2695 = sld [smem:[#allocation2 + $0xc6]]
    %v2696 = vstv %s2695
    %v2697 = vmul.f32 %v2696, %v1716
    %s2698 = sld [smem:[#allocation2 + $0xc7]]
    %v2699 = vstv %s2698
    %v2700 = vmul.f32 %v2699, %v1716
    %2702 = vrot.lane.b32.xlu0 %v2700, 127
    %v2703 = vpop.permute.xlu0 %2702
    %v2705 = vadd.f32 %v2697, %v2703
    %s2706 = sld [smem:[#allocation2 + $0xc8]]
    %v2707 = vstv %s2706
    %v2708 = vmul.f32 %v2707, %v1716
    %2710 = vrot.lane.b32.xlu0 %v2708, 126
    %v2711 = vpop.permute.xlu0 %2710
    %v2713 = vadd.f32 %v2705, %v2711
    %s2714 = sld [smem:[#allocation2 + $0xc9]]
    %v2715 = vstv %s2714
    %v2716 = vmul.f32 %v2715, %v1716
    %2718 = vrot.lane.b32.xlu0 %v2716, 125
    %v2719 = vpop.permute.xlu0 %2718
    %v2721 = vadd.f32 %v2713, %v2719
    %s2722 = sld [smem:[#allocation2 + $0xca]]
    %v2723 = vstv %s2722
    %v2724 = vmul.f32 %v2723, %v1831
    %v2725 = vadd.f32 %v2721, %v2724
    %s2726 = sld [smem:[#allocation2 + $0xcb]]
    %v2727 = vstv %s2726
    %v2728 = vmul.f32 %v2727, %v1831
    %2730 = vrot.lane.b32.xlu0 %v2728, 127
    %v2731 = vpop.permute.xlu0 %2730
    %v2733 = vadd.f32 %v2725, %v2731
    %s2734 = sld [smem:[#allocation2 + $0xcc]]
    %v2735 = vstv %s2734
    %v2736 = vmul.f32 %v2735, %v1831
    %2738 = vrot.lane.b32.xlu0 %v2736, 126
    %v2739 = vpop.permute.xlu0 %2738
    %v2741 = vadd.f32 %v2733, %v2739
    %s2742 = sld [smem:[#allocation2 + $0xcd]]
    %v2743 = vstv %s2742
    %v2744 = vmul.f32 %v2743, %v1831
    %2746 = vrot.lane.b32.xlu0 %v2744, 125
    %v2747 = vpop.permute.xlu0 %2746
    %v2749 = vadd.f32 %v2741, %v2747
    %s2750 = sld [smem:[#allocation2 + $0xce]]
    %v2751 = vstv %s2750
    %v2752 = vmul.f32 %v2751, %v1946
    %v2753 = vadd.f32 %v2749, %v2752
    %s2754 = sld [smem:[#allocation2 + $0xcf]]
    %v2755 = vstv %s2754
    %v2756 = vmul.f32 %v2755, %v1946
    %2758 = vrot.lane.b32.xlu0 %v2756, 127
    %v2759 = vpop.permute.xlu0 %2758
    %v2761 = vadd.f32 %v2753, %v2759
    %s2762 = sld [smem:[#allocation2 + $0xd0]]
    %v2763 = vstv %s2762
    %v2764 = vmul.f32 %v2763, %v1946
    %2766 = vrot.lane.b32.xlu0 %v2764, 126
    %v2767 = vpop.permute.xlu0 %2766
    %v2769 = vadd.f32 %v2761, %v2767
    %s2770 = sld [smem:[#allocation2 + $0xd1]]
    %v2771 = vstv %s2770
    %v2772 = vmul.f32 %v2771, %v1946
    %2774 = vrot.lane.b32.xlu0 %v2772, 125
    %v2775 = vpop.permute.xlu0 %2774
    %v2777 = vadd.f32 %v2769, %v2775
    %s2778 = sld [smem:[#allocation2 + $0xd2]]
    %v2779 = vstv %s2778
    %v2780 = vmul.f32 %v2779, %v2061
    %v2781 = vadd.f32 %v2777, %v2780
    %s2782 = sld [smem:[#allocation2 + $0xd3]]
    %v2783 = vstv %s2782
    %v2784 = vmul.f32 %v2783, %v2061
    %2786 = vrot.lane.b32.xlu0 %v2784, 127
    %v2787 = vpop.permute.xlu0 %2786
    %v2789 = vadd.f32 %v2781, %v2787
    %s2790 = sld [smem:[#allocation2 + $0xd4]]
    %v2791 = vstv %s2790
    %v2792 = vmul.f32 %v2791, %v2061
    %2794 = vrot.lane.b32.xlu0 %v2792, 126
    %v2795 = vpop.permute.xlu0 %2794
    %v2797 = vadd.f32 %v2789, %v2795
    %s2798 = sld [smem:[#allocation2 + $0xd5]]
    %v2799 = vstv %s2798
    %v2800 = vmul.f32 %v2799, %v2061
    %2802 = vrot.lane.b32.xlu0 %v2800, 125
    %v2803 = vpop.permute.xlu0 %2802
    %v2805 = vadd.f32 %v2797, %v2803
    %s2806 = sld [smem:[#allocation2 + $0xd6]]
    %v2807 = vstv %s2806
    %v2808 = vmul.f32 %v2807, %v2176
    %v2809 = vadd.f32 %v2805, %v2808
    %s2810 = sld [smem:[#allocation2 + $0xd7]]
    %v2811 = vstv %s2810
    %v2812 = vmul.f32 %v2811, %v2176
    %2814 = vrot.lane.b32.xlu0 %v2812, 127
    %v2815 = vpop.permute.xlu0 %2814
    %v2817 = vadd.f32 %v2809, %v2815
    %s2818 = sld [smem:[#allocation2 + $0xd8]]
    %v2819 = vstv %s2818
    %v2820 = vmul.f32 %v2819, %v2176
    %2822 = vrot.lane.b32.xlu0 %v2820, 126
    %v2823 = vpop.permute.xlu0 %2822
    %v2825 = vadd.f32 %v2817, %v2823
    %s2826 = sld [smem:[#allocation2 + $0xd9]]
    %v2827 = vstv %s2826
    %v2828 = vmul.f32 %v2827, %v2176
    %2830 = vrot.lane.b32.xlu0 %v2828, 125
    %v2831 = vpop.permute.xlu0 %2830
    %v2833 = vadd.f32 %v2825, %v2831
    %s2834 = sld [smem:[#allocation2 + $0x155]]
    %v2835 = vstv %s2834
    %v2837 = vsel %vm2318, %v2833, 0
    %2839 = vmatpush.msra.mxu0 0.0
    %2840 = vmatpush.msra.mxu0 0.0
    %2841 = vmatpush.msra.mxu0 0.0
    %2842 = vmatpush.msra.mxu0 0.0
    %2843 = vmatpush.msra.mxu0 0.0
    %2844 = vmatpush.msra.mxu0 0.0
    %2845 = vmatpush.msra.mxu0 0.0
    %2846 = vmatpush.msra.mxu0 0.0
    %2847 = vmatpush.msra.mxu0 %v2324
    %2848 = vmatpush.msra.mxu0 %v360
    %2849 = vmatpush.msra.mxu0 %v358
    %2850 = vmatpush.msra.mxu0 %v356
    %2851 = vmatpush.msra.mxu0 %v354
    %2852 = vmatpush.msra.mxu0 %v352
    %2853 = vmatpush.msra.mxu0 %v350
    %2854 = vmatpush.msra.mxu0 %v348
    %2855 = vmatmul.f32.gmra.mxu0 %v2837
    %v2856 = vpop.f32.mrf.mxu0
    %v2857 = vadd.f32 %v2835, %v2856
    %2858 = vdwg.mxu0
    %v2859 = vmax.f32 %v2857, 0.0
    %s2860 = sld [smem:[#allocation2 + $0x15f]]
    %v2861 = vstv %s2860
    %v2862 = vmul.f32 %v2859, %v2861
    %s2863 = sld [smem:[#allocation2 + $0x169]]
    %v2864 = vstv %s2863
    %v2865 = vadd.f32 %v2862, %v2864
    %s2866 = sld [smem:[#allocation2 + $0xda]]
    %v2867 = vstv %s2866
    %v2868 = vmul.f32 %v2867, %v1716
    %s2869 = sld [smem:[#allocation2 + $0xdb]]
    %v2870 = vstv %s2869
    %v2871 = vmul.f32 %v2870, %v1716
    %2873 = vrot.lane.b32.xlu0 %v2871, 127
    %v2874 = vpop.permute.xlu0 %2873
    %v2876 = vadd.f32 %v2868, %v2874
    %s2877 = sld [smem:[#allocation2 + $0xdc]]
    %v2878 = vstv %s2877
    %v2879 = vmul.f32 %v2878, %v1716
    %2881 = vrot.lane.b32.xlu0 %v2879, 126
    %v2882 = vpop.permute.xlu0 %2881
    %v2884 = vadd.f32 %v2876, %v2882
    %s2885 = sld [smem:[#allocation2 + $0xdd]]
    %v2886 = vstv %s2885
    %v2887 = vmul.f32 %v2886, %v1716
    %2889 = vrot.lane.b32.xlu0 %v2887, 125
    %v2890 = vpop.permute.xlu0 %2889
    %v2892 = vadd.f32 %v2884, %v2890
    %s2893 = sld [smem:[#allocation2 + $0xde]]
    %v2894 = vstv %s2893
    %v2895 = vmul.f32 %v2894, %v1831
    %v2896 = vadd.f32 %v2892, %v2895
    %s2897 = sld [smem:[#allocation2 + $0xdf]]
    %v2898 = vstv %s2897
    %v2899 = vmul.f32 %v2898, %v1831
    %2901 = vrot.lane.b32.xlu0 %v2899, 127
    %v2902 = vpop.permute.xlu0 %2901
    %v2904 = vadd.f32 %v2896, %v2902
    %s2905 = sld [smem:[#allocation2 + $0xe0]]
    %v2906 = vstv %s2905
    %v2907 = vmul.f32 %v2906, %v1831
    %2909 = vrot.lane.b32.xlu0 %v2907, 126
    %v2910 = vpop.permute.xlu0 %2909
    %v2912 = vadd.f32 %v2904, %v2910
    %s2913 = sld [smem:[#allocation2 + $0xe1]]
    %v2914 = vstv %s2913
    %v2915 = vmul.f32 %v2914, %v1831
    %2917 = vrot.lane.b32.xlu0 %v2915, 125
    %v2918 = vpop.permute.xlu0 %2917
    %v2920 = vadd.f32 %v2912, %v2918
    %s2921 = sld [smem:[#allocation2 + $0xe2]]
    %v2922 = vstv %s2921
    %v2923 = vmul.f32 %v2922, %v1946
    %v2924 = vadd.f32 %v2920, %v2923
    %s2925 = sld [smem:[#allocation2 + $0xe3]]
    %v2926 = vstv %s2925
    %v2927 = vmul.f32 %v2926, %v1946
    %2929 = vrot.lane.b32.xlu0 %v2927, 127
    %v2930 = vpop.permute.xlu0 %2929
    %v2932 = vadd.f32 %v2924, %v2930
    %s2933 = sld [smem:[#allocation2 + $0xe4]]
    %v2934 = vstv %s2933
    %v2935 = vmul.f32 %v2934, %v1946
    %2937 = vrot.lane.b32.xlu0 %v2935, 126
    %v2938 = vpop.permute.xlu0 %2937
    %v2940 = vadd.f32 %v2932, %v2938
    %s2941 = sld [smem:[#allocation2 + $0xe5]]
    %v2942 = vstv %s2941
    %v2943 = vmul.f32 %v2942, %v1946
    %2945 = vrot.lane.b32.xlu0 %v2943, 125
    %v2946 = vpop.permute.xlu0 %2945
    %v2948 = vadd.f32 %v2940, %v2946
    %s2949 = sld [smem:[#allocation2 + $0xe6]]
    %v2950 = vstv %s2949
    %v2951 = vmul.f32 %v2950, %v2061
    %v2952 = vadd.f32 %v2948, %v2951
    %s2953 = sld [smem:[#allocation2 + $0xe7]]
    %v2954 = vstv %s2953
    %v2955 = vmul.f32 %v2954, %v2061
    %2957 = vrot.lane.b32.xlu0 %v2955, 127
    %v2958 = vpop.permute.xlu0 %2957
    %v2960 = vadd.f32 %v2952, %v2958
    %s2961 = sld [smem:[#allocation2 + $0xe8]]
    %v2962 = vstv %s2961
    %v2963 = vmul.f32 %v2962, %v2061
    %2965 = vrot.lane.b32.xlu0 %v2963, 126
    %v2966 = vpop.permute.xlu0 %2965
    %v2968 = vadd.f32 %v2960, %v2966
    %s2969 = sld [smem:[#allocation2 + $0xe9]]
    %v2970 = vstv %s2969
    %v2971 = vmul.f32 %v2970, %v2061
    %2973 = vrot.lane.b32.xlu0 %v2971, 125
    %v2974 = vpop.permute.xlu0 %2973
    %v2976 = vadd.f32 %v2968, %v2974
    %s2977 = sld [smem:[#allocation2 + $0xea]]
    %v2978 = vstv %s2977
    %v2979 = vmul.f32 %v2978, %v2176
    %v2980 = vadd.f32 %v2976, %v2979
    %s2981 = sld [smem:[#allocation2 + $0xeb]]
    %v2982 = vstv %s2981
    %v2983 = vmul.f32 %v2982, %v2176
    %2985 = vrot.lane.b32.xlu0 %v2983, 127
    %v2986 = vpop.permute.xlu0 %2985
    %v2988 = vadd.f32 %v2980, %v2986
    %s2989 = sld [smem:[#allocation2 + $0xec]]
    %v2990 = vstv %s2989
    %v2991 = vmul.f32 %v2990, %v2176
    %2993 = vrot.lane.b32.xlu0 %v2991, 126
    %v2994 = vpop.permute.xlu0 %2993
    %v2996 = vadd.f32 %v2988, %v2994
    %s2997 = sld [smem:[#allocation2 + $0xed]]
    %v2998 = vstv %s2997
    %v2999 = vmul.f32 %v2998, %v2176
    %3001 = vrot.lane.b32.xlu0 %v2999, 125
    %v3002 = vpop.permute.xlu0 %3001
    %v3004 = vadd.f32 %v2996, %v3002
    %s3005 = sld [smem:[#allocation2 + $0x156]]
    %v3006 = vstv %s3005
    %v3008 = vsel %vm2318, %v3004, 0
    %3010 = vmatpush.msra.mxu0 0.0
    %3011 = vmatpush.msra.mxu0 0.0
    %3012 = vmatpush.msra.mxu0 0.0
    %3013 = vmatpush.msra.mxu0 0.0
    %3014 = vmatpush.msra.mxu0 0.0
    %3015 = vmatpush.msra.mxu0 0.0
    %3016 = vmatpush.msra.mxu0 0.0
    %3017 = vmatpush.msra.mxu0 0.0
    %3018 = vmatpush.msra.mxu0 %v2324
    %3019 = vmatpush.msra.mxu0 %v360
    %3020 = vmatpush.msra.mxu0 %v358
    %3021 = vmatpush.msra.mxu0 %v356
    %3022 = vmatpush.msra.mxu0 %v354
    %3023 = vmatpush.msra.mxu0 %v352
    %3024 = vmatpush.msra.mxu0 %v350
    %3025 = vmatpush.msra.mxu0 %v348
    %3026 = vmatmul.f32.gmra.mxu0 %v3008
    %v3027 = vpop.f32.mrf.mxu0
    %v3028 = vadd.f32 %v3006, %v3027
    %3029 = vdwg.mxu0
    %v3030 = vmax.f32 %v3028, 0.0
    %s3031 = sld [smem:[#allocation2 + $0x160]]
    %v3032 = vstv %s3031
    %v3033 = vmul.f32 %v3030, %v3032
    %s3034 = sld [smem:[#allocation2 + $0x16a]]
    %v3035 = vstv %s3034
    %v3036 = vadd.f32 %v3033, %v3035
    %s3037 = sld [smem:[#allocation2 + $0xee]]
    %v3038 = vstv %s3037
    %v3039 = vmul.f32 %v3038, %v1716
    %s3040 = sld [smem:[#allocation2 + $0xef]]
    %v3041 = vstv %s3040
    %v3042 = vmul.f32 %v3041, %v1716
    %3044 = vrot.lane.b32.xlu0 %v3042, 127
    %v3045 = vpop.permute.xlu0 %3044
    %v3047 = vadd.f32 %v3039, %v3045
    %s3048 = sld [smem:[#allocation2 + $0xf0]]
    %v3049 = vstv %s3048
    %v3050 = vmul.f32 %v3049, %v1716
    %3052 = vrot.lane.b32.xlu0 %v3050, 126
    %v3053 = vpop.permute.xlu0 %3052
    %v3055 = vadd.f32 %v3047, %v3053
    %s3056 = sld [smem:[#allocation2 + $0xf1]]
    %v3057 = vstv %s3056
    %v3058 = vmul.f32 %v3057, %v1716
    %3060 = vrot.lane.b32.xlu0 %v3058, 125
    %v3061 = vpop.permute.xlu0 %3060
    %v3063 = vadd.f32 %v3055, %v3061
    %s3064 = sld [smem:[#allocation2 + $0xf2]]
    %v3065 = vstv %s3064
    %v3066 = vmul.f32 %v3065, %v1831
    %v3067 = vadd.f32 %v3063, %v3066
    %s3068 = sld [smem:[#allocation2 + $0xf3]]
    %v3069 = vstv %s3068
    %v3070 = vmul.f32 %v3069, %v1831
    %3072 = vrot.lane.b32.xlu0 %v3070, 127
    %v3073 = vpop.permute.xlu0 %3072
    %v3075 = vadd.f32 %v3067, %v3073
    %s3076 = sld [smem:[#allocation2 + $0xf4]]
    %v3077 = vstv %s3076
    %v3078 = vmul.f32 %v3077, %v1831
    %3080 = vrot.lane.b32.xlu0 %v3078, 126
    %v3081 = vpop.permute.xlu0 %3080
    %v3083 = vadd.f32 %v3075, %v3081
    %s3084 = sld [smem:[#allocation2 + $0xf5]]
    %v3085 = vstv %s3084
    %v3086 = vmul.f32 %v3085, %v1831
    %3088 = vrot.lane.b32.xlu0 %v3086, 125
    %v3089 = vpop.permute.xlu0 %3088
    %v3091 = vadd.f32 %v3083, %v3089
    %s3092 = sld [smem:[#allocation2 + $0xf6]]
    %v3093 = vstv %s3092
    %v3094 = vmul.f32 %v3093, %v1946
    %v3095 = vadd.f32 %v3091, %v3094
    %s3096 = sld [smem:[#allocation2 + $0xf7]]
    %v3097 = vstv %s3096
    %v3098 = vmul.f32 %v3097, %v1946
    %3100 = vrot.lane.b32.xlu0 %v3098, 127
    %v3101 = vpop.permute.xlu0 %3100
    %v3103 = vadd.f32 %v3095, %v3101
    %s3104 = sld [smem:[#allocation2 + $0xf8]]
    %v3105 = vstv %s3104
    %v3106 = vmul.f32 %v3105, %v1946
    %3108 = vrot.lane.b32.xlu0 %v3106, 126
    %v3109 = vpop.permute.xlu0 %3108
    %v3111 = vadd.f32 %v3103, %v3109
    %s3112 = sld [smem:[#allocation2 + $0xf9]]
    %v3113 = vstv %s3112
    %v3114 = vmul.f32 %v3113, %v1946
    %3116 = vrot.lane.b32.xlu0 %v3114, 125
    %v3117 = vpop.permute.xlu0 %3116
    %v3119 = vadd.f32 %v3111, %v3117
    %s3120 = sld [smem:[#allocation2 + $0xfa]]
    %v3121 = vstv %s3120
    %v3122 = vmul.f32 %v3121, %v2061
    %v3123 = vadd.f32 %v3119, %v3122
    %s3124 = sld [smem:[#allocation2 + $0xfb]]
    %v3125 = vstv %s3124
    %v3126 = vmul.f32 %v3125, %v2061
    %3128 = vrot.lane.b32.xlu0 %v3126, 127
    %v3129 = vpop.permute.xlu0 %3128
    %v3131 = vadd.f32 %v3123, %v3129
    %s3132 = sld [smem:[#allocation2 + $0xfc]]
    %v3133 = vstv %s3132
    %v3134 = vmul.f32 %v3133, %v2061
    %3136 = vrot.lane.b32.xlu0 %v3134, 126
    %v3137 = vpop.permute.xlu0 %3136
    %v3139 = vadd.f32 %v3131, %v3137
    %s3140 = sld [smem:[#allocation2 + $0xfd]]
    %v3141 = vstv %s3140
    %v3142 = vmul.f32 %v3141, %v2061
    %3144 = vrot.lane.b32.xlu0 %v3142, 125
    %v3145 = vpop.permute.xlu0 %3144
    %v3147 = vadd.f32 %v3139, %v3145
    %s3148 = sld [smem:[#allocation2 + $0xfe]]
    %v3149 = vstv %s3148
    %v3150 = vmul.f32 %v3149, %v2176
    %v3151 = vadd.f32 %v3147, %v3150
    %s3152 = sld [smem:[#allocation2 + $0xff]]
    %v3153 = vstv %s3152
    %v3154 = vmul.f32 %v3153, %v2176
    %3156 = vrot.lane.b32.xlu0 %v3154, 127
    %v3157 = vpop.permute.xlu0 %3156
    %v3159 = vadd.f32 %v3151, %v3157
    %s3160 = sld [smem:[#allocation2 + $0x100]]
    %v3161 = vstv %s3160
    %v3162 = vmul.f32 %v3161, %v2176
    %3164 = vrot.lane.b32.xlu0 %v3162, 126
    %v3165 = vpop.permute.xlu0 %3164
    %v3167 = vadd.f32 %v3159, %v3165
    %s3168 = sld [smem:[#allocation2 + $0x101]]
    %v3169 = vstv %s3168
    %v3170 = vmul.f32 %v3169, %v2176
    %3172 = vrot.lane.b32.xlu0 %v3170, 125
    %v3173 = vpop.permute.xlu0 %3172
    %v3175 = vadd.f32 %v3167, %v3173
    %s3176 = sld [smem:[#allocation2 + $0x157]]
    %v3177 = vstv %s3176
    %v3179 = vsel %vm2318, %v3175, 0
    %3181 = vmatpush.msra.mxu0 0.0
    %3182 = vmatpush.msra.mxu0 0.0
    %3183 = vmatpush.msra.mxu0 0.0
    %3184 = vmatpush.msra.mxu0 0.0
    %3185 = vmatpush.msra.mxu0 0.0
    %3186 = vmatpush.msra.mxu0 0.0
    %3187 = vmatpush.msra.mxu0 0.0
    %3188 = vmatpush.msra.mxu0 0.0
    %3189 = vmatpush.msra.mxu0 %v2324
    %3190 = vmatpush.msra.mxu0 %v360
    %3191 = vmatpush.msra.mxu0 %v358
    %3192 = vmatpush.msra.mxu0 %v356
    %3193 = vmatpush.msra.mxu0 %v354
    %3194 = vmatpush.msra.mxu0 %v352
    %3195 = vmatpush.msra.mxu0 %v350
    %3196 = vmatpush.msra.mxu0 %v348
    %3197 = vmatmul.f32.gmra.mxu0 %v3179
    %v3198 = vpop.f32.mrf.mxu0
    %v3199 = vadd.f32 %v3177, %v3198
    %3200 = vdwg.mxu0
    %v3201 = vmax.f32 %v3199, 0.0
    %s3202 = sld [smem:[#allocation2 + $0x161]]
    %v3203 = vstv %s3202
    %v3204 = vmul.f32 %v3201, %v3203
    %s3205 = sld [smem:[#allocation2 + $0x16b]]
    %v3206 = vstv %s3205
    %v3207 = vadd.f32 %v3204, %v3206
    %s3208 = sld [smem:[#allocation2 + $0x102]]
    %v3209 = vstv %s3208
    %v3210 = vmul.f32 %v3209, %v1716
    %s3211 = sld [smem:[#allocation2 + $0x103]]
    %v3212 = vstv %s3211
    %v3213 = vmul.f32 %v3212, %v1716
    %3215 = vrot.lane.b32.xlu0 %v3213, 127
    %v3216 = vpop.permute.xlu0 %3215
    %v3218 = vadd.f32 %v3210, %v3216
    %s3219 = sld [smem:[#allocation2 + $0x104]]
    %v3220 = vstv %s3219
    %v3221 = vmul.f32 %v3220, %v1716
    %3223 = vrot.lane.b32.xlu0 %v3221, 126
    %v3224 = vpop.permute.xlu0 %3223
    %v3226 = vadd.f32 %v3218, %v3224
    %s3227 = sld [smem:[#allocation2 + $0x105]]
    %v3228 = vstv %s3227
    %v3229 = vmul.f32 %v3228, %v1716
    %3231 = vrot.lane.b32.xlu0 %v3229, 125
    %v3232 = vpop.permute.xlu0 %3231
    %v3234 = vadd.f32 %v3226, %v3232
    %s3235 = sld [smem:[#allocation2 + $0x106]]
    %v3236 = vstv %s3235
    %v3237 = vmul.f32 %v3236, %v1831
    %v3238 = vadd.f32 %v3234, %v3237
    %s3239 = sld [smem:[#allocation2 + $0x107]]
    %v3240 = vstv %s3239
    %v3241 = vmul.f32 %v3240, %v1831
    %3243 = vrot.lane.b32.xlu0 %v3241, 127
    %v3244 = vpop.permute.xlu0 %3243
    %v3246 = vadd.f32 %v3238, %v3244
    %s3247 = sld [smem:[#allocation2 + $0x108]]
    %v3248 = vstv %s3247
    %v3249 = vmul.f32 %v3248, %v1831
    %3251 = vrot.lane.b32.xlu0 %v3249, 126
    %v3252 = vpop.permute.xlu0 %3251
    %v3254 = vadd.f32 %v3246, %v3252
    %s3255 = sld [smem:[#allocation2 + $0x109]]
    %v3256 = vstv %s3255
    %v3257 = vmul.f32 %v3256, %v1831
    %3259 = vrot.lane.b32.xlu0 %v3257, 125
    %v3260 = vpop.permute.xlu0 %3259
    %v3262 = vadd.f32 %v3254, %v3260
    %s3263 = sld [smem:[#allocation2 + $0x10a]]
    %v3264 = vstv %s3263
    %v3265 = vmul.f32 %v3264, %v1946
    %v3266 = vadd.f32 %v3262, %v3265
    %s3267 = sld [smem:[#allocation2 + $0x10b]]
    %v3268 = vstv %s3267
    %v3269 = vmul.f32 %v3268, %v1946
    %3271 = vrot.lane.b32.xlu0 %v3269, 127
    %v3272 = vpop.permute.xlu0 %3271
    %v3274 = vadd.f32 %v3266, %v3272
    %s3275 = sld [smem:[#allocation2 + $0x10c]]
    %v3276 = vstv %s3275
    %v3277 = vmul.f32 %v3276, %v1946
    %3279 = vrot.lane.b32.xlu0 %v3277, 126
    %v3280 = vpop.permute.xlu0 %3279
    %v3282 = vadd.f32 %v3274, %v3280
    %s3283 = sld [smem:[#allocation2 + $0x10d]]
    %v3284 = vstv %s3283
    %v3285 = vmul.f32 %v3284, %v1946
    %3287 = vrot.lane.b32.xlu0 %v3285, 125
    %v3288 = vpop.permute.xlu0 %3287
    %v3290 = vadd.f32 %v3282, %v3288
    %s3291 = sld [smem:[#allocation2 + $0x10e]]
    %v3292 = vstv %s3291
    %v3293 = vmul.f32 %v3292, %v2061
    %v3294 = vadd.f32 %v3290, %v3293
    %s3295 = sld [smem:[#allocation2 + $0x10f]]
    %v3296 = vstv %s3295
    %v3297 = vmul.f32 %v3296, %v2061
    %3299 = vrot.lane.b32.xlu0 %v3297, 127
    %v3300 = vpop.permute.xlu0 %3299
    %v3302 = vadd.f32 %v3294, %v3300
    %s3303 = sld [smem:[#allocation2 + $0x110]]
    %v3304 = vstv %s3303
    %v3305 = vmul.f32 %v3304, %v2061
    %3307 = vrot.lane.b32.xlu0 %v3305, 126
    %v3308 = vpop.permute.xlu0 %3307
    %v3310 = vadd.f32 %v3302, %v3308
    %s3311 = sld [smem:[#allocation2 + $0x111]]
    %v3312 = vstv %s3311
    %v3313 = vmul.f32 %v3312, %v2061
    %3315 = vrot.lane.b32.xlu0 %v3313, 125
    %v3316 = vpop.permute.xlu0 %3315
    %v3318 = vadd.f32 %v3310, %v3316
    %s3319 = sld [smem:[#allocation2 + $0x112]]
    %v3320 = vstv %s3319
    %v3321 = vmul.f32 %v3320, %v2176
    %v3322 = vadd.f32 %v3318, %v3321
    %s3323 = sld [smem:[#allocation2 + $0x113]]
    %v3324 = vstv %s3323
    %v3325 = vmul.f32 %v3324, %v2176
    %3327 = vrot.lane.b32.xlu0 %v3325, 127
    %v3328 = vpop.permute.xlu0 %3327
    %v3330 = vadd.f32 %v3322, %v3328
    %s3331 = sld [smem:[#allocation2 + $0x114]]
    %v3332 = vstv %s3331
    %v3333 = vmul.f32 %v3332, %v2176
    %3335 = vrot.lane.b32.xlu0 %v3333, 126
    %v3336 = vpop.permute.xlu0 %3335
    %v3338 = vadd.f32 %v3330, %v3336
    %s3339 = sld [smem:[#allocation2 + $0x115]]
    %v3340 = vstv %s3339
    %v3341 = vmul.f32 %v3340, %v2176
    %3343 = vrot.lane.b32.xlu0 %v3341, 125
    %v3344 = vpop.permute.xlu0 %3343
    %v3346 = vadd.f32 %v3338, %v3344
    %s3347 = sld [smem:[#allocation2 + $0x158]]
    %v3348 = vstv %s3347
    %v3350 = vsel %vm2318, %v3346, 0
    %3352 = vmatpush.msra.mxu0 0.0
    %3353 = vmatpush.msra.mxu0 0.0
    %3354 = vmatpush.msra.mxu0 0.0
    %3355 = vmatpush.msra.mxu0 0.0
    %3356 = vmatpush.msra.mxu0 0.0
    %3357 = vmatpush.msra.mxu0 0.0
    %3358 = vmatpush.msra.mxu0 0.0
    %3359 = vmatpush.msra.mxu0 0.0
    %3360 = vmatpush.msra.mxu0 %v2324
    %3361 = vmatpush.msra.mxu0 %v360
    %3362 = vmatpush.msra.mxu0 %v358
    %3363 = vmatpush.msra.mxu0 %v356
    %3364 = vmatpush.msra.mxu0 %v354
    %3365 = vmatpush.msra.mxu0 %v352
    %3366 = vmatpush.msra.mxu0 %v350
    %3367 = vmatpush.msra.mxu0 %v348
    %3368 = vmatmul.f32.gmra.mxu0 %v3350
    %v3369 = vpop.f32.mrf.mxu0
    %v3370 = vadd.f32 %v3348, %v3369
    %3371 = vdwg.mxu0
    %v3372 = vmax.f32 %v3370, 0.0
    %s3373 = sld [smem:[#allocation2 + $0x162]]
    %v3374 = vstv %s3373
    %v3375 = vmul.f32 %v3372, %v3374
    %s3376 = sld [smem:[#allocation2 + $0x16c]]
    %v3377 = vstv %s3376
    %v3378 = vadd.f32 %v3375, %v3377
    %s3379 = sld [smem:[#allocation2 + $0x116]]
    %v3380 = vstv %s3379
    %v3381 = vmul.f32 %v3380, %v1716
    %s3382 = sld [smem:[#allocation2 + $0x117]]
    %v3383 = vstv %s3382
    %v3384 = vmul.f32 %v3383, %v1716
    %3386 = vrot.lane.b32.xlu0 %v3384, 127
    %v3387 = vpop.permute.xlu0 %3386
    %v3389 = vadd.f32 %v3381, %v3387
    %s3390 = sld [smem:[#allocation2 + $0x118]]
    %v3391 = vstv %s3390
    %v3392 = vmul.f32 %v3391, %v1716
    %3394 = vrot.lane.b32.xlu0 %v3392, 126
    %v3395 = vpop.permute.xlu0 %3394
    %v3397 = vadd.f32 %v3389, %v3395
    %s3398 = sld [smem:[#allocation2 + $0x119]]
    %v3399 = vstv %s3398
    %v3400 = vmul.f32 %v3399, %v1716
    %3402 = vrot.lane.b32.xlu0 %v3400, 125
    %v3403 = vpop.permute.xlu0 %3402
    %v3405 = vadd.f32 %v3397, %v3403
    %s3406 = sld [smem:[#allocation2 + $0x11a]]
    %v3407 = vstv %s3406
    %v3408 = vmul.f32 %v3407, %v1831
    %v3409 = vadd.f32 %v3405, %v3408
    %s3410 = sld [smem:[#allocation2 + $0x11b]]
    %v3411 = vstv %s3410
    %v3412 = vmul.f32 %v3411, %v1831
    %3414 = vrot.lane.b32.xlu0 %v3412, 127
    %v3415 = vpop.permute.xlu0 %3414
    %v3417 = vadd.f32 %v3409, %v3415
    %s3418 = sld [smem:[#allocation2 + $0x11c]]
    %v3419 = vstv %s3418
    %v3420 = vmul.f32 %v3419, %v1831
    %3422 = vrot.lane.b32.xlu0 %v3420, 126
    %v3423 = vpop.permute.xlu0 %3422
    %v3425 = vadd.f32 %v3417, %v3423
    %s3426 = sld [smem:[#allocation2 + $0x11d]]
    %v3427 = vstv %s3426
    %v3428 = vmul.f32 %v3427, %v1831
    %3430 = vrot.lane.b32.xlu0 %v3428, 125
    %v3431 = vpop.permute.xlu0 %3430
    %v3433 = vadd.f32 %v3425, %v3431
    %s3434 = sld [smem:[#allocation2 + $0x11e]]
    %v3435 = vstv %s3434
    %v3436 = vmul.f32 %v3435, %v1946
    %v3437 = vadd.f32 %v3433, %v3436
    %s3438 = sld [smem:[#allocation2 + $0x11f]]
    %v3439 = vstv %s3438
    %v3440 = vmul.f32 %v3439, %v1946
    %3442 = vrot.lane.b32.xlu0 %v3440, 127
    %v3443 = vpop.permute.xlu0 %3442
    %v3445 = vadd.f32 %v3437, %v3443
    %s3446 = sld [smem:[#allocation2 + $0x120]]
    %v3447 = vstv %s3446
    %v3448 = vmul.f32 %v3447, %v1946
    %3450 = vrot.lane.b32.xlu0 %v3448, 126
    %v3451 = vpop.permute.xlu0 %3450
    %v3453 = vadd.f32 %v3445, %v3451
    %s3454 = sld [smem:[#allocation2 + $0x121]]
    %v3455 = vstv %s3454
    %v3456 = vmul.f32 %v3455, %v1946
    %3458 = vrot.lane.b32.xlu0 %v3456, 125
    %v3459 = vpop.permute.xlu0 %3458
    %v3461 = vadd.f32 %v3453, %v3459
    %s3462 = sld [smem:[#allocation2 + $0x122]]
    %v3463 = vstv %s3462
    %v3464 = vmul.f32 %v3463, %v2061
    %v3465 = vadd.f32 %v3461, %v3464
    %s3466 = sld [smem:[#allocation2 + $0x123]]
    %v3467 = vstv %s3466
    %v3468 = vmul.f32 %v3467, %v2061
    %3470 = vrot.lane.b32.xlu0 %v3468, 127
    %v3471 = vpop.permute.xlu0 %3470
    %v3473 = vadd.f32 %v3465, %v3471
    %s3474 = sld [smem:[#allocation2 + $0x124]]
    %v3475 = vstv %s3474
    %v3476 = vmul.f32 %v3475, %v2061
    %3478 = vrot.lane.b32.xlu0 %v3476, 126
    %v3479 = vpop.permute.xlu0 %3478
    %v3481 = vadd.f32 %v3473, %v3479
    %s3482 = sld [smem:[#allocation2 + $0x125]]
    %v3483 = vstv %s3482
    %v3484 = vmul.f32 %v3483, %v2061
    %3486 = vrot.lane.b32.xlu0 %v3484, 125
    %v3487 = vpop.permute.xlu0 %3486
    %v3489 = vadd.f32 %v3481, %v3487
    %s3490 = sld [smem:[#allocation2 + $0x126]]
    %v3491 = vstv %s3490
    %v3492 = vmul.f32 %v3491, %v2176
    %v3493 = vadd.f32 %v3489, %v3492
    %s3494 = sld [smem:[#allocation2 + $0x127]]
    %v3495 = vstv %s3494
    %v3496 = vmul.f32 %v3495, %v2176
    %3498 = vrot.lane.b32.xlu0 %v3496, 127
    %v3499 = vpop.permute.xlu0 %3498
    %v3501 = vadd.f32 %v3493, %v3499
    %s3502 = sld [smem:[#allocation2 + $0x128]]
    %v3503 = vstv %s3502
    %v3504 = vmul.f32 %v3503, %v2176
    %3506 = vrot.lane.b32.xlu0 %v3504, 126
    %v3507 = vpop.permute.xlu0 %3506
    %v3509 = vadd.f32 %v3501, %v3507
    %s3510 = sld [smem:[#allocation2 + $0x129]]
    %v3511 = vstv %s3510
    %v3512 = vmul.f32 %v3511, %v2176
    %3514 = vrot.lane.b32.xlu0 %v3512, 125
    %v3515 = vpop.permute.xlu0 %3514
    %v3517 = vadd.f32 %v3509, %v3515
    %s3518 = sld [smem:[#allocation2 + $0x159]]
    %v3519 = vstv %s3518
    %v3521 = vsel %vm2318, %v3517, 0
    %3523 = vmatpush.msra.mxu0 0.0
    %3524 = vmatpush.msra.mxu0 0.0
    %3525 = vmatpush.msra.mxu0 0.0
    %3526 = vmatpush.msra.mxu0 0.0
    %3527 = vmatpush.msra.mxu0 0.0
    %3528 = vmatpush.msra.mxu0 0.0
    %3529 = vmatpush.msra.mxu0 0.0
    %3530 = vmatpush.msra.mxu0 0.0
    %3531 = vmatpush.msra.mxu0 %v2324
    %3532 = vmatpush.msra.mxu0 %v360
    %3533 = vmatpush.msra.mxu0 %v358
    %3534 = vmatpush.msra.mxu0 %v356
    %3535 = vmatpush.msra.mxu0 %v354
    %3536 = vmatpush.msra.mxu0 %v352
    %3537 = vmatpush.msra.mxu0 %v350
    %3538 = vmatpush.msra.mxu0 %v348
    %3539 = vmatmul.f32.gmra.mxu0 %v3521
    %v3540 = vpop.f32.mrf.mxu0
    %v3541 = vadd.f32 %v3519, %v3540
    %3542 = vdwg.mxu0
    %v3543 = vmax.f32 %v3541, 0.0
    %s3544 = sld [smem:[#allocation2 + $0x163]]
    %v3545 = vstv %s3544
    %v3546 = vmul.f32 %v3543, %v3545
    %s3547 = sld [smem:[#allocation2 + $0x16d]]
    %v3548 = vstv %s3547
    %v3549 = vadd.f32 %v3546, %v3548
    %s3550 = sld [smem:[#allocation2 + $0x12a]]
    %v3551 = vstv %s3550
    %v3552 = vmul.f32 %v3551, %v1716
    %s3553 = sld [smem:[#allocation2 + $0x12b]]
    %v3554 = vstv %s3553
    %v3555 = vmul.f32 %v3554, %v1716
    %3557 = vrot.lane.b32.xlu0 %v3555, 127
    %v3558 = vpop.permute.xlu0 %3557
    %v3560 = vadd.f32 %v3552, %v3558
    %s3561 = sld [smem:[#allocation2 + $0x12c]]
    %v3562 = vstv %s3561
    %v3563 = vmul.f32 %v3562, %v1716
    %3565 = vrot.lane.b32.xlu0 %v3563, 126
    %v3566 = vpop.permute.xlu0 %3565
    %v3568 = vadd.f32 %v3560, %v3566
    %s3569 = sld [smem:[#allocation2 + $0x12d]]
    %v3570 = vstv %s3569
    %v3571 = vmul.f32 %v3570, %v1716
    %3573 = vrot.lane.b32.xlu0 %v3571, 125
    %v3574 = vpop.permute.xlu0 %3573
    %v3576 = vadd.f32 %v3568, %v3574
    %s3577 = sld [smem:[#allocation2 + $0x12e]]
    %v3578 = vstv %s3577
    %v3579 = vmul.f32 %v3578, %v1831
    %v3580 = vadd.f32 %v3576, %v3579
    %s3581 = sld [smem:[#allocation2 + $0x12f]]
    %v3582 = vstv %s3581
    %v3583 = vmul.f32 %v3582, %v1831
    %3585 = vrot.lane.b32.xlu0 %v3583, 127
    %v3586 = vpop.permute.xlu0 %3585
    %v3588 = vadd.f32 %v3580, %v3586
    %s3589 = sld [smem:[#allocation2 + $0x130]]
    %v3590 = vstv %s3589
    %v3591 = vmul.f32 %v3590, %v1831
    %3593 = vrot.lane.b32.xlu0 %v3591, 126
    %v3594 = vpop.permute.xlu0 %3593
    %v3596 = vadd.f32 %v3588, %v3594
    %s3597 = sld [smem:[#allocation2 + $0x131]]
    %v3598 = vstv %s3597
    %v3599 = vmul.f32 %v3598, %v1831
    %3601 = vrot.lane.b32.xlu0 %v3599, 125
    %v3602 = vpop.permute.xlu0 %3601
    %v3604 = vadd.f32 %v3596, %v3602
    %s3605 = sld [smem:[#allocation2 + $0x132]]
    %v3606 = vstv %s3605
    %v3607 = vmul.f32 %v3606, %v1946
    %v3608 = vadd.f32 %v3604, %v3607
    %s3609 = sld [smem:[#allocation2 + $0x133]]
    %v3610 = vstv %s3609
    %v3611 = vmul.f32 %v3610, %v1946
    %3613 = vrot.lane.b32.xlu0 %v3611, 127
    %v3614 = vpop.permute.xlu0 %3613
    %v3616 = vadd.f32 %v3608, %v3614
    %s3617 = sld [smem:[#allocation2 + $0x134]]
    %v3618 = vstv %s3617
    %v3619 = vmul.f32 %v3618, %v1946
    %3621 = vrot.lane.b32.xlu0 %v3619, 126
    %v3622 = vpop.permute.xlu0 %3621
    %v3624 = vadd.f32 %v3616, %v3622
    %s3625 = sld [smem:[#allocation2 + $0x135]]
    %v3626 = vstv %s3625
    %v3627 = vmul.f32 %v3626, %v1946
    %3629 = vrot.lane.b32.xlu0 %v3627, 125
    %v3630 = vpop.permute.xlu0 %3629
    %v3632 = vadd.f32 %v3624, %v3630
    %s3633 = sld [smem:[#allocation2 + $0x136]]
    %v3634 = vstv %s3633
    %v3635 = vmul.f32 %v3634, %v2061
    %v3636 = vadd.f32 %v3632, %v3635
    %s3637 = sld [smem:[#allocation2 + $0x137]]
    %v3638 = vstv %s3637
    %v3639 = vmul.f32 %v3638, %v2061
    %3641 = vrot.lane.b32.xlu0 %v3639, 127
    %v3642 = vpop.permute.xlu0 %3641
    %v3644 = vadd.f32 %v3636, %v3642
    %s3645 = sld [smem:[#allocation2 + $0x138]]
    %v3646 = vstv %s3645
    %v3647 = vmul.f32 %v3646, %v2061
    %3649 = vrot.lane.b32.xlu0 %v3647, 126
    %v3650 = vpop.permute.xlu0 %3649
    %v3652 = vadd.f32 %v3644, %v3650
    %s3653 = sld [smem:[#allocation2 + $0x139]]
    %v3654 = vstv %s3653
    %v3655 = vmul.f32 %v3654, %v2061
    %3657 = vrot.lane.b32.xlu0 %v3655, 125
    %v3658 = vpop.permute.xlu0 %3657
    %v3660 = vadd.f32 %v3652, %v3658
    %s3661 = sld [smem:[#allocation2 + $0x13a]]
    %v3662 = vstv %s3661
    %v3663 = vmul.f32 %v3662, %v2176
    %v3664 = vadd.f32 %v3660, %v3663
    %s3665 = sld [smem:[#allocation2 + $0x13b]]
    %v3666 = vstv %s3665
    %v3667 = vmul.f32 %v3666, %v2176
    %3669 = vrot.lane.b32.xlu0 %v3667, 127
    %v3670 = vpop.permute.xlu0 %3669
    %v3672 = vadd.f32 %v3664, %v3670
    %s3673 = sld [smem:[#allocation2 + $0x13c]]
    %v3674 = vstv %s3673
    %v3675 = vmul.f32 %v3674, %v2176
    %3677 = vrot.lane.b32.xlu0 %v3675, 126
    %v3678 = vpop.permute.xlu0 %3677
    %v3680 = vadd.f32 %v3672, %v3678
    %s3681 = sld [smem:[#allocation2 + $0x13d]]
    %v3682 = vstv %s3681
    %v3683 = vmul.f32 %v3682, %v2176
    %3685 = vrot.lane.b32.xlu0 %v3683, 125
    %v3686 = vpop.permute.xlu0 %3685
    %v3688 = vadd.f32 %v3680, %v3686
    %s3689 = sld [smem:[#allocation2 + $0x15a]]
    %v3690 = vstv %s3689
    %v3692 = vsel %vm2318, %v3688, 0
    %3694 = vmatpush.msra.mxu0 0.0
    %3695 = vmatpush.msra.mxu0 0.0
    %3696 = vmatpush.msra.mxu0 0.0
    %3697 = vmatpush.msra.mxu0 0.0
    %3698 = vmatpush.msra.mxu0 0.0
    %3699 = vmatpush.msra.mxu0 0.0
    %3700 = vmatpush.msra.mxu0 0.0
    %3701 = vmatpush.msra.mxu0 0.0
    %3702 = vmatpush.msra.mxu0 %v2324
    %3703 = vmatpush.msra.mxu0 %v360
    %3704 = vmatpush.msra.mxu0 %v358
    %3705 = vmatpush.msra.mxu0 %v356
    %3706 = vmatpush.msra.mxu0 %v354
    %3707 = vmatpush.msra.mxu0 %v352
    %3708 = vmatpush.msra.mxu0 %v350
    %3709 = vmatpush.msra.mxu0 %v348
    %3710 = vmatmul.f32.gmra.mxu0 %v3692
    %v3711 = vpop.f32.mrf.mxu0
    %v3712 = vadd.f32 %v3690, %v3711
    %3713 = vdwg.mxu0
    %v3714 = vmax.f32 %v3712, 0.0
    %s3715 = sld [smem:[#allocation2 + $0x164]]
    %v3716 = vstv %s3715
    %v3717 = vmul.f32 %v3714, %v3716
    %s3718 = sld [smem:[#allocation2 + $0x16e]]
    %v3719 = vstv %s3718
    %v3720 = vadd.f32 %v3717, %v3719
    %s3721 = sld [smem:[#allocation2 + $0x13e]]
    %v3722 = vstv %s3721
    %v3723 = vmul.f32 %v3722, %v1716
    %s3724 = sld [smem:[#allocation2 + $0x13f]]
    %v3725 = vstv %s3724
    %v3726 = vmul.f32 %v3725, %v1716
    %3728 = vrot.lane.b32.xlu0 %v3726, 127
    %v3729 = vpop.permute.xlu0 %3728
    %v3731 = vadd.f32 %v3723, %v3729
    %s3732 = sld [smem:[#allocation2 + $0x140]]
    %v3733 = vstv %s3732
    %v3734 = vmul.f32 %v3733, %v1716
    %3736 = vrot.lane.b32.xlu0 %v3734, 126
    %v3737 = vpop.permute.xlu0 %3736
    %v3739 = vadd.f32 %v3731, %v3737
    %s3740 = sld [smem:[#allocation2 + $0x141]]
    %v3741 = vstv %s3740
    %v3742 = vmul.f32 %v3741, %v1716
    %3744 = vrot.lane.b32.xlu0 %v3742, 125
    %v3745 = vpop.permute.xlu0 %3744
    %v3747 = vadd.f32 %v3739, %v3745
    %s3748 = sld [smem:[#allocation2 + $0x142]]
    %v3749 = vstv %s3748
    %v3750 = vmul.f32 %v3749, %v1831
    %v3751 = vadd.f32 %v3747, %v3750
    %s3752 = sld [smem:[#allocation2 + $0x143]]
    %v3753 = vstv %s3752
    %v3754 = vmul.f32 %v3753, %v1831
    %3756 = vrot.lane.b32.xlu0 %v3754, 127
    %v3757 = vpop.permute.xlu0 %3756
    %v3759 = vadd.f32 %v3751, %v3757
    %s3760 = sld [smem:[#allocation2 + $0x144]]
    %v3761 = vstv %s3760
    %v3762 = vmul.f32 %v3761, %v1831
    %3764 = vrot.lane.b32.xlu0 %v3762, 126
    %v3765 = vpop.permute.xlu0 %3764
    %v3767 = vadd.f32 %v3759, %v3765
    %s3768 = sld [smem:[#allocation2 + $0x145]]
    %v3769 = vstv %s3768
    %v3770 = vmul.f32 %v3769, %v1831
    %3772 = vrot.lane.b32.xlu0 %v3770, 125
    %v3773 = vpop.permute.xlu0 %3772
    %v3775 = vadd.f32 %v3767, %v3773
    %s3776 = sld [smem:[#allocation2 + $0x146]]
    %v3777 = vstv %s3776
    %v3778 = vmul.f32 %v3777, %v1946
    %v3779 = vadd.f32 %v3775, %v3778
    %s3780 = sld [smem:[#allocation2 + $0x147]]
    %v3781 = vstv %s3780
    %v3782 = vmul.f32 %v3781, %v1946
    %3784 = vrot.lane.b32.xlu0 %v3782, 127
    %v3785 = vpop.permute.xlu0 %3784
    %v3787 = vadd.f32 %v3779, %v3785
    %s3788 = sld [smem:[#allocation2 + $0x148]]
    %v3789 = vstv %s3788
    %v3790 = vmul.f32 %v3789, %v1946
    %3792 = vrot.lane.b32.xlu0 %v3790, 126
    %v3793 = vpop.permute.xlu0 %3792
    %v3795 = vadd.f32 %v3787, %v3793
    %s3796 = sld [smem:[#allocation2 + $0x149]]
    %v3797 = vstv %s3796
    %v3798 = vmul.f32 %v3797, %v1946
    %3800 = vrot.lane.b32.xlu0 %v3798, 125
    %v3801 = vpop.permute.xlu0 %3800
    %v3803 = vadd.f32 %v3795, %v3801
    %s3804 = sld [smem:[#allocation2 + $0x14a]]
    %v3805 = vstv %s3804
    %v3806 = vmul.f32 %v3805, %v2061
    %v3807 = vadd.f32 %v3803, %v3806
    %s3808 = sld [smem:[#allocation2 + $0x14b]]
    %v3809 = vstv %s3808
    %v3810 = vmul.f32 %v3809, %v2061
    %3812 = vrot.lane.b32.xlu0 %v3810, 127
    %v3813 = vpop.permute.xlu0 %3812
    %v3815 = vadd.f32 %v3807, %v3813
    %s3816 = sld [smem:[#allocation2 + $0x14c]]
    %v3817 = vstv %s3816
    %v3818 = vmul.f32 %v3817, %v2061
    %3820 = vrot.lane.b32.xlu0 %v3818, 126
    %v3821 = vpop.permute.xlu0 %3820
    %v3823 = vadd.f32 %v3815, %v3821
    %s3824 = sld [smem:[#allocation2 + $0x14d]]
    %v3825 = vstv %s3824
    %v3826 = vmul.f32 %v3825, %v2061
    %3828 = vrot.lane.b32.xlu0 %v3826, 125
    %v3829 = vpop.permute.xlu0 %3828
    %v3831 = vadd.f32 %v3823, %v3829
    %s3832 = sld [smem:[#allocation2 + $0x14e]]
    %v3833 = vstv %s3832
    %v3834 = vmul.f32 %v3833, %v2176
    %v3835 = vadd.f32 %v3831, %v3834
    %s3836 = sld [smem:[#allocation2 + $0x14f]]
    %v3837 = vstv %s3836
    %v3838 = vmul.f32 %v3837, %v2176
    %3840 = vrot.lane.b32.xlu0 %v3838, 127
    %v3841 = vpop.permute.xlu0 %3840
    %v3843 = vadd.f32 %v3835, %v3841
    %s3844 = sld [smem:[#allocation2 + $0x150]]
    %v3845 = vstv %s3844
    %v3846 = vmul.f32 %v3845, %v2176
    %3848 = vrot.lane.b32.xlu0 %v3846, 126
    %v3849 = vpop.permute.xlu0 %3848
    %v3851 = vadd.f32 %v3843, %v3849
    %s3852 = sld [smem:[#allocation2 + $0x151]]
    %v3853 = vstv %s3852
    %v3854 = vmul.f32 %v3853, %v2176
    %3856 = vrot.lane.b32.xlu0 %v3854, 125
    %v3857 = vpop.permute.xlu0 %3856
    %v3859 = vadd.f32 %v3851, %v3857
    %s3860 = sld [smem:[#allocation2 + $0x15b]]
    %v3861 = vstv %s3860
    %v3863 = vsel %vm2318, %v3859, 0
    %3865 = vmatpush.msra.mxu0 0.0
    %3866 = vmatpush.msra.mxu0 0.0
    %3867 = vmatpush.msra.mxu0 0.0
    %3868 = vmatpush.msra.mxu0 0.0
    %3869 = vmatpush.msra.mxu0 0.0
    %3870 = vmatpush.msra.mxu0 0.0
    %3871 = vmatpush.msra.mxu0 0.0
    %3872 = vmatpush.msra.mxu0 0.0
    %3873 = vmatpush.msra.mxu0 %v2324
    %3874 = vmatpush.msra.mxu0 %v360
    %3875 = vmatpush.msra.mxu0 %v358
    %3876 = vmatpush.msra.mxu0 %v356
    %3877 = vmatpush.msra.mxu0 %v354
    %3878 = vmatpush.msra.mxu0 %v352
    %3879 = vmatpush.msra.mxu0 %v350
    %3880 = vmatpush.msra.mxu0 %v348
    %3881 = vmatmul.f32.gmra.mxu0 %v3863
    %v3882 = vpop.f32.mrf.mxu0
    %v3883 = vadd.f32 %v3861, %v3882
    %3884 = vdwg.mxu0
    %v3885 = vmax.f32 %v3883, 0.0
    %s3886 = sld [smem:[#allocation2 + $0x165]]
    %v3887 = vstv %s3886
    %v3888 = vmul.f32 %v3885, %v3887
    %s3889 = sld [smem:[#allocation2 + $0x16f]]
    %v3890 = vstv %s3889
    %v3891 = vadd.f32 %v3888, %v3890
    %s3892 = sld [smem:[#allocation2 + $0x170]]
    %v3893 = vstv %s3892
    %v3894 = vmul.f32 %v3893, %v2352
    %s3895 = sld [smem:[#allocation2 + $0x171]]
    %v3896 = vstv %s3895
    %v3897 = vmul.f32 %v3896, %v2352
    %3899 = vrot.lane.b32.xlu0 %v3897, 127
    %v3900 = vpop.permute.xlu0 %3899
    %v3902 = vadd.f32 %v3894, %v3900
    %s3903 = sld [smem:[#allocation2 + $0x172]]
    %v3904 = vstv %s3903
    %v3905 = vmul.f32 %v3904, %v2352
    %3907 = vrot.lane.b32.xlu0 %v3905, 126
    %v3908 = vpop.permute.xlu0 %3907
    %v3910 = vadd.f32 %v3902, %v3908
    %s3911 = sld [smem:[#allocation2 + $0x173]]
    %v3912 = vstv %s3911
    %v3913 = vmul.f32 %v3912, %v2523
    %v3914 = vadd.f32 %v3910, %v3913
    %s3915 = sld [smem:[#allocation2 + $0x174]]
    %v3916 = vstv %s3915
    %v3917 = vmul.f32 %v3916, %v2523
    %3919 = vrot.lane.b32.xlu0 %v3917, 127
    %v3920 = vpop.permute.xlu0 %3919
    %v3922 = vadd.f32 %v3914, %v3920
    %s3923 = sld [smem:[#allocation2 + $0x175]]
    %v3924 = vstv %s3923
    %v3925 = vmul.f32 %v3924, %v2523
    %3927 = vrot.lane.b32.xlu0 %v3925, 126
    %v3928 = vpop.permute.xlu0 %3927
    %v3930 = vadd.f32 %v3922, %v3928
    %s3931 = sld [smem:[#allocation2 + $0x176]]
    %v3932 = vstv %s3931
    %v3933 = vmul.f32 %v3932, %v2694
    %v3934 = vadd.f32 %v3930, %v3933
    %s3935 = sld [smem:[#allocation2 + $0x177]]
    %v3936 = vstv %s3935
    %v3937 = vmul.f32 %v3936, %v2694
    %3939 = vrot.lane.b32.xlu0 %v3937, 127
    %v3940 = vpop.permute.xlu0 %3939
    %v3942 = vadd.f32 %v3934, %v3940
    %s3943 = sld [smem:[#allocation2 + $0x178]]
    %v3944 = vstv %s3943
    %v3945 = vmul.f32 %v3944, %v2694
    %3947 = vrot.lane.b32.xlu0 %v3945, 126
    %v3948 = vpop.permute.xlu0 %3947
    %v3950 = vadd.f32 %v3942, %v3948
    %s3951 = sld [smem:[#allocation2 + $0x179]]
    %v3952 = vstv %s3951
    %v3953 = vmul.f32 %v3952, %v2865
    %v3954 = vadd.f32 %v3950, %v3953
    %s3955 = sld [smem:[#allocation2 + $0x17a]]
    %v3956 = vstv %s3955
    %v3957 = vmul.f32 %v3956, %v2865
    %3959 = vrot.lane.b32.xlu0 %v3957, 127
    %v3960 = vpop.permute.xlu0 %3959
    %v3962 = vadd.f32 %v3954, %v3960
    %s3963 = sld [smem:[#allocation2 + $0x17b]]
    %v3964 = vstv %s3963
    %v3965 = vmul.f32 %v3964, %v2865
    %3967 = vrot.lane.b32.xlu0 %v3965, 126
    %v3968 = vpop.permute.xlu0 %3967
    %v3970 = vadd.f32 %v3962, %v3968
    %s3971 = sld [smem:[#allocation2 + $0x17c]]
    %v3972 = vstv %s3971
    %v3973 = vmul.f32 %v3972, %v3036
    %v3974 = vadd.f32 %v3970, %v3973
    %s3975 = sld [smem:[#allocation2 + $0x17d]]
    %v3976 = vstv %s3975
    %v3977 = vmul.f32 %v3976, %v3036
    %3979 = vrot.lane.b32.xlu0 %v3977, 127
    %v3980 = vpop.permute.xlu0 %3979
    %v3982 = vadd.f32 %v3974, %v3980
    %s3983 = sld [smem:[#allocation2 + $0x17e]]
    %v3984 = vstv %s3983
    %v3985 = vmul.f32 %v3984, %v3036
    %3987 = vrot.lane.b32.xlu0 %v3985, 126
    %v3988 = vpop.permute.xlu0 %3987
    %v3990 = vadd.f32 %v3982, %v3988
    %s3991 = sld [smem:[#allocation2 + $0x17f]]
    %v3992 = vstv %s3991
    %v3993 = vmul.f32 %v3992, %v3207
    %v3994 = vadd.f32 %v3990, %v3993
    %s3995 = sld [smem:[#allocation2 + $0x180]]
    %v3996 = vstv %s3995
    %v3997 = vmul.f32 %v3996, %v3207
    %3999 = vrot.lane.b32.xlu0 %v3997, 127
    %v4000 = vpop.permute.xlu0 %3999
    %v4002 = vadd.f32 %v3994, %v4000
    %s4003 = sld [smem:[#allocation2 + $0x181]]
    %v4004 = vstv %s4003
    %v4005 = vmul.f32 %v4004, %v3207
    %4007 = vrot.lane.b32.xlu0 %v4005, 126
    %v4008 = vpop.permute.xlu0 %4007
    %v4010 = vadd.f32 %v4002, %v4008
    %s4011 = sld [smem:[#allocation2 + $0x182]]
    %v4012 = vstv %s4011
    %v4013 = vmul.f32 %v4012, %v3378
    %v4014 = vadd.f32 %v4010, %v4013
    %s4015 = sld [smem:[#allocation2 + $0x183]]
    %v4016 = vstv %s4015
    %v4017 = vmul.f32 %v4016, %v3378
    %4019 = vrot.lane.b32.xlu0 %v4017, 127
    %v4020 = vpop.permute.xlu0 %4019
    %v4022 = vadd.f32 %v4014, %v4020
    %s4023 = sld [smem:[#allocation2 + $0x184]]
    %v4024 = vstv %s4023
    %v4025 = vmul.f32 %v4024, %v3378
    %4027 = vrot.lane.b32.xlu0 %v4025, 126
    %v4028 = vpop.permute.xlu0 %4027
    %v4030 = vadd.f32 %v4022, %v4028
    %s4031 = sld [smem:[#allocation2 + $0x185]]
    %v4032 = vstv %s4031
    %v4033 = vmul.f32 %v4032, %v3549
    %v4034 = vadd.f32 %v4030, %v4033
    %s4035 = sld [smem:[#allocation2 + $0x186]]
    %v4036 = vstv %s4035
    %v4037 = vmul.f32 %v4036, %v3549
    %4039 = vrot.lane.b32.xlu0 %v4037, 127
    %v4040 = vpop.permute.xlu0 %4039
    %v4042 = vadd.f32 %v4034, %v4040
    %s4043 = sld [smem:[#allocation2 + $0x187]]
    %v4044 = vstv %s4043
    %v4045 = vmul.f32 %v4044, %v3549
    %4047 = vrot.lane.b32.xlu0 %v4045, 126
    %v4048 = vpop.permute.xlu0 %4047
    %v4050 = vadd.f32 %v4042, %v4048
    %s4051 = sld [smem:[#allocation2 + $0x188]]
    %v4052 = vstv %s4051
    %v4053 = vmul.f32 %v4052, %v3720
    %v4054 = vadd.f32 %v4050, %v4053
    %s4055 = sld [smem:[#allocation2 + $0x189]]
    %v4056 = vstv %s4055
    %v4057 = vmul.f32 %v4056, %v3720
    %4059 = vrot.lane.b32.xlu0 %v4057, 127
    %v4060 = vpop.permute.xlu0 %4059
    %v4062 = vadd.f32 %v4054, %v4060
    %s4063 = sld [smem:[#allocation2 + $0x18a]]
    %v4064 = vstv %s4063
    %v4065 = vmul.f32 %v4064, %v3720
    %4067 = vrot.lane.b32.xlu0 %v4065, 126
    %v4068 = vpop.permute.xlu0 %4067
    %v4070 = vadd.f32 %v4062, %v4068
    %s4071 = sld [smem:[#allocation2 + $0x18b]]
    %v4072 = vstv %s4071
    %v4073 = vmul.f32 %v4072, %v3891
    %v4074 = vadd.f32 %v4070, %v4073
    %s4075 = sld [smem:[#allocation2 + $0x18c]]
    %v4076 = vstv %s4075
    %v4077 = vmul.f32 %v4076, %v3891
    %4079 = vrot.lane.b32.xlu0 %v4077, 127
    %v4080 = vpop.permute.xlu0 %4079
    %v4082 = vadd.f32 %v4074, %v4080
    %s4083 = sld [smem:[#allocation2 + $0x18d]]
    %v4084 = vstv %s4083
    %v4085 = vmul.f32 %v4084, %v3891
    %4087 = vrot.lane.b32.xlu0 %v4085, 126
    %v4088 = vpop.permute.xlu0 %4087
    %v4090 = vadd.f32 %v4082, %v4088
    %s4091 = sld [smem:[#allocation2 + $0x29c]]
    %v4092 = vstv %s4091
    %vm4093 = vcmask 220160
    %v4095 = vsel %vm4093, %v4090, 0
    %v4098 = vsel %vm1123, %v354, 0
    %4100 = vmatpush.msra.mxu0 0.0
    %4101 = vmatpush.msra.mxu0 0.0
    %4102 = vmatpush.msra.mxu0 0.0
    %4103 = vmatpush.msra.mxu0 0.0
    %4104 = vmatpush.msra.mxu0 0.0
    %4105 = vmatpush.msra.mxu0 0.0
    %4106 = vmatpush.msra.mxu0 0.0
    %4107 = vmatpush.msra.mxu0 0.0
    %4108 = vmatpush.msra.mxu0 0.0
    %4109 = vmatpush.msra.mxu0 0.0
    %4110 = vmatpush.msra.mxu0 0.0
    %4111 = vmatpush.msra.mxu0 0.0
    %4112 = vmatpush.msra.mxu0 %v4098
    %4113 = vmatpush.msra.mxu0 %v352
    %4114 = vmatpush.msra.mxu0 %v350
    %4115 = vmatpush.msra.mxu0 %v348
    %4116 = vmatmul.f32.gmra.mxu0 %v4095
    %v4117 = vpop.f32.mrf.mxu0
    %v4118 = vadd.f32 %v4092, %v4117
    %4119 = vdwg.mxu0
    %v4120 = vmax.f32 %v4118, 0.0
    %s4121 = sld [smem:[#allocation2 + $0x2a6]]
    %v4122 = vstv %s4121
    %v4123 = vmul.f32 %v4120, %v4122
    %s4124 = sld [smem:[#allocation2 + $0x2b0]]
    %v4125 = vstv %s4124
    %v4126 = vadd.f32 %v4123, %v4125
    %s4127 = sld [smem:[#allocation2 + $0x18e]]
    %v4128 = vstv %s4127
    %v4129 = vmul.f32 %v4128, %v2352
    %s4130 = sld [smem:[#allocation2 + $0x18f]]
    %v4131 = vstv %s4130
    %v4132 = vmul.f32 %v4131, %v2352
    %4134 = vrot.lane.b32.xlu0 %v4132, 127
    %v4135 = vpop.permute.xlu0 %4134
    %v4137 = vadd.f32 %v4129, %v4135
    %s4138 = sld [smem:[#allocation2 + $0x190]]
    %v4139 = vstv %s4138
    %v4140 = vmul.f32 %v4139, %v2352
    %4142 = vrot.lane.b32.xlu0 %v4140, 126
    %v4143 = vpop.permute.xlu0 %4142
    %v4145 = vadd.f32 %v4137, %v4143
    %s4146 = sld [smem:[#allocation2 + $0x191]]
    %v4147 = vstv %s4146
    %v4148 = vmul.f32 %v4147, %v2523
    %v4149 = vadd.f32 %v4145, %v4148
    %s4150 = sld [smem:[#allocation2 + $0x192]]
    %v4151 = vstv %s4150
    %v4152 = vmul.f32 %v4151, %v2523
    %4154 = vrot.lane.b32.xlu0 %v4152, 127
    %v4155 = vpop.permute.xlu0 %4154
    %v4157 = vadd.f32 %v4149, %v4155
    %s4158 = sld [smem:[#allocation2 + $0x193]]
    %v4159 = vstv %s4158
    %v4160 = vmul.f32 %v4159, %v2523
    %4162 = vrot.lane.b32.xlu0 %v4160, 126
    %v4163 = vpop.permute.xlu0 %4162
    %v4165 = vadd.f32 %v4157, %v4163
    %s4166 = sld [smem:[#allocation2 + $0x194]]
    %v4167 = vstv %s4166
    %v4168 = vmul.f32 %v4167, %v2694
    %v4169 = vadd.f32 %v4165, %v4168
    %s4170 = sld [smem:[#allocation2 + $0x195]]
    %v4171 = vstv %s4170
    %v4172 = vmul.f32 %v4171, %v2694
    %4174 = vrot.lane.b32.xlu0 %v4172, 127
    %v4175 = vpop.permute.xlu0 %4174
    %v4177 = vadd.f32 %v4169, %v4175
    %s4178 = sld [smem:[#allocation2 + $0x196]]
    %v4179 = vstv %s4178
    %v4180 = vmul.f32 %v4179, %v2694
    %4182 = vrot.lane.b32.xlu0 %v4180, 126
    %v4183 = vpop.permute.xlu0 %4182
    %v4185 = vadd.f32 %v4177, %v4183
    %s4186 = sld [smem:[#allocation2 + $0x197]]
    %v4187 = vstv %s4186
    %v4188 = vmul.f32 %v4187, %v2865
    %v4189 = vadd.f32 %v4185, %v4188
    %s4190 = sld [smem:[#allocation2 + $0x198]]
    %v4191 = vstv %s4190
    %v4192 = vmul.f32 %v4191, %v2865
    %4194 = vrot.lane.b32.xlu0 %v4192, 127
    %v4195 = vpop.permute.xlu0 %4194
    %v4197 = vadd.f32 %v4189, %v4195
    %s4198 = sld [smem:[#allocation2 + $0x199]]
    %v4199 = vstv %s4198
    %v4200 = vmul.f32 %v4199, %v2865
    %4202 = vrot.lane.b32.xlu0 %v4200, 126
    %v4203 = vpop.permute.xlu0 %4202
    %v4205 = vadd.f32 %v4197, %v4203
    %s4206 = sld [smem:[#allocation2 + $0x19a]]
    %v4207 = vstv %s4206
    %v4208 = vmul.f32 %v4207, %v3036
    %v4209 = vadd.f32 %v4205, %v4208
    %s4210 = sld [smem:[#allocation2 + $0x19b]]
    %v4211 = vstv %s4210
    %v4212 = vmul.f32 %v4211, %v3036
    %4214 = vrot.lane.b32.xlu0 %v4212, 127
    %v4215 = vpop.permute.xlu0 %4214
    %v4217 = vadd.f32 %v4209, %v4215
    %s4218 = sld [smem:[#allocation2 + $0x19c]]
    %v4219 = vstv %s4218
    %v4220 = vmul.f32 %v4219, %v3036
    %4222 = vrot.lane.b32.xlu0 %v4220, 126
    %v4223 = vpop.permute.xlu0 %4222
    %v4225 = vadd.f32 %v4217, %v4223
    %s4226 = sld [smem:[#allocation2 + $0x19d]]
    %v4227 = vstv %s4226
    %v4228 = vmul.f32 %v4227, %v3207
    %v4229 = vadd.f32 %v4225, %v4228
    %s4230 = sld [smem:[#allocation2 + $0x19e]]
    %v4231 = vstv %s4230
    %v4232 = vmul.f32 %v4231, %v3207
    %4234 = vrot.lane.b32.xlu0 %v4232, 127
    %v4235 = vpop.permute.xlu0 %4234
    %v4237 = vadd.f32 %v4229, %v4235
    %s4238 = sld [smem:[#allocation2 + $0x19f]]
    %v4239 = vstv %s4238
    %v4240 = vmul.f32 %v4239, %v3207
    %4242 = vrot.lane.b32.xlu0 %v4240, 126
    %v4243 = vpop.permute.xlu0 %4242
    %v4245 = vadd.f32 %v4237, %v4243
    %s4246 = sld [smem:[#allocation2 + $0x1a0]]
    %v4247 = vstv %s4246
    %v4248 = vmul.f32 %v4247, %v3378
    %v4249 = vadd.f32 %v4245, %v4248
    %s4250 = sld [smem:[#allocation2 + $0x1a1]]
    %v4251 = vstv %s4250
    %v4252 = vmul.f32 %v4251, %v3378
    %4254 = vrot.lane.b32.xlu0 %v4252, 127
    %v4255 = vpop.permute.xlu0 %4254
    %v4257 = vadd.f32 %v4249, %v4255
    %s4258 = sld [smem:[#allocation2 + $0x1a2]]
    %v4259 = vstv %s4258
    %v4260 = vmul.f32 %v4259, %v3378
    %4262 = vrot.lane.b32.xlu0 %v4260, 126
    %v4263 = vpop.permute.xlu0 %4262
    %v4265 = vadd.f32 %v4257, %v4263
    %s4266 = sld [smem:[#allocation2 + $0x1a3]]
    %v4267 = vstv %s4266
    %v4268 = vmul.f32 %v4267, %v3549
    %v4269 = vadd.f32 %v4265, %v4268
    %s4270 = sld [smem:[#allocation2 + $0x1a4]]
    %v4271 = vstv %s4270
    %v4272 = vmul.f32 %v4271, %v3549
    %4274 = vrot.lane.b32.xlu0 %v4272, 127
    %v4275 = vpop.permute.xlu0 %4274
    %v4277 = vadd.f32 %v4269, %v4275
    %s4278 = sld [smem:[#allocation2 + $0x1a5]]
    %v4279 = vstv %s4278
    %v4280 = vmul.f32 %v4279, %v3549
    %4282 = vrot.lane.b32.xlu0 %v4280, 126
    %v4283 = vpop.permute.xlu0 %4282
    %v4285 = vadd.f32 %v4277, %v4283
    %s4286 = sld [smem:[#allocation2 + $0x1a6]]
    %v4287 = vstv %s4286
    %v4288 = vmul.f32 %v4287, %v3720
    %v4289 = vadd.f32 %v4285, %v4288
    %s4290 = sld [smem:[#allocation2 + $0x1a7]]
    %v4291 = vstv %s4290
    %v4292 = vmul.f32 %v4291, %v3720
    %4294 = vrot.lane.b32.xlu0 %v4292, 127
    %v4295 = vpop.permute.xlu0 %4294
    %v4297 = vadd.f32 %v4289, %v4295
    %s4298 = sld [smem:[#allocation2 + $0x1a8]]
    %v4299 = vstv %s4298
    %v4300 = vmul.f32 %v4299, %v3720
    %4302 = vrot.lane.b32.xlu0 %v4300, 126
    %v4303 = vpop.permute.xlu0 %4302
    %v4305 = vadd.f32 %v4297, %v4303
    %s4306 = sld [smem:[#allocation2 + $0x1a9]]
    %v4307 = vstv %s4306
    %v4308 = vmul.f32 %v4307, %v3891
    %v4309 = vadd.f32 %v4305, %v4308
    %s4310 = sld [smem:[#allocation2 + $0x1aa]]
    %v4311 = vstv %s4310
    %v4312 = vmul.f32 %v4311, %v3891
    %4314 = vrot.lane.b32.xlu0 %v4312, 127
    %v4315 = vpop.permute.xlu0 %4314
    %v4317 = vadd.f32 %v4309, %v4315
    %s4318 = sld [smem:[#allocation2 + $0x1ab]]
    %v4319 = vstv %s4318
    %v4320 = vmul.f32 %v4319, %v3891
    %4322 = vrot.lane.b32.xlu0 %v4320, 126
    %v4323 = vpop.permute.xlu0 %4322
    %v4325 = vadd.f32 %v4317, %v4323
    %s4326 = sld [smem:[#allocation2 + $0x29d]]
    %v4327 = vstv %s4326
    %v4329 = vsel %vm4093, %v4325, 0
    %4331 = vmatpush.msra.mxu0 0.0
    %4332 = vmatpush.msra.mxu0 0.0
    %4333 = vmatpush.msra.mxu0 0.0
    %4334 = vmatpush.msra.mxu0 0.0
    %4335 = vmatpush.msra.mxu0 0.0
    %4336 = vmatpush.msra.mxu0 0.0
    %4337 = vmatpush.msra.mxu0 0.0
    %4338 = vmatpush.msra.mxu0 0.0
    %4339 = vmatpush.msra.mxu0 0.0
    %4340 = vmatpush.msra.mxu0 0.0
    %4341 = vmatpush.msra.mxu0 0.0
    %4342 = vmatpush.msra.mxu0 0.0
    %4343 = vmatpush.msra.mxu0 %v4098
    %4344 = vmatpush.msra.mxu0 %v352
    %4345 = vmatpush.msra.mxu0 %v350
    %4346 = vmatpush.msra.mxu0 %v348
    %4347 = vmatmul.f32.gmra.mxu0 %v4329
    %v4348 = vpop.f32.mrf.mxu0
    %v4349 = vadd.f32 %v4327, %v4348
    %4350 = vdwg.mxu0
    %v4351 = vmax.f32 %v4349, 0.0
    %s4352 = sld [smem:[#allocation2 + $0x2a7]]
    %v4353 = vstv %s4352
    %v4354 = vmul.f32 %v4351, %v4353
    %s4355 = sld [smem:[#allocation2 + $0x2b1]]
    %v4356 = vstv %s4355
    %v4357 = vadd.f32 %v4354, %v4356
    %s4358 = sld [smem:[#allocation2 + $0x1ac]]
    %v4359 = vstv %s4358
    %v4360 = vmul.f32 %v4359, %v2352
    %s4361 = sld [smem:[#allocation2 + $0x1ad]]
    %v4362 = vstv %s4361
    %v4363 = vmul.f32 %v4362, %v2352
    %4365 = vrot.lane.b32.xlu0 %v4363, 127
    %v4366 = vpop.permute.xlu0 %4365
    %v4368 = vadd.f32 %v4360, %v4366
    %s4369 = sld [smem:[#allocation2 + $0x1ae]]
    %v4370 = vstv %s4369
    %v4371 = vmul.f32 %v4370, %v2352
    %4373 = vrot.lane.b32.xlu0 %v4371, 126
    %v4374 = vpop.permute.xlu0 %4373
    %v4376 = vadd.f32 %v4368, %v4374
    %s4377 = sld [smem:[#allocation2 + $0x1af]]
    %v4378 = vstv %s4377
    %v4379 = vmul.f32 %v4378, %v2523
    %v4380 = vadd.f32 %v4376, %v4379
    %s4381 = sld [smem:[#allocation2 + $0x1b0]]
    %v4382 = vstv %s4381
    %v4383 = vmul.f32 %v4382, %v2523
    %4385 = vrot.lane.b32.xlu0 %v4383, 127
    %v4386 = vpop.permute.xlu0 %4385
    %v4388 = vadd.f32 %v4380, %v4386
    %s4389 = sld [smem:[#allocation2 + $0x1b1]]
    %v4390 = vstv %s4389
    %v4391 = vmul.f32 %v4390, %v2523
    %4393 = vrot.lane.b32.xlu0 %v4391, 126
    %v4394 = vpop.permute.xlu0 %4393
    %v4396 = vadd.f32 %v4388, %v4394
    %s4397 = sld [smem:[#allocation2 + $0x1b2]]
    %v4398 = vstv %s4397
    %v4399 = vmul.f32 %v4398, %v2694
    %v4400 = vadd.f32 %v4396, %v4399
    %s4401 = sld [smem:[#allocation2 + $0x1b3]]
    %v4402 = vstv %s4401
    %v4403 = vmul.f32 %v4402, %v2694
    %4405 = vrot.lane.b32.xlu0 %v4403, 127
    %v4406 = vpop.permute.xlu0 %4405
    %v4408 = vadd.f32 %v4400, %v4406
    %s4409 = sld [smem:[#allocation2 + $0x1b4]]
    %v4410 = vstv %s4409
    %v4411 = vmul.f32 %v4410, %v2694
    %4413 = vrot.lane.b32.xlu0 %v4411, 126
    %v4414 = vpop.permute.xlu0 %4413
    %v4416 = vadd.f32 %v4408, %v4414
    %s4417 = sld [smem:[#allocation2 + $0x1b5]]
    %v4418 = vstv %s4417
    %v4419 = vmul.f32 %v4418, %v2865
    %v4420 = vadd.f32 %v4416, %v4419
    %s4421 = sld [smem:[#allocation2 + $0x1b6]]
    %v4422 = vstv %s4421
    %v4423 = vmul.f32 %v4422, %v2865
    %4425 = vrot.lane.b32.xlu0 %v4423, 127
    %v4426 = vpop.permute.xlu0 %4425
    %v4428 = vadd.f32 %v4420, %v4426
    %s4429 = sld [smem:[#allocation2 + $0x1b7]]
    %v4430 = vstv %s4429
    %v4431 = vmul.f32 %v4430, %v2865
    %4433 = vrot.lane.b32.xlu0 %v4431, 126
    %v4434 = vpop.permute.xlu0 %4433
    %v4436 = vadd.f32 %v4428, %v4434
    %s4437 = sld [smem:[#allocation2 + $0x1b8]]
    %v4438 = vstv %s4437
    %v4439 = vmul.f32 %v4438, %v3036
    %v4440 = vadd.f32 %v4436, %v4439
    %s4441 = sld [smem:[#allocation2 + $0x1b9]]
    %v4442 = vstv %s4441
    %v4443 = vmul.f32 %v4442, %v3036
    %4445 = vrot.lane.b32.xlu0 %v4443, 127
    %v4446 = vpop.permute.xlu0 %4445
    %v4448 = vadd.f32 %v4440, %v4446
    %s4449 = sld [smem:[#allocation2 + $0x1ba]]
    %v4450 = vstv %s4449
    %v4451 = vmul.f32 %v4450, %v3036
    %4453 = vrot.lane.b32.xlu0 %v4451, 126
    %v4454 = vpop.permute.xlu0 %4453
    %v4456 = vadd.f32 %v4448, %v4454
    %s4457 = sld [smem:[#allocation2 + $0x1bb]]
    %v4458 = vstv %s4457
    %v4459 = vmul.f32 %v4458, %v3207
    %v4460 = vadd.f32 %v4456, %v4459
    %s4461 = sld [smem:[#allocation2 + $0x1bc]]
    %v4462 = vstv %s4461
    %v4463 = vmul.f32 %v4462, %v3207
    %4465 = vrot.lane.b32.xlu0 %v4463, 127
    %v4466 = vpop.permute.xlu0 %4465
    %v4468 = vadd.f32 %v4460, %v4466
    %s4469 = sld [smem:[#allocation2 + $0x1bd]]
    %v4470 = vstv %s4469
    %v4471 = vmul.f32 %v4470, %v3207
    %4473 = vrot.lane.b32.xlu0 %v4471, 126
    %v4474 = vpop.permute.xlu0 %4473
    %v4476 = vadd.f32 %v4468, %v4474
    %s4477 = sld [smem:[#allocation2 + $0x1be]]
    %v4478 = vstv %s4477
    %v4479 = vmul.f32 %v4478, %v3378
    %v4480 = vadd.f32 %v4476, %v4479
    %s4481 = sld [smem:[#allocation2 + $0x1bf]]
    %v4482 = vstv %s4481
    %v4483 = vmul.f32 %v4482, %v3378
    %4485 = vrot.lane.b32.xlu0 %v4483, 127
    %v4486 = vpop.permute.xlu0 %4485
    %v4488 = vadd.f32 %v4480, %v4486
    %s4489 = sld [smem:[#allocation2 + $0x1c0]]
    %v4490 = vstv %s4489
    %v4491 = vmul.f32 %v4490, %v3378
    %4493 = vrot.lane.b32.xlu0 %v4491, 126
    %v4494 = vpop.permute.xlu0 %4493
    %v4496 = vadd.f32 %v4488, %v4494
    %s4497 = sld [smem:[#allocation2 + $0x1c1]]
    %v4498 = vstv %s4497
    %v4499 = vmul.f32 %v4498, %v3549
    %v4500 = vadd.f32 %v4496, %v4499
    %s4501 = sld [smem:[#allocation2 + $0x1c2]]
    %v4502 = vstv %s4501
    %v4503 = vmul.f32 %v4502, %v3549
    %4505 = vrot.lane.b32.xlu0 %v4503, 127
    %v4506 = vpop.permute.xlu0 %4505
    %v4508 = vadd.f32 %v4500, %v4506
    %s4509 = sld [smem:[#allocation2 + $0x1c3]]
    %v4510 = vstv %s4509
    %v4511 = vmul.f32 %v4510, %v3549
    %4513 = vrot.lane.b32.xlu0 %v4511, 126
    %v4514 = vpop.permute.xlu0 %4513
    %v4516 = vadd.f32 %v4508, %v4514
    %s4517 = sld [smem:[#allocation2 + $0x1c4]]
    %v4518 = vstv %s4517
    %v4519 = vmul.f32 %v4518, %v3720
    %v4520 = vadd.f32 %v4516, %v4519
    %s4521 = sld [smem:[#allocation2 + $0x1c5]]
    %v4522 = vstv %s4521
    %v4523 = vmul.f32 %v4522, %v3720
    %4525 = vrot.lane.b32.xlu0 %v4523, 127
    %v4526 = vpop.permute.xlu0 %4525
    %v4528 = vadd.f32 %v4520, %v4526
    %s4529 = sld [smem:[#allocation2 + $0x1c6]]
    %v4530 = vstv %s4529
    %v4531 = vmul.f32 %v4530, %v3720
    %4533 = vrot.lane.b32.xlu0 %v4531, 126
    %v4534 = vpop.permute.xlu0 %4533
    %v4536 = vadd.f32 %v4528, %v4534
    %s4537 = sld [smem:[#allocation2 + $0x1c7]]
    %v4538 = vstv %s4537
    %v4539 = vmul.f32 %v4538, %v3891
    %v4540 = vadd.f32 %v4536, %v4539
    %s4541 = sld [smem:[#allocation2 + $0x1c8]]
    %v4542 = vstv %s4541
    %v4543 = vmul.f32 %v4542, %v3891
    %4545 = vrot.lane.b32.xlu0 %v4543, 127
    %v4546 = vpop.permute.xlu0 %4545
    %v4548 = vadd.f32 %v4540, %v4546
    %s4549 = sld [smem:[#allocation2 + $0x1c9]]
    %v4550 = vstv %s4549
    %v4551 = vmul.f32 %v4550, %v3891
    %4553 = vrot.lane.b32.xlu0 %v4551, 126
    %v4554 = vpop.permute.xlu0 %4553
    %v4556 = vadd.f32 %v4548, %v4554
    %s4557 = sld [smem:[#allocation2 + $0x29e]]
    %v4558 = vstv %s4557
    %v4560 = vsel %vm4093, %v4556, 0
    %4562 = vmatpush.msra.mxu0 0.0
    %4563 = vmatpush.msra.mxu0 0.0
    %4564 = vmatpush.msra.mxu0 0.0
    %4565 = vmatpush.msra.mxu0 0.0
    %4566 = vmatpush.msra.mxu0 0.0
    %4567 = vmatpush.msra.mxu0 0.0
    %4568 = vmatpush.msra.mxu0 0.0
    %4569 = vmatpush.msra.mxu0 0.0
    %4570 = vmatpush.msra.mxu0 0.0
    %4571 = vmatpush.msra.mxu0 0.0
    %4572 = vmatpush.msra.mxu0 0.0
    %4573 = vmatpush.msra.mxu0 0.0
    %4574 = vmatpush.msra.mxu0 %v4098
    %4575 = vmatpush.msra.mxu0 %v352
    %4576 = vmatpush.msra.mxu0 %v350
    %4577 = vmatpush.msra.mxu0 %v348
    %4578 = vmatmul.f32.gmra.mxu0 %v4560
    %v4579 = vpop.f32.mrf.mxu0
    %v4580 = vadd.f32 %v4558, %v4579
    %4581 = vdwg.mxu0
    %v4582 = vmax.f32 %v4580, 0.0
    %s4583 = sld [smem:[#allocation2 + $0x2a8]]
    %v4584 = vstv %s4583
    %v4585 = vmul.f32 %v4582, %v4584
    %s4586 = sld [smem:[#allocation2 + $0x2b2]]
    %v4587 = vstv %s4586
    %v4588 = vadd.f32 %v4585, %v4587
    %s4589 = sld [smem:[#allocation2 + $0x1ca]]
    %v4590 = vstv %s4589
    %v4591 = vmul.f32 %v4590, %v2352
    %s4592 = sld [smem:[#allocation2 + $0x1cb]]
    %v4593 = vstv %s4592
    %v4594 = vmul.f32 %v4593, %v2352
    %4596 = vrot.lane.b32.xlu0 %v4594, 127
    %v4597 = vpop.permute.xlu0 %4596
    %v4599 = vadd.f32 %v4591, %v4597
    %s4600 = sld [smem:[#allocation2 + $0x1cc]]
    %v4601 = vstv %s4600
    %v4602 = vmul.f32 %v4601, %v2352
    %4604 = vrot.lane.b32.xlu0 %v4602, 126
    %v4605 = vpop.permute.xlu0 %4604
    %v4607 = vadd.f32 %v4599, %v4605
    %s4608 = sld [smem:[#allocation2 + $0x1cd]]
    %v4609 = vstv %s4608
    %v4610 = vmul.f32 %v4609, %v2523
    %v4611 = vadd.f32 %v4607, %v4610
    %s4612 = sld [smem:[#allocation2 + $0x1ce]]
    %v4613 = vstv %s4612
    %v4614 = vmul.f32 %v4613, %v2523
    %4616 = vrot.lane.b32.xlu0 %v4614, 127
    %v4617 = vpop.permute.xlu0 %4616
    %v4619 = vadd.f32 %v4611, %v4617
    %s4620 = sld [smem:[#allocation2 + $0x1cf]]
    %v4621 = vstv %s4620
    %v4622 = vmul.f32 %v4621, %v2523
    %4624 = vrot.lane.b32.xlu0 %v4622, 126
    %v4625 = vpop.permute.xlu0 %4624
    %v4627 = vadd.f32 %v4619, %v4625
    %s4628 = sld [smem:[#allocation2 + $0x1d0]]
    %v4629 = vstv %s4628
    %v4630 = vmul.f32 %v4629, %v2694
    %v4631 = vadd.f32 %v4627, %v4630
    %s4632 = sld [smem:[#allocation2 + $0x1d1]]
    %v4633 = vstv %s4632
    %v4634 = vmul.f32 %v4633, %v2694
    %4636 = vrot.lane.b32.xlu0 %v4634, 127
    %v4637 = vpop.permute.xlu0 %4636
    %v4639 = vadd.f32 %v4631, %v4637
    %s4640 = sld [smem:[#allocation2 + $0x1d2]]
    %v4641 = vstv %s4640
    %v4642 = vmul.f32 %v4641, %v2694
    %4644 = vrot.lane.b32.xlu0 %v4642, 126
    %v4645 = vpop.permute.xlu0 %4644
    %v4647 = vadd.f32 %v4639, %v4645
    %s4648 = sld [smem:[#allocation2 + $0x1d3]]
    %v4649 = vstv %s4648
    %v4650 = vmul.f32 %v4649, %v2865
    %v4651 = vadd.f32 %v4647, %v4650
    %s4652 = sld [smem:[#allocation2 + $0x1d4]]
    %v4653 = vstv %s4652
    %v4654 = vmul.f32 %v4653, %v2865
    %4656 = vrot.lane.b32.xlu0 %v4654, 127
    %v4657 = vpop.permute.xlu0 %4656
    %v4659 = vadd.f32 %v4651, %v4657
    %s4660 = sld [smem:[#allocation2 + $0x1d5]]
    %v4661 = vstv %s4660
    %v4662 = vmul.f32 %v4661, %v2865
    %4664 = vrot.lane.b32.xlu0 %v4662, 126
    %v4665 = vpop.permute.xlu0 %4664
    %v4667 = vadd.f32 %v4659, %v4665
    %s4668 = sld [smem:[#allocation2 + $0x1d6]]
    %v4669 = vstv %s4668
    %v4670 = vmul.f32 %v4669, %v3036
    %v4671 = vadd.f32 %v4667, %v4670
    %s4672 = sld [smem:[#allocation2 + $0x1d7]]
    %v4673 = vstv %s4672
    %v4674 = vmul.f32 %v4673, %v3036
    %4676 = vrot.lane.b32.xlu0 %v4674, 127
    %v4677 = vpop.permute.xlu0 %4676
    %v4679 = vadd.f32 %v4671, %v4677
    %s4680 = sld [smem:[#allocation2 + $0x1d8]]
    %v4681 = vstv %s4680
    %v4682 = vmul.f32 %v4681, %v3036
    %4684 = vrot.lane.b32.xlu0 %v4682, 126
    %v4685 = vpop.permute.xlu0 %4684
    %v4687 = vadd.f32 %v4679, %v4685
    %s4688 = sld [smem:[#allocation2 + $0x1d9]]
    %v4689 = vstv %s4688
    %v4690 = vmul.f32 %v4689, %v3207
    %v4691 = vadd.f32 %v4687, %v4690
    %s4692 = sld [smem:[#allocation2 + $0x1da]]
    %v4693 = vstv %s4692
    %v4694 = vmul.f32 %v4693, %v3207
    %4696 = vrot.lane.b32.xlu0 %v4694, 127
    %v4697 = vpop.permute.xlu0 %4696
    %v4699 = vadd.f32 %v4691, %v4697
    %s4700 = sld [smem:[#allocation2 + $0x1db]]
    %v4701 = vstv %s4700
    %v4702 = vmul.f32 %v4701, %v3207
    %4704 = vrot.lane.b32.xlu0 %v4702, 126
    %v4705 = vpop.permute.xlu0 %4704
    %v4707 = vadd.f32 %v4699, %v4705
    %s4708 = sld [smem:[#allocation2 + $0x1dc]]
    %v4709 = vstv %s4708
    %v4710 = vmul.f32 %v4709, %v3378
    %v4711 = vadd.f32 %v4707, %v4710
    %s4712 = sld [smem:[#allocation2 + $0x1dd]]
    %v4713 = vstv %s4712
    %v4714 = vmul.f32 %v4713, %v3378
    %4716 = vrot.lane.b32.xlu0 %v4714, 127
    %v4717 = vpop.permute.xlu0 %4716
    %v4719 = vadd.f32 %v4711, %v4717
    %s4720 = sld [smem:[#allocation2 + $0x1de]]
    %v4721 = vstv %s4720
    %v4722 = vmul.f32 %v4721, %v3378
    %4724 = vrot.lane.b32.xlu0 %v4722, 126
    %v4725 = vpop.permute.xlu0 %4724
    %v4727 = vadd.f32 %v4719, %v4725
    %s4728 = sld [smem:[#allocation2 + $0x1df]]
    %v4729 = vstv %s4728
    %v4730 = vmul.f32 %v4729, %v3549
    %v4731 = vadd.f32 %v4727, %v4730
    %s4732 = sld [smem:[#allocation2 + $0x1e0]]
    %v4733 = vstv %s4732
    %v4734 = vmul.f32 %v4733, %v3549
    %4736 = vrot.lane.b32.xlu0 %v4734, 127
    %v4737 = vpop.permute.xlu0 %4736
    %v4739 = vadd.f32 %v4731, %v4737
    %s4740 = sld [smem:[#allocation2 + $0x1e1]]
    %v4741 = vstv %s4740
    %v4742 = vmul.f32 %v4741, %v3549
    %4744 = vrot.lane.b32.xlu0 %v4742, 126
    %v4745 = vpop.permute.xlu0 %4744
    %v4747 = vadd.f32 %v4739, %v4745
    %s4748 = sld [smem:[#allocation2 + $0x1e2]]
    %v4749 = vstv %s4748
    %v4750 = vmul.f32 %v4749, %v3720
    %v4751 = vadd.f32 %v4747, %v4750
    %s4752 = sld [smem:[#allocation2 + $0x1e3]]
    %v4753 = vstv %s4752
    %v4754 = vmul.f32 %v4753, %v3720
    %4756 = vrot.lane.b32.xlu0 %v4754, 127
    %v4757 = vpop.permute.xlu0 %4756
    %v4759 = vadd.f32 %v4751, %v4757
    %s4760 = sld [smem:[#allocation2 + $0x1e4]]
    %v4761 = vstv %s4760
    %v4762 = vmul.f32 %v4761, %v3720
    %4764 = vrot.lane.b32.xlu0 %v4762, 126
    %v4765 = vpop.permute.xlu0 %4764
    %v4767 = vadd.f32 %v4759, %v4765
    %s4768 = sld [smem:[#allocation2 + $0x1e5]]
    %v4769 = vstv %s4768
    %v4770 = vmul.f32 %v4769, %v3891
    %v4771 = vadd.f32 %v4767, %v4770
    %s4772 = sld [smem:[#allocation2 + $0x1e6]]
    %v4773 = vstv %s4772
    %v4774 = vmul.f32 %v4773, %v3891
    %4776 = vrot.lane.b32.xlu0 %v4774, 127
    %v4777 = vpop.permute.xlu0 %4776
    %v4779 = vadd.f32 %v4771, %v4777
    %s4780 = sld [smem:[#allocation2 + $0x1e7]]
    %v4781 = vstv %s4780
    %v4782 = vmul.f32 %v4781, %v3891
    %4784 = vrot.lane.b32.xlu0 %v4782, 126
    %v4785 = vpop.permute.xlu0 %4784
    %v4787 = vadd.f32 %v4779, %v4785
    %s4788 = sld [smem:[#allocation2 + $0x29f]]
    %v4789 = vstv %s4788
    %v4791 = vsel %vm4093, %v4787, 0
    %4793 = vmatpush.msra.mxu0 0.0
    %4794 = vmatpush.msra.mxu0 0.0
    %4795 = vmatpush.msra.mxu0 0.0
    %4796 = vmatpush.msra.mxu0 0.0
    %4797 = vmatpush.msra.mxu0 0.0
    %4798 = vmatpush.msra.mxu0 0.0
    %4799 = vmatpush.msra.mxu0 0.0
    %4800 = vmatpush.msra.mxu0 0.0
    %4801 = vmatpush.msra.mxu0 0.0
    %4802 = vmatpush.msra.mxu0 0.0
    %4803 = vmatpush.msra.mxu0 0.0
    %4804 = vmatpush.msra.mxu0 0.0
    %4805 = vmatpush.msra.mxu0 %v4098
    %4806 = vmatpush.msra.mxu0 %v352
    %4807 = vmatpush.msra.mxu0 %v350
    %4808 = vmatpush.msra.mxu0 %v348
    %4809 = vmatmul.f32.gmra.mxu0 %v4791
    %v4810 = vpop.f32.mrf.mxu0
    %v4811 = vadd.f32 %v4789, %v4810
    %4812 = vdwg.mxu0
    %v4813 = vmax.f32 %v4811, 0.0
    %s4814 = sld [smem:[#allocation2 + $0x2a9]]
    %v4815 = vstv %s4814
    %v4816 = vmul.f32 %v4813, %v4815
    %s4817 = sld [smem:[#allocation2 + $0x2b3]]
    %v4818 = vstv %s4817
    %v4819 = vadd.f32 %v4816, %v4818
    %s4820 = sld [smem:[#allocation2 + $0x1e8]]
    %v4821 = vstv %s4820
    %v4822 = vmul.f32 %v4821, %v2352
    %s4823 = sld [smem:[#allocation2 + $0x1e9]]
    %v4824 = vstv %s4823
    %v4825 = vmul.f32 %v4824, %v2352
    %4827 = vrot.lane.b32.xlu0 %v4825, 127
    %v4828 = vpop.permute.xlu0 %4827
    %v4830 = vadd.f32 %v4822, %v4828
    %s4831 = sld [smem:[#allocation2 + $0x1ea]]
    %v4832 = vstv %s4831
    %v4833 = vmul.f32 %v4832, %v2352
    %4835 = vrot.lane.b32.xlu0 %v4833, 126
    %v4836 = vpop.permute.xlu0 %4835
    %v4838 = vadd.f32 %v4830, %v4836
    %s4839 = sld [smem:[#allocation2 + $0x1eb]]
    %v4840 = vstv %s4839
    %v4841 = vmul.f32 %v4840, %v2523
    %v4842 = vadd.f32 %v4838, %v4841
    %s4843 = sld [smem:[#allocation2 + $0x1ec]]
    %v4844 = vstv %s4843
    %v4845 = vmul.f32 %v4844, %v2523
    %4847 = vrot.lane.b32.xlu0 %v4845, 127
    %v4848 = vpop.permute.xlu0 %4847
    %v4850 = vadd.f32 %v4842, %v4848
    %s4851 = sld [smem:[#allocation2 + $0x1ed]]
    %v4852 = vstv %s4851
    %v4853 = vmul.f32 %v4852, %v2523
    %4855 = vrot.lane.b32.xlu0 %v4853, 126
    %v4856 = vpop.permute.xlu0 %4855
    %v4858 = vadd.f32 %v4850, %v4856
    %s4859 = sld [smem:[#allocation2 + $0x1ee]]
    %v4860 = vstv %s4859
    %v4861 = vmul.f32 %v4860, %v2694
    %v4862 = vadd.f32 %v4858, %v4861
    %s4863 = sld [smem:[#allocation2 + $0x1ef]]
    %v4864 = vstv %s4863
    %v4865 = vmul.f32 %v4864, %v2694
    %4867 = vrot.lane.b32.xlu0 %v4865, 127
    %v4868 = vpop.permute.xlu0 %4867
    %v4870 = vadd.f32 %v4862, %v4868
    %s4871 = sld [smem:[#allocation2 + $0x1f0]]
    %v4872 = vstv %s4871
    %v4873 = vmul.f32 %v4872, %v2694
    %4875 = vrot.lane.b32.xlu0 %v4873, 126
    %v4876 = vpop.permute.xlu0 %4875
    %v4878 = vadd.f32 %v4870, %v4876
    %s4879 = sld [smem:[#allocation2 + $0x1f1]]
    %v4880 = vstv %s4879
    %v4881 = vmul.f32 %v4880, %v2865
    %v4882 = vadd.f32 %v4878, %v4881
    %s4883 = sld [smem:[#allocation2 + $0x1f2]]
    %v4884 = vstv %s4883
    %v4885 = vmul.f32 %v4884, %v2865
    %4887 = vrot.lane.b32.xlu0 %v4885, 127
    %v4888 = vpop.permute.xlu0 %4887
    %v4890 = vadd.f32 %v4882, %v4888
    %s4891 = sld [smem:[#allocation2 + $0x1f3]]
    %v4892 = vstv %s4891
    %v4893 = vmul.f32 %v4892, %v2865
    %4895 = vrot.lane.b32.xlu0 %v4893, 126
    %v4896 = vpop.permute.xlu0 %4895
    %v4898 = vadd.f32 %v4890, %v4896
    %s4899 = sld [smem:[#allocation2 + $0x1f4]]
    %v4900 = vstv %s4899
    %v4901 = vmul.f32 %v4900, %v3036
    %v4902 = vadd.f32 %v4898, %v4901
    %s4903 = sld [smem:[#allocation2 + $0x1f5]]
    %v4904 = vstv %s4903
    %v4905 = vmul.f32 %v4904, %v3036
    %4907 = vrot.lane.b32.xlu0 %v4905, 127
    %v4908 = vpop.permute.xlu0 %4907
    %v4910 = vadd.f32 %v4902, %v4908
    %s4911 = sld [smem:[#allocation2 + $0x1f6]]
    %v4912 = vstv %s4911
    %v4913 = vmul.f32 %v4912, %v3036
    %4915 = vrot.lane.b32.xlu0 %v4913, 126
    %v4916 = vpop.permute.xlu0 %4915
    %v4918 = vadd.f32 %v4910, %v4916
    %s4919 = sld [smem:[#allocation2 + $0x1f7]]
    %v4920 = vstv %s4919
    %v4921 = vmul.f32 %v4920, %v3207
    %v4922 = vadd.f32 %v4918, %v4921
    %s4923 = sld [smem:[#allocation2 + $0x1f8]]
    %v4924 = vstv %s4923
    %v4925 = vmul.f32 %v4924, %v3207
    %4927 = vrot.lane.b32.xlu0 %v4925, 127
    %v4928 = vpop.permute.xlu0 %4927
    %v4930 = vadd.f32 %v4922, %v4928
    %s4931 = sld [smem:[#allocation2 + $0x1f9]]
    %v4932 = vstv %s4931
    %v4933 = vmul.f32 %v4932, %v3207
    %4935 = vrot.lane.b32.xlu0 %v4933, 126
    %v4936 = vpop.permute.xlu0 %4935
    %v4938 = vadd.f32 %v4930, %v4936
    %s4939 = sld [smem:[#allocation2 + $0x1fa]]
    %v4940 = vstv %s4939
    %v4941 = vmul.f32 %v4940, %v3378
    %v4942 = vadd.f32 %v4938, %v4941
    %s4943 = sld [smem:[#allocation2 + $0x1fb]]
    %v4944 = vstv %s4943
    %v4945 = vmul.f32 %v4944, %v3378
    %4947 = vrot.lane.b32.xlu0 %v4945, 127
    %v4948 = vpop.permute.xlu0 %4947
    %v4950 = vadd.f32 %v4942, %v4948
    %s4951 = sld [smem:[#allocation2 + $0x1fc]]
    %v4952 = vstv %s4951
    %v4953 = vmul.f32 %v4952, %v3378
    %4955 = vrot.lane.b32.xlu0 %v4953, 126
    %v4956 = vpop.permute.xlu0 %4955
    %v4958 = vadd.f32 %v4950, %v4956
    %s4959 = sld [smem:[#allocation2 + $0x1fd]]
    %v4960 = vstv %s4959
    %v4961 = vmul.f32 %v4960, %v3549
    %v4962 = vadd.f32 %v4958, %v4961
    %s4963 = sld [smem:[#allocation2 + $0x1fe]]
    %v4964 = vstv %s4963
    %v4965 = vmul.f32 %v4964, %v3549
    %4967 = vrot.lane.b32.xlu0 %v4965, 127
    %v4968 = vpop.permute.xlu0 %4967
    %v4970 = vadd.f32 %v4962, %v4968
    %s4971 = sld [smem:[#allocation2 + $0x1ff]]
    %v4972 = vstv %s4971
    %v4973 = vmul.f32 %v4972, %v3549
    %4975 = vrot.lane.b32.xlu0 %v4973, 126
    %v4976 = vpop.permute.xlu0 %4975
    %v4978 = vadd.f32 %v4970, %v4976
    %s4979 = sld [smem:[#allocation2 + $0x200]]
    %v4980 = vstv %s4979
    %v4981 = vmul.f32 %v4980, %v3720
    %v4982 = vadd.f32 %v4978, %v4981
    %s4983 = sld [smem:[#allocation2 + $0x201]]
    %v4984 = vstv %s4983
    %v4985 = vmul.f32 %v4984, %v3720
    %4987 = vrot.lane.b32.xlu0 %v4985, 127
    %v4988 = vpop.permute.xlu0 %4987
    %v4990 = vadd.f32 %v4982, %v4988
    %s4991 = sld [smem:[#allocation2 + $0x202]]
    %v4992 = vstv %s4991
    %v4993 = vmul.f32 %v4992, %v3720
    %4995 = vrot.lane.b32.xlu0 %v4993, 126
    %v4996 = vpop.permute.xlu0 %4995
    %v4998 = vadd.f32 %v4990, %v4996
    %s4999 = sld [smem:[#allocation2 + $0x203]]
    %v5000 = vstv %s4999
    %v5001 = vmul.f32 %v5000, %v3891
    %v5002 = vadd.f32 %v4998, %v5001
    %s5003 = sld [smem:[#allocation2 + $0x204]]
    %v5004 = vstv %s5003
    %v5005 = vmul.f32 %v5004, %v3891
    %5007 = vrot.lane.b32.xlu0 %v5005, 127
    %v5008 = vpop.permute.xlu0 %5007
    %v5010 = vadd.f32 %v5002, %v5008
    %s5011 = sld [smem:[#allocation2 + $0x205]]
    %v5012 = vstv %s5011
    %v5013 = vmul.f32 %v5012, %v3891
    %5015 = vrot.lane.b32.xlu0 %v5013, 126
    %v5016 = vpop.permute.xlu0 %5015
    %v5018 = vadd.f32 %v5010, %v5016
    %s5019 = sld [smem:[#allocation2 + $0x2a0]]
    %v5020 = vstv %s5019
    %v5022 = vsel %vm4093, %v5018, 0
    %5024 = vmatpush.msra.mxu0 0.0
    %5025 = vmatpush.msra.mxu0 0.0
    %5026 = vmatpush.msra.mxu0 0.0
    %5027 = vmatpush.msra.mxu0 0.0
    %5028 = vmatpush.msra.mxu0 0.0
    %5029 = vmatpush.msra.mxu0 0.0
    %5030 = vmatpush.msra.mxu0 0.0
    %5031 = vmatpush.msra.mxu0 0.0
    %5032 = vmatpush.msra.mxu0 0.0
    %5033 = vmatpush.msra.mxu0 0.0
    %5034 = vmatpush.msra.mxu0 0.0
    %5035 = vmatpush.msra.mxu0 0.0
    %5036 = vmatpush.msra.mxu0 %v4098
    %5037 = vmatpush.msra.mxu0 %v352
    %5038 = vmatpush.msra.mxu0 %v350
    %5039 = vmatpush.msra.mxu0 %v348
    %5040 = vmatmul.f32.gmra.mxu0 %v5022
    %v5041 = vpop.f32.mrf.mxu0
    %v5042 = vadd.f32 %v5020, %v5041
    %5043 = vdwg.mxu0
    %v5044 = vmax.f32 %v5042, 0.0
    %s5045 = sld [smem:[#allocation2 + $0x2aa]]
    %v5046 = vstv %s5045
    %v5047 = vmul.f32 %v5044, %v5046
    %s5048 = sld [smem:[#allocation2 + $0x2b4]]
    %v5049 = vstv %s5048
    %v5050 = vadd.f32 %v5047, %v5049
    %s5051 = sld [smem:[#allocation2 + $0x206]]
    %v5052 = vstv %s5051
    %v5053 = vmul.f32 %v5052, %v2352
    %s5054 = sld [smem:[#allocation2 + $0x207]]
    %v5055 = vstv %s5054
    %v5056 = vmul.f32 %v5055, %v2352
    %5058 = vrot.lane.b32.xlu0 %v5056, 127
    %v5059 = vpop.permute.xlu0 %5058
    %v5061 = vadd.f32 %v5053, %v5059
    %s5062 = sld [smem:[#allocation2 + $0x208]]
    %v5063 = vstv %s5062
    %v5064 = vmul.f32 %v5063, %v2352
    %5066 = vrot.lane.b32.xlu0 %v5064, 126
    %v5067 = vpop.permute.xlu0 %5066
    %v5069 = vadd.f32 %v5061, %v5067
    %s5070 = sld [smem:[#allocation2 + $0x209]]
    %v5071 = vstv %s5070
    %v5072 = vmul.f32 %v5071, %v2523
    %v5073 = vadd.f32 %v5069, %v5072
    %s5074 = sld [smem:[#allocation2 + $0x20a]]
    %v5075 = vstv %s5074
    %v5076 = vmul.f32 %v5075, %v2523
    %5078 = vrot.lane.b32.xlu0 %v5076, 127
    %v5079 = vpop.permute.xlu0 %5078
    %v5081 = vadd.f32 %v5073, %v5079
    %s5082 = sld [smem:[#allocation2 + $0x20b]]
    %v5083 = vstv %s5082
    %v5084 = vmul.f32 %v5083, %v2523
    %5086 = vrot.lane.b32.xlu0 %v5084, 126
    %v5087 = vpop.permute.xlu0 %5086
    %v5089 = vadd.f32 %v5081, %v5087
    %s5090 = sld [smem:[#allocation2 + $0x20c]]
    %v5091 = vstv %s5090
    %v5092 = vmul.f32 %v5091, %v2694
    %v5093 = vadd.f32 %v5089, %v5092
    %s5094 = sld [smem:[#allocation2 + $0x20d]]
    %v5095 = vstv %s5094
    %v5096 = vmul.f32 %v5095, %v2694
    %5098 = vrot.lane.b32.xlu0 %v5096, 127
    %v5099 = vpop.permute.xlu0 %5098
    %v5101 = vadd.f32 %v5093, %v5099
    %s5102 = sld [smem:[#allocation2 + $0x20e]]
    %v5103 = vstv %s5102
    %v5104 = vmul.f32 %v5103, %v2694
    %5106 = vrot.lane.b32.xlu0 %v5104, 126
    %v5107 = vpop.permute.xlu0 %5106
    %v5109 = vadd.f32 %v5101, %v5107
    %s5110 = sld [smem:[#allocation2 + $0x20f]]
    %v5111 = vstv %s5110
    %v5112 = vmul.f32 %v5111, %v2865
    %v5113 = vadd.f32 %v5109, %v5112
    %s5114 = sld [smem:[#allocation2 + $0x210]]
    %v5115 = vstv %s5114
    %v5116 = vmul.f32 %v5115, %v2865
    %5118 = vrot.lane.b32.xlu0 %v5116, 127
    %v5119 = vpop.permute.xlu0 %5118
    %v5121 = vadd.f32 %v5113, %v5119
    %s5122 = sld [smem:[#allocation2 + $0x211]]
    %v5123 = vstv %s5122
    %v5124 = vmul.f32 %v5123, %v2865
    %5126 = vrot.lane.b32.xlu0 %v5124, 126
    %v5127 = vpop.permute.xlu0 %5126
    %v5129 = vadd.f32 %v5121, %v5127
    %s5130 = sld [smem:[#allocation2 + $0x212]]
    %v5131 = vstv %s5130
    %v5132 = vmul.f32 %v5131, %v3036
    %v5133 = vadd.f32 %v5129, %v5132
    %s5134 = sld [smem:[#allocation2 + $0x213]]
    %v5135 = vstv %s5134
    %v5136 = vmul.f32 %v5135, %v3036
    %5138 = vrot.lane.b32.xlu0 %v5136, 127
    %v5139 = vpop.permute.xlu0 %5138
    %v5141 = vadd.f32 %v5133, %v5139
    %s5142 = sld [smem:[#allocation2 + $0x214]]
    %v5143 = vstv %s5142
    %v5144 = vmul.f32 %v5143, %v3036
    %5146 = vrot.lane.b32.xlu0 %v5144, 126
    %v5147 = vpop.permute.xlu0 %5146
    %v5149 = vadd.f32 %v5141, %v5147
    %s5150 = sld [smem:[#allocation2 + $0x215]]
    %v5151 = vstv %s5150
    %v5152 = vmul.f32 %v5151, %v3207
    %v5153 = vadd.f32 %v5149, %v5152
    %s5154 = sld [smem:[#allocation2 + $0x216]]
    %v5155 = vstv %s5154
    %v5156 = vmul.f32 %v5155, %v3207
    %5158 = vrot.lane.b32.xlu0 %v5156, 127
    %v5159 = vpop.permute.xlu0 %5158
    %v5161 = vadd.f32 %v5153, %v5159
    %s5162 = sld [smem:[#allocation2 + $0x217]]
    %v5163 = vstv %s5162
    %v5164 = vmul.f32 %v5163, %v3207
    %5166 = vrot.lane.b32.xlu0 %v5164, 126
    %v5167 = vpop.permute.xlu0 %5166
    %v5169 = vadd.f32 %v5161, %v5167
    %s5170 = sld [smem:[#allocation2 + $0x218]]
    %v5171 = vstv %s5170
    %v5172 = vmul.f32 %v5171, %v3378
    %v5173 = vadd.f32 %v5169, %v5172
    %s5174 = sld [smem:[#allocation2 + $0x219]]
    %v5175 = vstv %s5174
    %v5176 = vmul.f32 %v5175, %v3378
    %5178 = vrot.lane.b32.xlu0 %v5176, 127
    %v5179 = vpop.permute.xlu0 %5178
    %v5181 = vadd.f32 %v5173, %v5179
    %s5182 = sld [smem:[#allocation2 + $0x21a]]
    %v5183 = vstv %s5182
    %v5184 = vmul.f32 %v5183, %v3378
    %5186 = vrot.lane.b32.xlu0 %v5184, 126
    %v5187 = vpop.permute.xlu0 %5186
    %v5189 = vadd.f32 %v5181, %v5187
    %s5190 = sld [smem:[#allocation2 + $0x21b]]
    %v5191 = vstv %s5190
    %v5192 = vmul.f32 %v5191, %v3549
    %v5193 = vadd.f32 %v5189, %v5192
    %s5194 = sld [smem:[#allocation2 + $0x21c]]
    %v5195 = vstv %s5194
    %v5196 = vmul.f32 %v5195, %v3549
    %5198 = vrot.lane.b32.xlu0 %v5196, 127
    %v5199 = vpop.permute.xlu0 %5198
    %v5201 = vadd.f32 %v5193, %v5199
    %s5202 = sld [smem:[#allocation2 + $0x21d]]
    %v5203 = vstv %s5202
    %v5204 = vmul.f32 %v5203, %v3549
    %5206 = vrot.lane.b32.xlu0 %v5204, 126
    %v5207 = vpop.permute.xlu0 %5206
    %v5209 = vadd.f32 %v5201, %v5207
    %s5210 = sld [smem:[#allocation2 + $0x21e]]
    %v5211 = vstv %s5210
    %v5212 = vmul.f32 %v5211, %v3720
    %v5213 = vadd.f32 %v5209, %v5212
    %s5214 = sld [smem:[#allocation2 + $0x21f]]
    %v5215 = vstv %s5214
    %v5216 = vmul.f32 %v5215, %v3720
    %5218 = vrot.lane.b32.xlu0 %v5216, 127
    %v5219 = vpop.permute.xlu0 %5218
    %v5221 = vadd.f32 %v5213, %v5219
    %s5222 = sld [smem:[#allocation2 + $0x220]]
    %v5223 = vstv %s5222
    %v5224 = vmul.f32 %v5223, %v3720
    %5226 = vrot.lane.b32.xlu0 %v5224, 126
    %v5227 = vpop.permute.xlu0 %5226
    %v5229 = vadd.f32 %v5221, %v5227
    %s5230 = sld [smem:[#allocation2 + $0x221]]
    %v5231 = vstv %s5230
    %v5232 = vmul.f32 %v5231, %v3891
    %v5233 = vadd.f32 %v5229, %v5232
    %s5234 = sld [smem:[#allocation2 + $0x222]]
    %v5235 = vstv %s5234
    %v5236 = vmul.f32 %v5235, %v3891
    %5238 = vrot.lane.b32.xlu0 %v5236, 127
    %v5239 = vpop.permute.xlu0 %5238
    %v5241 = vadd.f32 %v5233, %v5239
    %s5242 = sld [smem:[#allocation2 + $0x223]]
    %v5243 = vstv %s5242
    %v5244 = vmul.f32 %v5243, %v3891
    %5246 = vrot.lane.b32.xlu0 %v5244, 126
    %v5247 = vpop.permute.xlu0 %5246
    %v5249 = vadd.f32 %v5241, %v5247
    %s5250 = sld [smem:[#allocation2 + $0x2a1]]
    %v5251 = vstv %s5250
    %v5253 = vsel %vm4093, %v5249, 0
    %5255 = vmatpush.msra.mxu0 0.0
    %5256 = vmatpush.msra.mxu0 0.0
    %5257 = vmatpush.msra.mxu0 0.0
    %5258 = vmatpush.msra.mxu0 0.0
    %5259 = vmatpush.msra.mxu0 0.0
    %5260 = vmatpush.msra.mxu0 0.0
    %5261 = vmatpush.msra.mxu0 0.0
    %5262 = vmatpush.msra.mxu0 0.0
    %5263 = vmatpush.msra.mxu0 0.0
    %5264 = vmatpush.msra.mxu0 0.0
    %5265 = vmatpush.msra.mxu0 0.0
    %5266 = vmatpush.msra.mxu0 0.0
    %5267 = vmatpush.msra.mxu0 %v4098
    %5268 = vmatpush.msra.mxu0 %v352
    %5269 = vmatpush.msra.mxu0 %v350
    %5270 = vmatpush.msra.mxu0 %v348
    %5271 = vmatmul.f32.gmra.mxu0 %v5253
    %v5272 = vpop.f32.mrf.mxu0
    %v5273 = vadd.f32 %v5251, %v5272
    %5274 = vdwg.mxu0
    %v5275 = vmax.f32 %v5273, 0.0
    %s5276 = sld [smem:[#allocation2 + $0x2ab]]
    %v5277 = vstv %s5276
    %v5278 = vmul.f32 %v5275, %v5277
    %s5279 = sld [smem:[#allocation2 + $0x2b5]]
    %v5280 = vstv %s5279
    %v5281 = vadd.f32 %v5278, %v5280
    %s5282 = sld [smem:[#allocation2 + $0x224]]
    %v5283 = vstv %s5282
    %v5284 = vmul.f32 %v5283, %v2352
    %s5285 = sld [smem:[#allocation2 + $0x225]]
    %v5286 = vstv %s5285
    %v5287 = vmul.f32 %v5286, %v2352
    %5289 = vrot.lane.b32.xlu0 %v5287, 127
    %v5290 = vpop.permute.xlu0 %5289
    %v5292 = vadd.f32 %v5284, %v5290
    %s5293 = sld [smem:[#allocation2 + $0x226]]
    %v5294 = vstv %s5293
    %v5295 = vmul.f32 %v5294, %v2352
    %5297 = vrot.lane.b32.xlu0 %v5295, 126
    %v5298 = vpop.permute.xlu0 %5297
    %v5300 = vadd.f32 %v5292, %v5298
    %s5301 = sld [smem:[#allocation2 + $0x227]]
    %v5302 = vstv %s5301
    %v5303 = vmul.f32 %v5302, %v2523
    %v5304 = vadd.f32 %v5300, %v5303
    %s5305 = sld [smem:[#allocation2 + $0x228]]
    %v5306 = vstv %s5305
    %v5307 = vmul.f32 %v5306, %v2523
    %5309 = vrot.lane.b32.xlu0 %v5307, 127
    %v5310 = vpop.permute.xlu0 %5309
    %v5312 = vadd.f32 %v5304, %v5310
    %s5313 = sld [smem:[#allocation2 + $0x229]]
    %v5314 = vstv %s5313
    %v5315 = vmul.f32 %v5314, %v2523
    %5317 = vrot.lane.b32.xlu0 %v5315, 126
    %v5318 = vpop.permute.xlu0 %5317
    %v5320 = vadd.f32 %v5312, %v5318
    %s5321 = sld [smem:[#allocation2 + $0x22a]]
    %v5322 = vstv %s5321
    %v5323 = vmul.f32 %v5322, %v2694
    %v5324 = vadd.f32 %v5320, %v5323
    %s5325 = sld [smem:[#allocation2 + $0x22b]]
    %v5326 = vstv %s5325
    %v5327 = vmul.f32 %v5326, %v2694
    %5329 = vrot.lane.b32.xlu0 %v5327, 127
    %v5330 = vpop.permute.xlu0 %5329
    %v5332 = vadd.f32 %v5324, %v5330
    %s5333 = sld [smem:[#allocation2 + $0x22c]]
    %v5334 = vstv %s5333
    %v5335 = vmul.f32 %v5334, %v2694
    %5337 = vrot.lane.b32.xlu0 %v5335, 126
    %v5338 = vpop.permute.xlu0 %5337
    %v5340 = vadd.f32 %v5332, %v5338
    %s5341 = sld [smem:[#allocation2 + $0x22d]]
    %v5342 = vstv %s5341
    %v5343 = vmul.f32 %v5342, %v2865
    %v5344 = vadd.f32 %v5340, %v5343
    %s5345 = sld [smem:[#allocation2 + $0x22e]]
    %v5346 = vstv %s5345
    %v5347 = vmul.f32 %v5346, %v2865
    %5349 = vrot.lane.b32.xlu0 %v5347, 127
    %v5350 = vpop.permute.xlu0 %5349
    %v5352 = vadd.f32 %v5344, %v5350
    %s5353 = sld [smem:[#allocation2 + $0x22f]]
    %v5354 = vstv %s5353
    %v5355 = vmul.f32 %v5354, %v2865
    %5357 = vrot.lane.b32.xlu0 %v5355, 126
    %v5358 = vpop.permute.xlu0 %5357
    %v5360 = vadd.f32 %v5352, %v5358
    %s5361 = sld [smem:[#allocation2 + $0x230]]
    %v5362 = vstv %s5361
    %v5363 = vmul.f32 %v5362, %v3036
    %v5364 = vadd.f32 %v5360, %v5363
    %s5365 = sld [smem:[#allocation2 + $0x231]]
    %v5366 = vstv %s5365
    %v5367 = vmul.f32 %v5366, %v3036
    %5369 = vrot.lane.b32.xlu0 %v5367, 127
    %v5370 = vpop.permute.xlu0 %5369
    %v5372 = vadd.f32 %v5364, %v5370
    %s5373 = sld [smem:[#allocation2 + $0x232]]
    %v5374 = vstv %s5373
    %v5375 = vmul.f32 %v5374, %v3036
    %5377 = vrot.lane.b32.xlu0 %v5375, 126
    %v5378 = vpop.permute.xlu0 %5377
    %v5380 = vadd.f32 %v5372, %v5378
    %s5381 = sld [smem:[#allocation2 + $0x233]]
    %v5382 = vstv %s5381
    %v5383 = vmul.f32 %v5382, %v3207
    %v5384 = vadd.f32 %v5380, %v5383
    %s5385 = sld [smem:[#allocation2 + $0x234]]
    %v5386 = vstv %s5385
    %v5387 = vmul.f32 %v5386, %v3207
    %5389 = vrot.lane.b32.xlu0 %v5387, 127
    %v5390 = vpop.permute.xlu0 %5389
    %v5392 = vadd.f32 %v5384, %v5390
    %s5393 = sld [smem:[#allocation2 + $0x235]]
    %v5394 = vstv %s5393
    %v5395 = vmul.f32 %v5394, %v3207
    %5397 = vrot.lane.b32.xlu0 %v5395, 126
    %v5398 = vpop.permute.xlu0 %5397
    %v5400 = vadd.f32 %v5392, %v5398
    %s5401 = sld [smem:[#allocation2 + $0x236]]
    %v5402 = vstv %s5401
    %v5403 = vmul.f32 %v5402, %v3378
    %v5404 = vadd.f32 %v5400, %v5403
    %s5405 = sld [smem:[#allocation2 + $0x237]]
    %v5406 = vstv %s5405
    %v5407 = vmul.f32 %v5406, %v3378
    %5409 = vrot.lane.b32.xlu0 %v5407, 127
    %v5410 = vpop.permute.xlu0 %5409
    %v5412 = vadd.f32 %v5404, %v5410
    %s5413 = sld [smem:[#allocation2 + $0x238]]
    %v5414 = vstv %s5413
    %v5415 = vmul.f32 %v5414, %v3378
    %5417 = vrot.lane.b32.xlu0 %v5415, 126
    %v5418 = vpop.permute.xlu0 %5417
    %v5420 = vadd.f32 %v5412, %v5418
    %s5421 = sld [smem:[#allocation2 + $0x239]]
    %v5422 = vstv %s5421
    %v5423 = vmul.f32 %v5422, %v3549
    %v5424 = vadd.f32 %v5420, %v5423
    %s5425 = sld [smem:[#allocation2 + $0x23a]]
    %v5426 = vstv %s5425
    %v5427 = vmul.f32 %v5426, %v3549
    %5429 = vrot.lane.b32.xlu0 %v5427, 127
    %v5430 = vpop.permute.xlu0 %5429
    %v5432 = vadd.f32 %v5424, %v5430
    %s5433 = sld [smem:[#allocation2 + $0x23b]]
    %v5434 = vstv %s5433
    %v5435 = vmul.f32 %v5434, %v3549
    %5437 = vrot.lane.b32.xlu0 %v5435, 126
    %v5438 = vpop.permute.xlu0 %5437
    %v5440 = vadd.f32 %v5432, %v5438
    %s5441 = sld [smem:[#allocation2 + $0x23c]]
    %v5442 = vstv %s5441
    %v5443 = vmul.f32 %v5442, %v3720
    %v5444 = vadd.f32 %v5440, %v5443
    %s5445 = sld [smem:[#allocation2 + $0x23d]]
    %v5446 = vstv %s5445
    %v5447 = vmul.f32 %v5446, %v3720
    %5449 = vrot.lane.b32.xlu0 %v5447, 127
    %v5450 = vpop.permute.xlu0 %5449
    %v5452 = vadd.f32 %v5444, %v5450
    %s5453 = sld [smem:[#allocation2 + $0x23e]]
    %v5454 = vstv %s5453
    %v5455 = vmul.f32 %v5454, %v3720
    %5457 = vrot.lane.b32.xlu0 %v5455, 126
    %v5458 = vpop.permute.xlu0 %5457
    %v5460 = vadd.f32 %v5452, %v5458
    %s5461 = sld [smem:[#allocation2 + $0x23f]]
    %v5462 = vstv %s5461
    %v5463 = vmul.f32 %v5462, %v3891
    %v5464 = vadd.f32 %v5460, %v5463
    %s5465 = sld [smem:[#allocation2 + $0x240]]
    %v5466 = vstv %s5465
    %v5467 = vmul.f32 %v5466, %v3891
    %5469 = vrot.lane.b32.xlu0 %v5467, 127
    %v5470 = vpop.permute.xlu0 %5469
    %v5472 = vadd.f32 %v5464, %v5470
    %s5473 = sld [smem:[#allocation2 + $0x241]]
    %v5474 = vstv %s5473
    %v5475 = vmul.f32 %v5474, %v3891
    %5477 = vrot.lane.b32.xlu0 %v5475, 126
    %v5478 = vpop.permute.xlu0 %5477
    %v5480 = vadd.f32 %v5472, %v5478
    %s5481 = sld [smem:[#allocation2 + $0x2a2]]
    %v5482 = vstv %s5481
    %v5484 = vsel %vm4093, %v5480, 0
    %5486 = vmatpush.msra.mxu0 0.0
    %5487 = vmatpush.msra.mxu0 0.0
    %5488 = vmatpush.msra.mxu0 0.0
    %5489 = vmatpush.msra.mxu0 0.0
    %5490 = vmatpush.msra.mxu0 0.0
    %5491 = vmatpush.msra.mxu0 0.0
    %5492 = vmatpush.msra.mxu0 0.0
    %5493 = vmatpush.msra.mxu0 0.0
    %5494 = vmatpush.msra.mxu0 0.0
    %5495 = vmatpush.msra.mxu0 0.0
    %5496 = vmatpush.msra.mxu0 0.0
    %5497 = vmatpush.msra.mxu0 0.0
    %5498 = vmatpush.msra.mxu0 %v4098
    %5499 = vmatpush.msra.mxu0 %v352
    %5500 = vmatpush.msra.mxu0 %v350
    %5501 = vmatpush.msra.mxu0 %v348
    %5502 = vmatmul.f32.gmra.mxu0 %v5484
    %v5503 = vpop.f32.mrf.mxu0
    %v5504 = vadd.f32 %v5482, %v5503
    %5505 = vdwg.mxu0
    %v5506 = vmax.f32 %v5504, 0.0
    %s5507 = sld [smem:[#allocation2 + $0x2ac]]
    %v5508 = vstv %s5507
    %v5509 = vmul.f32 %v5506, %v5508
    %s5510 = sld [smem:[#allocation2 + $0x2b6]]
    %v5511 = vstv %s5510
    %v5512 = vadd.f32 %v5509, %v5511
    %s5513 = sld [smem:[#allocation2 + $0x242]]
    %v5514 = vstv %s5513
    %v5515 = vmul.f32 %v5514, %v2352
    %s5516 = sld [smem:[#allocation2 + $0x243]]
    %v5517 = vstv %s5516
    %v5518 = vmul.f32 %v5517, %v2352
    %5520 = vrot.lane.b32.xlu0 %v5518, 127
    %v5521 = vpop.permute.xlu0 %5520
    %v5523 = vadd.f32 %v5515, %v5521
    %s5524 = sld [smem:[#allocation2 + $0x244]]
    %v5525 = vstv %s5524
    %v5526 = vmul.f32 %v5525, %v2352
    %5528 = vrot.lane.b32.xlu0 %v5526, 126
    %v5529 = vpop.permute.xlu0 %5528
    %v5531 = vadd.f32 %v5523, %v5529
    %s5532 = sld [smem:[#allocation2 + $0x245]]
    %v5533 = vstv %s5532
    %v5534 = vmul.f32 %v5533, %v2523
    %v5535 = vadd.f32 %v5531, %v5534
    %s5536 = sld [smem:[#allocation2 + $0x246]]
    %v5537 = vstv %s5536
    %v5538 = vmul.f32 %v5537, %v2523
    %5540 = vrot.lane.b32.xlu0 %v5538, 127
    %v5541 = vpop.permute.xlu0 %5540
    %v5543 = vadd.f32 %v5535, %v5541
    %s5544 = sld [smem:[#allocation2 + $0x247]]
    %v5545 = vstv %s5544
    %v5546 = vmul.f32 %v5545, %v2523
    %5548 = vrot.lane.b32.xlu0 %v5546, 126
    %v5549 = vpop.permute.xlu0 %5548
    %v5551 = vadd.f32 %v5543, %v5549
    %s5552 = sld [smem:[#allocation2 + $0x248]]
    %v5553 = vstv %s5552
    %v5554 = vmul.f32 %v5553, %v2694
    %v5555 = vadd.f32 %v5551, %v5554
    %s5556 = sld [smem:[#allocation2 + $0x249]]
    %v5557 = vstv %s5556
    %v5558 = vmul.f32 %v5557, %v2694
    %5560 = vrot.lane.b32.xlu0 %v5558, 127
    %v5561 = vpop.permute.xlu0 %5560
    %v5563 = vadd.f32 %v5555, %v5561
    %s5564 = sld [smem:[#allocation2 + $0x24a]]
    %v5565 = vstv %s5564
    %v5566 = vmul.f32 %v5565, %v2694
    %5568 = vrot.lane.b32.xlu0 %v5566, 126
    %v5569 = vpop.permute.xlu0 %5568
    %v5571 = vadd.f32 %v5563, %v5569
    %s5572 = sld [smem:[#allocation2 + $0x24b]]
    %v5573 = vstv %s5572
    %v5574 = vmul.f32 %v5573, %v2865
    %v5575 = vadd.f32 %v5571, %v5574
    %s5576 = sld [smem:[#allocation2 + $0x24c]]
    %v5577 = vstv %s5576
    %v5578 = vmul.f32 %v5577, %v2865
    %5580 = vrot.lane.b32.xlu0 %v5578, 127
    %v5581 = vpop.permute.xlu0 %5580
    %v5583 = vadd.f32 %v5575, %v5581
    %s5584 = sld [smem:[#allocation2 + $0x24d]]
    %v5585 = vstv %s5584
    %v5586 = vmul.f32 %v5585, %v2865
    %5588 = vrot.lane.b32.xlu0 %v5586, 126
    %v5589 = vpop.permute.xlu0 %5588
    %v5591 = vadd.f32 %v5583, %v5589
    %s5592 = sld [smem:[#allocation2 + $0x24e]]
    %v5593 = vstv %s5592
    %v5594 = vmul.f32 %v5593, %v3036
    %v5595 = vadd.f32 %v5591, %v5594
    %s5596 = sld [smem:[#allocation2 + $0x24f]]
    %v5597 = vstv %s5596
    %v5598 = vmul.f32 %v5597, %v3036
    %5600 = vrot.lane.b32.xlu0 %v5598, 127
    %v5601 = vpop.permute.xlu0 %5600
    %v5603 = vadd.f32 %v5595, %v5601
    %s5604 = sld [smem:[#allocation2 + $0x250]]
    %v5605 = vstv %s5604
    %v5606 = vmul.f32 %v5605, %v3036
    %5608 = vrot.lane.b32.xlu0 %v5606, 126
    %v5609 = vpop.permute.xlu0 %5608
    %v5611 = vadd.f32 %v5603, %v5609
    %s5612 = sld [smem:[#allocation2 + $0x251]]
    %v5613 = vstv %s5612
    %v5614 = vmul.f32 %v5613, %v3207
    %v5615 = vadd.f32 %v5611, %v5614
    %s5616 = sld [smem:[#allocation2 + $0x252]]
    %v5617 = vstv %s5616
    %v5618 = vmul.f32 %v5617, %v3207
    %5620 = vrot.lane.b32.xlu0 %v5618, 127
    %v5621 = vpop.permute.xlu0 %5620
    %v5623 = vadd.f32 %v5615, %v5621
    %s5624 = sld [smem:[#allocation2 + $0x253]]
    %v5625 = vstv %s5624
    %v5626 = vmul.f32 %v5625, %v3207
    %5628 = vrot.lane.b32.xlu0 %v5626, 126
    %v5629 = vpop.permute.xlu0 %5628
    %v5631 = vadd.f32 %v5623, %v5629
    %s5632 = sld [smem:[#allocation2 + $0x254]]
    %v5633 = vstv %s5632
    %v5634 = vmul.f32 %v5633, %v3378
    %v5635 = vadd.f32 %v5631, %v5634
    %s5636 = sld [smem:[#allocation2 + $0x255]]
    %v5637 = vstv %s5636
    %v5638 = vmul.f32 %v5637, %v3378
    %5640 = vrot.lane.b32.xlu0 %v5638, 127
    %v5641 = vpop.permute.xlu0 %5640
    %v5643 = vadd.f32 %v5635, %v5641
    %s5644 = sld [smem:[#allocation2 + $0x256]]
    %v5645 = vstv %s5644
    %v5646 = vmul.f32 %v5645, %v3378
    %5648 = vrot.lane.b32.xlu0 %v5646, 126
    %v5649 = vpop.permute.xlu0 %5648
    %v5651 = vadd.f32 %v5643, %v5649
    %s5652 = sld [smem:[#allocation2 + $0x257]]
    %v5653 = vstv %s5652
    %v5654 = vmul.f32 %v5653, %v3549
    %v5655 = vadd.f32 %v5651, %v5654
    %s5656 = sld [smem:[#allocation2 + $0x258]]
    %v5657 = vstv %s5656
    %v5658 = vmul.f32 %v5657, %v3549
    %5660 = vrot.lane.b32.xlu0 %v5658, 127
    %v5661 = vpop.permute.xlu0 %5660
    %v5663 = vadd.f32 %v5655, %v5661
    %s5664 = sld [smem:[#allocation2 + $0x259]]
    %v5665 = vstv %s5664
    %v5666 = vmul.f32 %v5665, %v3549
    %5668 = vrot.lane.b32.xlu0 %v5666, 126
    %v5669 = vpop.permute.xlu0 %5668
    %v5671 = vadd.f32 %v5663, %v5669
    %s5672 = sld [smem:[#allocation2 + $0x25a]]
    %v5673 = vstv %s5672
    %v5674 = vmul.f32 %v5673, %v3720
    %v5675 = vadd.f32 %v5671, %v5674
    %s5676 = sld [smem:[#allocation2 + $0x25b]]
    %v5677 = vstv %s5676
    %v5678 = vmul.f32 %v5677, %v3720
    %5680 = vrot.lane.b32.xlu0 %v5678, 127
    %v5681 = vpop.permute.xlu0 %5680
    %v5683 = vadd.f32 %v5675, %v5681
    %s5684 = sld [smem:[#allocation2 + $0x25c]]
    %v5685 = vstv %s5684
    %v5686 = vmul.f32 %v5685, %v3720
    %5688 = vrot.lane.b32.xlu0 %v5686, 126
    %v5689 = vpop.permute.xlu0 %5688
    %v5691 = vadd.f32 %v5683, %v5689
    %s5692 = sld [smem:[#allocation2 + $0x25d]]
    %v5693 = vstv %s5692
    %v5694 = vmul.f32 %v5693, %v3891
    %v5695 = vadd.f32 %v5691, %v5694
    %s5696 = sld [smem:[#allocation2 + $0x25e]]
    %v5697 = vstv %s5696
    %v5698 = vmul.f32 %v5697, %v3891
    %5700 = vrot.lane.b32.xlu0 %v5698, 127
    %v5701 = vpop.permute.xlu0 %5700
    %v5703 = vadd.f32 %v5695, %v5701
    %s5704 = sld [smem:[#allocation2 + $0x25f]]
    %v5705 = vstv %s5704
    %v5706 = vmul.f32 %v5705, %v3891
    %5708 = vrot.lane.b32.xlu0 %v5706, 126
    %v5709 = vpop.permute.xlu0 %5708
    %v5711 = vadd.f32 %v5703, %v5709
    %s5712 = sld [smem:[#allocation2 + $0x2a3]]
    %v5713 = vstv %s5712
    %v5715 = vsel %vm4093, %v5711, 0
    %5717 = vmatpush.msra.mxu0 0.0
    %5718 = vmatpush.msra.mxu0 0.0
    %5719 = vmatpush.msra.mxu0 0.0
    %5720 = vmatpush.msra.mxu0 0.0
    %5721 = vmatpush.msra.mxu0 0.0
    %5722 = vmatpush.msra.mxu0 0.0
    %5723 = vmatpush.msra.mxu0 0.0
    %5724 = vmatpush.msra.mxu0 0.0
    %5725 = vmatpush.msra.mxu0 0.0
    %5726 = vmatpush.msra.mxu0 0.0
    %5727 = vmatpush.msra.mxu0 0.0
    %5728 = vmatpush.msra.mxu0 0.0
    %5729 = vmatpush.msra.mxu0 %v4098
    %5730 = vmatpush.msra.mxu0 %v352
    %5731 = vmatpush.msra.mxu0 %v350
    %5732 = vmatpush.msra.mxu0 %v348
    %5733 = vmatmul.f32.gmra.mxu0 %v5715
    %v5734 = vpop.f32.mrf.mxu0
    %v5735 = vadd.f32 %v5713, %v5734
    %5736 = vdwg.mxu0
    %v5737 = vmax.f32 %v5735, 0.0
    %s5738 = sld [smem:[#allocation2 + $0x2ad]]
    %v5739 = vstv %s5738
    %v5740 = vmul.f32 %v5737, %v5739
    %s5741 = sld [smem:[#allocation2 + $0x2b7]]
    %v5742 = vstv %s5741
    %v5743 = vadd.f32 %v5740, %v5742
    %s5744 = sld [smem:[#allocation2 + $0x260]]
    %v5745 = vstv %s5744
    %v5746 = vmul.f32 %v5745, %v2352
    %s5747 = sld [smem:[#allocation2 + $0x261]]
    %v5748 = vstv %s5747
    %v5749 = vmul.f32 %v5748, %v2352
    %5751 = vrot.lane.b32.xlu0 %v5749, 127
    %v5752 = vpop.permute.xlu0 %5751
    %v5754 = vadd.f32 %v5746, %v5752
    %s5755 = sld [smem:[#allocation2 + $0x262]]
    %v5756 = vstv %s5755
    %v5757 = vmul.f32 %v5756, %v2352
    %5759 = vrot.lane.b32.xlu0 %v5757, 126
    %v5760 = vpop.permute.xlu0 %5759
    %v5762 = vadd.f32 %v5754, %v5760
    %s5763 = sld [smem:[#allocation2 + $0x263]]
    %v5764 = vstv %s5763
    %v5765 = vmul.f32 %v5764, %v2523
    %v5766 = vadd.f32 %v5762, %v5765
    %s5767 = sld [smem:[#allocation2 + $0x264]]
    %v5768 = vstv %s5767
    %v5769 = vmul.f32 %v5768, %v2523
    %5771 = vrot.lane.b32.xlu0 %v5769, 127
    %v5772 = vpop.permute.xlu0 %5771
    %v5774 = vadd.f32 %v5766, %v5772
    %s5775 = sld [smem:[#allocation2 + $0x265]]
    %v5776 = vstv %s5775
    %v5777 = vmul.f32 %v5776, %v2523
    %5779 = vrot.lane.b32.xlu0 %v5777, 126
    %v5780 = vpop.permute.xlu0 %5779
    %v5782 = vadd.f32 %v5774, %v5780
    %s5783 = sld [smem:[#allocation2 + $0x266]]
    %v5784 = vstv %s5783
    %v5785 = vmul.f32 %v5784, %v2694
    %v5786 = vadd.f32 %v5782, %v5785
    %s5787 = sld [smem:[#allocation2 + $0x267]]
    %v5788 = vstv %s5787
    %v5789 = vmul.f32 %v5788, %v2694
    %5791 = vrot.lane.b32.xlu0 %v5789, 127
    %v5792 = vpop.permute.xlu0 %5791
    %v5794 = vadd.f32 %v5786, %v5792
    %s5795 = sld [smem:[#allocation2 + $0x268]]
    %v5796 = vstv %s5795
    %v5797 = vmul.f32 %v5796, %v2694
    %5799 = vrot.lane.b32.xlu0 %v5797, 126
    %v5800 = vpop.permute.xlu0 %5799
    %v5802 = vadd.f32 %v5794, %v5800
    %s5803 = sld [smem:[#allocation2 + $0x269]]
    %v5804 = vstv %s5803
    %v5805 = vmul.f32 %v5804, %v2865
    %v5806 = vadd.f32 %v5802, %v5805
    %s5807 = sld [smem:[#allocation2 + $0x26a]]
    %v5808 = vstv %s5807
    %v5809 = vmul.f32 %v5808, %v2865
    %5811 = vrot.lane.b32.xlu0 %v5809, 127
    %v5812 = vpop.permute.xlu0 %5811
    %v5814 = vadd.f32 %v5806, %v5812
    %s5815 = sld [smem:[#allocation2 + $0x26b]]
    %v5816 = vstv %s5815
    %v5817 = vmul.f32 %v5816, %v2865
    %5819 = vrot.lane.b32.xlu0 %v5817, 126
    %v5820 = vpop.permute.xlu0 %5819
    %v5822 = vadd.f32 %v5814, %v5820
    %s5823 = sld [smem:[#allocation2 + $0x26c]]
    %v5824 = vstv %s5823
    %v5825 = vmul.f32 %v5824, %v3036
    %v5826 = vadd.f32 %v5822, %v5825
    %s5827 = sld [smem:[#allocation2 + $0x26d]]
    %v5828 = vstv %s5827
    %v5829 = vmul.f32 %v5828, %v3036
    %5831 = vrot.lane.b32.xlu0 %v5829, 127
    %v5832 = vpop.permute.xlu0 %5831
    %v5834 = vadd.f32 %v5826, %v5832
    %s5835 = sld [smem:[#allocation2 + $0x26e]]
    %v5836 = vstv %s5835
    %v5837 = vmul.f32 %v5836, %v3036
    %5839 = vrot.lane.b32.xlu0 %v5837, 126
    %v5840 = vpop.permute.xlu0 %5839
    %v5842 = vadd.f32 %v5834, %v5840
    %s5843 = sld [smem:[#allocation2 + $0x26f]]
    %v5844 = vstv %s5843
    %v5845 = vmul.f32 %v5844, %v3207
    %v5846 = vadd.f32 %v5842, %v5845
    %s5847 = sld [smem:[#allocation2 + $0x270]]
    %v5848 = vstv %s5847
    %v5849 = vmul.f32 %v5848, %v3207
    %5851 = vrot.lane.b32.xlu0 %v5849, 127
    %v5852 = vpop.permute.xlu0 %5851
    %v5854 = vadd.f32 %v5846, %v5852
    %s5855 = sld [smem:[#allocation2 + $0x271]]
    %v5856 = vstv %s5855
    %v5857 = vmul.f32 %v5856, %v3207
    %5859 = vrot.lane.b32.xlu0 %v5857, 126
    %v5860 = vpop.permute.xlu0 %5859
    %v5862 = vadd.f32 %v5854, %v5860
    %s5863 = sld [smem:[#allocation2 + $0x272]]
    %v5864 = vstv %s5863
    %v5865 = vmul.f32 %v5864, %v3378
    %v5866 = vadd.f32 %v5862, %v5865
    %s5867 = sld [smem:[#allocation2 + $0x273]]
    %v5868 = vstv %s5867
    %v5869 = vmul.f32 %v5868, %v3378
    %5871 = vrot.lane.b32.xlu0 %v5869, 127
    %v5872 = vpop.permute.xlu0 %5871
    %v5874 = vadd.f32 %v5866, %v5872
    %s5875 = sld [smem:[#allocation2 + $0x274]]
    %v5876 = vstv %s5875
    %v5877 = vmul.f32 %v5876, %v3378
    %5879 = vrot.lane.b32.xlu0 %v5877, 126
    %v5880 = vpop.permute.xlu0 %5879
    %v5882 = vadd.f32 %v5874, %v5880
    %s5883 = sld [smem:[#allocation2 + $0x275]]
    %v5884 = vstv %s5883
    %v5885 = vmul.f32 %v5884, %v3549
    %v5886 = vadd.f32 %v5882, %v5885
    %s5887 = sld [smem:[#allocation2 + $0x276]]
    %v5888 = vstv %s5887
    %v5889 = vmul.f32 %v5888, %v3549
    %5891 = vrot.lane.b32.xlu0 %v5889, 127
    %v5892 = vpop.permute.xlu0 %5891
    %v5894 = vadd.f32 %v5886, %v5892
    %s5895 = sld [smem:[#allocation2 + $0x277]]
    %v5896 = vstv %s5895
    %v5897 = vmul.f32 %v5896, %v3549
    %5899 = vrot.lane.b32.xlu0 %v5897, 126
    %v5900 = vpop.permute.xlu0 %5899
    %v5902 = vadd.f32 %v5894, %v5900
    %s5903 = sld [smem:[#allocation2 + $0x278]]
    %v5904 = vstv %s5903
    %v5905 = vmul.f32 %v5904, %v3720
    %v5906 = vadd.f32 %v5902, %v5905
    %s5907 = sld [smem:[#allocation2 + $0x279]]
    %v5908 = vstv %s5907
    %v5909 = vmul.f32 %v5908, %v3720
    %5911 = vrot.lane.b32.xlu0 %v5909, 127
    %v5912 = vpop.permute.xlu0 %5911
    %v5914 = vadd.f32 %v5906, %v5912
    %s5915 = sld [smem:[#allocation2 + $0x27a]]
    %v5916 = vstv %s5915
    %v5917 = vmul.f32 %v5916, %v3720
    %5919 = vrot.lane.b32.xlu0 %v5917, 126
    %v5920 = vpop.permute.xlu0 %5919
    %v5922 = vadd.f32 %v5914, %v5920
    %s5923 = sld [smem:[#allocation2 + $0x27b]]
    %v5924 = vstv %s5923
    %v5925 = vmul.f32 %v5924, %v3891
    %v5926 = vadd.f32 %v5922, %v5925
    %s5927 = sld [smem:[#allocation2 + $0x27c]]
    %v5928 = vstv %s5927
    %v5929 = vmul.f32 %v5928, %v3891
    %5931 = vrot.lane.b32.xlu0 %v5929, 127
    %v5932 = vpop.permute.xlu0 %5931
    %v5934 = vadd.f32 %v5926, %v5932
    %s5935 = sld [smem:[#allocation2 + $0x27d]]
    %v5936 = vstv %s5935
    %v5937 = vmul.f32 %v5936, %v3891
    %5939 = vrot.lane.b32.xlu0 %v5937, 126
    %v5940 = vpop.permute.xlu0 %5939
    %v5942 = vadd.f32 %v5934, %v5940
    %s5943 = sld [smem:[#allocation2 + $0x2a4]]
    %v5944 = vstv %s5943
    %v5946 = vsel %vm4093, %v5942, 0
    %5948 = vmatpush.msra.mxu0 0.0
    %5949 = vmatpush.msra.mxu0 0.0
    %5950 = vmatpush.msra.mxu0 0.0
    %5951 = vmatpush.msra.mxu0 0.0
    %5952 = vmatpush.msra.mxu0 0.0
    %5953 = vmatpush.msra.mxu0 0.0
    %5954 = vmatpush.msra.mxu0 0.0
    %5955 = vmatpush.msra.mxu0 0.0
    %5956 = vmatpush.msra.mxu0 0.0
    %5957 = vmatpush.msra.mxu0 0.0
    %5958 = vmatpush.msra.mxu0 0.0
    %5959 = vmatpush.msra.mxu0 0.0
    %5960 = vmatpush.msra.mxu0 %v4098
    %5961 = vmatpush.msra.mxu0 %v352
    %5962 = vmatpush.msra.mxu0 %v350
    %5963 = vmatpush.msra.mxu0 %v348
    %5964 = vmatmul.f32.gmra.mxu0 %v5946
    %v5965 = vpop.f32.mrf.mxu0
    %v5966 = vadd.f32 %v5944, %v5965
    %5967 = vdwg.mxu0
    %v5968 = vmax.f32 %v5966, 0.0
    %s5969 = sld [smem:[#allocation2 + $0x2ae]]
    %v5970 = vstv %s5969
    %v5971 = vmul.f32 %v5968, %v5970
    %s5972 = sld [smem:[#allocation2 + $0x2b8]]
    %v5973 = vstv %s5972
    %v5974 = vadd.f32 %v5971, %v5973
    %s5975 = sld [smem:[#allocation2 + $0x27e]]
    %v5976 = vstv %s5975
    %v5977 = vmul.f32 %v5976, %v2352
    %s5978 = sld [smem:[#allocation2 + $0x27f]]
    %v5979 = vstv %s5978
    %v5980 = vmul.f32 %v5979, %v2352
    %5982 = vrot.lane.b32.xlu0 %v5980, 127
    %v5983 = vpop.permute.xlu0 %5982
    %v5985 = vadd.f32 %v5977, %v5983
    %s5986 = sld [smem:[#allocation2 + $0x280]]
    %v5987 = vstv %s5986
    %v5988 = vmul.f32 %v5987, %v2352
    %5990 = vrot.lane.b32.xlu0 %v5988, 126
    %v5991 = vpop.permute.xlu0 %5990
    %v5993 = vadd.f32 %v5985, %v5991
    %s5994 = sld [smem:[#allocation2 + $0x281]]
    %v5995 = vstv %s5994
    %v5996 = vmul.f32 %v5995, %v2523
    %v5997 = vadd.f32 %v5993, %v5996
    %s5998 = sld [smem:[#allocation2 + $0x282]]
    %v5999 = vstv %s5998
    %v6000 = vmul.f32 %v5999, %v2523
    %6002 = vrot.lane.b32.xlu0 %v6000, 127
    %v6003 = vpop.permute.xlu0 %6002
    %v6005 = vadd.f32 %v5997, %v6003
    %s6006 = sld [smem:[#allocation2 + $0x283]]
    %v6007 = vstv %s6006
    %v6008 = vmul.f32 %v6007, %v2523
    %6010 = vrot.lane.b32.xlu0 %v6008, 126
    %v6011 = vpop.permute.xlu0 %6010
    %v6013 = vadd.f32 %v6005, %v6011
    %s6014 = sld [smem:[#allocation2 + $0x284]]
    %v6015 = vstv %s6014
    %v6016 = vmul.f32 %v6015, %v2694
    %v6017 = vadd.f32 %v6013, %v6016
    %s6018 = sld [smem:[#allocation2 + $0x285]]
    %v6019 = vstv %s6018
    %v6020 = vmul.f32 %v6019, %v2694
    %6022 = vrot.lane.b32.xlu0 %v6020, 127
    %v6023 = vpop.permute.xlu0 %6022
    %v6025 = vadd.f32 %v6017, %v6023
    %s6026 = sld [smem:[#allocation2 + $0x286]]
    %v6027 = vstv %s6026
    %v6028 = vmul.f32 %v6027, %v2694
    %6030 = vrot.lane.b32.xlu0 %v6028, 126
    %v6031 = vpop.permute.xlu0 %6030
    %v6033 = vadd.f32 %v6025, %v6031
    %s6034 = sld [smem:[#allocation2 + $0x287]]
    %v6035 = vstv %s6034
    %v6036 = vmul.f32 %v6035, %v2865
    %v6037 = vadd.f32 %v6033, %v6036
    %s6038 = sld [smem:[#allocation2 + $0x288]]
    %v6039 = vstv %s6038
    %v6040 = vmul.f32 %v6039, %v2865
    %6042 = vrot.lane.b32.xlu0 %v6040, 127
    %v6043 = vpop.permute.xlu0 %6042
    %v6045 = vadd.f32 %v6037, %v6043
    %s6046 = sld [smem:[#allocation2 + $0x289]]
    %v6047 = vstv %s6046
    %v6048 = vmul.f32 %v6047, %v2865
    %6050 = vrot.lane.b32.xlu0 %v6048, 126
    %v6051 = vpop.permute.xlu0 %6050
    %v6053 = vadd.f32 %v6045, %v6051
    %s6054 = sld [smem:[#allocation2 + $0x28a]]
    %v6055 = vstv %s6054
    %v6056 = vmul.f32 %v6055, %v3036
    %v6057 = vadd.f32 %v6053, %v6056
    %s6058 = sld [smem:[#allocation2 + $0x28b]]
    %v6059 = vstv %s6058
    %v6060 = vmul.f32 %v6059, %v3036
    %6062 = vrot.lane.b32.xlu0 %v6060, 127
    %v6063 = vpop.permute.xlu0 %6062
    %v6065 = vadd.f32 %v6057, %v6063
    %s6066 = sld [smem:[#allocation2 + $0x28c]]
    %v6067 = vstv %s6066
    %v6068 = vmul.f32 %v6067, %v3036
    %6070 = vrot.lane.b32.xlu0 %v6068, 126
    %v6071 = vpop.permute.xlu0 %6070
    %v6073 = vadd.f32 %v6065, %v6071
    %s6074 = sld [smem:[#allocation2 + $0x28d]]
    %v6075 = vstv %s6074
    %v6076 = vmul.f32 %v6075, %v3207
    %v6077 = vadd.f32 %v6073, %v6076
    %s6078 = sld [smem:[#allocation2 + $0x28e]]
    %v6079 = vstv %s6078
    %v6080 = vmul.f32 %v6079, %v3207
    %6082 = vrot.lane.b32.xlu0 %v6080, 127
    %v6083 = vpop.permute.xlu0 %6082
    %v6085 = vadd.f32 %v6077, %v6083
    %s6086 = sld [smem:[#allocation2 + $0x28f]]
    %v6087 = vstv %s6086
    %v6088 = vmul.f32 %v6087, %v3207
    %6090 = vrot.lane.b32.xlu0 %v6088, 126
    %v6091 = vpop.permute.xlu0 %6090
    %v6093 = vadd.f32 %v6085, %v6091
    %s6094 = sld [smem:[#allocation2 + $0x290]]
    %v6095 = vstv %s6094
    %v6096 = vmul.f32 %v6095, %v3378
    %v6097 = vadd.f32 %v6093, %v6096
    %s6098 = sld [smem:[#allocation2 + $0x291]]
    %v6099 = vstv %s6098
    %v6100 = vmul.f32 %v6099, %v3378
    %6102 = vrot.lane.b32.xlu0 %v6100, 127
    %v6103 = vpop.permute.xlu0 %6102
    %v6105 = vadd.f32 %v6097, %v6103
    %s6106 = sld [smem:[#allocation2 + $0x292]]
    %v6107 = vstv %s6106
    %v6108 = vmul.f32 %v6107, %v3378
    %6110 = vrot.lane.b32.xlu0 %v6108, 126
    %v6111 = vpop.permute.xlu0 %6110
    %v6113 = vadd.f32 %v6105, %v6111
    %s6114 = sld [smem:[#allocation2 + $0x293]]
    %v6115 = vstv %s6114
    %v6116 = vmul.f32 %v6115, %v3549
    %v6117 = vadd.f32 %v6113, %v6116
    %s6118 = sld [smem:[#allocation2 + $0x294]]
    %v6119 = vstv %s6118
    %v6120 = vmul.f32 %v6119, %v3549
    %6122 = vrot.lane.b32.xlu0 %v6120, 127
    %v6123 = vpop.permute.xlu0 %6122
    %v6125 = vadd.f32 %v6117, %v6123
    %s6126 = sld [smem:[#allocation2 + $0x295]]
    %v6127 = vstv %s6126
    %v6128 = vmul.f32 %v6127, %v3549
    %6130 = vrot.lane.b32.xlu0 %v6128, 126
    %v6131 = vpop.permute.xlu0 %6130
    %v6133 = vadd.f32 %v6125, %v6131
    %s6134 = sld [smem:[#allocation2 + $0x296]]
    %v6135 = vstv %s6134
    %v6136 = vmul.f32 %v6135, %v3720
    %v6137 = vadd.f32 %v6133, %v6136
    %s6138 = sld [smem:[#allocation2 + $0x297]]
    %v6139 = vstv %s6138
    %v6140 = vmul.f32 %v6139, %v3720
    %6142 = vrot.lane.b32.xlu0 %v6140, 127
    %v6143 = vpop.permute.xlu0 %6142
    %v6145 = vadd.f32 %v6137, %v6143
    %s6146 = sld [smem:[#allocation2 + $0x298]]
    %v6147 = vstv %s6146
    %v6148 = vmul.f32 %v6147, %v3720
    %6150 = vrot.lane.b32.xlu0 %v6148, 126
    %v6151 = vpop.permute.xlu0 %6150
    %v6153 = vadd.f32 %v6145, %v6151
    %s6154 = sld [smem:[#allocation2 + $0x299]]
    %v6155 = vstv %s6154
    %v6156 = vmul.f32 %v6155, %v3891
    %v6157 = vadd.f32 %v6153, %v6156
    %s6158 = sld [smem:[#allocation2 + $0x29a]]
    %v6159 = vstv %s6158
    %v6160 = vmul.f32 %v6159, %v3891
    %6162 = vrot.lane.b32.xlu0 %v6160, 127
    %v6163 = vpop.permute.xlu0 %6162
    %v6165 = vadd.f32 %v6157, %v6163
    %s6166 = sld [smem:[#allocation2 + $0x29b]]
    %v6167 = vstv %s6166
    %v6168 = vmul.f32 %v6167, %v3891
    %6170 = vrot.lane.b32.xlu0 %v6168, 126
    %v6171 = vpop.permute.xlu0 %6170
    %v6173 = vadd.f32 %v6165, %v6171
    %s6174 = sld [smem:[#allocation2 + $0x2a5]]
    %v6175 = vstv %s6174
    %v6177 = vsel %vm4093, %v6173, 0
    %6179 = vmatpush.msra.mxu0 0.0
    %6180 = vmatpush.msra.mxu0 0.0
    %6181 = vmatpush.msra.mxu0 0.0
    %6182 = vmatpush.msra.mxu0 0.0
    %6183 = vmatpush.msra.mxu0 0.0
    %6184 = vmatpush.msra.mxu0 0.0
    %6185 = vmatpush.msra.mxu0 0.0
    %6186 = vmatpush.msra.mxu0 0.0
    %6187 = vmatpush.msra.mxu0 0.0
    %6188 = vmatpush.msra.mxu0 0.0
    %6189 = vmatpush.msra.mxu0 0.0
    %6190 = vmatpush.msra.mxu0 0.0
    %6191 = vmatpush.msra.mxu0 %v4098
    %6192 = vmatpush.msra.mxu0 %v352
    %6193 = vmatpush.msra.mxu0 %v350
    %6194 = vmatpush.msra.mxu0 %v348
    %6195 = vmatmul.f32.gmra.mxu0 %v6177
    %v6196 = vpop.f32.mrf.mxu0
    %v6197 = vadd.f32 %v6175, %v6196
    %6198 = vdwg.mxu0
    %v6199 = vmax.f32 %v6197, 0.0
    %s6200 = sld [smem:[#allocation2 + $0x2af]]
    %v6201 = vstv %s6200
    %v6202 = vmul.f32 %v6199, %v6201
    %s6203 = sld [smem:[#allocation2 + $0x2b9]]
    %v6204 = vstv %s6203
    %v6205 = vadd.f32 %v6202, %v6204
    %v6206 = vld [vmem:[%s3] sm:$0x1]
    %v6207 = vld [vmem:[%s2] sm:$0xff]
    %v6208 = vld [vmem:[%s2 + $0x8] sm:$0x3f]
    %vm6209 = vcmask 113664
    %v6211 = vsel %vm6209, %v4126, 0
    %vm6213 = vcmask 1045504
    %v6215 = vsel %vm6213, %v6208, 0
    %6217 = vmatpush.msra.mxu0 0.0
    %6218 = vmatpush.msra.mxu0 0.0
    %6219 = vmatpush.msra.mxu0 0.0
    %6220 = vmatpush.msra.mxu0 0.0
    %6221 = vmatpush.msra.mxu0 0.0
    %6222 = vmatpush.msra.mxu0 0.0
    %6223 = vmatpush.msra.mxu0 0.0
    %6224 = vmatpush.msra.mxu0 0.0
    %6225 = vmatpush.msra.mxu0 0.0
    %6226 = vmatpush.msra.mxu0 0.0
    %6227 = vmatpush.msra.mxu0 0.0
    %6228 = vmatpush.msra.mxu0 0.0
    %6229 = vmatpush.msra.mxu0 0.0
    %6230 = vmatpush.msra.mxu0 0.0
    %6231 = vmatpush.msra.mxu0 %v6215
    %6232 = vmatpush.msra.mxu0 %v6207
    %6233 = vmatmul.f32.gmra.mxu0 %v6211
    %v6234 = vpop.f32.mrf.mxu0
    %v6235 = vadd.f32 0.0, %v6234
    %6236 = vdwg.mxu0
    %v6238 = vperm.slane %v6206, 0
    %v6240 = vadd.f32 %v6238, %v6235
    %s6241 = scalar_lea.vmem %s2, 16
    %v6242 = vld [vmem:[%s6241] sm:$0xff]
    %v6243 = vld [vmem:[%s6241 + $0x8] sm:$0x3f]
    %v6245 = vsel %vm6209, %v4357, 0
    %v6248 = vsel %vm6213, %v6243, 0
    %6250 = vmatpush.msra.mxu0 0.0
    %6251 = vmatpush.msra.mxu0 0.0
    %6252 = vmatpush.msra.mxu0 0.0
    %6253 = vmatpush.msra.mxu0 0.0
    %6254 = vmatpush.msra.mxu0 0.0
    %6255 = vmatpush.msra.mxu0 0.0
    %6256 = vmatpush.msra.mxu0 0.0
    %6257 = vmatpush.msra.mxu0 0.0
    %6258 = vmatpush.msra.mxu0 0.0
    %6259 = vmatpush.msra.mxu0 0.0
    %6260 = vmatpush.msra.mxu0 0.0
    %6261 = vmatpush.msra.mxu0 0.0
    %6262 = vmatpush.msra.mxu0 0.0
    %6263 = vmatpush.msra.mxu0 0.0
    %6264 = vmatpush.msra.mxu0 %v6248
    %6265 = vmatpush.msra.mxu0 %v6242
    %6266 = vmatmul.f32.gmra.mxu0 %v6245
    %v6267 = vpop.f32.mrf.mxu0
    %v6268 = vadd.f32 0.0, %v6267
    %6269 = vdwg.mxu0
    %v6270 = vadd.f32 %v6240, %v6268
    %s6271 = scalar_lea.vmem %s2, 32
    %v6272 = vld [vmem:[%s6271] sm:$0xff]
    %v6273 = vld [vmem:[%s6271 + $0x8] sm:$0x3f]
    %v6275 = vsel %vm6209, %v4588, 0
    %v6278 = vsel %vm6213, %v6273, 0
    %6280 = vmatpush.msra.mxu0 0.0
    %6281 = vmatpush.msra.mxu0 0.0
    %6282 = vmatpush.msra.mxu0 0.0
    %6283 = vmatpush.msra.mxu0 0.0
    %6284 = vmatpush.msra.mxu0 0.0
    %6285 = vmatpush.msra.mxu0 0.0
    %6286 = vmatpush.msra.mxu0 0.0
    %6287 = vmatpush.msra.mxu0 0.0
    %6288 = vmatpush.msra.mxu0 0.0
    %6289 = vmatpush.msra.mxu0 0.0
    %6290 = vmatpush.msra.mxu0 0.0
    %6291 = vmatpush.msra.mxu0 0.0
    %6292 = vmatpush.msra.mxu0 0.0
    %6293 = vmatpush.msra.mxu0 0.0
    %6294 = vmatpush.msra.mxu0 %v6278
    %6295 = vmatpush.msra.mxu0 %v6272
    %6296 = vmatmul.f32.gmra.mxu0 %v6275
    %v6297 = vpop.f32.mrf.mxu0
    %v6298 = vadd.f32 0.0, %v6297
    %6299 = vdwg.mxu0
    %v6300 = vadd.f32 %v6270, %v6298
    %s6301 = scalar_lea.vmem %s2, 48
    %v6302 = vld [vmem:[%s6301] sm:$0xff]
    %v6303 = vld [vmem:[%s6301 + $0x8] sm:$0x3f]
    %v6305 = vsel %vm6209, %v4819, 0
    %v6308 = vsel %vm6213, %v6303, 0
    %6310 = vmatpush.msra.mxu0 0.0
    %6311 = vmatpush.msra.mxu0 0.0
    %6312 = vmatpush.msra.mxu0 0.0
    %6313 = vmatpush.msra.mxu0 0.0
    %6314 = vmatpush.msra.mxu0 0.0
    %6315 = vmatpush.msra.mxu0 0.0
    %6316 = vmatpush.msra.mxu0 0.0
    %6317 = vmatpush.msra.mxu0 0.0
    %6318 = vmatpush.msra.mxu0 0.0
    %6319 = vmatpush.msra.mxu0 0.0
    %6320 = vmatpush.msra.mxu0 0.0
    %6321 = vmatpush.msra.mxu0 0.0
    %6322 = vmatpush.msra.mxu0 0.0
    %6323 = vmatpush.msra.mxu0 0.0
    %6324 = vmatpush.msra.mxu0 %v6308
    %6325 = vmatpush.msra.mxu0 %v6302
    %6326 = vmatmul.f32.gmra.mxu0 %v6305
    %v6327 = vpop.f32.mrf.mxu0
    %v6328 = vadd.f32 0.0, %v6327
    %6329 = vdwg.mxu0
    %v6330 = vadd.f32 %v6300, %v6328
    %s6331 = scalar_lea.vmem %s2, 64
    %v6332 = vld [vmem:[%s6331] sm:$0xff]
    %v6333 = vld [vmem:[%s6331 + $0x8] sm:$0x3f]
    %v6335 = vsel %vm6209, %v5050, 0
    %v6338 = vsel %vm6213, %v6333, 0
    %6340 = vmatpush.msra.mxu0 0.0
    %6341 = vmatpush.msra.mxu0 0.0
    %6342 = vmatpush.msra.mxu0 0.0
    %6343 = vmatpush.msra.mxu0 0.0
    %6344 = vmatpush.msra.mxu0 0.0
    %6345 = vmatpush.msra.mxu0 0.0
    %6346 = vmatpush.msra.mxu0 0.0
    %6347 = vmatpush.msra.mxu0 0.0
    %6348 = vmatpush.msra.mxu0 0.0
    %6349 = vmatpush.msra.mxu0 0.0
    %6350 = vmatpush.msra.mxu0 0.0
    %6351 = vmatpush.msra.mxu0 0.0
    %6352 = vmatpush.msra.mxu0 0.0
    %6353 = vmatpush.msra.mxu0 0.0
    %6354 = vmatpush.msra.mxu0 %v6338
    %6355 = vmatpush.msra.mxu0 %v6332
    %6356 = vmatmul.f32.gmra.mxu0 %v6335
    %v6357 = vpop.f32.mrf.mxu0
    %v6358 = vadd.f32 0.0, %v6357
    %6359 = vdwg.mxu0
    %v6360 = vadd.f32 %v6330, %v6358
    %s6361 = scalar_lea.vmem %s2, 80
    %v6362 = vld [vmem:[%s6361] sm:$0xff]
    %v6363 = vld [vmem:[%s6361 + $0x8] sm:$0x3f]
    %v6365 = vsel %vm6209, %v5281, 0
    %v6368 = vsel %vm6213, %v6363, 0
    %6370 = vmatpush.msra.mxu0 0.0
    %6371 = vmatpush.msra.mxu0 0.0
    %6372 = vmatpush.msra.mxu0 0.0
    %6373 = vmatpush.msra.mxu0 0.0
    %6374 = vmatpush.msra.mxu0 0.0
    %6375 = vmatpush.msra.mxu0 0.0
    %6376 = vmatpush.msra.mxu0 0.0
    %6377 = vmatpush.msra.mxu0 0.0
    %6378 = vmatpush.msra.mxu0 0.0
    %6379 = vmatpush.msra.mxu0 0.0
    %6380 = vmatpush.msra.mxu0 0.0
    %6381 = vmatpush.msra.mxu0 0.0
    %6382 = vmatpush.msra.mxu0 0.0
    %6383 = vmatpush.msra.mxu0 0.0
    %6384 = vmatpush.msra.mxu0 %v6368
    %6385 = vmatpush.msra.mxu0 %v6362
    %6386 = vmatmul.f32.gmra.mxu0 %v6365
    %v6387 = vpop.f32.mrf.mxu0
    %v6388 = vadd.f32 0.0, %v6387
    %6389 = vdwg.mxu0
    %v6390 = vadd.f32 %v6360, %v6388
    %s6391 = scalar_lea.vmem %s2, 96
    %v6392 = vld [vmem:[%s6391] sm:$0xff]
    %v6393 = vld [vmem:[%s6391 + $0x8] sm:$0x3f]
    %v6395 = vsel %vm6209, %v5512, 0
    %v6398 = vsel %vm6213, %v6393, 0
    %6400 = vmatpush.msra.mxu0 0.0
    %6401 = vmatpush.msra.mxu0 0.0
    %6402 = vmatpush.msra.mxu0 0.0
    %6403 = vmatpush.msra.mxu0 0.0
    %6404 = vmatpush.msra.mxu0 0.0
    %6405 = vmatpush.msra.mxu0 0.0
    %6406 = vmatpush.msra.mxu0 0.0
    %6407 = vmatpush.msra.mxu0 0.0
    %6408 = vmatpush.msra.mxu0 0.0
    %6409 = vmatpush.msra.mxu0 0.0
    %6410 = vmatpush.msra.mxu0 0.0
    %6411 = vmatpush.msra.mxu0 0.0
    %6412 = vmatpush.msra.mxu0 0.0
    %6413 = vmatpush.msra.mxu0 0.0
    %6414 = vmatpush.msra.mxu0 %v6398
    %6415 = vmatpush.msra.mxu0 %v6392
    %6416 = vmatmul.f32.gmra.mxu0 %v6395
    %v6417 = vpop.f32.mrf.mxu0
    %v6418 = vadd.f32 0.0, %v6417
    %6419 = vdwg.mxu0
    %v6420 = vadd.f32 %v6390, %v6418
    %s6421 = scalar_lea.vmem %s2, 112
    %v6422 = vld [vmem:[%s6421] sm:$0xff]
    %v6423 = vld [vmem:[%s6421 + $0x8] sm:$0x3f]
    %v6425 = vsel %vm6209, %v5743, 0
    %v6428 = vsel %vm6213, %v6423, 0
    %6430 = vmatpush.msra.mxu0 0.0
    %6431 = vmatpush.msra.mxu0 0.0
    %6432 = vmatpush.msra.mxu0 0.0
    %6433 = vmatpush.msra.mxu0 0.0
    %6434 = vmatpush.msra.mxu0 0.0
    %6435 = vmatpush.msra.mxu0 0.0
    %6436 = vmatpush.msra.mxu0 0.0
    %6437 = vmatpush.msra.mxu0 0.0
    %6438 = vmatpush.msra.mxu0 0.0
    %6439 = vmatpush.msra.mxu0 0.0
    %6440 = vmatpush.msra.mxu0 0.0
    %6441 = vmatpush.msra.mxu0 0.0
    %6442 = vmatpush.msra.mxu0 0.0
    %6443 = vmatpush.msra.mxu0 0.0
    %6444 = vmatpush.msra.mxu0 %v6428
    %6445 = vmatpush.msra.mxu0 %v6422
    %6446 = vmatmul.f32.gmra.mxu0 %v6425
    %v6447 = vpop.f32.mrf.mxu0
    %v6448 = vadd.f32 0.0, %v6447
    %6449 = vdwg.mxu0
    %v6450 = vadd.f32 %v6420, %v6448
    %s6451 = scalar_lea.vmem %s2, 128
    %v6452 = vld [vmem:[%s6451] sm:$0xff]
    %v6453 = vld [vmem:[%s6451 + $0x8] sm:$0x3f]
    %v6455 = vsel %vm6209, %v5974, 0
    %v6458 = vsel %vm6213, %v6453, 0
    %6460 = vmatpush.msra.mxu0 0.0
    %6461 = vmatpush.msra.mxu0 0.0
    %6462 = vmatpush.msra.mxu0 0.0
    %6463 = vmatpush.msra.mxu0 0.0
    %6464 = vmatpush.msra.mxu0 0.0
    %6465 = vmatpush.msra.mxu0 0.0
    %6466 = vmatpush.msra.mxu0 0.0
    %6467 = vmatpush.msra.mxu0 0.0
    %6468 = vmatpush.msra.mxu0 0.0
    %6469 = vmatpush.msra.mxu0 0.0
    %6470 = vmatpush.msra.mxu0 0.0
    %6471 = vmatpush.msra.mxu0 0.0
    %6472 = vmatpush.msra.mxu0 0.0
    %6473 = vmatpush.msra.mxu0 0.0
    %6474 = vmatpush.msra.mxu0 %v6458
    %6475 = vmatpush.msra.mxu0 %v6452
    %6476 = vmatmul.f32.gmra.mxu0 %v6455
    %v6477 = vpop.f32.mrf.mxu0
    %v6478 = vadd.f32 0.0, %v6477
    %6479 = vdwg.mxu0
    %v6480 = vadd.f32 %v6450, %v6478
    %s6481 = scalar_lea.vmem %s2, 144
    %v6482 = vld [vmem:[%s6481] sm:$0xff]
    %v6483 = vld [vmem:[%s6481 + $0x8] sm:$0x3f]
    %v6485 = vsel %vm6209, %v6205, 0
    %v6488 = vsel %vm6213, %v6483, 0
    %6490 = vmatpush.msra.mxu0 0.0
    %6491 = vmatpush.msra.mxu0 0.0
    %6492 = vmatpush.msra.mxu0 0.0
    %6493 = vmatpush.msra.mxu0 0.0
    %6494 = vmatpush.msra.mxu0 0.0
    %6495 = vmatpush.msra.mxu0 0.0
    %6496 = vmatpush.msra.mxu0 0.0
    %6497 = vmatpush.msra.mxu0 0.0
    %6498 = vmatpush.msra.mxu0 0.0
    %6499 = vmatpush.msra.mxu0 0.0
    %6500 = vmatpush.msra.mxu0 0.0
    %6501 = vmatpush.msra.mxu0 0.0
    %6502 = vmatpush.msra.mxu0 0.0
    %6503 = vmatpush.msra.mxu0 0.0
    %6504 = vmatpush.msra.mxu0 %v6488
    %6505 = vmatpush.msra.mxu0 %v6482
    %6506 = vmatmul.f32.gmra.mxu0 %v6485
    %v6507 = vpop.f32.mrf.mxu0
    %v6508 = vadd.f32 0.0, %v6507
    %6509 = vdwg.mxu0
    %v6510 = vadd.f32 %v6480, %v6508
    %vm6511 = vcmask 9216
    %6512 = vst.msk [vmem:[#allocation5] sm:$0x3] %vm6511, %v6510
    // Predicated region
    $region22: #{forward.1} parent=1 // pred_check
      _
    $region23: #{forward.1} parent=1 // pred_check_branch
      %6514 = sbr.rel (0) target = $region25
    $region24: #{forward.1} parent=1 // pred_region
      %6516 = vsyncadd [#allocation3], 0
      %s6518 = sshll.u32 [#allocation5], 4
      %s6519 = int_to_ptr.vmem [resolvable:$true] %s6518
      %s6520 = sshll.u32 %s4, 4
      %s6521 = int_to_ptr.hbm [resolvable:$true] %s6520
      %6523 = dma.vmem_to_hbm [thread:$0]  %s6519, 32, %s6521, [#allocation3]
    $region25: #{forward.1} parent=1 // pred_fallthru
      _
    // Predicated region
    $region26: #{forward.1} parent=1 // pred_check
      _
    $region27: #{forward.1} parent=1 // pred_check_branch
      %6525 = sbr.rel (0) target = $region29
    $region28: #{forward.1} parent=1 // pred_region
      %6527 = dma.done [#allocation3], 32
    $region29: #{forward.1} parent=1 // pred_fallthru
      _
    %6528 = vsyncpa [#allocation3], 1
    %6529 = vsyncpa [#allocation4], 1

</llo_original>
